<compile_context>
chip_gen: v7x
topology: tpu7x:2x2x1
jax: 0.10.0
libtpu: 0.0.40
codegen_flags: <defaults>
</compile_context>

<pallas_src>
import functools

import jax
import jax.numpy as jnp
from jax import lax
from jax.experimental import pallas as pl
from jax.experimental.pallas import tpu as pltpu

_EPS = 1e-5


# --------------------------------------------------------------------------
# In-kernel helpers
# --------------------------------------------------------------------------
def _zero_border(pad_ref, hp, wp, c, dtype):
    """Zero only the 1-pixel border of an (hp, wp, c) padded scratch buffer."""
    pad_ref[0:1, :, :] = jnp.zeros((1, wp, c), dtype)
    pad_ref[hp - 1:hp, :, :] = jnp.zeros((1, wp, c), dtype)
    pad_ref[:, 0:1, :] = jnp.zeros((hp, 1, c), dtype)
    pad_ref[:, wp - 1:wp, :] = jnp.zeros((hp, 1, c), dtype)


def _tap(pad_ref, kh, kw, ho, wo, stride):
    """Shifted (possibly strided) window of the padded activation, tap (kh, kw)."""
    if stride == 1:
        return pad_ref[kh:kh + ho, kw:kw + wo, :]
    return pad_ref[pl.ds(kh, ho, stride), pl.ds(kw, wo, stride), :]


def _conv3x3(pad_ref, w_ref, ho, wo, cin, cout, stride):
    """3x3 conv over a zero-padded (hp, wp, cin) scratch as 9 MXU GEMM taps."""
    acc = jnp.zeros((ho * wo, cout), jnp.float32)
    for kh in range(3):
        for kw in range(3):
            patch = _tap(pad_ref, kh, kw, ho, wo, stride).reshape(ho * wo, cin)
            acc = acc + jnp.dot(patch, w_ref[kh * 3 + kw],
                                preferred_element_type=jnp.float32)
    return acc  # (ho*wo, cout) float32


def _write_stats(stat_ref, y2d):
    """Per-image partial sums (sum, sum-of-squares) for two-pass BatchNorm."""
    stat_ref[0:1, :] = jnp.sum(y2d, axis=0, keepdims=True)
    stat_ref[1:2, :] = jnp.sum(y2d * y2d, axis=0, keepdims=True)


# --------------------------------------------------------------------------
# Pass 1: conv1 (+ optional 1x1/stride-2 shortcut conv) + BN partial sums
# --------------------------------------------------------------------------
def _pass1_kernel(*refs, H, W, Cin, Cout, Ho, Wo, stride, mm_dtype,
                  is_downsample):
    if is_downsample:
        (x_ref, w1_ref, wd_ref, y1_ref, s1_ref, ys_ref, sd_ref, xpad_ref) = refs
    else:
        (x_ref, w1_ref, y1_ref, s1_ref, xpad_ref) = refs
        wd_ref = ys_ref = sd_ref = None

    hp, wp = H + 2, W + 2
    # Stage the image into the zero-padded scratch in the matmul dtype
    # (border-only zeroing; interior fully overwritten every step).
    _zero_border(xpad_ref, hp, wp, Cin, mm_dtype)
    xpad_ref[1:H + 1, 1:W + 1, :] = x_ref[...].astype(mm_dtype)

    y1 = _conv3x3(xpad_ref, w1_ref, Ho, Wo, Cin, Cout, stride)
    y1_ref[...] = y1.reshape(Ho, Wo, Cout)
    _write_stats(s1_ref, y1)

    if is_downsample:
        # 1x1 / stride-2 shortcut conv: the center tap of the padded input is
        # exactly x[::2, ::2] — reuse the resident scratch, no extra input DMA.
        xs = _tap(xpad_ref, 1, 1, Ho, Wo, stride).reshape(Ho * Wo, Cin)
        ys = jnp.dot(xs, wd_ref[...], preferred_element_type=jnp.float32)
        ys_ref[...] = ys.reshape(Ho, Wo, Cout)
        _write_stats(sd_ref, ys)


# --------------------------------------------------------------------------
# Pass 2: BN1 (affine) + ReLU + conv2 + BN2 partial sums
# --------------------------------------------------------------------------
def _pass2_kernel(y1_ref, a1_ref, c1_ref, w2_ref, y2_ref, s2_ref, hpad_ref, *,
                  Ho, Wo, Cout, mm_dtype):
    hp, wp = Ho + 2, Wo + 2
    a1 = a1_ref[...].reshape(1, 1, Cout)
    c1 = c1_ref[...].reshape(1, 1, Cout)
    h1 = jnp.maximum(y1_ref[...] * a1 + c1, 0.0)            # BN1 + ReLU in f32

    _zero_border(hpad_ref, hp, wp, Cout, mm_dtype)
    hpad_ref[1:Ho + 1, 1:Wo + 1, :] = h1.astype(mm_dtype)    # MXU-ready staging

    y2 = _conv3x3(hpad_ref, w2_ref, Ho, Wo, Cout, Cout, 1)
    y2_ref[...] = y2.reshape(Ho, Wo, Cout)
    _write_stats(s2_ref, y2)


# --------------------------------------------------------------------------
# Pass 3: BN2 + shortcut (identity or BN of the 1x1 conv) + add + ReLU
# --------------------------------------------------------------------------
def _pass3_kernel(*refs, is_downsample, Cout):
    if is_downsample:
        (y2_ref, a2_ref, c2_ref, ys_ref, ad_ref, cd_ref, o_ref) = refs
    else:
        (y2_ref, a2_ref, c2_ref, xsc_ref, o_ref) = refs

    a2 = a2_ref[...].reshape(1, 1, Cout)
    c2 = c2_ref[...].reshape(1, 1, Cout)
    y2 = y2_ref[...] * a2 + c2
    if is_downsample:
        ad = ad_ref[...].reshape(1, 1, Cout)
        cd = cd_ref[...].reshape(1, 1, Cout)
        sc = ys_ref[...] * ad + cd
    else:
        sc = xsc_ref[...]
    o_ref[...] = jnp.maximum(y2 + sc, 0.0)


# --------------------------------------------------------------------------
# Host wrapper
# --------------------------------------------------------------------------
def _bn_affine(stats, n, gamma, beta):
    """Fold batch statistics (training mode, biased variance) into scale/shift."""
    s = jnp.sum(stats[:, 0, :], axis=0)
    q = jnp.sum(stats[:, 1, :], axis=0)
    mean = s / n
    var = q / n - mean * mean
    scale = gamma.reshape(-1) * lax.rsqrt(var + _EPS)
    shift = beta.reshape(-1) - mean * scale
    c = scale.shape[0]
    return (scale.reshape(1, c).astype(jnp.float32),
            shift.reshape(1, c).astype(jnp.float32))


def _img_spec(h, w, c):
    return pl.BlockSpec((None, h, w, c), lambda b: (b, 0, 0, 0))


def _stat_spec(c):
    return pl.BlockSpec((None, 2, c), lambda b: (b, 0, 0))


def _full_spec(shape):
    rank = len(shape)
    return pl.BlockSpec(shape, lambda b: (0,) * rank)


@functools.partial(jax.jit, static_argnums=(2, 3))
def resblock_forward(x_nchw, params, is_downsample, matmul_dtype=jnp.bfloat16):
    stride = 2 if is_downsample else 1
    B, Cin, H, W = x_nchw.shape
    Cout = params["w1"].shape[-1]
    Ho = (H + 2 - 3) // stride + 1
    Wo = (W + 2 - 3) // stride + 1
    n = B * Ho * Wo
    if not is_downsample:
        assert Cin == Cout, "identity shortcut requires in_channel == out_channel"

    f32 = jnp.float32
    cparams = pltpu.CompilerParams(dimension_semantics=("parallel",))

    x = jnp.transpose(x_nchw, (0, 2, 3, 1)).astype(f32)            # NHWC
    w1 = params["w1"].reshape(9, Cin, Cout).astype(matmul_dtype)   # (tap, Cin, Cout)
    w2 = params["w2"].reshape(9, Cout, Cout).astype(matmul_dtype)

    # ---------------- pass 1 ----------------
    p1_inputs = [x, w1]
    p1_in_specs = [_img_spec(H, W, Cin), _full_spec((9, Cin, Cout))]
    p1_out_shapes = [jax.ShapeDtypeStruct((B, Ho, Wo, Cout), f32),
                     jax.ShapeDtypeStruct((B, 2, Cout), f32)]
    p1_out_specs = [_img_spec(Ho, Wo, Cout), _stat_spec(Cout)]
    if is_downsample:
        p1_inputs.append(params["wd"].astype(matmul_dtype))
        p1_in_specs.append(_full_spec((Cin, Cout)))
        p1_out_shapes += [jax.ShapeDtypeStruct((B, Ho, Wo, Cout), f32),
                          jax.ShapeDtypeStruct((B, 2, Cout), f32)]
        p1_out_specs += [_img_spec(Ho, Wo, Cout), _stat_spec(Cout)]

    p1_out = pl.pallas_call(
        functools.partial(_pass1_kernel, H=H, W=W, Cin=Cin, Cout=Cout, Ho=Ho,
                          Wo=Wo, stride=stride, mm_dtype=matmul_dtype,
                          is_downsample=is_downsample),
        grid=(B,),
        in_specs=p1_in_specs,
        out_specs=p1_out_specs,
        out_shape=p1_out_shapes,
        scratch_shapes=[pltpu.VMEM((H + 2, W + 2, Cin), matmul_dtype)],
        compiler_params=cparams,
    )(*p1_inputs)
    if is_downsample:
        y1, s1, ys, sd = p1_out
    else:
        y1, s1 = p1_out

    a1, c1 = _bn_affine(s1, n, params["g1"], params["b1"])

    # ---------------- pass 2 ----------------
    y2, s2 = pl.pallas_call(
        functools.partial(_pass2_kernel, Ho=Ho, Wo=Wo, Cout=Cout,
                          mm_dtype=matmul_dtype),
        grid=(B,),
        in_specs=[_img_spec(Ho, Wo, Cout), _full_spec((1, Cout)),
                  _full_spec((1, Cout)), _full_spec((9, Cout, Cout))],
        out_specs=[_img_spec(Ho, Wo, Cout), _stat_spec(Cout)],
        out_shape=[jax.ShapeDtypeStruct((B, Ho, Wo, Cout), f32),
                   jax.ShapeDtypeStruct((B, 2, Cout), f32)],
        scratch_shapes=[pltpu.VMEM((Ho + 2, Wo + 2, Cout), matmul_dtype)],
        compiler_params=cparams,
    )(y1, a1, c1, w2)

    a2, c2 = _bn_affine(s2, n, params["g2"], params["b2"])

    # ---------------- pass 3 ----------------
    if is_downsample:
        ad, cd = _bn_affine(sd, n, params["gd"], params["bd"])
        p3_inputs = [y2, a2, c2, ys, ad, cd]
        p3_in_specs = [_img_spec(Ho, Wo, Cout), _full_spec((1, Cout)),
                       _full_spec((1, Cout)), _img_spec(Ho, Wo, Cout),
                       _full_spec((1, Cout)), _full_spec((1, Cout))]
    else:
        p3_inputs = [y2, a2, c2, x]
        p3_in_specs = [_img_spec(Ho, Wo, Cout), _full_spec((1, Cout)),
                       _full_spec((1, Cout)), _img_spec(H, W, Cin)]

    out = pl.pallas_call(
        functools.partial(_pass3_kernel, is_downsample=is_downsample, Cout=Cout),
        grid=(B,),
        in_specs=p3_in_specs,
        out_specs=_img_spec(Ho, Wo, Cout),
        out_shape=jax.ShapeDtypeStruct((B, Ho, Wo, Cout), f32),
        compiler_params=cparams,
    )(*p3_inputs)

    return jnp.transpose(out, (0, 3, 1, 2))                         # NCHW


# ----------------------------- reference & setup -----------------------------
def _bn_ref(y, g, b):
    mean = jnp.mean(y, axis=(0, 1, 2), keepdims=True)
    var = jnp.mean((y - mean) ** 2, axis=(0, 1, 2), keepdims=True)
    return (y - mean) * (g.reshape(1, 1, 1, -1) * lax.rsqrt(var + _EPS)) \
        + b.reshape(1, 1, 1, -1)


def resblock_reference(x_nchw, params, is_downsample, matmul_dtype=jnp.float32):
    stride = 2 if is_downsample else 1
    x = jnp.transpose(x_nchw, (0, 2, 3, 1)).astype(jnp.float32)

    def conv(a, w, s, pad):
        return lax.conv_general_dilated(
            a.astype(matmul_dtype), w.astype(matmul_dtype), (s, s), pad,
            dimension_numbers=("NHWC", "HWIO", "NHWC"),
            preferred_element_type=jnp.float32)

    h = conv(x, params["w1"], stride, ((1, 1), (1, 1)))
    h = jnp.maximum(_bn_ref(h, params["g1"], params["b1"]), 0.0)
    h = conv(h, params["w2"], 1, ((1, 1), (1, 1)))
    h = _bn_ref(h, params["g2"], params["b2"])
    if is_downsample:
        wd = params["wd"].reshape(1, 1, *params["wd"].shape)
        sc = _bn_ref(conv(x, wd, stride, ((0, 0), (0, 0))),
                     params["gd"], params["bd"])
    else:
        sc = x
    out = jnp.maximum(h + sc, 0.0)
    return jnp.transpose(out, (0, 3, 1, 2))


def init_params(key, cin, cout, is_downsample):
    ks = jax.random.split(key, 8)
    p = {
        "w1": jax.random.normal(ks[0], (3, 3, cin, cout), jnp.float32) * 0.2,
        "g1": jax.random.uniform(ks[1], (1, cout), jnp.float32, 0.5, 1.5),
        "b1": jax.random.normal(ks[2], (1, cout), jnp.float32) * 0.1,
        "w2": jax.random.normal(ks[3], (3, 3, cout, cout), jnp.float32) * 0.2,
        "g2": jax.random.uniform(ks[4], (1, cout), jnp.float32, 0.5, 1.5),
        "b2": jax.random.normal(ks[5], (1, cout), jnp.float32) * 0.1,
    }
    if is_downsample:
        p["wd"] = jax.random.normal(ks[6], (cin, cout), jnp.float32) * 0.2
        p["gd"] = jnp.ones((1, cout), jnp.float32)
        p["bd"] = jnp.zeros((1, cout), jnp.float32)
    return p


if __name__ == "__main__":
    key = jax.random.PRNGKey(0)
    kx, kp1, kp2 = jax.random.split(key, 3)
    x = jax.random.normal(kx, (2, 4, 16, 16), jnp.float32)   # NCHW, like PyTorch

    configs = [
        (4, 4, False, kp1),   # same-channel block, identity shortcut
        (4, 8, True, kp2),    # downsample block, 1x1-stride-2 conv shortcut
    ]
    for cin, cout, ds, kp in configs:
        params = init_params(kp, cin, cout, ds)
        # f32 MXU path: exact-semantics check; bf16 MXU path: perf-recommended
        # operand dtype, compared against a matching bf16-operand reference.
        for mm_dtype, tol in ((jnp.float32, 1e-3), (jnp.bfloat16, 5e-3)):
            out = jax.block_until_ready(resblock_forward(x, params, ds, mm_dtype))
            ref = resblock_reference(x, params, ds, mm_dtype)
            assert out.shape == ref.shape, (out.shape, ref.shape)
            err = float(jnp.max(jnp.abs(out - ref)))
            assert err <= tol, (cin, cout, ds, str(mm_dtype), err)

    print("KERNEL_OK")
</pallas_src>

<mosaic_0001>
module attributes {stable_mosaic.version = 11 : i64} {
  func.func @_pass1_kernel(%arg0: i32, %arg1: memref<1x16x16x4xf32, #tpu.memory_space<vmem>>, %arg2: memref<9x4x4xf32, #tpu.memory_space<vmem>>, %arg3: memref<1x16x16x4xf32, #tpu.memory_space<vmem>>, %arg4: memref<1x2x4xf32, #tpu.memory_space<vmem>>, %arg5: memref<18x18x4xf32, #tpu.memory_space<vmem>>) attributes {dimension_semantics = [#tpu.dimension_semantics<parallel>], iteration_bounds = array<i64: 2>, scalar_prefetch = 0 : i64, scratch_operands = 1 : i64, tpu.core_type = #tpu.core_type<tc>, window_params = [{transform_indices = @transform_0, window_bounds = array<i64: 1, 16, 16, 4>}, {pipeline_mode = #tpu.pipeline_mode<synchronous>, transform_indices = @transform_1, window_bounds = array<i64: 9, 4, 4>}, {transform_indices = @transform_2, window_bounds = array<i64: 1, 16, 16, 4>}, {transform_indices = @transform_3, window_bounds = array<i64: 1, 2, 4>}]} {
    %cst = arith.constant 0.000000e+00 : f32
    %0 = vector.broadcast %cst : f32 to vector<1x18x4xf32>
    %c0 = arith.constant 0 : index
    %c0_0 = arith.constant 0 : index
    %c0_1 = arith.constant 0 : index
    %1 = vector.load %arg5[%c0, %c0_0, %c0_1] : memref<18x18x4xf32, #tpu.memory_space<vmem>>, vector<1x18x4xf32>
    tpu.vector_store %arg5[%c0, %c0_0, %c0_1], %0 {strides = array<i32>} : memref<18x18x4xf32, #tpu.memory_space<vmem>>, vector<1x18x4xf32>,
    %cst_2 = arith.constant 0.000000e+00 : f32
    %2 = vector.broadcast %cst_2 : f32 to vector<1x18x4xf32>
    %c17 = arith.constant 17 : index
    %c0_3 = arith.constant 0 : index
    %c0_4 = arith.constant 0 : index
    %3 = vector.load %arg5[%c17, %c0_3, %c0_4] : memref<18x18x4xf32, #tpu.memory_space<vmem>>, vector<1x18x4xf32>
    tpu.vector_store %arg5[%c17, %c0_3, %c0_4], %2 {strides = array<i32>} : memref<18x18x4xf32, #tpu.memory_space<vmem>>, vector<1x18x4xf32>,
    %cst_5 = arith.constant 0.000000e+00 : f32
    %4 = vector.broadcast %cst_5 : f32 to vector<18x1x4xf32>
    %c0_6 = arith.constant 0 : index
    %c0_7 = arith.constant 0 : index
    %c0_8 = arith.constant 0 : index
    %5 = vector.load %arg5[%c0_6, %c0_7, %c0_8] : memref<18x18x4xf32, #tpu.memory_space<vmem>>, vector<18x1x4xf32>
    tpu.vector_store %arg5[%c0_6, %c0_7, %c0_8], %4 {strides = array<i32>} : memref<18x18x4xf32, #tpu.memory_space<vmem>>, vector<18x1x4xf32>,
    %cst_9 = arith.constant 0.000000e+00 : f32
    %6 = vector.broadcast %cst_9 : f32 to vector<18x1x4xf32>
    %c0_10 = arith.constant 0 : index
    %c17_11 = arith.constant 17 : index
    %c0_12 = arith.constant 0 : index
    %7 = vector.load %arg5[%c0_10, %c17_11, %c0_12] : memref<18x18x4xf32, #tpu.memory_space<vmem>>, vector<18x1x4xf32>
    tpu.vector_store %arg5[%c0_10, %c17_11, %c0_12], %6 {strides = array<i32>} : memref<18x18x4xf32, #tpu.memory_space<vmem>>, vector<18x1x4xf32>,
    %c0_13 = arith.constant 0 : index
    %c0_14 = arith.constant 0 : index
    %c0_15 = arith.constant 0 : index
    %c0_16 = arith.constant 0 : index
    %8 = vector.load %arg1[%c0_13, %c0_14, %c0_15, %c0_16] : memref<1x16x16x4xf32, #tpu.memory_space<vmem>>, vector<1x16x16x4xf32>
    %9 = vector.shape_cast %8 : vector<1x16x16x4xf32> to vector<16x16x4xf32>
    %c1 = arith.constant 1 : index
    %c1_17 = arith.constant 1 : index
    %c0_18 = arith.constant 0 : index
    %10 = vector.load %arg5[%c1, %c1_17, %c0_18] : memref<18x18x4xf32, #tpu.memory_space<vmem>>, vector<16x16x4xf32>
    tpu.vector_store %arg5[%c1, %c1_17, %c0_18], %9 {strides = array<i32>} : memref<18x18x4xf32, #tpu.memory_space<vmem>>, vector<16x16x4xf32>,
    %cst_19 = arith.constant 0.000000e+00 : f32
    %11 = vector.broadcast %cst_19 : f32 to vector<256x4xf32>
    %c0_20 = arith.constant 0 : index
    %c0_21 = arith.constant 0 : index
    %c0_22 = arith.constant 0 : index
    %12 = vector.load %arg5[%c0_20, %c0_21, %c0_22] : memref<18x18x4xf32, #tpu.memory_space<vmem>>, vector<16x16x4xf32>
    %13 = vector.shape_cast %12 : vector<16x16x4xf32> to vector<256x4xf32>
    %c0_23 = arith.constant 0 : index
    %c0_24 = arith.constant 0 : index
    %c0_25 = arith.constant 0 : index
    %14 = vector.load %arg2[%c0_23, %c0_24, %c0_25] : memref<9x4x4xf32, #tpu.memory_space<vmem>>, vector<1x4x4xf32>
    %15 = vector.shape_cast %14 : vector<1x4x4xf32> to vector<4x4xf32>
    %cst_26 = arith.constant dense<0.000000e+00> : vector<256x4xf32>
    %16 = tpu.matmul %13, %15, %cst_26 {dimension_numbers = #tpu.dot_dimension_numbers<[1], [0], [0], [1], [0, 0, 1, 1], [], []>} : vector<256x4xf32>, vector<4x4xf32>, vector<256x4xf32> -> vector<256x4xf32>
    %17 = arith.addf %11, %16 : vector<256x4xf32>
    %c0_27 = arith.constant 0 : index
    %c1_28 = arith.constant 1 : index
    %c0_29 = arith.constant 0 : index
    %18 = vector.load %arg5[%c0_27, %c1_28, %c0_29] : memref<18x18x4xf32, #tpu.memory_space<vmem>>, vector<16x16x4xf32>
    %19 = vector.shape_cast %18 : vector<16x16x4xf32> to vector<256x4xf32>
    %c1_30 = arith.constant 1 : index
    %c0_31 = arith.constant 0 : index
    %c0_32 = arith.constant 0 : index
    %20 = vector.load %arg2[%c1_30, %c0_31, %c0_32] : memref<9x4x4xf32, #tpu.memory_space<vmem>>, vector<1x4x4xf32>
    %21 = vector.shape_cast %20 : vector<1x4x4xf32> to vector<4x4xf32>
    %cst_33 = arith.constant dense<0.000000e+00> : vector<256x4xf32>
    %22 = tpu.matmul %19, %21, %cst_33 {dimension_numbers = #tpu.dot_dimension_numbers<[1], [0], [0], [1], [0, 0, 1, 1], [], []>} : vector<256x4xf32>, vector<4x4xf32>, vector<256x4xf32> -> vector<256x4xf32>
    %23 = arith.addf %17, %22 : vector<256x4xf32>
    %c0_34 = arith.constant 0 : index
    %c2 = arith.constant 2 : index
    %c0_35 = arith.constant 0 : index
    %24 = vector.load %arg5[%c0_34, %c2, %c0_35] : memref<18x18x4xf32, #tpu.memory_space<vmem>>, vector<16x16x4xf32>
    %25 = vector.shape_cast %24 : vector<16x16x4xf32> to vector<256x4xf32>
    %c2_36 = arith.constant 2 : index
    %c0_37 = arith.constant 0 : index
    %c0_38 = arith.constant 0 : index
    %26 = vector.load %arg2[%c2_36, %c0_37, %c0_38] : memref<9x4x4xf32, #tpu.memory_space<vmem>>, vector<1x4x4xf32>
    %27 = vector.shape_cast %26 : vector<1x4x4xf32> to vector<4x4xf32>
    %cst_39 = arith.constant dense<0.000000e+00> : vector<256x4xf32>
    %28 = tpu.matmul %25, %27, %cst_39 {dimension_numbers = #tpu.dot_dimension_numbers<[1], [0], [0], [1], [0, 0, 1, 1], [], []>} : vector<256x4xf32>, vector<4x4xf32>, vector<256x4xf32> -> vector<256x4xf32>
    %29 = arith.addf %23, %28 : vector<256x4xf32>
    %c1_40 = arith.constant 1 : index
    %c0_41 = arith.constant 0 : index
    %c0_42 = arith.constant 0 : index
    %30 = vector.load %arg5[%c1_40, %c0_41, %c0_42] : memref<18x18x4xf32, #tpu.memory_space<vmem>>, vector<16x16x4xf32>
    %31 = vector.shape_cast %30 : vector<16x16x4xf32> to vector<256x4xf32>
    %c3 = arith.constant 3 : index
    %c0_43 = arith.constant 0 : index
    %c0_44 = arith.constant 0 : index
    %32 = vector.load %arg2[%c3, %c0_43, %c0_44] : memref<9x4x4xf32, #tpu.memory_space<vmem>>, vector<1x4x4xf32>
    %33 = vector.shape_cast %32 : vector<1x4x4xf32> to vector<4x4xf32>
    %cst_45 = arith.constant dense<0.000000e+00> : vector<256x4xf32>
    %34 = tpu.matmul %31, %33, %cst_45 {dimension_numbers = #tpu.dot_dimension_numbers<[1], [0], [0], [1], [0, 0, 1, 1], [], []>} : vector<256x4xf32>, vector<4x4xf32>, vector<256x4xf32> -> vector<256x4xf32>
    %35 = arith.addf %29, %34 : vector<256x4xf32>
    %c1_46 = arith.constant 1 : index
    %c1_47 = arith.constant 1 : index
    %c0_48 = arith.constant 0 : index
    %36 = vector.load %arg5[%c1_46, %c1_47, %c0_48] : memref<18x18x4xf32, #tpu.memory_space<vmem>>, vector<16x16x4xf32>
    %37 = vector.shape_cast %36 : vector<16x16x4xf32> to vector<256x4xf32>
    %c4 = arith.constant 4 : index
    %c0_49 = arith.constant 0 : index
    %c0_50 = arith.constant 0 : index
    %38 = vector.load %arg2[%c4, %c0_49, %c0_50] : memref<9x4x4xf32, #tpu.memory_space<vmem>>, vector<1x4x4xf32>
    %39 = vector.shape_cast %38 : vector<1x4x4xf32> to vector<4x4xf32>
    %cst_51 = arith.constant dense<0.000000e+00> : vector<256x4xf32>
    %40 = tpu.matmul %37, %39, %cst_51 {dimension_numbers = #tpu.dot_dimension_numbers<[1], [0], [0], [1], [0, 0, 1, 1], [], []>} : vector<256x4xf32>, vector<4x4xf32>, vector<256x4xf32> -> vector<256x4xf32>
    %41 = arith.addf %35, %40 : vector<256x4xf32>
    %c1_52 = arith.constant 1 : index
    %c2_53 = arith.constant 2 : index
    %c0_54 = arith.constant 0 : index
    %42 = vector.load %arg5[%c1_52, %c2_53, %c0_54] : memref<18x18x4xf32, #tpu.memory_space<vmem>>, vector<16x16x4xf32>
    %43 = vector.shape_cast %42 : vector<16x16x4xf32> to vector<256x4xf32>
    %c5 = arith.constant 5 : index
    %c0_55 = arith.constant 0 : index
    %c0_56 = arith.constant 0 : index
    %44 = vector.load %arg2[%c5, %c0_55, %c0_56] : memref<9x4x4xf32, #tpu.memory_space<vmem>>, vector<1x4x4xf32>
    %45 = vector.shape_cast %44 : vector<1x4x4xf32> to vector<4x4xf32>
    %cst_57 = arith.constant dense<0.000000e+00> : vector<256x4xf32>
    %46 = tpu.matmul %43, %45, %cst_57 {dimension_numbers = #tpu.dot_dimension_numbers<[1], [0], [0], [1], [0, 0, 1, 1], [], []>} : vector<256x4xf32>, vector<4x4xf32>, vector<256x4xf32> -> vector<256x4xf32>
    %47 = arith.addf %41, %46 : vector<256x4xf32>
    %c2_58 = arith.constant 2 : index
    %c0_59 = arith.constant 0 : index
    %c0_60 = arith.constant 0 : index
    %48 = vector.load %arg5[%c2_58, %c0_59, %c0_60] : memref<18x18x4xf32, #tpu.memory_space<vmem>>, vector<16x16x4xf32>
    %49 = vector.shape_cast %48 : vector<16x16x4xf32> to vector<256x4xf32>
    %c6 = arith.constant 6 : index
    %c0_61 = arith.constant 0 : index
    %c0_62 = arith.constant 0 : index
    %50 = vector.load %arg2[%c6, %c0_61, %c0_62] : memref<9x4x4xf32, #tpu.memory_space<vmem>>, vector<1x4x4xf32>
    %51 = vector.shape_cast %50 : vector<1x4x4xf32> to vector<4x4xf32>
    %cst_63 = arith.constant dense<0.000000e+00> : vector<256x4xf32>
    %52 = tpu.matmul %49, %51, %cst_63 {dimension_numbers = #tpu.dot_dimension_numbers<[1], [0], [0], [1], [0, 0, 1, 1], [], []>} : vector<256x4xf32>, vector<4x4xf32>, vector<256x4xf32> -> vector<256x4xf32>
    %53 = arith.addf %47, %52 : vector<256x4xf32>
    %c2_64 = arith.constant 2 : index
    %c1_65 = arith.constant 1 : index
    %c0_66 = arith.constant 0 : index
    %54 = vector.load %arg5[%c2_64, %c1_65, %c0_66] : memref<18x18x4xf32, #tpu.memory_space<vmem>>, vector<16x16x4xf32>
    %55 = vector.shape_cast %54 : vector<16x16x4xf32> to vector<256x4xf32>
    %c7 = arith.constant 7 : index
    %c0_67 = arith.constant 0 : index
    %c0_68 = arith.constant 0 : index
    %56 = vector.load %arg2[%c7, %c0_67, %c0_68] : memref<9x4x4xf32, #tpu.memory_space<vmem>>, vector<1x4x4xf32>
    %57 = vector.shape_cast %56 : vector<1x4x4xf32> to vector<4x4xf32>
    %cst_69 = arith.constant dense<0.000000e+00> : vector<256x4xf32>
    %58 = tpu.matmul %55, %57, %cst_69 {dimension_numbers = #tpu.dot_dimension_numbers<[1], [0], [0], [1], [0, 0, 1, 1], [], []>} : vector<256x4xf32>, vector<4x4xf32>, vector<256x4xf32> -> vector<256x4xf32>
    %59 = arith.addf %53, %58 : vector<256x4xf32>
    %c2_70 = arith.constant 2 : index
    %c2_71 = arith.constant 2 : index
    %c0_72 = arith.constant 0 : index
    %60 = vector.load %arg5[%c2_70, %c2_71, %c0_72] : memref<18x18x4xf32, #tpu.memory_space<vmem>>, vector<16x16x4xf32>
    %61 = vector.shape_cast %60 : vector<16x16x4xf32> to vector<256x4xf32>
    %c8 = arith.constant 8 : index
    %c0_73 = arith.constant 0 : index
    %c0_74 = arith.constant 0 : index
    %62 = vector.load %arg2[%c8, %c0_73, %c0_74] : memref<9x4x4xf32, #tpu.memory_space<vmem>>, vector<1x4x4xf32>
    %63 = vector.shape_cast %62 : vector<1x4x4xf32> to vector<4x4xf32>
    %cst_75 = arith.constant dense<0.000000e+00> : vector<256x4xf32>
    %64 = tpu.matmul %61, %63, %cst_75 {dimension_numbers = #tpu.dot_dimension_numbers<[1], [0], [0], [1], [0, 0, 1, 1], [], []>} : vector<256x4xf32>, vector<4x4xf32>, vector<256x4xf32> -> vector<256x4xf32>
    %65 = arith.addf %59, %64 : vector<256x4xf32>
    %66 = vector.shape_cast %65 : vector<256x4xf32> to vector<16x16x4xf32>
    %c0_76 = arith.constant 0 : index
    %c0_77 = arith.constant 0 : index
    %c0_78 = arith.constant 0 : index
    %c0_79 = arith.constant 0 : index
    %67 = vector.load %arg3[%c0_76, %c0_77, %c0_78, %c0_79] : memref<1x16x16x4xf32, #tpu.memory_space<vmem>>, vector<1x16x16x4xf32>
    %68 = vector.shape_cast %67 : vector<1x16x16x4xf32> to vector<16x16x4xf32>
    %69 = vector.shape_cast %66 : vector<16x16x4xf32> to vector<1x16x16x4xf32>
    tpu.vector_store %arg3[%c0_76, %c0_77, %c0_78, %c0_79], %69 {strides = array<i32>} : memref<1x16x16x4xf32, #tpu.memory_space<vmem>>, vector<1x16x16x4xf32>,
    %cst_80 = arith.constant dense<0.000000e+00> : vector<4xf32>
    %70 = vector.multi_reduction <add>, %65, %cst_80 [0] : vector<256x4xf32> to vector<4xf32>
    %71 = vector.shape_cast %70 : vector<4xf32> to vector<1x4xf32>
    %c0_81 = arith.constant 0 : index
    %c0_82 = arith.constant 0 : index
    %c0_83 = arith.constant 0 : index
    %72 = vector.load %arg4[%c0_81, %c0_82, %c0_83] : memref<1x2x4xf32, #tpu.memory_space<vmem>>, vector<1x1x4xf32>
    %73 = vector.shape_cast %72 : vector<1x1x4xf32> to vector<1x4xf32>
    %74 = vector.shape_cast %71 : vector<1x4xf32> to vector<1x1x4xf32>
    tpu.vector_store %arg4[%c0_81, %c0_82, %c0_83], %74 {strides = array<i32>} : memref<1x2x4xf32, #tpu.memory_space<vmem>>, vector<1x1x4xf32>,
    %75 = arith.mulf %65, %65 : vector<256x4xf32>
    %cst_84 = arith.constant dense<0.000000e+00> : vector<4xf32>
    %76 = vector.multi_reduction <add>, %75, %cst_84 [0] : vector<256x4xf32> to vector<4xf32>
    %77 = vector.shape_cast %76 : vector<4xf32> to vector<1x4xf32>
    %c0_85 = arith.constant 0 : index
    %c1_86 = arith.constant 1 : index
    %c0_87 = arith.constant 0 : index
    %78 = vector.load %arg4[%c0_85, %c1_86, %c0_87] : memref<1x2x4xf32, #tpu.memory_space<vmem>>, vector<1x1x4xf32>
    %79 = vector.shape_cast %78 : vector<1x1x4xf32> to vector<1x4xf32>
    %80 = vector.shape_cast %77 : vector<1x4xf32> to vector<1x1x4xf32>
    tpu.vector_store %arg4[%c0_85, %c1_86, %c0_87], %80 {strides = array<i32>} : memref<1x2x4xf32, #tpu.memory_space<vmem>>, vector<1x1x4xf32>,
    return
  }
  func.func @transform_0(%arg0: i32) -> (i32, i32, i32, i32) {
    %c0_i32 = arith.constant 0 : i32
    %c0_i32_0 = arith.constant 0 : i32
    %c0_i32_1 = arith.constant 0 : i32
    %c0_i32_2 = arith.constant 0 : i32
    return %arg0, %c0_i32, %c0_i32_0, %c0_i32_1 : i32, i32, i32, i32
  }
  func.func @transform_1(%arg0: i32) -> (i32, i32, i32) {
    %c0_i32 = arith.constant 0 : i32
    %c0_i32_0 = arith.constant 0 : i32
    %c0_i32_1 = arith.constant 0 : i32
    %c0_i32_2 = arith.constant 0 : i32
    return %c0_i32, %c0_i32_0, %c0_i32_1 : i32, i32, i32
  }
  func.func @transform_2(%arg0: i32) -> (i32, i32, i32, i32) {
    %c0_i32 = arith.constant 0 : i32
    %c0_i32_0 = arith.constant 0 : i32
    %c0_i32_1 = arith.constant 0 : i32
    %c0_i32_2 = arith.constant 0 : i32
    return %arg0, %c0_i32, %c0_i32_0, %c0_i32_1 : i32, i32, i32, i32
  }
  func.func @transform_3(%arg0: i32) -> (i32, i32, i32) {
    %c0_i32 = arith.constant 0 : i32
    %c0_i32_0 = arith.constant 0 : i32
    %c0_i32_1 = arith.constant 0 : i32
    return %arg0, %c0_i32, %c0_i32_0 : i32, i32, i32
  }
}

module attributes {stable_mosaic.version = 11 : i64} {
  func.func @_pass3_kernel(%arg0: i32, %arg1: memref<1x16x16x4xf32, #tpu.memory_space<vmem>>, %arg2: memref<1x4xf32, #tpu.memory_space<vmem>>, %arg3: memref<1x4xf32, #tpu.memory_space<vmem>>, %arg4: memref<1x16x16x4xf32, #tpu.memory_space<vmem>>, %arg5: memref<1x16x16x4xf32, #tpu.memory_space<vmem>>) attributes {dimension_semantics = [#tpu.dimension_semantics<parallel>], iteration_bounds = array<i64: 2>, scalar_prefetch = 0 : i64, scratch_operands = 0 : i64, tpu.core_type = #tpu.core_type<tc>, window_params = [{transform_indices = @transform_0, window_bounds = array<i64: 1, 16, 16, 4>}, {pipeline_mode = #tpu.pipeline_mode<synchronous>, transform_indices = @transform_1, window_bounds = array<i64: 1, 4>}, {pipeline_mode = #tpu.pipeline_mode<synchronous>, transform_indices = @transform_2, window_bounds = array<i64: 1, 4>}, {transform_indices = @transform_3, window_bounds = array<i64: 1, 16, 16, 4>}, {transform_indices = @transform_4, window_bounds = array<i64: 1, 16, 16, 4>}]} {
    %c0 = arith.constant 0 : index
    %c0_0 = arith.constant 0 : index
    %0 = vector.load %arg2[%c0, %c0_0] : memref<1x4xf32, #tpu.memory_space<vmem>>, vector<1x4xf32>
    %1 = vector.shape_cast %0 : vector<1x4xf32> to vector<1x1x4xf32>
    %c0_1 = arith.constant 0 : index
    %c0_2 = arith.constant 0 : index
    %2 = vector.load %arg3[%c0_1, %c0_2] : memref<1x4xf32, #tpu.memory_space<vmem>>, vector<1x4xf32>
    %3 = vector.shape_cast %2 : vector<1x4xf32> to vector<1x1x4xf32>
    %c0_3 = arith.constant 0 : index
    %c0_4 = arith.constant 0 : index
    %c0_5 = arith.constant 0 : index
    %c0_6 = arith.constant 0 : index
    %4 = vector.load %arg1[%c0_3, %c0_4, %c0_5, %c0_6] : memref<1x16x16x4xf32, #tpu.memory_space<vmem>>, vector<1x16x16x4xf32>
    %5 = vector.shape_cast %4 : vector<1x16x16x4xf32> to vector<16x16x4xf32>
    %6 = vector.broadcast %1 : vector<1x1x4xf32> to vector<16x16x4xf32>
    %7 = arith.mulf %5, %6 : vector<16x16x4xf32>
    %8 = vector.broadcast %3 : vector<1x1x4xf32> to vector<16x16x4xf32>
    %9 = arith.addf %7, %8 : vector<16x16x4xf32>
    %c0_7 = arith.constant 0 : index
    %c0_8 = arith.constant 0 : index
    %c0_9 = arith.constant 0 : index
    %c0_10 = arith.constant 0 : index
    %10 = vector.load %arg4[%c0_7, %c0_8, %c0_9, %c0_10] : memref<1x16x16x4xf32, #tpu.memory_space<vmem>>, vector<1x16x16x4xf32>
    %11 = vector.shape_cast %10 : vector<1x16x16x4xf32> to vector<16x16x4xf32>
    %12 = arith.addf %9, %11 : vector<16x16x4xf32>
    %cst = arith.constant 0.000000e+00 : f32
    %13 = vector.broadcast %cst : f32 to vector<16x16x4xf32>
    %14 = arith.maximumf %12, %13 : vector<16x16x4xf32>
    %c0_11 = arith.constant 0 : index
    %c0_12 = arith.constant 0 : index
    %c0_13 = arith.constant 0 : index
    %c0_14 = arith.constant 0 : index
    %15 = vector.load %arg5[%c0_11, %c0_12, %c0_13, %c0_14] : memref<1x16x16x4xf32, #tpu.memory_space<vmem>>, vector<1x16x16x4xf32>
    %16 = vector.shape_cast %15 : vector<1x16x16x4xf32> to vector<16x16x4xf32>
    %17 = vector.shape_cast %14 : vector<16x16x4xf32> to vector<1x16x16x4xf32>
    tpu.vector_store %arg5[%c0_11, %c0_12, %c0_13, %c0_14], %17 {strides = array<i32>} : memref<1x16x16x4xf32, #tpu.memory_space<vmem>>, vector<1x16x16x4xf32>,
    return
  }
  func.func @transform_0(%arg0: i32) -> (i32, i32, i32, i32) {
    %c0_i32 = arith.constant 0 : i32
    %c0_i32_0 = arith.constant 0 : i32
    %c0_i32_1 = arith.constant 0 : i32
    %c0_i32_2 = arith.constant 0 : i32
    return %arg0, %c0_i32, %c0_i32_0, %c0_i32_1 : i32, i32, i32, i32
  }
  func.func @transform_1(%arg0: i32) -> (i32, i32) {
    %c0_i32 = arith.constant 0 : i32
    %c0_i32_0 = arith.constant 0 : i32
    %c0_i32_1 = arith.constant 0 : i32
    return %c0_i32, %c0_i32_0 : i32, i32
  }
  func.func @transform_2(%arg0: i32) -> (i32, i32) {
    %c0_i32 = arith.constant 0 : i32
    %c0_i32_0 = arith.constant 0 : i32
    %c0_i32_1 = arith.constant 0 : i32
    return %c0_i32, %c0_i32_0 : i32, i32
  }
  func.func @transform_3(%arg0: i32) -> (i32, i32, i32, i32) {
    %c0_i32 = arith.constant 0 : i32
    %c0_i32_0 = arith.constant 0 : i32
    %c0_i32_1 = arith.constant 0 : i32
    %c0_i32_2 = arith.constant 0 : i32
    return %arg0, %c0_i32, %c0_i32_0, %c0_i32_1 : i32, i32, i32, i32
  }
  func.func @transform_4(%arg0: i32) -> (i32, i32, i32, i32) {
    %c0_i32 = arith.constant 0 : i32
    %c0_i32_0 = arith.constant 0 : i32
    %c0_i32_1 = arith.constant 0 : i32
    %c0_i32_2 = arith.constant 0 : i32
    return %arg0, %c0_i32, %c0_i32_0, %c0_i32_1 : i32, i32, i32, i32
  }
}

module attributes {stable_mosaic.version = 11 : i64} {
  func.func @_pass2_kernel(%arg0: i32, %arg1: memref<1x16x16x4xf32, #tpu.memory_space<vmem>>, %arg2: memref<1x4xf32, #tpu.memory_space<vmem>>, %arg3: memref<1x4xf32, #tpu.memory_space<vmem>>, %arg4: memref<9x4x4xf32, #tpu.memory_space<vmem>>, %arg5: memref<1x16x16x4xf32, #tpu.memory_space<vmem>>, %arg6: memref<1x2x4xf32, #tpu.memory_space<vmem>>, %arg7: memref<18x18x4xf32, #tpu.memory_space<vmem>>) attributes {dimension_semantics = [#tpu.dimension_semantics<parallel>], iteration_bounds = array<i64: 2>, scalar_prefetch = 0 : i64, scratch_operands = 1 : i64, tpu.core_type = #tpu.core_type<tc>, window_params = [{transform_indices = @transform_0, window_bounds = array<i64: 1, 16, 16, 4>}, {pipeline_mode = #tpu.pipeline_mode<synchronous>, transform_indices = @transform_1, window_bounds = array<i64: 1, 4>}, {pipeline_mode = #tpu.pipeline_mode<synchronous>, transform_indices = @transform_2, window_bounds = array<i64: 1, 4>}, {pipeline_mode = #tpu.pipeline_mode<synchronous>, transform_indices = @transform_3, window_bounds = array<i64: 9, 4, 4>}, {transform_indices = @transform_4, window_bounds = array<i64: 1, 16, 16, 4>}, {transform_indices = @transform_5, window_bounds = array<i64: 1, 2, 4>}]} {
    %c0 = arith.constant 0 : index
    %c0_0 = arith.constant 0 : index
    %0 = vector.load %arg2[%c0, %c0_0] : memref<1x4xf32, #tpu.memory_space<vmem>>, vector<1x4xf32>
    %1 = vector.shape_cast %0 : vector<1x4xf32> to vector<1x1x4xf32>
    %c0_1 = arith.constant 0 : index
    %c0_2 = arith.constant 0 : index
    %2 = vector.load %arg3[%c0_1, %c0_2] : memref<1x4xf32, #tpu.memory_space<vmem>>, vector<1x4xf32>
    %3 = vector.shape_cast %2 : vector<1x4xf32> to vector<1x1x4xf32>
    %c0_3 = arith.constant 0 : index
    %c0_4 = arith.constant 0 : index
    %c0_5 = arith.constant 0 : index
    %c0_6 = arith.constant 0 : index
    %4 = vector.load %arg1[%c0_3, %c0_4, %c0_5, %c0_6] : memref<1x16x16x4xf32, #tpu.memory_space<vmem>>, vector<1x16x16x4xf32>
    %5 = vector.shape_cast %4 : vector<1x16x16x4xf32> to vector<16x16x4xf32>
    %6 = vector.broadcast %1 : vector<1x1x4xf32> to vector<16x16x4xf32>
    %7 = arith.mulf %5, %6 : vector<16x16x4xf32>
    %8 = vector.broadcast %3 : vector<1x1x4xf32> to vector<16x16x4xf32>
    %9 = arith.addf %7, %8 : vector<16x16x4xf32>
    %cst = arith.constant 0.000000e+00 : f32
    %10 = vector.broadcast %cst : f32 to vector<16x16x4xf32>
    %11 = arith.maximumf %9, %10 : vector<16x16x4xf32>
    %cst_7 = arith.constant 0.000000e+00 : f32
    %12 = vector.broadcast %cst_7 : f32 to vector<1x18x4xf32>
    %c0_8 = arith.constant 0 : index
    %c0_9 = arith.constant 0 : index
    %c0_10 = arith.constant 0 : index
    %13 = vector.load %arg7[%c0_8, %c0_9, %c0_10] : memref<18x18x4xf32, #tpu.memory_space<vmem>>, vector<1x18x4xf32>
    tpu.vector_store %arg7[%c0_8, %c0_9, %c0_10], %12 {strides = array<i32>} : memref<18x18x4xf32, #tpu.memory_space<vmem>>, vector<1x18x4xf32>,
    %cst_11 = arith.constant 0.000000e+00 : f32
    %14 = vector.broadcast %cst_11 : f32 to vector<1x18x4xf32>
    %c17 = arith.constant 17 : index
    %c0_12 = arith.constant 0 : index
    %c0_13 = arith.constant 0 : index
    %15 = vector.load %arg7[%c17, %c0_12, %c0_13] : memref<18x18x4xf32, #tpu.memory_space<vmem>>, vector<1x18x4xf32>
    tpu.vector_store %arg7[%c17, %c0_12, %c0_13], %14 {strides = array<i32>} : memref<18x18x4xf32, #tpu.memory_space<vmem>>, vector<1x18x4xf32>,
    %cst_14 = arith.constant 0.000000e+00 : f32
    %16 = vector.broadcast %cst_14 : f32 to vector<18x1x4xf32>
    %c0_15 = arith.constant 0 : index
    %c0_16 = arith.constant 0 : index
    %c0_17 = arith.constant 0 : index
    %17 = vector.load %arg7[%c0_15, %c0_16, %c0_17] : memref<18x18x4xf32, #tpu.memory_space<vmem>>, vector<18x1x4xf32>
    tpu.vector_store %arg7[%c0_15, %c0_16, %c0_17], %16 {strides = array<i32>} : memref<18x18x4xf32, #tpu.memory_space<vmem>>, vector<18x1x4xf32>,
    %cst_18 = arith.constant 0.000000e+00 : f32
    %18 = vector.broadcast %cst_18 : f32 to vector<18x1x4xf32>
    %c0_19 = arith.constant 0 : index
    %c17_20 = arith.constant 17 : index
    %c0_21 = arith.constant 0 : index
    %19 = vector.load %arg7[%c0_19, %c17_20, %c0_21] : memref<18x18x4xf32, #tpu.memory_space<vmem>>, vector<18x1x4xf32>
    tpu.vector_store %arg7[%c0_19, %c17_20, %c0_21], %18 {strides = array<i32>} : memref<18x18x4xf32, #tpu.memory_space<vmem>>, vector<18x1x4xf32>,
    %c1 = arith.constant 1 : index
    %c1_22 = arith.constant 1 : index
    %c0_23 = arith.constant 0 : index
    %20 = vector.load %arg7[%c1, %c1_22, %c0_23] : memref<18x18x4xf32, #tpu.memory_space<vmem>>, vector<16x16x4xf32>
    tpu.vector_store %arg7[%c1, %c1_22, %c0_23], %11 {strides = array<i32>} : memref<18x18x4xf32, #tpu.memory_space<vmem>>, vector<16x16x4xf32>,
    %cst_24 = arith.constant 0.000000e+00 : f32
    %21 = vector.broadcast %cst_24 : f32 to vector<256x4xf32>
    %c0_25 = arith.constant 0 : index
    %c0_26 = arith.constant 0 : index
    %c0_27 = arith.constant 0 : index
    %22 = vector.load %arg7[%c0_25, %c0_26, %c0_27] : memref<18x18x4xf32, #tpu.memory_space<vmem>>, vector<16x16x4xf32>
    %23 = vector.shape_cast %22 : vector<16x16x4xf32> to vector<256x4xf32>
    %c0_28 = arith.constant 0 : index
    %c0_29 = arith.constant 0 : index
    %c0_30 = arith.constant 0 : index
    %24 = vector.load %arg4[%c0_28, %c0_29, %c0_30] : memref<9x4x4xf32, #tpu.memory_space<vmem>>, vector<1x4x4xf32>
    %25 = vector.shape_cast %24 : vector<1x4x4xf32> to vector<4x4xf32>
    %cst_31 = arith.constant dense<0.000000e+00> : vector<256x4xf32>
    %26 = tpu.matmul %23, %25, %cst_31 {dimension_numbers = #tpu.dot_dimension_numbers<[1], [0], [0], [1], [0, 0, 1, 1], [], []>} : vector<256x4xf32>, vector<4x4xf32>, vector<256x4xf32> -> vector<256x4xf32>
    %27 = arith.addf %21, %26 : vector<256x4xf32>
    %c0_32 = arith.constant 0 : index
    %c1_33 = arith.constant 1 : index
    %c0_34 = arith.constant 0 : index
    %28 = vector.load %arg7[%c0_32, %c1_33, %c0_34] : memref<18x18x4xf32, #tpu.memory_space<vmem>>, vector<16x16x4xf32>
    %29 = vector.shape_cast %28 : vector<16x16x4xf32> to vector<256x4xf32>
    %c1_35 = arith.constant 1 : index
    %c0_36 = arith.constant 0 : index
    %c0_37 = arith.constant 0 : index
    %30 = vector.load %arg4[%c1_35, %c0_36, %c0_37] : memref<9x4x4xf32, #tpu.memory_space<vmem>>, vector<1x4x4xf32>
    %31 = vector.shape_cast %30 : vector<1x4x4xf32> to vector<4x4xf32>
    %cst_38 = arith.constant dense<0.000000e+00> : vector<256x4xf32>
    %32 = tpu.matmul %29, %31, %cst_38 {dimension_numbers = #tpu.dot_dimension_numbers<[1], [0], [0], [1], [0, 0, 1, 1], [], []>} : vector<256x4xf32>, vector<4x4xf32>, vector<256x4xf32> -> vector<256x4xf32>
    %33 = arith.addf %27, %32 : vector<256x4xf32>
    %c0_39 = arith.constant 0 : index
    %c2 = arith.constant 2 : index
    %c0_40 = arith.constant 0 : index
    %34 = vector.load %arg7[%c0_39, %c2, %c0_40] : memref<18x18x4xf32, #tpu.memory_space<vmem>>, vector<16x16x4xf32>
    %35 = vector.shape_cast %34 : vector<16x16x4xf32> to vector<256x4xf32>
    %c2_41 = arith.constant 2 : index
    %c0_42 = arith.constant 0 : index
    %c0_43 = arith.constant 0 : index
    %36 = vector.load %arg4[%c2_41, %c0_42, %c0_43] : memref<9x4x4xf32, #tpu.memory_space<vmem>>, vector<1x4x4xf32>
    %37 = vector.shape_cast %36 : vector<1x4x4xf32> to vector<4x4xf32>
    %cst_44 = arith.constant dense<0.000000e+00> : vector<256x4xf32>
    %38 = tpu.matmul %35, %37, %cst_44 {dimension_numbers = #tpu.dot_dimension_numbers<[1], [0], [0], [1], [0, 0, 1, 1], [], []>} : vector<256x4xf32>, vector<4x4xf32>, vector<256x4xf32> -> vector<256x4xf32>
    %39 = arith.addf %33, %38 : vector<256x4xf32>
    %c1_45 = arith.constant 1 : index
    %c0_46 = arith.constant 0 : index
    %c0_47 = arith.constant 0 : index
    %40 = vector.load %arg7[%c1_45, %c0_46, %c0_47] : memref<18x18x4xf32, #tpu.memory_space<vmem>>, vector<16x16x4xf32>
    %41 = vector.shape_cast %40 : vector<16x16x4xf32> to vector<256x4xf32>
    %c3 = arith.constant 3 : index
    %c0_48 = arith.constant 0 : index
    %c0_49 = arith.constant 0 : index
    %42 = vector.load %arg4[%c3, %c0_48, %c0_49] : memref<9x4x4xf32, #tpu.memory_space<vmem>>, vector<1x4x4xf32>
    %43 = vector.shape_cast %42 : vector<1x4x4xf32> to vector<4x4xf32>
    %cst_50 = arith.constant dense<0.000000e+00> : vector<256x4xf32>
    %44 = tpu.matmul %41, %43, %cst_50 {dimension_numbers = #tpu.dot_dimension_numbers<[1], [0], [0], [1], [0, 0, 1, 1], [], []>} : vector<256x4xf32>, vector<4x4xf32>, vector<256x4xf32> -> vector<256x4xf32>
    %45 = arith.addf %39, %44 : vector<256x4xf32>
    %c1_51 = arith.constant 1 : index
    %c1_52 = arith.constant 1 : index
    %c0_53 = arith.constant 0 : index
    %46 = vector.load %arg7[%c1_51, %c1_52, %c0_53] : memref<18x18x4xf32, #tpu.memory_space<vmem>>, vector<16x16x4xf32>
    %47 = vector.shape_cast %46 : vector<16x16x4xf32> to vector<256x4xf32>
    %c4 = arith.constant 4 : index
    %c0_54 = arith.constant 0 : index
    %c0_55 = arith.constant 0 : index
    %48 = vector.load %arg4[%c4, %c0_54, %c0_55] : memref<9x4x4xf32, #tpu.memory_space<vmem>>, vector<1x4x4xf32>
    %49 = vector.shape_cast %48 : vector<1x4x4xf32> to vector<4x4xf32>
    %cst_56 = arith.constant dense<0.000000e+00> : vector<256x4xf32>
    %50 = tpu.matmul %47, %49, %cst_56 {dimension_numbers = #tpu.dot_dimension_numbers<[1], [0], [0], [1], [0, 0, 1, 1], [], []>} : vector<256x4xf32>, vector<4x4xf32>, vector<256x4xf32> -> vector<256x4xf32>
    %51 = arith.addf %45, %50 : vector<256x4xf32>
    %c1_57 = arith.constant 1 : index
    %c2_58 = arith.constant 2 : index
    %c0_59 = arith.constant 0 : index
    %52 = vector.load %arg7[%c1_57, %c2_58, %c0_59] : memref<18x18x4xf32, #tpu.memory_space<vmem>>, vector<16x16x4xf32>
    %53 = vector.shape_cast %52 : vector<16x16x4xf32> to vector<256x4xf32>
    %c5 = arith.constant 5 : index
    %c0_60 = arith.constant 0 : index
    %c0_61 = arith.constant 0 : index
    %54 = vector.load %arg4[%c5, %c0_60, %c0_61] : memref<9x4x4xf32, #tpu.memory_space<vmem>>, vector<1x4x4xf32>
    %55 = vector.shape_cast %54 : vector<1x4x4xf32> to vector<4x4xf32>
    %cst_62 = arith.constant dense<0.000000e+00> : vector<256x4xf32>
    %56 = tpu.matmul %53, %55, %cst_62 {dimension_numbers = #tpu.dot_dimension_numbers<[1], [0], [0], [1], [0, 0, 1, 1], [], []>} : vector<256x4xf32>, vector<4x4xf32>, vector<256x4xf32> -> vector<256x4xf32>
    %57 = arith.addf %51, %56 : vector<256x4xf32>
    %c2_63 = arith.constant 2 : index
    %c0_64 = arith.constant 0 : index
    %c0_65 = arith.constant 0 : index
    %58 = vector.load %arg7[%c2_63, %c0_64, %c0_65] : memref<18x18x4xf32, #tpu.memory_space<vmem>>, vector<16x16x4xf32>
    %59 = vector.shape_cast %58 : vector<16x16x4xf32> to vector<256x4xf32>
    %c6 = arith.constant 6 : index
    %c0_66 = arith.constant 0 : index
    %c0_67 = arith.constant 0 : index
    %60 = vector.load %arg4[%c6, %c0_66, %c0_67] : memref<9x4x4xf32, #tpu.memory_space<vmem>>, vector<1x4x4xf32>
    %61 = vector.shape_cast %60 : vector<1x4x4xf32> to vector<4x4xf32>
    %cst_68 = arith.constant dense<0.000000e+00> : vector<256x4xf32>
    %62 = tpu.matmul %59, %61, %cst_68 {dimension_numbers = #tpu.dot_dimension_numbers<[1], [0], [0], [1], [0, 0, 1, 1], [], []>} : vector<256x4xf32>, vector<4x4xf32>, vector<256x4xf32> -> vector<256x4xf32>
    %63 = arith.addf %57, %62 : vector<256x4xf32>
    %c2_69 = arith.constant 2 : index
    %c1_70 = arith.constant 1 : index
    %c0_71 = arith.constant 0 : index
    %64 = vector.load %arg7[%c2_69, %c1_70, %c0_71] : memref<18x18x4xf32, #tpu.memory_space<vmem>>, vector<16x16x4xf32>
    %65 = vector.shape_cast %64 : vector<16x16x4xf32> to vector<256x4xf32>
    %c7 = arith.constant 7 : index
    %c0_72 = arith.constant 0 : index
    %c0_73 = arith.constant 0 : index
    %66 = vector.load %arg4[%c7, %c0_72, %c0_73] : memref<9x4x4xf32, #tpu.memory_space<vmem>>, vector<1x4x4xf32>
    %67 = vector.shape_cast %66 : vector<1x4x4xf32> to vector<4x4xf32>
    %cst_74 = arith.constant dense<0.000000e+00> : vector<256x4xf32>
    %68 = tpu.matmul %65, %67, %cst_74 {dimension_numbers = #tpu.dot_dimension_numbers<[1], [0], [0], [1], [0, 0, 1, 1], [], []>} : vector<256x4xf32>, vector<4x4xf32>, vector<256x4xf32> -> vector<256x4xf32>
    %69 = arith.addf %63, %68 : vector<256x4xf32>
    %c2_75 = arith.constant 2 : index
    %c2_76 = arith.constant 2 : index
    %c0_77 = arith.constant 0 : index
    %70 = vector.load %arg7[%c2_75, %c2_76, %c0_77] : memref<18x18x4xf32, #tpu.memory_space<vmem>>, vector<16x16x4xf32>
    %71 = vector.shape_cast %70 : vector<16x16x4xf32> to vector<256x4xf32>
    %c8 = arith.constant 8 : index
    %c0_78 = arith.constant 0 : index
    %c0_79 = arith.constant 0 : index
    %72 = vector.load %arg4[%c8, %c0_78, %c0_79] : memref<9x4x4xf32, #tpu.memory_space<vmem>>, vector<1x4x4xf32>
    %73 = vector.shape_cast %72 : vector<1x4x4xf32> to vector<4x4xf32>
    %cst_80 = arith.constant dense<0.000000e+00> : vector<256x4xf32>
    %74 = tpu.matmul %71, %73, %cst_80 {dimension_numbers = #tpu.dot_dimension_numbers<[1], [0], [0], [1], [0, 0, 1, 1], [], []>} : vector<256x4xf32>, vector<4x4xf32>, vector<256x4xf32> -> vector<256x4xf32>
    %75 = arith.addf %69, %74 : vector<256x4xf32>
    %76 = vector.shape_cast %75 : vector<256x4xf32> to vector<16x16x4xf32>
    %c0_81 = arith.constant 0 : index
    %c0_82 = arith.constant 0 : index
    %c0_83 = arith.constant 0 : index
    %c0_84 = arith.constant 0 : index
    %77 = vector.load %arg5[%c0_81, %c0_82, %c0_83, %c0_84] : memref<1x16x16x4xf32, #tpu.memory_space<vmem>>, vector<1x16x16x4xf32>
    %78 = vector.shape_cast %77 : vector<1x16x16x4xf32> to vector<16x16x4xf32>
    %79 = vector.shape_cast %76 : vector<16x16x4xf32> to vector<1x16x16x4xf32>
    tpu.vector_store %arg5[%c0_81, %c0_82, %c0_83, %c0_84], %79 {strides = array<i32>} : memref<1x16x16x4xf32, #tpu.memory_space<vmem>>, vector<1x16x16x4xf32>,
    %cst_85 = arith.constant dense<0.000000e+00> : vector<4xf32>
    %80 = vector.multi_reduction <add>, %75, %cst_85 [0] : vector<256x4xf32> to vector<4xf32>
    %81 = vector.shape_cast %80 : vector<4xf32> to vector<1x4xf32>
    %c0_86 = arith.constant 0 : index
    %c0_87 = arith.constant 0 : index
    %c0_88 = arith.constant 0 : index
    %82 = vector.load %arg6[%c0_86, %c0_87, %c0_88] : memref<1x2x4xf32, #tpu.memory_space<vmem>>, vector<1x1x4xf32>
    %83 = vector.shape_cast %82 : vector<1x1x4xf32> to vector<1x4xf32>
    %84 = vector.shape_cast %81 : vector<1x4xf32> to vector<1x1x4xf32>
    tpu.vector_store %arg6[%c0_86, %c0_87, %c0_88], %84 {strides = array<i32>} : memref<1x2x4xf32, #tpu.memory_space<vmem>>, vector<1x1x4xf32>,
    %85 = arith.mulf %75, %75 : vector<256x4xf32>
    %cst_89 = arith.constant dense<0.000000e+00> : vector<4xf32>
    %86 = vector.multi_reduction <add>, %85, %cst_89 [0] : vector<256x4xf32> to vector<4xf32>
    %87 = vector.shape_cast %86 : vector<4xf32> to vector<1x4xf32>
    %c0_90 = arith.constant 0 : index
    %c1_91 = arith.constant 1 : index
    %c0_92 = arith.constant 0 : index
    %88 = vector.load %arg6[%c0_90, %c1_91, %c0_92] : memref<1x2x4xf32, #tpu.memory_space<vmem>>, vector<1x1x4xf32>
    %89 = vector.shape_cast %88 : vector<1x1x4xf32> to vector<1x4xf32>
    %90 = vector.shape_cast %87 : vector<1x4xf32> to vector<1x1x4xf32>
    tpu.vector_store %arg6[%c0_90, %c1_91, %c0_92], %90 {strides = array<i32>} : memref<1x2x4xf32, #tpu.memory_space<vmem>>, vector<1x1x4xf32>,
    return
  }
  func.func @transform_0(%arg0: i32) -> (i32, i32, i32, i32) {
    %c0_i32 = arith.constant 0 : i32
    %c0_i32_0 = arith.constant 0 : i32
    %c0_i32_1 = arith.constant 0 : i32
    %c0_i32_2 = arith.constant 0 : i32
    return %arg0, %c0_i32, %c0_i32_0, %c0_i32_1 : i32, i32, i32, i32
  }
  func.func @transform_1(%arg0: i32) -> (i32, i32) {
    %c0_i32 = arith.constant 0 : i32
    %c0_i32_0 = arith.constant 0 : i32
    %c0_i32_1 = arith.constant 0 : i32
    return %c0_i32, %c0_i32_0 : i32, i32
  }
  func.func @transform_2(%arg0: i32) -> (i32, i32) {
    %c0_i32 = arith.constant 0 : i32
    %c0_i32_0 = arith.constant 0 : i32
    %c0_i32_1 = arith.constant 0 : i32
    return %c0_i32, %c0_i32_0 : i32, i32
  }
  func.func @transform_3(%arg0: i32) -> (i32, i32, i32) {
    %c0_i32 = arith.constant 0 : i32
    %c0_i32_0 = arith.constant 0 : i32
    %c0_i32_1 = arith.constant 0 : i32
    %c0_i32_2 = arith.constant 0 : i32
    return %c0_i32, %c0_i32_0, %c0_i32_1 : i32, i32, i32
  }
  func.func @transform_4(%arg0: i32) -> (i32, i32, i32, i32) {
    %c0_i32 = arith.constant 0 : i32
    %c0_i32_0 = arith.constant 0 : i32
    %c0_i32_1 = arith.constant 0 : i32
    %c0_i32_2 = arith.constant 0 : i32
    return %arg0, %c0_i32, %c0_i32_0, %c0_i32_1 : i32, i32, i32, i32
  }
  func.func @transform_5(%arg0: i32) -> (i32, i32, i32) {
    %c0_i32 = arith.constant 0 : i32
    %c0_i32_0 = arith.constant 0 : i32
    %c0_i32_1 = arith.constant 0 : i32
    return %arg0, %c0_i32, %c0_i32_0 : i32, i32, i32
  }
}

</mosaic_0001>

<llo_original>
// kernel: resblock_forward.5
$region0: #{resblock_forward.5}
  #allocation0 [shape = 'u32[]', space=smem, size = 0x4, offset = 0x4, fixed_abs, tag = 'smem constant byte address 0x4 - core index']
  #allocation1 [shape = 'u32[144,128]{1,0:T(1,128)}', space=vmem, size = 0x12000, scoped, tag = 'internal scratch']
  %s0 = inlined_call_operand.vmem [shape: f32[2,16,16,4], index: 0, kind: input, shape index: {}]
  %s1 = inlined_call_operand.vmem [shape: f32[1,4], index: 1, kind: input, shape index: {}]
  %s2 = inlined_call_operand.vmem [shape: f32[1,4], index: 2, kind: input, shape index: {}]
  %s3 = inlined_call_operand.vmem [shape: f32[2,16,16,4], index: 3, kind: input, shape index: {}]
  %s4 = inlined_call_operand.vmem [shape: f32[2,16,16,4], index: 4, kind: output, shape index: {}]
  %s5 = sld [smem:[#allocation0]]
  $region49: #{resblock_forward.5} parent=0
    _
  %s7 = ssub.s32 1, %s5
  %s8 = scalar_select 0, %s7, %s5
  loop: start=0, step=1, limit=4
  $region2: #{resblock_forward.5} parent=0 // loop_pre_header
    _
  $region3: #{resblock_forward.5} parent=0 // loop_header
    %s10 = sphi 0, %s14
    %p11 = scmp.ge.s32.totalorder %s10, 4
    %s20 = sphi 0, %s22
    %s23 = sphi 0, %s20
    %s24 = sphi 0, %s23
    %s40 = sphi 0, %s24
    %s44 = sphi 0, %s44
    %s46 = sphi 0, %s44
    %s47 = sphi 0, %s46
    %s61 = sphi 0, %s47
    %s65 = sphi 0, %s65
    %s67 = sphi 0, %s65
    %s68 = sphi 0, %s67
    %s82 = sphi 0, %s68
    %s88 = sphi 0, %s90
    %s91 = sphi 0, %s88
    %s92 = sphi 0, %s91
    %s108 = sphi 0, %s92
    %s114 = sphi 0, %s116
    %s117 = sphi 0, %s114
    %s118 = sphi 0, %s117
    %s134 = sphi 0, %s118
  $region4: #{resblock_forward.5} parent=0 // loop_header_branch
    %13 = sbr.rel (%p11) target = $region8
  $region5: #{resblock_forward.5} parent=0 // loop_body
    %s15 = ssub.s32 %s10, 1
    %s16 = ssub.s32 %s10, 2
    %s17 = sadd.s32 %s10, 1
    %s18 = ssub.s32 %s10, %s17
    %p19 = scmp.eq.s32.totalorder %s18, 0
    %s21 = sadd.s32 %s20, 1
    %s22 = scalar_select %p19, %s20, %s21
    %p25 = pneg %p19
    %p26 = scmp.eq.s32.totalorder %s10, 1
    %p27 = por %p25, %p26
    %p28 = scmp.ne.s32.totalorder %s20, %s23
    %p29 = scmp.eq.s32.totalorder %s10, 0
    %p30 = por %p28, %p29
    %p31 = scmp.ne.s32.totalorder %s20, %s23
    %p32 = scmp.eq.s32.totalorder %s15, 1
    %p33 = por %p31, %p32
    %p34 = scmp.ne.s32.totalorder %s23, %s24
    %p35 = scmp.eq.s32.totalorder %s15, 0
    %p36 = por %p34, %p35
    %p37 = scmp.ne.s32.totalorder %s23, %s24
    %p38 = scmp.eq.s32.totalorder %s16, 1
    %p39 = por %p37, %p38
    %p41 = scmp.ne.s32.totalorder %s24, %s40
    %p42 = scmp.eq.s32.totalorder %s16, 0
    %p43 = por %p41, %p42
    %s45 = sadd.s32 %s44, 1
    %p48 = scmp.eq.s32.totalorder %s10, 1
    %p49 = scmp.ne.s32.totalorder %s44, %s46
    %p50 = scmp.eq.s32.totalorder %s10, 0
    %p51 = por %p49, %p50
    %p52 = scmp.ne.s32.totalorder %s44, %s46
    %p53 = scmp.eq.s32.totalorder %s15, 1
    %p54 = por %p52, %p53
    %p55 = scmp.ne.s32.totalorder %s46, %s47
    %p56 = scmp.eq.s32.totalorder %s15, 0
    %p57 = por %p55, %p56
    %p58 = scmp.ne.s32.totalorder %s46, %s47
    %p59 = scmp.eq.s32.totalorder %s16, 1
    %p60 = por %p58, %p59
    %p62 = scmp.ne.s32.totalorder %s47, %s61
    %p63 = scmp.eq.s32.totalorder %s16, 0
    %p64 = por %p62, %p63
    %s66 = sadd.s32 %s65, 1
    %p69 = scmp.eq.s32.totalorder %s10, 1
    %p70 = scmp.ne.s32.totalorder %s65, %s67
    %p71 = scmp.eq.s32.totalorder %s10, 0
    %p72 = por %p70, %p71
    %p73 = scmp.ne.s32.totalorder %s65, %s67
    %p74 = scmp.eq.s32.totalorder %s15, 1
    %p75 = por %p73, %p74
    %p76 = scmp.ne.s32.totalorder %s67, %s68
    %p77 = scmp.eq.s32.totalorder %s15, 0
    %p78 = por %p76, %p77
    %p79 = scmp.ne.s32.totalorder %s67, %s68
    %p80 = scmp.eq.s32.totalorder %s16, 1
    %p81 = por %p79, %p80
    %p83 = scmp.ne.s32.totalorder %s68, %s82
    %p84 = scmp.eq.s32.totalorder %s16, 0
    %p85 = por %p83, %p84
    %s86 = ssub.s32 %s10, %s17
    %p87 = scmp.eq.s32.totalorder %s86, 0
    %s89 = sadd.s32 %s88, 1
    %s90 = scalar_select %p87, %s88, %s89
    %p93 = pneg %p87
    %p94 = scmp.eq.s32.totalorder %s10, 1
    %p95 = por %p93, %p94
    %p96 = scmp.ne.s32.totalorder %s88, %s91
    %p97 = scmp.eq.s32.totalorder %s10, 0
    %p98 = por %p96, %p97
    %p99 = scmp.ne.s32.totalorder %s88, %s91
    %p100 = scmp.eq.s32.totalorder %s15, 1
    %p101 = por %p99, %p100
    %p102 = scmp.ne.s32.totalorder %s91, %s92
    %p103 = scmp.eq.s32.totalorder %s15, 0
    %p104 = por %p102, %p103
    %p105 = scmp.ne.s32.totalorder %s91, %s92
    %p106 = scmp.eq.s32.totalorder %s16, 1
    %p107 = por %p105, %p106
    %p109 = scmp.ne.s32.totalorder %s92, %s108
    %p110 = scmp.eq.s32.totalorder %s16, 0
    %p111 = por %p109, %p110
    %s112 = ssub.s32 %s10, %s17
    %p113 = scmp.eq.s32.totalorder %s112, 0
    %s115 = sadd.s32 %s114, 1
    %s116 = scalar_select %p113, %s114, %s115
    %p119 = pneg %p113
    %p120 = scmp.eq.s32.totalorder %s10, 1
    %p121 = por %p119, %p120
    %p122 = scmp.ne.s32.totalorder %s114, %s117
    %p123 = scmp.eq.s32.totalorder %s10, 0
    %p124 = por %p122, %p123
    %p125 = scmp.ne.s32.totalorder %s114, %s117
    %p126 = scmp.eq.s32.totalorder %s15, 1
    %p127 = por %p125, %p126
    %p128 = scmp.ne.s32.totalorder %s117, %s118
    %p129 = scmp.eq.s32.totalorder %s15, 0
    %p130 = por %p128, %p129
    %p131 = scmp.ne.s32.totalorder %s117, %s118
    %p132 = scmp.eq.s32.totalorder %s16, 1
    %p133 = por %p131, %p132
    %p135 = scmp.ne.s32.totalorder %s118, %s134
    %p136 = scmp.eq.s32.totalorder %s16, 0
    %p137 = por %p135, %p136
    %p138 = scmp.le.s32.totalorder 1, %s10
    %p139 = scmp.lt.s32.totalorder %s10, 3
    %p140 = pnand %p138, %p139
    %p141 = pneg %p140
    // Predicated region
    $region9: #{resblock_forward.5} parent=5 // pred_check
      _
    $region10: #{resblock_forward.5} parent=5 // pred_check_branch
      %143 = sbr.rel (%p140) target = $region12
    $region11: #{resblock_forward.5} parent=5 // pred_region
      %s144 = ssub.s32 %s10, 1
      // Predicated region
      $region13: #{resblock_forward.5} parent=11 // pred_check
        %p145 = pneg %p57
      $region14: #{resblock_forward.5} parent=11 // pred_check_branch
        %147 = sbr.rel (%p145) target = $region16
      $region15: #{resblock_forward.5} parent=11 // pred_region
        _
      $region16: #{resblock_forward.5} parent=11 // pred_fallthru
        _
      // Predicated region
      $region17: #{resblock_forward.5} parent=11 // pred_check
        %p148 = pneg %p78
      $region18: #{resblock_forward.5} parent=11 // pred_check_branch
        %150 = sbr.rel (%p148) target = $region20
      $region19: #{resblock_forward.5} parent=11 // pred_region
        _
      $region20: #{resblock_forward.5} parent=11 // pred_fallthru
        _
    $region12: #{resblock_forward.5} parent=5 // pred_fallthru
      _
    %p151 = scmp.lt.s32.totalorder %s10, 2
    // Predicated region
    $region21: #{resblock_forward.5} parent=5 // pred_check
      %p152 = pneg %p151
    $region22: #{resblock_forward.5} parent=5 // pred_check_branch
      %154 = sbr.rel (%p152) target = $region24
    $region23: #{resblock_forward.5} parent=5 // pred_region
      // Predicated region
      $region25: #{resblock_forward.5} parent=23 // pred_check
        %p155 = pneg %p30
      $region26: #{resblock_forward.5} parent=23 // pred_check_branch
        %157 = sbr.rel (%p155) target = $region28
      $region27: #{resblock_forward.5} parent=23 // pred_region
        %p158 = scmp.lt.s32.totalorder %s10, 1
        %s159 = scalar_select %p158, %s10, 1
        %s160 = smul.addr %s159, 32
        %s161 = smul.addr %s160, 8
        %s162 = scalar_lea.vmem %s0, %s161
      $region28: #{resblock_forward.5} parent=23 // pred_fallthru
        _
      // Predicated region
      $region29: #{resblock_forward.5} parent=23 // pred_check
        %p163 = pneg %p98
      $region30: #{resblock_forward.5} parent=23 // pred_check_branch
        %165 = sbr.rel (%p163) target = $region32
      $region31: #{resblock_forward.5} parent=23 // pred_region
        %p166 = scmp.lt.s32.totalorder %s10, 1
        %s167 = scalar_select %p166, %s10, 1
        %s168 = smul.addr %s167, 32
        %s169 = smul.addr %s168, 8
        %s170 = scalar_lea.vmem %s3, %s169
      $region32: #{resblock_forward.5} parent=23 // pred_fallthru
        _
    $region24: #{resblock_forward.5} parent=5 // pred_fallthru
      _
    %p171 = scmp.le.s32.totalorder 1, %s10
    %p172 = scmp.lt.s32.totalorder %s10, 3
    %p173 = pnand %p171, %p172
    %p174 = pneg %p173
    // Predicated region
    $region33: #{resblock_forward.5} parent=5 // pred_check
      _
    $region34: #{resblock_forward.5} parent=5 // pred_check_branch
      %176 = sbr.rel (%p173) target = $region36
    $region35: #{resblock_forward.5} parent=5 // pred_region
      %s177 = ssub.s32 %s10, 1
      %p178 = scmp.lt.s32.totalorder %s15, 1
      %s179 = scalar_select %p178, %s15, 1
      %s180 = smul.addr %s179, 32
      %s181 = smul.addr %s180, 8
      %s182 = scalar_lea.vmem %s0, %s181
      %p183 = pneg %p36
      %p184 = pneg %p33
      %p185 = pneg %p57
      %p186 = pneg %p54
      %p187 = pneg %p78
      %p188 = pneg %p75
      %p189 = scmp.lt.s32.totalorder %s15, 1
      %s190 = scalar_select %p189, %s15, 1
      %s191 = smul.addr %s190, 32
      %s192 = smul.addr %s191, 8
      %s193 = scalar_lea.vmem %s3, %s192
      %p194 = pneg %p104
      %p195 = pneg %p101
      %p196 = pneg %p130
      %p197 = pneg %p127
      %p198 = scmp.lt.s32.totalorder %s15, 1
      %s199 = scalar_select %p198, %s15, 1
      %s200 = smul.addr %s199, 32
      %s201 = smul.addr %s200, 8
      %s202 = scalar_lea.vmem %s4, %s201
      %p203 = scmp.lt.s32.totalorder %s15, 1
      %s204 = scalar_select %p203, %s15, 1
      %s205 = smul.addr %s204, 32
      %s206 = smul.addr %s205, 8
      %s207 = scalar_lea.vmem %s0, %s206
      %p208 = scmp.lt.s32.totalorder %s15, 1
      %s209 = scalar_select %p208, %s15, 1
      %s210 = smul.addr %s209, 32
      %s211 = smul.addr %s210, 8
      %s212 = scalar_lea.vmem %s3, %s211
      %p213 = scmp.lt.s32.totalorder %s15, 1
      %s214 = scalar_select %p213, %s15, 1
      %s215 = smul.addr %s214, 32
      %s216 = smul.addr %s215, 8
      %s217 = scalar_lea.vmem %s4, %s216
      %v218 = vld [vmem:[%s1] sm:$0x1]
      %v219 = vld [vmem:[%s2] sm:$0x1]
      %v220 = vld [vmem:[%s207] sm:$0xff]
      %v221 = vld [vmem:[%s207 + $0x8] sm:$0xff]
      %v222 = vld [vmem:[%s207 + $0x10] sm:$0xff]
      %v223 = vld [vmem:[%s207 + $0x18] sm:$0xff]
      %v224 = vld [vmem:[%s207 + $0x20] sm:$0xff]
      %v225 = vld [vmem:[%s207 + $0x28] sm:$0xff]
      %v226 = vld [vmem:[%s207 + $0x30] sm:$0xff]
      %v227 = vld [vmem:[%s207 + $0x38] sm:$0xff]
      %v228 = vld [vmem:[%s207 + $0x40] sm:$0xff]
      %v229 = vld [vmem:[%s207 + $0x48] sm:$0xff]
      %v230 = vld [vmem:[%s207 + $0x50] sm:$0xff]
      %v231 = vld [vmem:[%s207 + $0x58] sm:$0xff]
      %v232 = vld [vmem:[%s207 + $0x60] sm:$0xff]
      %v233 = vld [vmem:[%s207 + $0x68] sm:$0xff]
      %v234 = vld [vmem:[%s207 + $0x70] sm:$0xff]
      %v235 = vld [vmem:[%s207 + $0x78] sm:$0xff]
      %v236 = vld [vmem:[%s207 + $0x80] sm:$0xff]
      %v237 = vld [vmem:[%s207 + $0x88] sm:$0xff]
      %v238 = vld [vmem:[%s207 + $0x90] sm:$0xff]
      %v239 = vld [vmem:[%s207 + $0x98] sm:$0xff]
      %v240 = vld [vmem:[%s207 + $0xa0] sm:$0xff]
      %v241 = vld [vmem:[%s207 + $0xa8] sm:$0xff]
      %v242 = vld [vmem:[%s207 + $0xb0] sm:$0xff]
      %v243 = vld [vmem:[%s207 + $0xb8] sm:$0xff]
      %v244 = vld [vmem:[%s207 + $0xc0] sm:$0xff]
      %v245 = vld [vmem:[%s207 + $0xc8] sm:$0xff]
      %v246 = vld [vmem:[%s207 + $0xd0] sm:$0xff]
      %v247 = vld [vmem:[%s207 + $0xd8] sm:$0xff]
      %v248 = vld [vmem:[%s207 + $0xe0] sm:$0xff]
      %v249 = vld [vmem:[%s207 + $0xe8] sm:$0xff]
      %v250 = vld [vmem:[%s207 + $0xf0] sm:$0xff]
      %v251 = vld [vmem:[%s207 + $0xf8] sm:$0xff]
      %v253 = vlaneseq
      %v254 = vshrl.u32 %v253, 7
      %v255 = vsub.s32 0, %v254
      %v256 = vrot.slane %v218, %v255
      %v258 = vmul.f32 %v220, %v256
      %v259 = vmul.f32 %v221, %v256
      %v260 = vmul.f32 %v222, %v256
      %v261 = vmul.f32 %v223, %v256
      %v262 = vmul.f32 %v224, %v256
      %v263 = vmul.f32 %v225, %v256
      %v264 = vmul.f32 %v226, %v256
      %v265 = vmul.f32 %v227, %v256
      %v266 = vmul.f32 %v228, %v256
      %v267 = vmul.f32 %v229, %v256
      %v268 = vmul.f32 %v230, %v256
      %v269 = vmul.f32 %v231, %v256
      %v270 = vmul.f32 %v232, %v256
      %v271 = vmul.f32 %v233, %v256
      %v272 = vmul.f32 %v234, %v256
      %v273 = vmul.f32 %v235, %v256
      %v274 = vmul.f32 %v236, %v256
      %v275 = vmul.f32 %v237, %v256
      %v276 = vmul.f32 %v238, %v256
      %v277 = vmul.f32 %v239, %v256
      %v278 = vmul.f32 %v240, %v256
      %v279 = vmul.f32 %v241, %v256
      %v280 = vmul.f32 %v242, %v256
      %v281 = vmul.f32 %v243, %v256
      %v282 = vmul.f32 %v244, %v256
      %v283 = vmul.f32 %v245, %v256
      %v284 = vmul.f32 %v246, %v256
      %v285 = vmul.f32 %v247, %v256
      %v286 = vmul.f32 %v248, %v256
      %v287 = vmul.f32 %v249, %v256
      %v288 = vmul.f32 %v250, %v256
      %v289 = vmul.f32 %v251, %v256
      %v291 = vlaneseq
      %v292 = vshrl.u32 %v291, 7
      %v293 = vsub.s32 0, %v292
      %v294 = vrot.slane %v219, %v293
      %v296 = vadd.f32 %v258, %v294
      %v297 = vadd.f32 %v259, %v294
      %v298 = vadd.f32 %v260, %v294
      %v299 = vadd.f32 %v261, %v294
      %v300 = vadd.f32 %v262, %v294
      %v301 = vadd.f32 %v263, %v294
      %v302 = vadd.f32 %v264, %v294
      %v303 = vadd.f32 %v265, %v294
      %v304 = vadd.f32 %v266, %v294
      %v305 = vadd.f32 %v267, %v294
      %v306 = vadd.f32 %v268, %v294
      %v307 = vadd.f32 %v269, %v294
      %v308 = vadd.f32 %v270, %v294
      %v309 = vadd.f32 %v271, %v294
      %v310 = vadd.f32 %v272, %v294
      %v311 = vadd.f32 %v273, %v294
      %v312 = vadd.f32 %v274, %v294
      %v313 = vadd.f32 %v275, %v294
      %v314 = vadd.f32 %v276, %v294
      %v315 = vadd.f32 %v277, %v294
      %v316 = vadd.f32 %v278, %v294
      %v317 = vadd.f32 %v279, %v294
      %v318 = vadd.f32 %v280, %v294
      %v319 = vadd.f32 %v281, %v294
      %v320 = vadd.f32 %v282, %v294
      %v321 = vadd.f32 %v283, %v294
      %v322 = vadd.f32 %v284, %v294
      %v323 = vadd.f32 %v285, %v294
      %v324 = vadd.f32 %v286, %v294
      %v325 = vadd.f32 %v287, %v294
      %v326 = vadd.f32 %v288, %v294
      %v327 = vadd.f32 %v289, %v294
      %v328 = vld [vmem:[%s212] sm:$0xff]
      %v329 = vld [vmem:[%s212 + $0x8] sm:$0xff]
      %v330 = vld [vmem:[%s212 + $0x10] sm:$0xff]
      %v331 = vld [vmem:[%s212 + $0x18] sm:$0xff]
      %v332 = vld [vmem:[%s212 + $0x20] sm:$0xff]
      %v333 = vld [vmem:[%s212 + $0x28] sm:$0xff]
      %v334 = vld [vmem:[%s212 + $0x30] sm:$0xff]
      %v335 = vld [vmem:[%s212 + $0x38] sm:$0xff]
      %v336 = vld [vmem:[%s212 + $0x40] sm:$0xff]
      %v337 = vld [vmem:[%s212 + $0x48] sm:$0xff]
      %v338 = vld [vmem:[%s212 + $0x50] sm:$0xff]
      %v339 = vld [vmem:[%s212 + $0x58] sm:$0xff]
      %v340 = vld [vmem:[%s212 + $0x60] sm:$0xff]
      %v341 = vld [vmem:[%s212 + $0x68] sm:$0xff]
      %v342 = vld [vmem:[%s212 + $0x70] sm:$0xff]
      %v343 = vld [vmem:[%s212 + $0x78] sm:$0xff]
      %v344 = vld [vmem:[%s212 + $0x80] sm:$0xff]
      %v345 = vld [vmem:[%s212 + $0x88] sm:$0xff]
      %v346 = vld [vmem:[%s212 + $0x90] sm:$0xff]
      %v347 = vld [vmem:[%s212 + $0x98] sm:$0xff]
      %v348 = vld [vmem:[%s212 + $0xa0] sm:$0xff]
      %v349 = vld [vmem:[%s212 + $0xa8] sm:$0xff]
      %v350 = vld [vmem:[%s212 + $0xb0] sm:$0xff]
      %v351 = vld [vmem:[%s212 + $0xb8] sm:$0xff]
      %v352 = vld [vmem:[%s212 + $0xc0] sm:$0xff]
      %v353 = vld [vmem:[%s212 + $0xc8] sm:$0xff]
      %v354 = vld [vmem:[%s212 + $0xd0] sm:$0xff]
      %v355 = vld [vmem:[%s212 + $0xd8] sm:$0xff]
      %v356 = vld [vmem:[%s212 + $0xe0] sm:$0xff]
      %v357 = vld [vmem:[%s212 + $0xe8] sm:$0xff]
      %v358 = vld [vmem:[%s212 + $0xf0] sm:$0xff]
      %v359 = vld [vmem:[%s212 + $0xf8] sm:$0xff]
      %v360 = vadd.f32 %v296, %v328
      %v361 = vadd.f32 %v297, %v329
      %v362 = vadd.f32 %v298, %v330
      %v363 = vadd.f32 %v299, %v331
      %v364 = vadd.f32 %v300, %v332
      %v365 = vadd.f32 %v301, %v333
      %v366 = vadd.f32 %v302, %v334
      %v367 = vadd.f32 %v303, %v335
      %v368 = vadd.f32 %v304, %v336
      %v369 = vadd.f32 %v305, %v337
      %v370 = vadd.f32 %v306, %v338
      %v371 = vadd.f32 %v307, %v339
      %v372 = vadd.f32 %v308, %v340
      %v373 = vadd.f32 %v309, %v341
      %v374 = vadd.f32 %v310, %v342
      %v375 = vadd.f32 %v311, %v343
      %v376 = vadd.f32 %v312, %v344
      %v377 = vadd.f32 %v313, %v345
      %v378 = vadd.f32 %v314, %v346
      %v379 = vadd.f32 %v315, %v347
      %v380 = vadd.f32 %v316, %v348
      %v381 = vadd.f32 %v317, %v349
      %v382 = vadd.f32 %v318, %v350
      %v383 = vadd.f32 %v319, %v351
      %v384 = vadd.f32 %v320, %v352
      %v385 = vadd.f32 %v321, %v353
      %v386 = vadd.f32 %v322, %v354
      %v387 = vadd.f32 %v323, %v355
      %v388 = vadd.f32 %v324, %v356
      %v389 = vadd.f32 %v325, %v357
      %v390 = vadd.f32 %v326, %v358
      %v391 = vadd.f32 %v327, %v359
      %v392 = vmax.f32 %v360, 0.0
      %v393 = vmax.f32 %v361, 0.0
      %v394 = vmax.f32 %v362, 0.0
      %v395 = vmax.f32 %v363, 0.0
      %v396 = vmax.f32 %v364, 0.0
      %v397 = vmax.f32 %v365, 0.0
      %v398 = vmax.f32 %v366, 0.0
      %v399 = vmax.f32 %v367, 0.0
      %v400 = vmax.f32 %v368, 0.0
      %v401 = vmax.f32 %v369, 0.0
      %v402 = vmax.f32 %v370, 0.0
      %v403 = vmax.f32 %v371, 0.0
      %v404 = vmax.f32 %v372, 0.0
      %v405 = vmax.f32 %v373, 0.0
      %v406 = vmax.f32 %v374, 0.0
      %v407 = vmax.f32 %v375, 0.0
      %v408 = vmax.f32 %v376, 0.0
      %v409 = vmax.f32 %v377, 0.0
      %v410 = vmax.f32 %v378, 0.0
      %v411 = vmax.f32 %v379, 0.0
      %v412 = vmax.f32 %v380, 0.0
      %v413 = vmax.f32 %v381, 0.0
      %v414 = vmax.f32 %v382, 0.0
      %v415 = vmax.f32 %v383, 0.0
      %v416 = vmax.f32 %v384, 0.0
      %v417 = vmax.f32 %v385, 0.0
      %v418 = vmax.f32 %v386, 0.0
      %v419 = vmax.f32 %v387, 0.0
      %v420 = vmax.f32 %v388, 0.0
      %v421 = vmax.f32 %v389, 0.0
      %v422 = vmax.f32 %v390, 0.0
      %v423 = vmax.f32 %v391, 0.0
      %vm424 = vcmask 31744
      %425 = vst.msk [vmem:[%s217] sm:$0xff] %vm424, %v392
      %426 = vst.msk [vmem:[%s217 + $0x8] sm:$0xff] %vm424, %v393
      %427 = vst.msk [vmem:[%s217 + $0x10] sm:$0xff] %vm424, %v394
      %428 = vst.msk [vmem:[%s217 + $0x18] sm:$0xff] %vm424, %v395
      %429 = vst.msk [vmem:[%s217 + $0x20] sm:$0xff] %vm424, %v396
      %430 = vst.msk [vmem:[%s217 + $0x28] sm:$0xff] %vm424, %v397
      %431 = vst.msk [vmem:[%s217 + $0x30] sm:$0xff] %vm424, %v398
      %432 = vst.msk [vmem:[%s217 + $0x38] sm:$0xff] %vm424, %v399
      %433 = vst.msk [vmem:[%s217 + $0x40] sm:$0xff] %vm424, %v400
      %434 = vst.msk [vmem:[%s217 + $0x48] sm:$0xff] %vm424, %v401
      %435 = vst.msk [vmem:[%s217 + $0x50] sm:$0xff] %vm424, %v402
      %436 = vst.msk [vmem:[%s217 + $0x58] sm:$0xff] %vm424, %v403
      %437 = vst.msk [vmem:[%s217 + $0x60] sm:$0xff] %vm424, %v404
      %438 = vst.msk [vmem:[%s217 + $0x68] sm:$0xff] %vm424, %v405
      %439 = vst.msk [vmem:[%s217 + $0x70] sm:$0xff] %vm424, %v406
      %440 = vst.msk [vmem:[%s217 + $0x78] sm:$0xff] %vm424, %v407
      %441 = vst.msk [vmem:[%s217 + $0x80] sm:$0xff] %vm424, %v408
      %442 = vst.msk [vmem:[%s217 + $0x88] sm:$0xff] %vm424, %v409
      %443 = vst.msk [vmem:[%s217 + $0x90] sm:$0xff] %vm424, %v410
      %444 = vst.msk [vmem:[%s217 + $0x98] sm:$0xff] %vm424, %v411
      %445 = vst.msk [vmem:[%s217 + $0xa0] sm:$0xff] %vm424, %v412
      %446 = vst.msk [vmem:[%s217 + $0xa8] sm:$0xff] %vm424, %v413
      %447 = vst.msk [vmem:[%s217 + $0xb0] sm:$0xff] %vm424, %v414
      %448 = vst.msk [vmem:[%s217 + $0xb8] sm:$0xff] %vm424, %v415
      %449 = vst.msk [vmem:[%s217 + $0xc0] sm:$0xff] %vm424, %v416
      %450 = vst.msk [vmem:[%s217 + $0xc8] sm:$0xff] %vm424, %v417
      %451 = vst.msk [vmem:[%s217 + $0xd0] sm:$0xff] %vm424, %v418
      %452 = vst.msk [vmem:[%s217 + $0xd8] sm:$0xff] %vm424, %v419
      %453 = vst.msk [vmem:[%s217 + $0xe0] sm:$0xff] %vm424, %v420
      %454 = vst.msk [vmem:[%s217 + $0xe8] sm:$0xff] %vm424, %v421
      %455 = vst.msk [vmem:[%s217 + $0xf0] sm:$0xff] %vm424, %v422
      %456 = vst.msk [vmem:[%s217 + $0xf8] sm:$0xff] %vm424, %v423
      %p457 = scmp.lt.s32.totalorder %s15, 1
      %s458 = scalar_select %p457, %s15, 1
      %s459 = smul.addr %s458, 32
      %s460 = smul.addr %s459, 8
      %s461 = scalar_lea.vmem %s4, %s460
      // Predicated region
      $region37: #{resblock_forward.5} parent=35 // pred_check
        %p462 = pneg %p127
      $region38: #{resblock_forward.5} parent=35 // pred_check_branch
        %464 = sbr.rel (%p462) target = $region40
      $region39: #{resblock_forward.5} parent=35 // pred_region
        _
      $region40: #{resblock_forward.5} parent=35 // pred_fallthru
        _
    $region36: #{resblock_forward.5} parent=5 // pred_fallthru
      _
    %p465 = scmp.le.s32.totalorder 2, %s10
    // Predicated region
    $region41: #{resblock_forward.5} parent=5 // pred_check
      %p466 = pneg %p465
    $region42: #{resblock_forward.5} parent=5 // pred_check_branch
      %468 = sbr.rel (%p466) target = $region44
    $region43: #{resblock_forward.5} parent=5 // pred_region
      %s469 = ssub.s32 %s10, 2
      // Predicated region
      $region45: #{resblock_forward.5} parent=43 // pred_check
        %p470 = pneg %p133
      $region46: #{resblock_forward.5} parent=43 // pred_check_branch
        %472 = sbr.rel (%p470) target = $region48
      $region47: #{resblock_forward.5} parent=43 // pred_region
        %p473 = scmp.lt.s32.totalorder %s16, 1
        %s474 = scalar_select %p473, %s16, 1
        %s475 = smul.addr %s474, 32
        %s476 = smul.addr %s475, 8
        %s477 = scalar_lea.vmem %s4, %s476
      $region48: #{resblock_forward.5} parent=43 // pred_fallthru
        _
    $region44: #{resblock_forward.5} parent=5 // pred_fallthru
      _
  $region6: #{resblock_forward.5} parent=0 // loop_footer
    %s14 = sadd.s32 1, %s10
  $region7: #{resblock_forward.5} parent=0 // loop_footer_branch
    %9 = sbr.rel target = $region3
  $region8: #{resblock_forward.5} parent=0 // loop_exit
    _

// kernel: resblock_forward.4
$region0: #{resblock_forward.4}
  #allocation0 [shape = 'u32[]', space=smem, size = 0x4, offset = 0x4, fixed_abs, tag = 'smem constant byte address 0x4 - core index']
  #allocation1 [shape = 'u32[144,128]{1,0:T(1,128)}', space=vmem, size = 0x12000, scoped, tag = 'internal scratch']
  #allocation2 [shape = 'f32[18,18,4]{2,1,0:T(8,128)}', space=vmem, size = 0x36000, scoped, tag = 'scratch operand']
  %s0 = inlined_call_operand.vmem [shape: f32[2,16,16,4], index: 0, kind: input, shape index: {}]
  %s1 = inlined_call_operand.vmem [shape: f32[1,4], index: 1, kind: input, shape index: {}]
  %s2 = inlined_call_operand.vmem [shape: f32[1,4], index: 2, kind: input, shape index: {}]
  %s3 = inlined_call_operand.vmem [shape: f32[9,4,4], index: 3, kind: input, shape index: {}]
  %s4 = inlined_call_operand.vmem [shape: f32[2,16,16,4], index: 4, kind: output, shape index: {0}]
  %s5 = inlined_call_operand.vmem [shape: f32[2,2,4], index: 5, kind: output, shape index: {1}]
  %6 = xla_tuple %s4, %s5
  %s7 = sld [smem:[#allocation0]]
  $region57: #{resblock_forward.4} parent=0
    _
  %s9 = ssub.s32 1, %s7
  %s10 = scalar_select 0, %s9, %s7
  loop: start=0, step=1, limit=4
  $region2: #{resblock_forward.4} parent=0 // loop_pre_header
    _
  $region3: #{resblock_forward.4} parent=0 // loop_header
    %s12 = sphi 0, %s16
    %p13 = scmp.ge.s32.totalorder %s12, 4
    %s22 = sphi 0, %s24
    %s25 = sphi 0, %s22
    %s26 = sphi 0, %s25
    %s42 = sphi 0, %s26
    %s46 = sphi 0, %s46
    %s48 = sphi 0, %s46
    %s49 = sphi 0, %s48
    %s63 = sphi 0, %s49
    %s67 = sphi 0, %s67
    %s69 = sphi 0, %s67
    %s70 = sphi 0, %s69
    %s84 = sphi 0, %s70
    %s88 = sphi 0, %s88
    %s90 = sphi 0, %s88
    %s91 = sphi 0, %s90
    %s105 = sphi 0, %s91
    %s111 = sphi 0, %s113
    %s114 = sphi 0, %s111
    %s115 = sphi 0, %s114
    %s131 = sphi 0, %s115
    %s137 = sphi 0, %s139
    %s140 = sphi 0, %s137
    %s141 = sphi 0, %s140
    %s157 = sphi 0, %s141
  $region4: #{resblock_forward.4} parent=0 // loop_header_branch
    %15 = sbr.rel (%p13) target = $region8
  $region5: #{resblock_forward.4} parent=0 // loop_body
    %s17 = ssub.s32 %s12, 1
    %s18 = ssub.s32 %s12, 2
    %s19 = sadd.s32 %s12, 1
    %s20 = ssub.s32 %s12, %s19
    %p21 = scmp.eq.s32.totalorder %s20, 0
    %s23 = sadd.s32 %s22, 1
    %s24 = scalar_select %p21, %s22, %s23
    %p27 = pneg %p21
    %p28 = scmp.eq.s32.totalorder %s12, 1
    %p29 = por %p27, %p28
    %p30 = scmp.ne.s32.totalorder %s22, %s25
    %p31 = scmp.eq.s32.totalorder %s12, 0
    %p32 = por %p30, %p31
    %p33 = scmp.ne.s32.totalorder %s22, %s25
    %p34 = scmp.eq.s32.totalorder %s17, 1
    %p35 = por %p33, %p34
    %p36 = scmp.ne.s32.totalorder %s25, %s26
    %p37 = scmp.eq.s32.totalorder %s17, 0
    %p38 = por %p36, %p37
    %p39 = scmp.ne.s32.totalorder %s25, %s26
    %p40 = scmp.eq.s32.totalorder %s18, 1
    %p41 = por %p39, %p40
    %p43 = scmp.ne.s32.totalorder %s26, %s42
    %p44 = scmp.eq.s32.totalorder %s18, 0
    %p45 = por %p43, %p44
    %s47 = sadd.s32 %s46, 1
    %p50 = scmp.eq.s32.totalorder %s12, 1
    %p51 = scmp.ne.s32.totalorder %s46, %s48
    %p52 = scmp.eq.s32.totalorder %s12, 0
    %p53 = por %p51, %p52
    %p54 = scmp.ne.s32.totalorder %s46, %s48
    %p55 = scmp.eq.s32.totalorder %s17, 1
    %p56 = por %p54, %p55
    %p57 = scmp.ne.s32.totalorder %s48, %s49
    %p58 = scmp.eq.s32.totalorder %s17, 0
    %p59 = por %p57, %p58
    %p60 = scmp.ne.s32.totalorder %s48, %s49
    %p61 = scmp.eq.s32.totalorder %s18, 1
    %p62 = por %p60, %p61
    %p64 = scmp.ne.s32.totalorder %s49, %s63
    %p65 = scmp.eq.s32.totalorder %s18, 0
    %p66 = por %p64, %p65
    %s68 = sadd.s32 %s67, 1
    %p71 = scmp.eq.s32.totalorder %s12, 1
    %p72 = scmp.ne.s32.totalorder %s67, %s69
    %p73 = scmp.eq.s32.totalorder %s12, 0
    %p74 = por %p72, %p73
    %p75 = scmp.ne.s32.totalorder %s67, %s69
    %p76 = scmp.eq.s32.totalorder %s17, 1
    %p77 = por %p75, %p76
    %p78 = scmp.ne.s32.totalorder %s69, %s70
    %p79 = scmp.eq.s32.totalorder %s17, 0
    %p80 = por %p78, %p79
    %p81 = scmp.ne.s32.totalorder %s69, %s70
    %p82 = scmp.eq.s32.totalorder %s18, 1
    %p83 = por %p81, %p82
    %p85 = scmp.ne.s32.totalorder %s70, %s84
    %p86 = scmp.eq.s32.totalorder %s18, 0
    %p87 = por %p85, %p86
    %s89 = sadd.s32 %s88, 1
    %p92 = scmp.eq.s32.totalorder %s12, 1
    %p93 = scmp.ne.s32.totalorder %s88, %s90
    %p94 = scmp.eq.s32.totalorder %s12, 0
    %p95 = por %p93, %p94
    %p96 = scmp.ne.s32.totalorder %s88, %s90
    %p97 = scmp.eq.s32.totalorder %s17, 1
    %p98 = por %p96, %p97
    %p99 = scmp.ne.s32.totalorder %s90, %s91
    %p100 = scmp.eq.s32.totalorder %s17, 0
    %p101 = por %p99, %p100
    %p102 = scmp.ne.s32.totalorder %s90, %s91
    %p103 = scmp.eq.s32.totalorder %s18, 1
    %p104 = por %p102, %p103
    %p106 = scmp.ne.s32.totalorder %s91, %s105
    %p107 = scmp.eq.s32.totalorder %s18, 0
    %p108 = por %p106, %p107
    %s109 = ssub.s32 %s12, %s19
    %p110 = scmp.eq.s32.totalorder %s109, 0
    %s112 = sadd.s32 %s111, 1
    %s113 = scalar_select %p110, %s111, %s112
    %p116 = pneg %p110
    %p117 = scmp.eq.s32.totalorder %s12, 1
    %p118 = por %p116, %p117
    %p119 = scmp.ne.s32.totalorder %s111, %s114
    %p120 = scmp.eq.s32.totalorder %s12, 0
    %p121 = por %p119, %p120
    %p122 = scmp.ne.s32.totalorder %s111, %s114
    %p123 = scmp.eq.s32.totalorder %s17, 1
    %p124 = por %p122, %p123
    %p125 = scmp.ne.s32.totalorder %s114, %s115
    %p126 = scmp.eq.s32.totalorder %s17, 0
    %p127 = por %p125, %p126
    %p128 = scmp.ne.s32.totalorder %s114, %s115
    %p129 = scmp.eq.s32.totalorder %s18, 1
    %p130 = por %p128, %p129
    %p132 = scmp.ne.s32.totalorder %s115, %s131
    %p133 = scmp.eq.s32.totalorder %s18, 0
    %p134 = por %p132, %p133
    %s135 = ssub.s32 %s12, %s19
    %p136 = scmp.eq.s32.totalorder %s135, 0
    %s138 = sadd.s32 %s137, 1
    %s139 = scalar_select %p136, %s137, %s138
    %p142 = pneg %p136
    %p143 = scmp.eq.s32.totalorder %s12, 1
    %p144 = por %p142, %p143
    %p145 = scmp.ne.s32.totalorder %s137, %s140
    %p146 = scmp.eq.s32.totalorder %s12, 0
    %p147 = por %p145, %p146
    %p148 = scmp.ne.s32.totalorder %s137, %s140
    %p149 = scmp.eq.s32.totalorder %s17, 1
    %p150 = por %p148, %p149
    %p151 = scmp.ne.s32.totalorder %s140, %s141
    %p152 = scmp.eq.s32.totalorder %s17, 0
    %p153 = por %p151, %p152
    %p154 = scmp.ne.s32.totalorder %s140, %s141
    %p155 = scmp.eq.s32.totalorder %s18, 1
    %p156 = por %p154, %p155
    %p158 = scmp.ne.s32.totalorder %s141, %s157
    %p159 = scmp.eq.s32.totalorder %s18, 0
    %p160 = por %p158, %p159
    %p161 = scmp.le.s32.totalorder 1, %s12
    %p162 = scmp.lt.s32.totalorder %s12, 3
    %p163 = pnand %p161, %p162
    %p164 = pneg %p163
    // Predicated region
    $region9: #{resblock_forward.4} parent=5 // pred_check
      _
    $region10: #{resblock_forward.4} parent=5 // pred_check_branch
      %166 = sbr.rel (%p163) target = $region12
    $region11: #{resblock_forward.4} parent=5 // pred_region
      %s167 = ssub.s32 %s12, 1
      // Predicated region
      $region13: #{resblock_forward.4} parent=11 // pred_check
        %p168 = pneg %p59
      $region14: #{resblock_forward.4} parent=11 // pred_check_branch
        %170 = sbr.rel (%p168) target = $region16
      $region15: #{resblock_forward.4} parent=11 // pred_region
        _
      $region16: #{resblock_forward.4} parent=11 // pred_fallthru
        _
      // Predicated region
      $region17: #{resblock_forward.4} parent=11 // pred_check
        %p171 = pneg %p80
      $region18: #{resblock_forward.4} parent=11 // pred_check_branch
        %173 = sbr.rel (%p171) target = $region20
      $region19: #{resblock_forward.4} parent=11 // pred_region
        _
      $region20: #{resblock_forward.4} parent=11 // pred_fallthru
        _
      // Predicated region
      $region21: #{resblock_forward.4} parent=11 // pred_check
        %p174 = pneg %p101
      $region22: #{resblock_forward.4} parent=11 // pred_check_branch
        %176 = sbr.rel (%p174) target = $region24
      $region23: #{resblock_forward.4} parent=11 // pred_region
        _
      $region24: #{resblock_forward.4} parent=11 // pred_fallthru
        _
    $region12: #{resblock_forward.4} parent=5 // pred_fallthru
      _
    %p177 = scmp.lt.s32.totalorder %s12, 2
    // Predicated region
    $region25: #{resblock_forward.4} parent=5 // pred_check
      %p178 = pneg %p177
    $region26: #{resblock_forward.4} parent=5 // pred_check_branch
      %180 = sbr.rel (%p178) target = $region28
    $region27: #{resblock_forward.4} parent=5 // pred_region
      // Predicated region
      $region29: #{resblock_forward.4} parent=27 // pred_check
        %p181 = pneg %p32
      $region30: #{resblock_forward.4} parent=27 // pred_check_branch
        %183 = sbr.rel (%p181) target = $region32
      $region31: #{resblock_forward.4} parent=27 // pred_region
        %p184 = scmp.lt.s32.totalorder %s12, 1
        %s185 = scalar_select %p184, %s12, 1
        %s186 = smul.addr %s185, 32
        %s187 = smul.addr %s186, 8
        %s188 = scalar_lea.vmem %s0, %s187
      $region32: #{resblock_forward.4} parent=27 // pred_fallthru
        _
    $region28: #{resblock_forward.4} parent=5 // pred_fallthru
      _
    %p189 = scmp.le.s32.totalorder 1, %s12
    %p190 = scmp.lt.s32.totalorder %s12, 3
    %p191 = pnand %p189, %p190
    %p192 = pneg %p191
    // Predicated region
    $region33: #{resblock_forward.4} parent=5 // pred_check
      _
    $region34: #{resblock_forward.4} parent=5 // pred_check_branch
      %194 = sbr.rel (%p191) target = $region36
    $region35: #{resblock_forward.4} parent=5 // pred_region
      %s195 = ssub.s32 %s12, 1
      %p196 = scmp.lt.s32.totalorder %s17, 1
      %s197 = scalar_select %p196, %s17, 1
      %s198 = smul.addr %s197, 32
      %s199 = smul.addr %s198, 8
      %s200 = scalar_lea.vmem %s0, %s199
      %p201 = pneg %p38
      %p202 = pneg %p35
      %p203 = pneg %p59
      %p204 = pneg %p56
      %p205 = pneg %p80
      %p206 = pneg %p77
      %p207 = pneg %p101
      %p208 = pneg %p98
      %p209 = pneg %p127
      %p210 = pneg %p124
      %p211 = scmp.lt.s32.totalorder %s17, 1
      %s212 = scalar_select %p211, %s17, 1
      %s213 = smul.addr %s212, 32
      %s214 = smul.addr %s213, 8
      %s215 = scalar_lea.vmem %s4, %s214
      %p216 = pneg %p153
      %p217 = pneg %p150
      %p218 = scmp.lt.s32.totalorder %s17, 1
      %s219 = scalar_select %p218, %s17, 1
      %s220 = smul.addr %s219, 2
      %s221 = scalar_lea.vmem %s5, %s220
      %p222 = scmp.lt.s32.totalorder %s17, 1
      %s223 = scalar_select %p222, %s17, 1
      %s224 = smul.addr %s223, 32
      %s225 = smul.addr %s224, 8
      %s226 = scalar_lea.vmem %s0, %s225
      %p227 = scmp.lt.s32.totalorder %s17, 1
      %s228 = scalar_select %p227, %s17, 1
      %s229 = smul.addr %s228, 32
      %s230 = smul.addr %s229, 8
      %s231 = scalar_lea.vmem %s4, %s230
      %p232 = scmp.lt.s32.totalorder %s17, 1
      %s233 = scalar_select %p232, %s17, 1
      %s234 = smul.addr %s233, 2
      %s235 = scalar_lea.vmem %s5, %s234
      %v236 = vld [vmem:[%s1] sm:$0x1]
      %v237 = vld [vmem:[%s2] sm:$0x1]
      %v238 = vld [vmem:[%s226] sm:$0xff]
      %v239 = vld [vmem:[%s226 + $0x8] sm:$0xff]
      %v240 = vld [vmem:[%s226 + $0x10] sm:$0xff]
      %v241 = vld [vmem:[%s226 + $0x18] sm:$0xff]
      %v242 = vld [vmem:[%s226 + $0x20] sm:$0xff]
      %v243 = vld [vmem:[%s226 + $0x28] sm:$0xff]
      %v244 = vld [vmem:[%s226 + $0x30] sm:$0xff]
      %v245 = vld [vmem:[%s226 + $0x38] sm:$0xff]
      %v246 = vld [vmem:[%s226 + $0x40] sm:$0xff]
      %v247 = vld [vmem:[%s226 + $0x48] sm:$0xff]
      %v248 = vld [vmem:[%s226 + $0x50] sm:$0xff]
      %v249 = vld [vmem:[%s226 + $0x58] sm:$0xff]
      %v250 = vld [vmem:[%s226 + $0x60] sm:$0xff]
      %v251 = vld [vmem:[%s226 + $0x68] sm:$0xff]
      %v252 = vld [vmem:[%s226 + $0x70] sm:$0xff]
      %v253 = vld [vmem:[%s226 + $0x78] sm:$0xff]
      %v254 = vld [vmem:[%s226 + $0x80] sm:$0xff]
      %v255 = vld [vmem:[%s226 + $0x88] sm:$0xff]
      %v256 = vld [vmem:[%s226 + $0x90] sm:$0xff]
      %v257 = vld [vmem:[%s226 + $0x98] sm:$0xff]
      %v258 = vld [vmem:[%s226 + $0xa0] sm:$0xff]
      %v259 = vld [vmem:[%s226 + $0xa8] sm:$0xff]
      %v260 = vld [vmem:[%s226 + $0xb0] sm:$0xff]
      %v261 = vld [vmem:[%s226 + $0xb8] sm:$0xff]
      %v262 = vld [vmem:[%s226 + $0xc0] sm:$0xff]
      %v263 = vld [vmem:[%s226 + $0xc8] sm:$0xff]
      %v264 = vld [vmem:[%s226 + $0xd0] sm:$0xff]
      %v265 = vld [vmem:[%s226 + $0xd8] sm:$0xff]
      %v266 = vld [vmem:[%s226 + $0xe0] sm:$0xff]
      %v267 = vld [vmem:[%s226 + $0xe8] sm:$0xff]
      %v268 = vld [vmem:[%s226 + $0xf0] sm:$0xff]
      %v269 = vld [vmem:[%s226 + $0xf8] sm:$0xff]
      %v271 = vlaneseq
      %v272 = vshrl.u32 %v271, 7
      %v273 = vsub.s32 0, %v272
      %v274 = vrot.slane %v236, %v273
      %v276 = vmul.f32 %v238, %v274
      %v277 = vmul.f32 %v239, %v274
      %v278 = vmul.f32 %v240, %v274
      %v279 = vmul.f32 %v241, %v274
      %v280 = vmul.f32 %v242, %v274
      %v281 = vmul.f32 %v243, %v274
      %v282 = vmul.f32 %v244, %v274
      %v283 = vmul.f32 %v245, %v274
      %v284 = vmul.f32 %v246, %v274
      %v285 = vmul.f32 %v247, %v274
      %v286 = vmul.f32 %v248, %v274
      %v287 = vmul.f32 %v249, %v274
      %v288 = vmul.f32 %v250, %v274
      %v289 = vmul.f32 %v251, %v274
      %v290 = vmul.f32 %v252, %v274
      %v291 = vmul.f32 %v253, %v274
      %v292 = vmul.f32 %v254, %v274
      %v293 = vmul.f32 %v255, %v274
      %v294 = vmul.f32 %v256, %v274
      %v295 = vmul.f32 %v257, %v274
      %v296 = vmul.f32 %v258, %v274
      %v297 = vmul.f32 %v259, %v274
      %v298 = vmul.f32 %v260, %v274
      %v299 = vmul.f32 %v261, %v274
      %v300 = vmul.f32 %v262, %v274
      %v301 = vmul.f32 %v263, %v274
      %v302 = vmul.f32 %v264, %v274
      %v303 = vmul.f32 %v265, %v274
      %v304 = vmul.f32 %v266, %v274
      %v305 = vmul.f32 %v267, %v274
      %v306 = vmul.f32 %v268, %v274
      %v307 = vmul.f32 %v269, %v274
      %v309 = vlaneseq
      %v310 = vshrl.u32 %v309, 7
      %v311 = vsub.s32 0, %v310
      %v312 = vrot.slane %v237, %v311
      %v314 = vadd.f32 %v276, %v312
      %v315 = vadd.f32 %v277, %v312
      %v316 = vadd.f32 %v278, %v312
      %v317 = vadd.f32 %v279, %v312
      %v318 = vadd.f32 %v280, %v312
      %v319 = vadd.f32 %v281, %v312
      %v320 = vadd.f32 %v282, %v312
      %v321 = vadd.f32 %v283, %v312
      %v322 = vadd.f32 %v284, %v312
      %v323 = vadd.f32 %v285, %v312
      %v324 = vadd.f32 %v286, %v312
      %v325 = vadd.f32 %v287, %v312
      %v326 = vadd.f32 %v288, %v312
      %v327 = vadd.f32 %v289, %v312
      %v328 = vadd.f32 %v290, %v312
      %v329 = vadd.f32 %v291, %v312
      %v330 = vadd.f32 %v292, %v312
      %v331 = vadd.f32 %v293, %v312
      %v332 = vadd.f32 %v294, %v312
      %v333 = vadd.f32 %v295, %v312
      %v334 = vadd.f32 %v296, %v312
      %v335 = vadd.f32 %v297, %v312
      %v336 = vadd.f32 %v298, %v312
      %v337 = vadd.f32 %v299, %v312
      %v338 = vadd.f32 %v300, %v312
      %v339 = vadd.f32 %v301, %v312
      %v340 = vadd.f32 %v302, %v312
      %v341 = vadd.f32 %v303, %v312
      %v342 = vadd.f32 %v304, %v312
      %v343 = vadd.f32 %v305, %v312
      %v344 = vadd.f32 %v306, %v312
      %v345 = vadd.f32 %v307, %v312
      %v346 = vmax.f32 %v314, 0.0
      %v347 = vmax.f32 %v315, 0.0
      %v348 = vmax.f32 %v316, 0.0
      %v349 = vmax.f32 %v317, 0.0
      %v350 = vmax.f32 %v318, 0.0
      %v351 = vmax.f32 %v319, 0.0
      %v352 = vmax.f32 %v320, 0.0
      %v353 = vmax.f32 %v321, 0.0
      %v354 = vmax.f32 %v322, 0.0
      %v355 = vmax.f32 %v323, 0.0
      %v356 = vmax.f32 %v324, 0.0
      %v357 = vmax.f32 %v325, 0.0
      %v358 = vmax.f32 %v326, 0.0
      %v359 = vmax.f32 %v327, 0.0
      %v360 = vmax.f32 %v328, 0.0
      %v361 = vmax.f32 %v329, 0.0
      %v362 = vmax.f32 %v330, 0.0
      %v363 = vmax.f32 %v331, 0.0
      %v364 = vmax.f32 %v332, 0.0
      %v365 = vmax.f32 %v333, 0.0
      %v366 = vmax.f32 %v334, 0.0
      %v367 = vmax.f32 %v335, 0.0
      %v368 = vmax.f32 %v336, 0.0
      %v369 = vmax.f32 %v337, 0.0
      %v370 = vmax.f32 %v338, 0.0
      %v371 = vmax.f32 %v339, 0.0
      %v372 = vmax.f32 %v340, 0.0
      %v373 = vmax.f32 %v341, 0.0
      %v374 = vmax.f32 %v342, 0.0
      %v375 = vmax.f32 %v343, 0.0
      %v376 = vmax.f32 %v344, 0.0
      %v377 = vmax.f32 %v345, 0.0
      %vm378 = vcmask 31744
      %379 = vst.msk [vmem:[#allocation2] sm:$0xff] %vm378, 0.0
      %380 = vst.msk [vmem:[#allocation2 + $0x8] sm:$0xff] %vm378, 0.0
      %vm381 = vcmask 25600
      %382 = vst.msk [vmem:[#allocation2 + $0x10] sm:$0x3] %vm381, 0.0
      %s383 = scalar_lea.vmem [#allocation2], 408
      %384 = vst.msk [vmem:[%s383] sm:$0xff] %vm378, 0.0
      %385 = vst.msk [vmem:[%s383 + $0x8] sm:$0xff] %vm378, 0.0
      %386 = vst.msk [vmem:[%s383 + $0x10] sm:$0x3] %vm381, 0.0
      %vm387 = vcmask 24576
      %388 = vst.msk [vmem:[#allocation2] sm:$0x1] %vm387, 0.0
      %389 = vst.msk [vmem:[#allocation2 + $0x18] sm:$0x1] %vm387, 0.0
      %390 = vst.msk [vmem:[#allocation2 + $0x30] sm:$0x1] %vm387, 0.0
      %391 = vst.msk [vmem:[#allocation2 + $0x48] sm:$0x1] %vm387, 0.0
      %392 = vst.msk [vmem:[#allocation2 + $0x60] sm:$0x1] %vm387, 0.0
      %393 = vst.msk [vmem:[#allocation2 + $0x78] sm:$0x1] %vm387, 0.0
      %394 = vst.msk [vmem:[#allocation2 + $0x90] sm:$0x1] %vm387, 0.0
      %395 = vst.msk [vmem:[#allocation2 + $0xa8] sm:$0x1] %vm387, 0.0
      %396 = vst.msk [vmem:[#allocation2 + $0xc0] sm:$0x1] %vm387, 0.0
      %397 = vst.msk [vmem:[#allocation2 + $0xd8] sm:$0x1] %vm387, 0.0
      %398 = vst.msk [vmem:[#allocation2 + $0xf0] sm:$0x1] %vm387, 0.0
      %399 = vst.msk [vmem:[#allocation2 + $0x108] sm:$0x1] %vm387, 0.0
      %400 = vst.msk [vmem:[#allocation2 + $0x120] sm:$0x1] %vm387, 0.0
      %401 = vst.msk [vmem:[#allocation2 + $0x138] sm:$0x1] %vm387, 0.0
      %402 = vst.msk [vmem:[#allocation2 + $0x150] sm:$0x1] %vm387, 0.0
      %403 = vst.msk [vmem:[#allocation2 + $0x168] sm:$0x1] %vm387, 0.0
      %404 = vst.msk [vmem:[#allocation2 + $0x180] sm:$0x1] %vm387, 0.0
      %405 = vst.msk [vmem:[#allocation2 + $0x198] sm:$0x1] %vm387, 0.0
      %406 = vst.msk [vmem:[#allocation2 + $0x11] sm:$0x1] %vm387, 0.0
      %407 = vst.msk [vmem:[#allocation2 + $0x29] sm:$0x1] %vm387, 0.0
      %408 = vst.msk [vmem:[#allocation2 + $0x41] sm:$0x1] %vm387, 0.0
      %409 = vst.msk [vmem:[#allocation2 + $0x59] sm:$0x1] %vm387, 0.0
      %410 = vst.msk [vmem:[#allocation2 + $0x71] sm:$0x1] %vm387, 0.0
      %411 = vst.msk [vmem:[#allocation2 + $0x89] sm:$0x1] %vm387, 0.0
      %412 = vst.msk [vmem:[#allocation2 + $0xa1] sm:$0x1] %vm387, 0.0
      %413 = vst.msk [vmem:[#allocation2 + $0xb9] sm:$0x1] %vm387, 0.0
      %414 = vst.msk [vmem:[#allocation2 + $0xd1] sm:$0x1] %vm387, 0.0
      %415 = vst.msk [vmem:[#allocation2 + $0xe9] sm:$0x1] %vm387, 0.0
      %416 = vst.msk [vmem:[#allocation2 + $0x101] sm:$0x1] %vm387, 0.0
      %417 = vst.msk [vmem:[#allocation2 + $0x119] sm:$0x1] %vm387, 0.0
      %418 = vst.msk [vmem:[#allocation2 + $0x131] sm:$0x1] %vm387, 0.0
      %419 = vst.msk [vmem:[#allocation2 + $0x149] sm:$0x1] %vm387, 0.0
      %420 = vst.msk [vmem:[#allocation2 + $0x161] sm:$0x1] %vm387, 0.0
      %421 = vst.msk [vmem:[#allocation2 + $0x179] sm:$0x1] %vm387, 0.0
      %422 = vst.msk [vmem:[#allocation2 + $0x191] sm:$0x1] %vm387, 0.0
      %423 = vst.msk [vmem:[#allocation2 + $0x1a9] sm:$0x1] %vm387, 0.0
      %s424 = scalar_lea.vmem [#allocation2], 24
      %425 = vst.msk [vmem:[%s424 + $0x1] sm:$0xff] %vm378, %v346
      %426 = vst.msk [vmem:[%s424 + $0x9] sm:$0xff] %vm378, %v347
      %427 = vst.msk [vmem:[%s424 + $0x19] sm:$0xff] %vm378, %v348
      %428 = vst.msk [vmem:[%s424 + $0x21] sm:$0xff] %vm378, %v349
      %429 = vst.msk [vmem:[%s424 + $0x31] sm:$0xff] %vm378, %v350
      %430 = vst.msk [vmem:[%s424 + $0x39] sm:$0xff] %vm378, %v351
      %431 = vst.msk [vmem:[%s424 + $0x49] sm:$0xff] %vm378, %v352
      %432 = vst.msk [vmem:[%s424 + $0x51] sm:$0xff] %vm378, %v353
      %433 = vst.msk [vmem:[%s424 + $0x61] sm:$0xff] %vm378, %v354
      %434 = vst.msk [vmem:[%s424 + $0x69] sm:$0xff] %vm378, %v355
      %435 = vst.msk [vmem:[%s424 + $0x79] sm:$0xff] %vm378, %v356
      %436 = vst.msk [vmem:[%s424 + $0x81] sm:$0xff] %vm378, %v357
      %437 = vst.msk [vmem:[%s424 + $0x91] sm:$0xff] %vm378, %v358
      %438 = vst.msk [vmem:[%s424 + $0x99] sm:$0xff] %vm378, %v359
      %439 = vst.msk [vmem:[%s424 + $0xa9] sm:$0xff] %vm378, %v360
      %440 = vst.msk [vmem:[%s424 + $0xb1] sm:$0xff] %vm378, %v361
      %441 = vst.msk [vmem:[%s424 + $0xc1] sm:$0xff] %vm378, %v362
      %442 = vst.msk [vmem:[%s424 + $0xc9] sm:$0xff] %vm378, %v363
      %443 = vst.msk [vmem:[%s424 + $0xd9] sm:$0xff] %vm378, %v364
      %444 = vst.msk [vmem:[%s424 + $0xe1] sm:$0xff] %vm378, %v365
      %445 = vst.msk [vmem:[%s424 + $0xf1] sm:$0xff] %vm378, %v366
      %446 = vst.msk [vmem:[%s424 + $0xf9] sm:$0xff] %vm378, %v367
      %447 = vst.msk [vmem:[%s424 + $0x109] sm:$0xff] %vm378, %v368
      %448 = vst.msk [vmem:[%s424 + $0x111] sm:$0xff] %vm378, %v369
      %449 = vst.msk [vmem:[%s424 + $0x121] sm:$0xff] %vm378, %v370
      %450 = vst.msk [vmem:[%s424 + $0x129] sm:$0xff] %vm378, %v371
      %451 = vst.msk [vmem:[%s424 + $0x139] sm:$0xff] %vm378, %v372
      %452 = vst.msk [vmem:[%s424 + $0x141] sm:$0xff] %vm378, %v373
      %453 = vst.msk [vmem:[%s424 + $0x151] sm:$0xff] %vm378, %v374
      %454 = vst.msk [vmem:[%s424 + $0x159] sm:$0xff] %vm378, %v375
      %455 = vst.msk [vmem:[%s424 + $0x169] sm:$0xff] %vm378, %v376
      %456 = vst.msk [vmem:[%s424 + $0x171] sm:$0xff] %vm378, %v377
      %v457 = vld [vmem:[#allocation2] sm:$0xff]
      %v458 = vld [vmem:[#allocation2 + $0x8] sm:$0xff]
      %v459 = vld [vmem:[#allocation2 + $0x18] sm:$0xff]
      %v460 = vld [vmem:[#allocation2 + $0x20] sm:$0xff]
      %v461 = vld [vmem:[#allocation2 + $0x30] sm:$0xff]
      %v462 = vld [vmem:[#allocation2 + $0x38] sm:$0xff]
      %v463 = vld [vmem:[#allocation2 + $0x48] sm:$0xff]
      %v464 = vld [vmem:[#allocation2 + $0x50] sm:$0xff]
      %v465 = vld [vmem:[#allocation2 + $0x60] sm:$0xff]
      %v466 = vld [vmem:[#allocation2 + $0x68] sm:$0xff]
      %v467 = vld [vmem:[#allocation2 + $0x78] sm:$0xff]
      %v468 = vld [vmem:[#allocation2 + $0x80] sm:$0xff]
      %v469 = vld [vmem:[#allocation2 + $0x90] sm:$0xff]
      %v470 = vld [vmem:[#allocation2 + $0x98] sm:$0xff]
      %v471 = vld [vmem:[#allocation2 + $0xa8] sm:$0xff]
      %v472 = vld [vmem:[#allocation2 + $0xb0] sm:$0xff]
      %v473 = vld [vmem:[#allocation2 + $0xc0] sm:$0xff]
      %v474 = vld [vmem:[#allocation2 + $0xc8] sm:$0xff]
      %v475 = vld [vmem:[#allocation2 + $0xd8] sm:$0xff]
      %v476 = vld [vmem:[#allocation2 + $0xe0] sm:$0xff]
      %v477 = vld [vmem:[#allocation2 + $0xf0] sm:$0xff]
      %v478 = vld [vmem:[#allocation2 + $0xf8] sm:$0xff]
      %v479 = vld [vmem:[#allocation2 + $0x108] sm:$0xff]
      %v480 = vld [vmem:[#allocation2 + $0x110] sm:$0xff]
      %v481 = vld [vmem:[#allocation2 + $0x120] sm:$0xff]
      %v482 = vld [vmem:[#allocation2 + $0x128] sm:$0xff]
      %v483 = vld [vmem:[#allocation2 + $0x138] sm:$0xff]
      %v484 = vld [vmem:[#allocation2 + $0x140] sm:$0xff]
      %v485 = vld [vmem:[#allocation2 + $0x150] sm:$0xff]
      %v486 = vld [vmem:[#allocation2 + $0x158] sm:$0xff]
      %v487 = vld [vmem:[#allocation2 + $0x168] sm:$0xff]
      %v488 = vld [vmem:[#allocation2 + $0x170] sm:$0xff]
      %v489 = vld [vmem:[%s3] sm:$0xf]
      %v490 = vld [vmem:[#allocation2 + $0x1] sm:$0xff]
      %v491 = vld [vmem:[#allocation2 + $0x9] sm:$0xff]
      %v492 = vld [vmem:[#allocation2 + $0x19] sm:$0xff]
      %v493 = vld [vmem:[#allocation2 + $0x21] sm:$0xff]
      %v494 = vld [vmem:[#allocation2 + $0x31] sm:$0xff]
      %v495 = vld [vmem:[#allocation2 + $0x39] sm:$0xff]
      %v496 = vld [vmem:[#allocation2 + $0x49] sm:$0xff]
      %v497 = vld [vmem:[#allocation2 + $0x51] sm:$0xff]
      %v498 = vld [vmem:[#allocation2 + $0x61] sm:$0xff]
      %v499 = vld [vmem:[#allocation2 + $0x69] sm:$0xff]
      %v500 = vld [vmem:[#allocation2 + $0x79] sm:$0xff]
      %v501 = vld [vmem:[#allocation2 + $0x81] sm:$0xff]
      %v502 = vld [vmem:[#allocation2 + $0x91] sm:$0xff]
      %v503 = vld [vmem:[#allocation2 + $0x99] sm:$0xff]
      %v504 = vld [vmem:[#allocation2 + $0xa9] sm:$0xff]
      %v505 = vld [vmem:[#allocation2 + $0xb1] sm:$0xff]
      %v506 = vld [vmem:[#allocation2 + $0xc1] sm:$0xff]
      %v507 = vld [vmem:[#allocation2 + $0xc9] sm:$0xff]
      %v508 = vld [vmem:[#allocation2 + $0xd9] sm:$0xff]
      %v509 = vld [vmem:[#allocation2 + $0xe1] sm:$0xff]
      %v510 = vld [vmem:[#allocation2 + $0xf1] sm:$0xff]
      %v511 = vld [vmem:[#allocation2 + $0xf9] sm:$0xff]
      %v512 = vld [vmem:[#allocation2 + $0x109] sm:$0xff]
      %v513 = vld [vmem:[#allocation2 + $0x111] sm:$0xff]
      %v514 = vld [vmem:[#allocation2 + $0x121] sm:$0xff]
      %v515 = vld [vmem:[#allocation2 + $0x129] sm:$0xff]
      %v516 = vld [vmem:[#allocation2 + $0x139] sm:$0xff]
      %v517 = vld [vmem:[#allocation2 + $0x141] sm:$0xff]
      %v518 = vld [vmem:[#allocation2 + $0x151] sm:$0xff]
      %v519 = vld [vmem:[#allocation2 + $0x159] sm:$0xff]
      %v520 = vld [vmem:[#allocation2 + $0x169] sm:$0xff]
      %v521 = vld [vmem:[#allocation2 + $0x171] sm:$0xff]
      %s522 = scalar_lea.vmem %s3, 4
      %v523 = vld [vmem:[%s522] sm:$0xf]
      %v525 = vsel %vm378, %v490, 0
      %v528 = vsel %vm378, %v491, 0
      %v531 = vsel %vm378, %v492, 0
      %v534 = vsel %vm378, %v493, 0
      %v537 = vsel %vm378, %v494, 0
      %v540 = vsel %vm378, %v495, 0
      %v543 = vsel %vm378, %v496, 0
      %v546 = vsel %vm378, %v497, 0
      %v549 = vsel %vm378, %v498, 0
      %v552 = vsel %vm378, %v499, 0
      %v555 = vsel %vm378, %v500, 0
      %v558 = vsel %vm378, %v501, 0
      %v561 = vsel %vm378, %v502, 0
      %v564 = vsel %vm378, %v503, 0
      %v567 = vsel %vm378, %v504, 0
      %v570 = vsel %vm378, %v505, 0
      %v573 = vsel %vm378, %v506, 0
      %v576 = vsel %vm378, %v507, 0
      %v579 = vsel %vm378, %v508, 0
      %v582 = vsel %vm378, %v509, 0
      %v585 = vsel %vm378, %v510, 0
      %v588 = vsel %vm378, %v511, 0
      %v591 = vsel %vm378, %v512, 0
      %v594 = vsel %vm378, %v513, 0
      %v597 = vsel %vm378, %v514, 0
      %v600 = vsel %vm378, %v515, 0
      %v603 = vsel %vm378, %v516, 0
      %v606 = vsel %vm378, %v517, 0
      %v609 = vsel %vm378, %v518, 0
      %v612 = vsel %vm378, %v519, 0
      %v615 = vsel %vm378, %v520, 0
      %v618 = vsel %vm378, %v521, 0
      %vm620 = vcmask 1043456
      %v622 = vsel %vm620, %v523, 0
      %624 = vmatprep.subr.mxu0 0.0
      %625 = vmatpush1.msra.mxu0 %v622
      %626 = vmatprep.subr.mxu0 0.0
      %627 = vmatpush1.msra.mxu0 0.0
      %628 = vmatprep.subr.mxu0 0.0
      %629 = vmatpush1.msra.mxu0 0.0
      %630 = vmatprep.subr.mxu0 0.0
      %631 = vmatpush1.msra.mxu0 0.0
      %632 = vmatprep.subr.mxu0 0.0
      %633 = vmatpush1.msra.mxu0 0.0
      %634 = vmatprep.subr.mxu0 0.0
      %635 = vmatpush1.msra.mxu0 0.0
      %636 = vmatprep.subr.mxu0 0.0
      %637 = vmatpush1.msra.mxu0 0.0
      %638 = vmatprep.subr.mxu0 0.0
      %639 = vmatpush1.msra.mxu0 0.0
      %640 = vmatprep.subr.mxu0 0.0
      %641 = vmatpush1.msra.mxu0 0.0
      %642 = vmatprep.subr.mxu0 0.0
      %643 = vmatpush1.msra.mxu0 0.0
      %644 = vmatprep.subr.mxu0 0.0
      %645 = vmatpush1.msra.mxu0 0.0
      %646 = vmatprep.subr.mxu0 0.0
      %647 = vmatpush1.msra.mxu0 0.0
      %648 = vmatprep.subr.mxu0 0.0
      %649 = vmatpush1.msra.mxu0 0.0
      %650 = vmatprep.subr.mxu0 0.0
      %651 = vmatpush1.msra.mxu0 0.0
      %652 = vmatprep.subr.mxu0 0.0
      %653 = vmatpush1.msra.mxu0 0.0
      %654 = vmatprep.subr.mxu0 0.0
      %655 = vmatpush1.msra.mxu0 0.0
      %656 = vmatprep.subr.mxu0 0.0
      %657 = vmatpush1.msra.mxu0 0.0
      %658 = vmatprep.subr.mxu0 0.0
      %659 = vmatpush1.msra.mxu0 0.0
      %660 = vmatprep.subr.mxu0 0.0
      %661 = vmatpush1.msra.mxu0 0.0
      %662 = vmatprep.subr.mxu0 0.0
      %663 = vmatpush1.msra.mxu0 0.0
      %664 = vmatprep.subr.mxu0 0.0
      %665 = vmatpush1.msra.mxu0 0.0
      %666 = vmatprep.subr.mxu0 0.0
      %667 = vmatpush1.msra.mxu0 0.0
      %668 = vmatprep.subr.mxu0 0.0
      %669 = vmatpush1.msra.mxu0 0.0
      %670 = vmatprep.subr.mxu0 0.0
      %671 = vmatpush1.msra.mxu0 0.0
      %672 = vmatprep.subr.mxu0 0.0
      %673 = vmatpush1.msra.mxu0 0.0
      %674 = vmatprep.subr.mxu0 0.0
      %675 = vmatpush1.msra.mxu0 0.0
      %676 = vmatprep.subr.mxu0 0.0
      %677 = vmatpush1.msra.mxu0 0.0
      %678 = vmatprep.subr.mxu0 0.0
      %679 = vmatpush1.msra.mxu0 0.0
      %680 = vmatprep.subr.mxu0 0.0
      %681 = vmatpush1.msra.mxu0 0.0
      %682 = vmatprep.subr.mxu0 0.0
      %683 = vmatpush1.msra.mxu0 0.0
      %684 = vmatprep.subr.mxu0 0.0
      %685 = vmatpush1.msra.mxu0 0.0
      %686 = vmatprep.subr.mxu0 0.0
      %687 = vmatpush1.msra.mxu0 0.0
      %688 = vmatprep.mubr.f32.mxu0 0.0
      %689 = vmatmul.mubr.f32.gmra.mrb[0].mxu0 %v525
      %v690 = vpop.f32.mrb[0].mxu0
      %v691 = vadd.f32 0.0, %v690
      %v692 = vpop.f32.mrb[0].mxu0
      %693 = vmatprep.mubr.f32.mxu0 0.0
      %694 = vmatmul.mubr.f32.gmra.mrb[0].mxu0 %v528
      %v695 = vpop.f32.mrb[0].mxu0
      %v696 = vadd.f32 0.0, %v695
      %v697 = vpop.f32.mrb[0].mxu0
      %698 = vmatprep.mubr.f32.mxu0 0.0
      %699 = vmatmul.mubr.f32.gmra.mrb[0].mxu0 %v531
      %v700 = vpop.f32.mrb[0].mxu0
      %v701 = vadd.f32 0.0, %v700
      %v702 = vpop.f32.mrb[0].mxu0
      %703 = vmatprep.mubr.f32.mxu0 0.0
      %704 = vmatmul.mubr.f32.gmra.mrb[0].mxu0 %v534
      %v705 = vpop.f32.mrb[0].mxu0
      %v706 = vadd.f32 0.0, %v705
      %v707 = vpop.f32.mrb[0].mxu0
      %708 = vmatprep.mubr.f32.mxu0 0.0
      %709 = vmatmul.mubr.f32.gmra.mrb[0].mxu0 %v537
      %v710 = vpop.f32.mrb[0].mxu0
      %v711 = vadd.f32 0.0, %v710
      %v712 = vpop.f32.mrb[0].mxu0
      %713 = vmatprep.mubr.f32.mxu0 0.0
      %714 = vmatmul.mubr.f32.gmra.mrb[0].mxu0 %v540
      %v715 = vpop.f32.mrb[0].mxu0
      %v716 = vadd.f32 0.0, %v715
      %v717 = vpop.f32.mrb[0].mxu0
      %718 = vmatprep.mubr.f32.mxu0 0.0
      %719 = vmatmul.mubr.f32.gmra.mrb[0].mxu0 %v543
      %v720 = vpop.f32.mrb[0].mxu0
      %v721 = vadd.f32 0.0, %v720
      %v722 = vpop.f32.mrb[0].mxu0
      %723 = vmatprep.mubr.f32.mxu0 0.0
      %724 = vmatmul.mubr.f32.gmra.mrb[0].mxu0 %v546
      %v725 = vpop.f32.mrb[0].mxu0
      %v726 = vadd.f32 0.0, %v725
      %v727 = vpop.f32.mrb[0].mxu0
      %728 = vmatprep.mubr.f32.mxu0 0.0
      %729 = vmatmul.mubr.f32.gmra.mrb[0].mxu0 %v549
      %v730 = vpop.f32.mrb[0].mxu0
      %v731 = vadd.f32 0.0, %v730
      %v732 = vpop.f32.mrb[0].mxu0
      %733 = vmatprep.mubr.f32.mxu0 0.0
      %734 = vmatmul.mubr.f32.gmra.mrb[0].mxu0 %v552
      %v735 = vpop.f32.mrb[0].mxu0
      %v736 = vadd.f32 0.0, %v735
      %v737 = vpop.f32.mrb[0].mxu0
      %738 = vmatprep.mubr.f32.mxu0 0.0
      %739 = vmatmul.mubr.f32.gmra.mrb[0].mxu0 %v555
      %v740 = vpop.f32.mrb[0].mxu0
      %v741 = vadd.f32 0.0, %v740
      %v742 = vpop.f32.mrb[0].mxu0
      %743 = vmatprep.mubr.f32.mxu0 0.0
      %744 = vmatmul.mubr.f32.gmra.mrb[0].mxu0 %v558
      %v745 = vpop.f32.mrb[0].mxu0
      %v746 = vadd.f32 0.0, %v745
      %v747 = vpop.f32.mrb[0].mxu0
      %748 = vmatprep.mubr.f32.mxu0 0.0
      %749 = vmatmul.mubr.f32.gmra.mrb[0].mxu0 %v561
      %v750 = vpop.f32.mrb[0].mxu0
      %v751 = vadd.f32 0.0, %v750
      %v752 = vpop.f32.mrb[0].mxu0
      %753 = vmatprep.mubr.f32.mxu0 0.0
      %754 = vmatmul.mubr.f32.gmra.mrb[0].mxu0 %v564
      %v755 = vpop.f32.mrb[0].mxu0
      %v756 = vadd.f32 0.0, %v755
      %v757 = vpop.f32.mrb[0].mxu0
      %758 = vmatprep.mubr.f32.mxu0 0.0
      %759 = vmatmul.mubr.f32.gmra.mrb[0].mxu0 %v567
      %v760 = vpop.f32.mrb[0].mxu0
      %v761 = vadd.f32 0.0, %v760
      %v762 = vpop.f32.mrb[0].mxu0
      %763 = vmatprep.mubr.f32.mxu0 0.0
      %764 = vmatmul.mubr.f32.gmra.mrb[0].mxu0 %v570
      %v765 = vpop.f32.mrb[0].mxu0
      %v766 = vadd.f32 0.0, %v765
      %v767 = vpop.f32.mrb[0].mxu0
      %768 = vmatprep.mubr.f32.mxu0 0.0
      %769 = vmatmul.mubr.f32.gmra.mrb[0].mxu0 %v573
      %v770 = vpop.f32.mrb[0].mxu0
      %v771 = vadd.f32 0.0, %v770
      %v772 = vpop.f32.mrb[0].mxu0
      %773 = vmatprep.mubr.f32.mxu0 0.0
      %774 = vmatmul.mubr.f32.gmra.mrb[0].mxu0 %v576
      %v775 = vpop.f32.mrb[0].mxu0
      %v776 = vadd.f32 0.0, %v775
      %v777 = vpop.f32.mrb[0].mxu0
      %778 = vmatprep.mubr.f32.mxu0 0.0
      %779 = vmatmul.mubr.f32.gmra.mrb[0].mxu0 %v579
      %v780 = vpop.f32.mrb[0].mxu0
      %v781 = vadd.f32 0.0, %v780
      %v782 = vpop.f32.mrb[0].mxu0
      %783 = vmatprep.mubr.f32.mxu0 0.0
      %784 = vmatmul.mubr.f32.gmra.mrb[0].mxu0 %v582
      %v785 = vpop.f32.mrb[0].mxu0
      %v786 = vadd.f32 0.0, %v785
      %v787 = vpop.f32.mrb[0].mxu0
      %788 = vmatprep.mubr.f32.mxu0 0.0
      %789 = vmatmul.mubr.f32.gmra.mrb[0].mxu0 %v585
      %v790 = vpop.f32.mrb[0].mxu0
      %v791 = vadd.f32 0.0, %v790
      %v792 = vpop.f32.mrb[0].mxu0
      %793 = vmatprep.mubr.f32.mxu0 0.0
      %794 = vmatmul.mubr.f32.gmra.mrb[0].mxu0 %v588
      %v795 = vpop.f32.mrb[0].mxu0
      %v796 = vadd.f32 0.0, %v795
      %v797 = vpop.f32.mrb[0].mxu0
      %798 = vmatprep.mubr.f32.mxu0 0.0
      %799 = vmatmul.mubr.f32.gmra.mrb[0].mxu0 %v591
      %v800 = vpop.f32.mrb[0].mxu0
      %v801 = vadd.f32 0.0, %v800
      %v802 = vpop.f32.mrb[0].mxu0
      %803 = vmatprep.mubr.f32.mxu0 0.0
      %804 = vmatmul.mubr.f32.gmra.mrb[0].mxu0 %v594
      %v805 = vpop.f32.mrb[0].mxu0
      %v806 = vadd.f32 0.0, %v805
      %v807 = vpop.f32.mrb[0].mxu0
      %808 = vmatprep.mubr.f32.mxu0 0.0
      %809 = vmatmul.mubr.f32.gmra.mrb[0].mxu0 %v597
      %v810 = vpop.f32.mrb[0].mxu0
      %v811 = vadd.f32 0.0, %v810
      %v812 = vpop.f32.mrb[0].mxu0
      %813 = vmatprep.mubr.f32.mxu0 0.0
      %814 = vmatmul.mubr.f32.gmra.mrb[0].mxu0 %v600
      %v815 = vpop.f32.mrb[0].mxu0
      %v816 = vadd.f32 0.0, %v815
      %v817 = vpop.f32.mrb[0].mxu0
      %818 = vmatprep.mubr.f32.mxu0 0.0
      %819 = vmatmul.mubr.f32.gmra.mrb[0].mxu0 %v603
      %v820 = vpop.f32.mrb[0].mxu0
      %v821 = vadd.f32 0.0, %v820
      %v822 = vpop.f32.mrb[0].mxu0
      %823 = vmatprep.mubr.f32.mxu0 0.0
      %824 = vmatmul.mubr.f32.gmra.mrb[0].mxu0 %v606
      %v825 = vpop.f32.mrb[0].mxu0
      %v826 = vadd.f32 0.0, %v825
      %v827 = vpop.f32.mrb[0].mxu0
      %828 = vmatprep.mubr.f32.mxu0 0.0
      %829 = vmatmul.mubr.f32.gmra.mrb[0].mxu0 %v609
      %v830 = vpop.f32.mrb[0].mxu0
      %v831 = vadd.f32 0.0, %v830
      %v832 = vpop.f32.mrb[0].mxu0
      %833 = vmatprep.mubr.f32.mxu0 0.0
      %834 = vmatmul.mubr.f32.gmra.mrb[0].mxu0 %v612
      %v835 = vpop.f32.mrb[0].mxu0
      %v836 = vadd.f32 0.0, %v835
      %v837 = vpop.f32.mrb[0].mxu0
      %838 = vmatprep.mubr.f32.mxu0 0.0
      %839 = vmatmul.mubr.f32.gmra.mrb[0].mxu0 %v615
      %v840 = vpop.f32.mrb[0].mxu0
      %v841 = vadd.f32 0.0, %v840
      %v842 = vpop.f32.mrb[0].mxu0
      %843 = vmatprep.mubr.f32.mxu0 0.0
      %844 = vmatmul.mubr.f32.gmra.mrb[0].mxu0 %v618
      %v845 = vpop.f32.mrb[0].mxu0
      %v846 = vadd.f32 0.0, %v845
      %v847 = vpop.f32.mrb[0].mxu0
      %848 = vdwg.mxu0
      %v850 = vsel %vm378, %v457, 0
      %v853 = vsel %vm378, %v458, 0
      %v856 = vsel %vm378, %v459, 0
      %v859 = vsel %vm378, %v460, 0
      %v862 = vsel %vm378, %v461, 0
      %v865 = vsel %vm378, %v462, 0
      %v868 = vsel %vm378, %v463, 0
      %v871 = vsel %vm378, %v464, 0
      %v874 = vsel %vm378, %v465, 0
      %v877 = vsel %vm378, %v466, 0
      %v880 = vsel %vm378, %v467, 0
      %v883 = vsel %vm378, %v468, 0
      %v886 = vsel %vm378, %v469, 0
      %v889 = vsel %vm378, %v470, 0
      %v892 = vsel %vm378, %v471, 0
      %v895 = vsel %vm378, %v472, 0
      %v898 = vsel %vm378, %v473, 0
      %v901 = vsel %vm378, %v474, 0
      %v904 = vsel %vm378, %v475, 0
      %v907 = vsel %vm378, %v476, 0
      %v910 = vsel %vm378, %v477, 0
      %v913 = vsel %vm378, %v478, 0
      %v916 = vsel %vm378, %v479, 0
      %v919 = vsel %vm378, %v480, 0
      %v922 = vsel %vm378, %v481, 0
      %v925 = vsel %vm378, %v482, 0
      %v928 = vsel %vm378, %v483, 0
      %v931 = vsel %vm378, %v484, 0
      %v934 = vsel %vm378, %v485, 0
      %v937 = vsel %vm378, %v486, 0
      %v940 = vsel %vm378, %v487, 0
      %v943 = vsel %vm378, %v488, 0
      %v946 = vsel %vm620, %v489, 0
      %948 = vmatprep.subr.mxu0 0.0
      %949 = vmatpush1.msra.mxu0 %v946
      %950 = vmatprep.subr.mxu0 0.0
      %951 = vmatpush1.msra.mxu0 0.0
      %952 = vmatprep.subr.mxu0 0.0
      %953 = vmatpush1.msra.mxu0 0.0
      %954 = vmatprep.subr.mxu0 0.0
      %955 = vmatpush1.msra.mxu0 0.0
      %956 = vmatprep.subr.mxu0 0.0
      %957 = vmatpush1.msra.mxu0 0.0
      %958 = vmatprep.subr.mxu0 0.0
      %959 = vmatpush1.msra.mxu0 0.0
      %960 = vmatprep.subr.mxu0 0.0
      %961 = vmatpush1.msra.mxu0 0.0
      %962 = vmatprep.subr.mxu0 0.0
      %963 = vmatpush1.msra.mxu0 0.0
      %964 = vmatprep.subr.mxu0 0.0
      %965 = vmatpush1.msra.mxu0 0.0
      %966 = vmatprep.subr.mxu0 0.0
      %967 = vmatpush1.msra.mxu0 0.0
      %968 = vmatprep.subr.mxu0 0.0
      %969 = vmatpush1.msra.mxu0 0.0
      %970 = vmatprep.subr.mxu0 0.0
      %971 = vmatpush1.msra.mxu0 0.0
      %972 = vmatprep.subr.mxu0 0.0
      %973 = vmatpush1.msra.mxu0 0.0
      %974 = vmatprep.subr.mxu0 0.0
      %975 = vmatpush1.msra.mxu0 0.0
      %976 = vmatprep.subr.mxu0 0.0
      %977 = vmatpush1.msra.mxu0 0.0
      %978 = vmatprep.subr.mxu0 0.0
      %979 = vmatpush1.msra.mxu0 0.0
      %980 = vmatprep.subr.mxu0 0.0
      %981 = vmatpush1.msra.mxu0 0.0
      %982 = vmatprep.subr.mxu0 0.0
      %983 = vmatpush1.msra.mxu0 0.0
      %984 = vmatprep.subr.mxu0 0.0
      %985 = vmatpush1.msra.mxu0 0.0
      %986 = vmatprep.subr.mxu0 0.0
      %987 = vmatpush1.msra.mxu0 0.0
      %988 = vmatprep.subr.mxu0 0.0
      %989 = vmatpush1.msra.mxu0 0.0
      %990 = vmatprep.subr.mxu0 0.0
      %991 = vmatpush1.msra.mxu0 0.0
      %992 = vmatprep.subr.mxu0 0.0
      %993 = vmatpush1.msra.mxu0 0.0
      %994 = vmatprep.subr.mxu0 0.0
      %995 = vmatpush1.msra.mxu0 0.0
      %996 = vmatprep.subr.mxu0 0.0
      %997 = vmatpush1.msra.mxu0 0.0
      %998 = vmatprep.subr.mxu0 0.0
      %999 = vmatpush1.msra.mxu0 0.0
      %1000 = vmatprep.subr.mxu0 0.0
      %1001 = vmatpush1.msra.mxu0 0.0
      %1002 = vmatprep.subr.mxu0 0.0
      %1003 = vmatpush1.msra.mxu0 0.0
      %1004 = vmatprep.subr.mxu0 0.0
      %1005 = vmatpush1.msra.mxu0 0.0
      %1006 = vmatprep.subr.mxu0 0.0
      %1007 = vmatpush1.msra.mxu0 0.0
      %1008 = vmatprep.subr.mxu0 0.0
      %1009 = vmatpush1.msra.mxu0 0.0
      %1010 = vmatprep.subr.mxu0 0.0
      %1011 = vmatpush1.msra.mxu0 0.0
      %1012 = vmatprep.mubr.f32.mxu0 0.0
      %1013 = vmatmul.mubr.f32.gmra.mrb[0].mxu0 %v850
      %v1014 = vpop.f32.mrb[0].mxu0
      %v1015 = vadd.f32 %v691, %v1014
      %v1016 = vpop.f32.mrb[0].mxu0
      %1017 = vmatprep.mubr.f32.mxu0 0.0
      %1018 = vmatmul.mubr.f32.gmra.mrb[0].mxu0 %v853
      %v1019 = vpop.f32.mrb[0].mxu0
      %v1020 = vadd.f32 %v696, %v1019
      %v1021 = vpop.f32.mrb[0].mxu0
      %1022 = vmatprep.mubr.f32.mxu0 0.0
      %1023 = vmatmul.mubr.f32.gmra.mrb[0].mxu0 %v856
      %v1024 = vpop.f32.mrb[0].mxu0
      %v1025 = vadd.f32 %v701, %v1024
      %v1026 = vpop.f32.mrb[0].mxu0
      %1027 = vmatprep.mubr.f32.mxu0 0.0
      %1028 = vmatmul.mubr.f32.gmra.mrb[0].mxu0 %v859
      %v1029 = vpop.f32.mrb[0].mxu0
      %v1030 = vadd.f32 %v706, %v1029
      %v1031 = vpop.f32.mrb[0].mxu0
      %1032 = vmatprep.mubr.f32.mxu0 0.0
      %1033 = vmatmul.mubr.f32.gmra.mrb[0].mxu0 %v862
      %v1034 = vpop.f32.mrb[0].mxu0
      %v1035 = vadd.f32 %v711, %v1034
      %v1036 = vpop.f32.mrb[0].mxu0
      %1037 = vmatprep.mubr.f32.mxu0 0.0
      %1038 = vmatmul.mubr.f32.gmra.mrb[0].mxu0 %v865
      %v1039 = vpop.f32.mrb[0].mxu0
      %v1040 = vadd.f32 %v716, %v1039
      %v1041 = vpop.f32.mrb[0].mxu0
      %1042 = vmatprep.mubr.f32.mxu0 0.0
      %1043 = vmatmul.mubr.f32.gmra.mrb[0].mxu0 %v868
      %v1044 = vpop.f32.mrb[0].mxu0
      %v1045 = vadd.f32 %v721, %v1044
      %v1046 = vpop.f32.mrb[0].mxu0
      %1047 = vmatprep.mubr.f32.mxu0 0.0
      %1048 = vmatmul.mubr.f32.gmra.mrb[0].mxu0 %v871
      %v1049 = vpop.f32.mrb[0].mxu0
      %v1050 = vadd.f32 %v726, %v1049
      %v1051 = vpop.f32.mrb[0].mxu0
      %1052 = vmatprep.mubr.f32.mxu0 0.0
      %1053 = vmatmul.mubr.f32.gmra.mrb[0].mxu0 %v874
      %v1054 = vpop.f32.mrb[0].mxu0
      %v1055 = vadd.f32 %v731, %v1054
      %v1056 = vpop.f32.mrb[0].mxu0
      %1057 = vmatprep.mubr.f32.mxu0 0.0
      %1058 = vmatmul.mubr.f32.gmra.mrb[0].mxu0 %v877
      %v1059 = vpop.f32.mrb[0].mxu0
      %v1060 = vadd.f32 %v736, %v1059
      %v1061 = vpop.f32.mrb[0].mxu0
      %1062 = vmatprep.mubr.f32.mxu0 0.0
      %1063 = vmatmul.mubr.f32.gmra.mrb[0].mxu0 %v880
      %v1064 = vpop.f32.mrb[0].mxu0
      %v1065 = vadd.f32 %v741, %v1064
      %v1066 = vpop.f32.mrb[0].mxu0
      %1067 = vmatprep.mubr.f32.mxu0 0.0
      %1068 = vmatmul.mubr.f32.gmra.mrb[0].mxu0 %v883
      %v1069 = vpop.f32.mrb[0].mxu0
      %v1070 = vadd.f32 %v746, %v1069
      %v1071 = vpop.f32.mrb[0].mxu0
      %1072 = vmatprep.mubr.f32.mxu0 0.0
      %1073 = vmatmul.mubr.f32.gmra.mrb[0].mxu0 %v886
      %v1074 = vpop.f32.mrb[0].mxu0
      %v1075 = vadd.f32 %v751, %v1074
      %v1076 = vpop.f32.mrb[0].mxu0
      %1077 = vmatprep.mubr.f32.mxu0 0.0
      %1078 = vmatmul.mubr.f32.gmra.mrb[0].mxu0 %v889
      %v1079 = vpop.f32.mrb[0].mxu0
      %v1080 = vadd.f32 %v756, %v1079
      %v1081 = vpop.f32.mrb[0].mxu0
      %1082 = vmatprep.mubr.f32.mxu0 0.0
      %1083 = vmatmul.mubr.f32.gmra.mrb[0].mxu0 %v892
      %v1084 = vpop.f32.mrb[0].mxu0
      %v1085 = vadd.f32 %v761, %v1084
      %v1086 = vpop.f32.mrb[0].mxu0
      %1087 = vmatprep.mubr.f32.mxu0 0.0
      %1088 = vmatmul.mubr.f32.gmra.mrb[0].mxu0 %v895
      %v1089 = vpop.f32.mrb[0].mxu0
      %v1090 = vadd.f32 %v766, %v1089
      %v1091 = vpop.f32.mrb[0].mxu0
      %1092 = vmatprep.mubr.f32.mxu0 0.0
      %1093 = vmatmul.mubr.f32.gmra.mrb[0].mxu0 %v898
      %v1094 = vpop.f32.mrb[0].mxu0
      %v1095 = vadd.f32 %v771, %v1094
      %v1096 = vpop.f32.mrb[0].mxu0
      %1097 = vmatprep.mubr.f32.mxu0 0.0
      %1098 = vmatmul.mubr.f32.gmra.mrb[0].mxu0 %v901
      %v1099 = vpop.f32.mrb[0].mxu0
      %v1100 = vadd.f32 %v776, %v1099
      %v1101 = vpop.f32.mrb[0].mxu0
      %1102 = vmatprep.mubr.f32.mxu0 0.0
      %1103 = vmatmul.mubr.f32.gmra.mrb[0].mxu0 %v904
      %v1104 = vpop.f32.mrb[0].mxu0
      %v1105 = vadd.f32 %v781, %v1104
      %v1106 = vpop.f32.mrb[0].mxu0
      %1107 = vmatprep.mubr.f32.mxu0 0.0
      %1108 = vmatmul.mubr.f32.gmra.mrb[0].mxu0 %v907
      %v1109 = vpop.f32.mrb[0].mxu0
      %v1110 = vadd.f32 %v786, %v1109
      %v1111 = vpop.f32.mrb[0].mxu0
      %1112 = vmatprep.mubr.f32.mxu0 0.0
      %1113 = vmatmul.mubr.f32.gmra.mrb[0].mxu0 %v910
      %v1114 = vpop.f32.mrb[0].mxu0
      %v1115 = vadd.f32 %v791, %v1114
      %v1116 = vpop.f32.mrb[0].mxu0
      %1117 = vmatprep.mubr.f32.mxu0 0.0
      %1118 = vmatmul.mubr.f32.gmra.mrb[0].mxu0 %v913
      %v1119 = vpop.f32.mrb[0].mxu0
      %v1120 = vadd.f32 %v796, %v1119
      %v1121 = vpop.f32.mrb[0].mxu0
      %1122 = vmatprep.mubr.f32.mxu0 0.0
      %1123 = vmatmul.mubr.f32.gmra.mrb[0].mxu0 %v916
      %v1124 = vpop.f32.mrb[0].mxu0
      %v1125 = vadd.f32 %v801, %v1124
      %v1126 = vpop.f32.mrb[0].mxu0
      %1127 = vmatprep.mubr.f32.mxu0 0.0
      %1128 = vmatmul.mubr.f32.gmra.mrb[0].mxu0 %v919
      %v1129 = vpop.f32.mrb[0].mxu0
      %v1130 = vadd.f32 %v806, %v1129
      %v1131 = vpop.f32.mrb[0].mxu0
      %1132 = vmatprep.mubr.f32.mxu0 0.0
      %1133 = vmatmul.mubr.f32.gmra.mrb[0].mxu0 %v922
      %v1134 = vpop.f32.mrb[0].mxu0
      %v1135 = vadd.f32 %v811, %v1134
      %v1136 = vpop.f32.mrb[0].mxu0
      %1137 = vmatprep.mubr.f32.mxu0 0.0
      %1138 = vmatmul.mubr.f32.gmra.mrb[0].mxu0 %v925
      %v1139 = vpop.f32.mrb[0].mxu0
      %v1140 = vadd.f32 %v816, %v1139
      %v1141 = vpop.f32.mrb[0].mxu0
      %1142 = vmatprep.mubr.f32.mxu0 0.0
      %1143 = vmatmul.mubr.f32.gmra.mrb[0].mxu0 %v928
      %v1144 = vpop.f32.mrb[0].mxu0
      %v1145 = vadd.f32 %v821, %v1144
      %v1146 = vpop.f32.mrb[0].mxu0
      %1147 = vmatprep.mubr.f32.mxu0 0.0
      %1148 = vmatmul.mubr.f32.gmra.mrb[0].mxu0 %v931
      %v1149 = vpop.f32.mrb[0].mxu0
      %v1150 = vadd.f32 %v826, %v1149
      %v1151 = vpop.f32.mrb[0].mxu0
      %1152 = vmatprep.mubr.f32.mxu0 0.0
      %1153 = vmatmul.mubr.f32.gmra.mrb[0].mxu0 %v934
      %v1154 = vpop.f32.mrb[0].mxu0
      %v1155 = vadd.f32 %v831, %v1154
      %v1156 = vpop.f32.mrb[0].mxu0
      %1157 = vmatprep.mubr.f32.mxu0 0.0
      %1158 = vmatmul.mubr.f32.gmra.mrb[0].mxu0 %v937
      %v1159 = vpop.f32.mrb[0].mxu0
      %v1160 = vadd.f32 %v836, %v1159
      %v1161 = vpop.f32.mrb[0].mxu0
      %1162 = vmatprep.mubr.f32.mxu0 0.0
      %1163 = vmatmul.mubr.f32.gmra.mrb[0].mxu0 %v940
      %v1164 = vpop.f32.mrb[0].mxu0
      %v1165 = vadd.f32 %v841, %v1164
      %v1166 = vpop.f32.mrb[0].mxu0
      %1167 = vmatprep.mubr.f32.mxu0 0.0
      %1168 = vmatmul.mubr.f32.gmra.mrb[0].mxu0 %v943
      %v1169 = vpop.f32.mrb[0].mxu0
      %v1170 = vadd.f32 %v846, %v1169
      %v1171 = vpop.f32.mrb[0].mxu0
      %1172 = vdwg.mxu0
      %v1173 = vld [vmem:[#allocation2 + $0x2] sm:$0xff]
      %v1174 = vld [vmem:[#allocation2 + $0xa] sm:$0xff]
      %v1175 = vld [vmem:[#allocation2 + $0x1a] sm:$0xff]
      %v1176 = vld [vmem:[#allocation2 + $0x22] sm:$0xff]
      %v1177 = vld [vmem:[#allocation2 + $0x32] sm:$0xff]
      %v1178 = vld [vmem:[#allocation2 + $0x3a] sm:$0xff]
      %v1179 = vld [vmem:[#allocation2 + $0x4a] sm:$0xff]
      %v1180 = vld [vmem:[#allocation2 + $0x52] sm:$0xff]
      %v1181 = vld [vmem:[#allocation2 + $0x62] sm:$0xff]
      %v1182 = vld [vmem:[#allocation2 + $0x6a] sm:$0xff]
      %v1183 = vld [vmem:[#allocation2 + $0x7a] sm:$0xff]
      %v1184 = vld [vmem:[#allocation2 + $0x82] sm:$0xff]
      %v1185 = vld [vmem:[#allocation2 + $0x92] sm:$0xff]
      %v1186 = vld [vmem:[#allocation2 + $0x9a] sm:$0xff]
      %v1187 = vld [vmem:[#allocation2 + $0xaa] sm:$0xff]
      %v1188 = vld [vmem:[#allocation2 + $0xb2] sm:$0xff]
      %v1189 = vld [vmem:[#allocation2 + $0xc2] sm:$0xff]
      %v1190 = vld [vmem:[#allocation2 + $0xca] sm:$0xff]
      %v1191 = vld [vmem:[#allocation2 + $0xda] sm:$0xff]
      %v1192 = vld [vmem:[#allocation2 + $0xe2] sm:$0xff]
      %v1193 = vld [vmem:[#allocation2 + $0xf2] sm:$0xff]
      %v1194 = vld [vmem:[#allocation2 + $0xfa] sm:$0xff]
      %v1195 = vld [vmem:[#allocation2 + $0x10a] sm:$0xff]
      %v1196 = vld [vmem:[#allocation2 + $0x112] sm:$0xff]
      %v1197 = vld [vmem:[#allocation2 + $0x122] sm:$0xff]
      %v1198 = vld [vmem:[#allocation2 + $0x12a] sm:$0xff]
      %v1199 = vld [vmem:[#allocation2 + $0x13a] sm:$0xff]
      %v1200 = vld [vmem:[#allocation2 + $0x142] sm:$0xff]
      %v1201 = vld [vmem:[#allocation2 + $0x152] sm:$0xff]
      %v1202 = vld [vmem:[#allocation2 + $0x15a] sm:$0xff]
      %v1203 = vld [vmem:[#allocation2 + $0x16a] sm:$0xff]
      %v1204 = vld [vmem:[#allocation2 + $0x172] sm:$0xff]
      %s1205 = scalar_lea.vmem %s3, 8
      %v1206 = vld [vmem:[%s1205] sm:$0xf]
      %v1208 = vsel %vm378, %v1173, 0
      %v1211 = vsel %vm378, %v1174, 0
      %v1214 = vsel %vm378, %v1175, 0
      %v1217 = vsel %vm378, %v1176, 0
      %v1220 = vsel %vm378, %v1177, 0
      %v1223 = vsel %vm378, %v1178, 0
      %v1226 = vsel %vm378, %v1179, 0
      %v1229 = vsel %vm378, %v1180, 0
      %v1232 = vsel %vm378, %v1181, 0
      %v1235 = vsel %vm378, %v1182, 0
      %v1238 = vsel %vm378, %v1183, 0
      %v1241 = vsel %vm378, %v1184, 0
      %v1244 = vsel %vm378, %v1185, 0
      %v1247 = vsel %vm378, %v1186, 0
      %v1250 = vsel %vm378, %v1187, 0
      %v1253 = vsel %vm378, %v1188, 0
      %v1256 = vsel %vm378, %v1189, 0
      %v1259 = vsel %vm378, %v1190, 0
      %v1262 = vsel %vm378, %v1191, 0
      %v1265 = vsel %vm378, %v1192, 0
      %v1268 = vsel %vm378, %v1193, 0
      %v1271 = vsel %vm378, %v1194, 0
      %v1274 = vsel %vm378, %v1195, 0
      %v1277 = vsel %vm378, %v1196, 0
      %v1280 = vsel %vm378, %v1197, 0
      %v1283 = vsel %vm378, %v1198, 0
      %v1286 = vsel %vm378, %v1199, 0
      %v1289 = vsel %vm378, %v1200, 0
      %v1292 = vsel %vm378, %v1201, 0
      %v1295 = vsel %vm378, %v1202, 0
      %v1298 = vsel %vm378, %v1203, 0
      %v1301 = vsel %vm378, %v1204, 0
      %v1304 = vsel %vm620, %v1206, 0
      %1306 = vmatprep.subr.mxu0 0.0
      %1307 = vmatpush1.msra.mxu0 %v1304
      %1308 = vmatprep.subr.mxu0 0.0
      %1309 = vmatpush1.msra.mxu0 0.0
      %1310 = vmatprep.subr.mxu0 0.0
      %1311 = vmatpush1.msra.mxu0 0.0
      %1312 = vmatprep.subr.mxu0 0.0
      %1313 = vmatpush1.msra.mxu0 0.0
      %1314 = vmatprep.subr.mxu0 0.0
      %1315 = vmatpush1.msra.mxu0 0.0
      %1316 = vmatprep.subr.mxu0 0.0
      %1317 = vmatpush1.msra.mxu0 0.0
      %1318 = vmatprep.subr.mxu0 0.0
      %1319 = vmatpush1.msra.mxu0 0.0
      %1320 = vmatprep.subr.mxu0 0.0
      %1321 = vmatpush1.msra.mxu0 0.0
      %1322 = vmatprep.subr.mxu0 0.0
      %1323 = vmatpush1.msra.mxu0 0.0
      %1324 = vmatprep.subr.mxu0 0.0
      %1325 = vmatpush1.msra.mxu0 0.0
      %1326 = vmatprep.subr.mxu0 0.0
      %1327 = vmatpush1.msra.mxu0 0.0
      %1328 = vmatprep.subr.mxu0 0.0
      %1329 = vmatpush1.msra.mxu0 0.0
      %1330 = vmatprep.subr.mxu0 0.0
      %1331 = vmatpush1.msra.mxu0 0.0
      %1332 = vmatprep.subr.mxu0 0.0
      %1333 = vmatpush1.msra.mxu0 0.0
      %1334 = vmatprep.subr.mxu0 0.0
      %1335 = vmatpush1.msra.mxu0 0.0
      %1336 = vmatprep.subr.mxu0 0.0
      %1337 = vmatpush1.msra.mxu0 0.0
      %1338 = vmatprep.subr.mxu0 0.0
      %1339 = vmatpush1.msra.mxu0 0.0
      %1340 = vmatprep.subr.mxu0 0.0
      %1341 = vmatpush1.msra.mxu0 0.0
      %1342 = vmatprep.subr.mxu0 0.0
      %1343 = vmatpush1.msra.mxu0 0.0
      %1344 = vmatprep.subr.mxu0 0.0
      %1345 = vmatpush1.msra.mxu0 0.0
      %1346 = vmatprep.subr.mxu0 0.0
      %1347 = vmatpush1.msra.mxu0 0.0
      %1348 = vmatprep.subr.mxu0 0.0
      %1349 = vmatpush1.msra.mxu0 0.0
      %1350 = vmatprep.subr.mxu0 0.0
      %1351 = vmatpush1.msra.mxu0 0.0
      %1352 = vmatprep.subr.mxu0 0.0
      %1353 = vmatpush1.msra.mxu0 0.0
      %1354 = vmatprep.subr.mxu0 0.0
      %1355 = vmatpush1.msra.mxu0 0.0
      %1356 = vmatprep.subr.mxu0 0.0
      %1357 = vmatpush1.msra.mxu0 0.0
      %1358 = vmatprep.subr.mxu0 0.0
      %1359 = vmatpush1.msra.mxu0 0.0
      %1360 = vmatprep.subr.mxu0 0.0
      %1361 = vmatpush1.msra.mxu0 0.0
      %1362 = vmatprep.subr.mxu0 0.0
      %1363 = vmatpush1.msra.mxu0 0.0
      %1364 = vmatprep.subr.mxu0 0.0
      %1365 = vmatpush1.msra.mxu0 0.0
      %1366 = vmatprep.subr.mxu0 0.0
      %1367 = vmatpush1.msra.mxu0 0.0
      %1368 = vmatprep.subr.mxu0 0.0
      %1369 = vmatpush1.msra.mxu0 0.0
      %1370 = vmatprep.mubr.f32.mxu0 0.0
      %1371 = vmatmul.mubr.f32.gmra.mrb[0].mxu0 %v1208
      %v1372 = vpop.f32.mrb[0].mxu0
      %v1373 = vadd.f32 0.0, %v1372
      %v1374 = vpop.f32.mrb[0].mxu0
      %1375 = vmatprep.mubr.f32.mxu0 0.0
      %1376 = vmatmul.mubr.f32.gmra.mrb[0].mxu0 %v1211
      %v1377 = vpop.f32.mrb[0].mxu0
      %v1378 = vadd.f32 0.0, %v1377
      %v1379 = vpop.f32.mrb[0].mxu0
      %1380 = vmatprep.mubr.f32.mxu0 0.0
      %1381 = vmatmul.mubr.f32.gmra.mrb[0].mxu0 %v1214
      %v1382 = vpop.f32.mrb[0].mxu0
      %v1383 = vadd.f32 0.0, %v1382
      %v1384 = vpop.f32.mrb[0].mxu0
      %1385 = vmatprep.mubr.f32.mxu0 0.0
      %1386 = vmatmul.mubr.f32.gmra.mrb[0].mxu0 %v1217
      %v1387 = vpop.f32.mrb[0].mxu0
      %v1388 = vadd.f32 0.0, %v1387
      %v1389 = vpop.f32.mrb[0].mxu0
      %1390 = vmatprep.mubr.f32.mxu0 0.0
      %1391 = vmatmul.mubr.f32.gmra.mrb[0].mxu0 %v1220
      %v1392 = vpop.f32.mrb[0].mxu0
      %v1393 = vadd.f32 0.0, %v1392
      %v1394 = vpop.f32.mrb[0].mxu0
      %1395 = vmatprep.mubr.f32.mxu0 0.0
      %1396 = vmatmul.mubr.f32.gmra.mrb[0].mxu0 %v1223
      %v1397 = vpop.f32.mrb[0].mxu0
      %v1398 = vadd.f32 0.0, %v1397
      %v1399 = vpop.f32.mrb[0].mxu0
      %1400 = vmatprep.mubr.f32.mxu0 0.0
      %1401 = vmatmul.mubr.f32.gmra.mrb[0].mxu0 %v1226
      %v1402 = vpop.f32.mrb[0].mxu0
      %v1403 = vadd.f32 0.0, %v1402
      %v1404 = vpop.f32.mrb[0].mxu0
      %1405 = vmatprep.mubr.f32.mxu0 0.0
      %1406 = vmatmul.mubr.f32.gmra.mrb[0].mxu0 %v1229
      %v1407 = vpop.f32.mrb[0].mxu0
      %v1408 = vadd.f32 0.0, %v1407
      %v1409 = vpop.f32.mrb[0].mxu0
      %1410 = vmatprep.mubr.f32.mxu0 0.0
      %1411 = vmatmul.mubr.f32.gmra.mrb[0].mxu0 %v1232
      %v1412 = vpop.f32.mrb[0].mxu0
      %v1413 = vadd.f32 0.0, %v1412
      %v1414 = vpop.f32.mrb[0].mxu0
      %1415 = vmatprep.mubr.f32.mxu0 0.0
      %1416 = vmatmul.mubr.f32.gmra.mrb[0].mxu0 %v1235
      %v1417 = vpop.f32.mrb[0].mxu0
      %v1418 = vadd.f32 0.0, %v1417
      %v1419 = vpop.f32.mrb[0].mxu0
      %1420 = vmatprep.mubr.f32.mxu0 0.0
      %1421 = vmatmul.mubr.f32.gmra.mrb[0].mxu0 %v1238
      %v1422 = vpop.f32.mrb[0].mxu0
      %v1423 = vadd.f32 0.0, %v1422
      %v1424 = vpop.f32.mrb[0].mxu0
      %1425 = vmatprep.mubr.f32.mxu0 0.0
      %1426 = vmatmul.mubr.f32.gmra.mrb[0].mxu0 %v1241
      %v1427 = vpop.f32.mrb[0].mxu0
      %v1428 = vadd.f32 0.0, %v1427
      %v1429 = vpop.f32.mrb[0].mxu0
      %1430 = vmatprep.mubr.f32.mxu0 0.0
      %1431 = vmatmul.mubr.f32.gmra.mrb[0].mxu0 %v1244
      %v1432 = vpop.f32.mrb[0].mxu0
      %v1433 = vadd.f32 0.0, %v1432
      %v1434 = vpop.f32.mrb[0].mxu0
      %1435 = vmatprep.mubr.f32.mxu0 0.0
      %1436 = vmatmul.mubr.f32.gmra.mrb[0].mxu0 %v1247
      %v1437 = vpop.f32.mrb[0].mxu0
      %v1438 = vadd.f32 0.0, %v1437
      %v1439 = vpop.f32.mrb[0].mxu0
      %1440 = vmatprep.mubr.f32.mxu0 0.0
      %1441 = vmatmul.mubr.f32.gmra.mrb[0].mxu0 %v1250
      %v1442 = vpop.f32.mrb[0].mxu0
      %v1443 = vadd.f32 0.0, %v1442
      %v1444 = vpop.f32.mrb[0].mxu0
      %1445 = vmatprep.mubr.f32.mxu0 0.0
      %1446 = vmatmul.mubr.f32.gmra.mrb[0].mxu0 %v1253
      %v1447 = vpop.f32.mrb[0].mxu0
      %v1448 = vadd.f32 0.0, %v1447
      %v1449 = vpop.f32.mrb[0].mxu0
      %1450 = vmatprep.mubr.f32.mxu0 0.0
      %1451 = vmatmul.mubr.f32.gmra.mrb[0].mxu0 %v1256
      %v1452 = vpop.f32.mrb[0].mxu0
      %v1453 = vadd.f32 0.0, %v1452
      %v1454 = vpop.f32.mrb[0].mxu0
      %1455 = vmatprep.mubr.f32.mxu0 0.0
      %1456 = vmatmul.mubr.f32.gmra.mrb[0].mxu0 %v1259
      %v1457 = vpop.f32.mrb[0].mxu0
      %v1458 = vadd.f32 0.0, %v1457
      %v1459 = vpop.f32.mrb[0].mxu0
      %1460 = vmatprep.mubr.f32.mxu0 0.0
      %1461 = vmatmul.mubr.f32.gmra.mrb[0].mxu0 %v1262
      %v1462 = vpop.f32.mrb[0].mxu0
      %v1463 = vadd.f32 0.0, %v1462
      %v1464 = vpop.f32.mrb[0].mxu0
      %1465 = vmatprep.mubr.f32.mxu0 0.0
      %1466 = vmatmul.mubr.f32.gmra.mrb[0].mxu0 %v1265
      %v1467 = vpop.f32.mrb[0].mxu0
      %v1468 = vadd.f32 0.0, %v1467
      %v1469 = vpop.f32.mrb[0].mxu0
      %1470 = vmatprep.mubr.f32.mxu0 0.0
      %1471 = vmatmul.mubr.f32.gmra.mrb[0].mxu0 %v1268
      %v1472 = vpop.f32.mrb[0].mxu0
      %v1473 = vadd.f32 0.0, %v1472
      %v1474 = vpop.f32.mrb[0].mxu0
      %1475 = vmatprep.mubr.f32.mxu0 0.0
      %1476 = vmatmul.mubr.f32.gmra.mrb[0].mxu0 %v1271
      %v1477 = vpop.f32.mrb[0].mxu0
      %v1478 = vadd.f32 0.0, %v1477
      %v1479 = vpop.f32.mrb[0].mxu0
      %1480 = vmatprep.mubr.f32.mxu0 0.0
      %1481 = vmatmul.mubr.f32.gmra.mrb[0].mxu0 %v1274
      %v1482 = vpop.f32.mrb[0].mxu0
      %v1483 = vadd.f32 0.0, %v1482
      %v1484 = vpop.f32.mrb[0].mxu0
      %1485 = vmatprep.mubr.f32.mxu0 0.0
      %1486 = vmatmul.mubr.f32.gmra.mrb[0].mxu0 %v1277
      %v1487 = vpop.f32.mrb[0].mxu0
      %v1488 = vadd.f32 0.0, %v1487
      %v1489 = vpop.f32.mrb[0].mxu0
      %1490 = vmatprep.mubr.f32.mxu0 0.0
      %1491 = vmatmul.mubr.f32.gmra.mrb[0].mxu0 %v1280
      %v1492 = vpop.f32.mrb[0].mxu0
      %v1493 = vadd.f32 0.0, %v1492
      %v1494 = vpop.f32.mrb[0].mxu0
      %1495 = vmatprep.mubr.f32.mxu0 0.0
      %1496 = vmatmul.mubr.f32.gmra.mrb[0].mxu0 %v1283
      %v1497 = vpop.f32.mrb[0].mxu0
      %v1498 = vadd.f32 0.0, %v1497
      %v1499 = vpop.f32.mrb[0].mxu0
      %1500 = vmatprep.mubr.f32.mxu0 0.0
      %1501 = vmatmul.mubr.f32.gmra.mrb[0].mxu0 %v1286
      %v1502 = vpop.f32.mrb[0].mxu0
      %v1503 = vadd.f32 0.0, %v1502
      %v1504 = vpop.f32.mrb[0].mxu0
      %1505 = vmatprep.mubr.f32.mxu0 0.0
      %1506 = vmatmul.mubr.f32.gmra.mrb[0].mxu0 %v1289
      %v1507 = vpop.f32.mrb[0].mxu0
      %v1508 = vadd.f32 0.0, %v1507
      %v1509 = vpop.f32.mrb[0].mxu0
      %1510 = vmatprep.mubr.f32.mxu0 0.0
      %1511 = vmatmul.mubr.f32.gmra.mrb[0].mxu0 %v1292
      %v1512 = vpop.f32.mrb[0].mxu0
      %v1513 = vadd.f32 0.0, %v1512
      %v1514 = vpop.f32.mrb[0].mxu0
      %1515 = vmatprep.mubr.f32.mxu0 0.0
      %1516 = vmatmul.mubr.f32.gmra.mrb[0].mxu0 %v1295
      %v1517 = vpop.f32.mrb[0].mxu0
      %v1518 = vadd.f32 0.0, %v1517
      %v1519 = vpop.f32.mrb[0].mxu0
      %1520 = vmatprep.mubr.f32.mxu0 0.0
      %1521 = vmatmul.mubr.f32.gmra.mrb[0].mxu0 %v1298
      %v1522 = vpop.f32.mrb[0].mxu0
      %v1523 = vadd.f32 0.0, %v1522
      %v1524 = vpop.f32.mrb[0].mxu0
      %1525 = vmatprep.mubr.f32.mxu0 0.0
      %1526 = vmatmul.mubr.f32.gmra.mrb[0].mxu0 %v1301
      %v1527 = vpop.f32.mrb[0].mxu0
      %v1528 = vadd.f32 0.0, %v1527
      %v1529 = vpop.f32.mrb[0].mxu0
      %1530 = vdwg.mxu0
      %v1531 = vadd.f32 %v1015, %v1373
      %v1532 = vadd.f32 %v1020, %v1378
      %v1533 = vadd.f32 %v1025, %v1383
      %v1534 = vadd.f32 %v1030, %v1388
      %v1535 = vadd.f32 %v1035, %v1393
      %v1536 = vadd.f32 %v1040, %v1398
      %v1537 = vadd.f32 %v1045, %v1403
      %v1538 = vadd.f32 %v1050, %v1408
      %v1539 = vadd.f32 %v1055, %v1413
      %v1540 = vadd.f32 %v1060, %v1418
      %v1541 = vadd.f32 %v1065, %v1423
      %v1542 = vadd.f32 %v1070, %v1428
      %v1543 = vadd.f32 %v1075, %v1433
      %v1544 = vadd.f32 %v1080, %v1438
      %v1545 = vadd.f32 %v1085, %v1443
      %v1546 = vadd.f32 %v1090, %v1448
      %v1547 = vadd.f32 %v1095, %v1453
      %v1548 = vadd.f32 %v1100, %v1458
      %v1549 = vadd.f32 %v1105, %v1463
      %v1550 = vadd.f32 %v1110, %v1468
      %v1551 = vadd.f32 %v1115, %v1473
      %v1552 = vadd.f32 %v1120, %v1478
      %v1553 = vadd.f32 %v1125, %v1483
      %v1554 = vadd.f32 %v1130, %v1488
      %v1555 = vadd.f32 %v1135, %v1493
      %v1556 = vadd.f32 %v1140, %v1498
      %v1557 = vadd.f32 %v1145, %v1503
      %v1558 = vadd.f32 %v1150, %v1508
      %v1559 = vadd.f32 %v1155, %v1513
      %v1560 = vadd.f32 %v1160, %v1518
      %v1561 = vadd.f32 %v1165, %v1523
      %v1562 = vadd.f32 %v1170, %v1528
      %v1563 = vld [vmem:[%s424] sm:$0xff]
      %v1564 = vld [vmem:[%s424 + $0x8] sm:$0xff]
      %v1565 = vld [vmem:[%s424 + $0x18] sm:$0xff]
      %v1566 = vld [vmem:[%s424 + $0x20] sm:$0xff]
      %v1567 = vld [vmem:[%s424 + $0x30] sm:$0xff]
      %v1568 = vld [vmem:[%s424 + $0x38] sm:$0xff]
      %v1569 = vld [vmem:[%s424 + $0x48] sm:$0xff]
      %v1570 = vld [vmem:[%s424 + $0x50] sm:$0xff]
      %v1571 = vld [vmem:[%s424 + $0x60] sm:$0xff]
      %v1572 = vld [vmem:[%s424 + $0x68] sm:$0xff]
      %v1573 = vld [vmem:[%s424 + $0x78] sm:$0xff]
      %v1574 = vld [vmem:[%s424 + $0x80] sm:$0xff]
      %v1575 = vld [vmem:[%s424 + $0x90] sm:$0xff]
      %v1576 = vld [vmem:[%s424 + $0x98] sm:$0xff]
      %v1577 = vld [vmem:[%s424 + $0xa8] sm:$0xff]
      %v1578 = vld [vmem:[%s424 + $0xb0] sm:$0xff]
      %v1579 = vld [vmem:[%s424 + $0xc0] sm:$0xff]
      %v1580 = vld [vmem:[%s424 + $0xc8] sm:$0xff]
      %v1581 = vld [vmem:[%s424 + $0xd8] sm:$0xff]
      %v1582 = vld [vmem:[%s424 + $0xe0] sm:$0xff]
      %v1583 = vld [vmem:[%s424 + $0xf0] sm:$0xff]
      %v1584 = vld [vmem:[%s424 + $0xf8] sm:$0xff]
      %v1585 = vld [vmem:[%s424 + $0x108] sm:$0xff]
      %v1586 = vld [vmem:[%s424 + $0x110] sm:$0xff]
      %v1587 = vld [vmem:[%s424 + $0x120] sm:$0xff]
      %v1588 = vld [vmem:[%s424 + $0x128] sm:$0xff]
      %v1589 = vld [vmem:[%s424 + $0x138] sm:$0xff]
      %v1590 = vld [vmem:[%s424 + $0x140] sm:$0xff]
      %v1591 = vld [vmem:[%s424 + $0x150] sm:$0xff]
      %v1592 = vld [vmem:[%s424 + $0x158] sm:$0xff]
      %v1593 = vld [vmem:[%s424 + $0x168] sm:$0xff]
      %v1594 = vld [vmem:[%s424 + $0x170] sm:$0xff]
      %s1595 = scalar_lea.vmem %s3, 12
      %v1596 = vld [vmem:[%s1595] sm:$0xf]
      %v1598 = vsel %vm378, %v1563, 0
      %v1601 = vsel %vm378, %v1564, 0
      %v1604 = vsel %vm378, %v1565, 0
      %v1607 = vsel %vm378, %v1566, 0
      %v1610 = vsel %vm378, %v1567, 0
      %v1613 = vsel %vm378, %v1568, 0
      %v1616 = vsel %vm378, %v1569, 0
      %v1619 = vsel %vm378, %v1570, 0
      %v1622 = vsel %vm378, %v1571, 0
      %v1625 = vsel %vm378, %v1572, 0
      %v1628 = vsel %vm378, %v1573, 0
      %v1631 = vsel %vm378, %v1574, 0
      %v1634 = vsel %vm378, %v1575, 0
      %v1637 = vsel %vm378, %v1576, 0
      %v1640 = vsel %vm378, %v1577, 0
      %v1643 = vsel %vm378, %v1578, 0
      %v1646 = vsel %vm378, %v1579, 0
      %v1649 = vsel %vm378, %v1580, 0
      %v1652 = vsel %vm378, %v1581, 0
      %v1655 = vsel %vm378, %v1582, 0
      %v1658 = vsel %vm378, %v1583, 0
      %v1661 = vsel %vm378, %v1584, 0
      %v1664 = vsel %vm378, %v1585, 0
      %v1667 = vsel %vm378, %v1586, 0
      %v1670 = vsel %vm378, %v1587, 0
      %v1673 = vsel %vm378, %v1588, 0
      %v1676 = vsel %vm378, %v1589, 0
      %v1679 = vsel %vm378, %v1590, 0
      %v1682 = vsel %vm378, %v1591, 0
      %v1685 = vsel %vm378, %v1592, 0
      %v1688 = vsel %vm378, %v1593, 0
      %v1691 = vsel %vm378, %v1594, 0
      %v1694 = vsel %vm620, %v1596, 0
      %1696 = vmatprep.subr.mxu0 0.0
      %1697 = vmatpush1.msra.mxu0 %v1694
      %1698 = vmatprep.subr.mxu0 0.0
      %1699 = vmatpush1.msra.mxu0 0.0
      %1700 = vmatprep.subr.mxu0 0.0
      %1701 = vmatpush1.msra.mxu0 0.0
      %1702 = vmatprep.subr.mxu0 0.0
      %1703 = vmatpush1.msra.mxu0 0.0
      %1704 = vmatprep.subr.mxu0 0.0
      %1705 = vmatpush1.msra.mxu0 0.0
      %1706 = vmatprep.subr.mxu0 0.0
      %1707 = vmatpush1.msra.mxu0 0.0
      %1708 = vmatprep.subr.mxu0 0.0
      %1709 = vmatpush1.msra.mxu0 0.0
      %1710 = vmatprep.subr.mxu0 0.0
      %1711 = vmatpush1.msra.mxu0 0.0
      %1712 = vmatprep.subr.mxu0 0.0
      %1713 = vmatpush1.msra.mxu0 0.0
      %1714 = vmatprep.subr.mxu0 0.0
      %1715 = vmatpush1.msra.mxu0 0.0
      %1716 = vmatprep.subr.mxu0 0.0
      %1717 = vmatpush1.msra.mxu0 0.0
      %1718 = vmatprep.subr.mxu0 0.0
      %1719 = vmatpush1.msra.mxu0 0.0
      %1720 = vmatprep.subr.mxu0 0.0
      %1721 = vmatpush1.msra.mxu0 0.0
      %1722 = vmatprep.subr.mxu0 0.0
      %1723 = vmatpush1.msra.mxu0 0.0
      %1724 = vmatprep.subr.mxu0 0.0
      %1725 = vmatpush1.msra.mxu0 0.0
      %1726 = vmatprep.subr.mxu0 0.0
      %1727 = vmatpush1.msra.mxu0 0.0
      %1728 = vmatprep.subr.mxu0 0.0
      %1729 = vmatpush1.msra.mxu0 0.0
      %1730 = vmatprep.subr.mxu0 0.0
      %1731 = vmatpush1.msra.mxu0 0.0
      %1732 = vmatprep.subr.mxu0 0.0
      %1733 = vmatpush1.msra.mxu0 0.0
      %1734 = vmatprep.subr.mxu0 0.0
      %1735 = vmatpush1.msra.mxu0 0.0
      %1736 = vmatprep.subr.mxu0 0.0
      %1737 = vmatpush1.msra.mxu0 0.0
      %1738 = vmatprep.subr.mxu0 0.0
      %1739 = vmatpush1.msra.mxu0 0.0
      %1740 = vmatprep.subr.mxu0 0.0
      %1741 = vmatpush1.msra.mxu0 0.0
      %1742 = vmatprep.subr.mxu0 0.0
      %1743 = vmatpush1.msra.mxu0 0.0
      %1744 = vmatprep.subr.mxu0 0.0
      %1745 = vmatpush1.msra.mxu0 0.0
      %1746 = vmatprep.subr.mxu0 0.0
      %1747 = vmatpush1.msra.mxu0 0.0
      %1748 = vmatprep.subr.mxu0 0.0
      %1749 = vmatpush1.msra.mxu0 0.0
      %1750 = vmatprep.subr.mxu0 0.0
      %1751 = vmatpush1.msra.mxu0 0.0
      %1752 = vmatprep.subr.mxu0 0.0
      %1753 = vmatpush1.msra.mxu0 0.0
      %1754 = vmatprep.subr.mxu0 0.0
      %1755 = vmatpush1.msra.mxu0 0.0
      %1756 = vmatprep.subr.mxu0 0.0
      %1757 = vmatpush1.msra.mxu0 0.0
      %1758 = vmatprep.subr.mxu0 0.0
      %1759 = vmatpush1.msra.mxu0 0.0
      %1760 = vmatprep.mubr.f32.mxu0 0.0
      %1761 = vmatmul.mubr.f32.gmra.mrb[0].mxu0 %v1598
      %v1762 = vpop.f32.mrb[0].mxu0
      %v1763 = vadd.f32 0.0, %v1762
      %v1764 = vpop.f32.mrb[0].mxu0
      %1765 = vmatprep.mubr.f32.mxu0 0.0
      %1766 = vmatmul.mubr.f32.gmra.mrb[0].mxu0 %v1601
      %v1767 = vpop.f32.mrb[0].mxu0
      %v1768 = vadd.f32 0.0, %v1767
      %v1769 = vpop.f32.mrb[0].mxu0
      %1770 = vmatprep.mubr.f32.mxu0 0.0
      %1771 = vmatmul.mubr.f32.gmra.mrb[0].mxu0 %v1604
      %v1772 = vpop.f32.mrb[0].mxu0
      %v1773 = vadd.f32 0.0, %v1772
      %v1774 = vpop.f32.mrb[0].mxu0
      %1775 = vmatprep.mubr.f32.mxu0 0.0
      %1776 = vmatmul.mubr.f32.gmra.mrb[0].mxu0 %v1607
      %v1777 = vpop.f32.mrb[0].mxu0
      %v1778 = vadd.f32 0.0, %v1777
      %v1779 = vpop.f32.mrb[0].mxu0
      %1780 = vmatprep.mubr.f32.mxu0 0.0
      %1781 = vmatmul.mubr.f32.gmra.mrb[0].mxu0 %v1610
      %v1782 = vpop.f32.mrb[0].mxu0
      %v1783 = vadd.f32 0.0, %v1782
      %v1784 = vpop.f32.mrb[0].mxu0
      %1785 = vmatprep.mubr.f32.mxu0 0.0
      %1786 = vmatmul.mubr.f32.gmra.mrb[0].mxu0 %v1613
      %v1787 = vpop.f32.mrb[0].mxu0
      %v1788 = vadd.f32 0.0, %v1787
      %v1789 = vpop.f32.mrb[0].mxu0
      %1790 = vmatprep.mubr.f32.mxu0 0.0
      %1791 = vmatmul.mubr.f32.gmra.mrb[0].mxu0 %v1616
      %v1792 = vpop.f32.mrb[0].mxu0
      %v1793 = vadd.f32 0.0, %v1792
      %v1794 = vpop.f32.mrb[0].mxu0
      %1795 = vmatprep.mubr.f32.mxu0 0.0
      %1796 = vmatmul.mubr.f32.gmra.mrb[0].mxu0 %v1619
      %v1797 = vpop.f32.mrb[0].mxu0
      %v1798 = vadd.f32 0.0, %v1797
      %v1799 = vpop.f32.mrb[0].mxu0
      %1800 = vmatprep.mubr.f32.mxu0 0.0
      %1801 = vmatmul.mubr.f32.gmra.mrb[0].mxu0 %v1622
      %v1802 = vpop.f32.mrb[0].mxu0
      %v1803 = vadd.f32 0.0, %v1802
      %v1804 = vpop.f32.mrb[0].mxu0
      %1805 = vmatprep.mubr.f32.mxu0 0.0
      %1806 = vmatmul.mubr.f32.gmra.mrb[0].mxu0 %v1625
      %v1807 = vpop.f32.mrb[0].mxu0
      %v1808 = vadd.f32 0.0, %v1807
      %v1809 = vpop.f32.mrb[0].mxu0
      %1810 = vmatprep.mubr.f32.mxu0 0.0
      %1811 = vmatmul.mubr.f32.gmra.mrb[0].mxu0 %v1628
      %v1812 = vpop.f32.mrb[0].mxu0
      %v1813 = vadd.f32 0.0, %v1812
      %v1814 = vpop.f32.mrb[0].mxu0
      %1815 = vmatprep.mubr.f32.mxu0 0.0
      %1816 = vmatmul.mubr.f32.gmra.mrb[0].mxu0 %v1631
      %v1817 = vpop.f32.mrb[0].mxu0
      %v1818 = vadd.f32 0.0, %v1817
      %v1819 = vpop.f32.mrb[0].mxu0
      %1820 = vmatprep.mubr.f32.mxu0 0.0
      %1821 = vmatmul.mubr.f32.gmra.mrb[0].mxu0 %v1634
      %v1822 = vpop.f32.mrb[0].mxu0
      %v1823 = vadd.f32 0.0, %v1822
      %v1824 = vpop.f32.mrb[0].mxu0
      %1825 = vmatprep.mubr.f32.mxu0 0.0
      %1826 = vmatmul.mubr.f32.gmra.mrb[0].mxu0 %v1637
      %v1827 = vpop.f32.mrb[0].mxu0
      %v1828 = vadd.f32 0.0, %v1827
      %v1829 = vpop.f32.mrb[0].mxu0
      %1830 = vmatprep.mubr.f32.mxu0 0.0
      %1831 = vmatmul.mubr.f32.gmra.mrb[0].mxu0 %v1640
      %v1832 = vpop.f32.mrb[0].mxu0
      %v1833 = vadd.f32 0.0, %v1832
      %v1834 = vpop.f32.mrb[0].mxu0
      %1835 = vmatprep.mubr.f32.mxu0 0.0
      %1836 = vmatmul.mubr.f32.gmra.mrb[0].mxu0 %v1643
      %v1837 = vpop.f32.mrb[0].mxu0
      %v1838 = vadd.f32 0.0, %v1837
      %v1839 = vpop.f32.mrb[0].mxu0
      %1840 = vmatprep.mubr.f32.mxu0 0.0
      %1841 = vmatmul.mubr.f32.gmra.mrb[0].mxu0 %v1646
      %v1842 = vpop.f32.mrb[0].mxu0
      %v1843 = vadd.f32 0.0, %v1842
      %v1844 = vpop.f32.mrb[0].mxu0
      %1845 = vmatprep.mubr.f32.mxu0 0.0
      %1846 = vmatmul.mubr.f32.gmra.mrb[0].mxu0 %v1649
      %v1847 = vpop.f32.mrb[0].mxu0
      %v1848 = vadd.f32 0.0, %v1847
      %v1849 = vpop.f32.mrb[0].mxu0
      %1850 = vmatprep.mubr.f32.mxu0 0.0
      %1851 = vmatmul.mubr.f32.gmra.mrb[0].mxu0 %v1652
      %v1852 = vpop.f32.mrb[0].mxu0
      %v1853 = vadd.f32 0.0, %v1852
      %v1854 = vpop.f32.mrb[0].mxu0
      %1855 = vmatprep.mubr.f32.mxu0 0.0
      %1856 = vmatmul.mubr.f32.gmra.mrb[0].mxu0 %v1655
      %v1857 = vpop.f32.mrb[0].mxu0
      %v1858 = vadd.f32 0.0, %v1857
      %v1859 = vpop.f32.mrb[0].mxu0
      %1860 = vmatprep.mubr.f32.mxu0 0.0
      %1861 = vmatmul.mubr.f32.gmra.mrb[0].mxu0 %v1658
      %v1862 = vpop.f32.mrb[0].mxu0
      %v1863 = vadd.f32 0.0, %v1862
      %v1864 = vpop.f32.mrb[0].mxu0
      %1865 = vmatprep.mubr.f32.mxu0 0.0
      %1866 = vmatmul.mubr.f32.gmra.mrb[0].mxu0 %v1661
      %v1867 = vpop.f32.mrb[0].mxu0
      %v1868 = vadd.f32 0.0, %v1867
      %v1869 = vpop.f32.mrb[0].mxu0
      %1870 = vmatprep.mubr.f32.mxu0 0.0
      %1871 = vmatmul.mubr.f32.gmra.mrb[0].mxu0 %v1664
      %v1872 = vpop.f32.mrb[0].mxu0
      %v1873 = vadd.f32 0.0, %v1872
      %v1874 = vpop.f32.mrb[0].mxu0
      %1875 = vmatprep.mubr.f32.mxu0 0.0
      %1876 = vmatmul.mubr.f32.gmra.mrb[0].mxu0 %v1667
      %v1877 = vpop.f32.mrb[0].mxu0
      %v1878 = vadd.f32 0.0, %v1877
      %v1879 = vpop.f32.mrb[0].mxu0
      %1880 = vmatprep.mubr.f32.mxu0 0.0
      %1881 = vmatmul.mubr.f32.gmra.mrb[0].mxu0 %v1670
      %v1882 = vpop.f32.mrb[0].mxu0
      %v1883 = vadd.f32 0.0, %v1882
      %v1884 = vpop.f32.mrb[0].mxu0
      %1885 = vmatprep.mubr.f32.mxu0 0.0
      %1886 = vmatmul.mubr.f32.gmra.mrb[0].mxu0 %v1673
      %v1887 = vpop.f32.mrb[0].mxu0
      %v1888 = vadd.f32 0.0, %v1887
      %v1889 = vpop.f32.mrb[0].mxu0
      %1890 = vmatprep.mubr.f32.mxu0 0.0
      %1891 = vmatmul.mubr.f32.gmra.mrb[0].mxu0 %v1676
      %v1892 = vpop.f32.mrb[0].mxu0
      %v1893 = vadd.f32 0.0, %v1892
      %v1894 = vpop.f32.mrb[0].mxu0
      %1895 = vmatprep.mubr.f32.mxu0 0.0
      %1896 = vmatmul.mubr.f32.gmra.mrb[0].mxu0 %v1679
      %v1897 = vpop.f32.mrb[0].mxu0
      %v1898 = vadd.f32 0.0, %v1897
      %v1899 = vpop.f32.mrb[0].mxu0
      %1900 = vmatprep.mubr.f32.mxu0 0.0
      %1901 = vmatmul.mubr.f32.gmra.mrb[0].mxu0 %v1682
      %v1902 = vpop.f32.mrb[0].mxu0
      %v1903 = vadd.f32 0.0, %v1902
      %v1904 = vpop.f32.mrb[0].mxu0
      %1905 = vmatprep.mubr.f32.mxu0 0.0
      %1906 = vmatmul.mubr.f32.gmra.mrb[0].mxu0 %v1685
      %v1907 = vpop.f32.mrb[0].mxu0
      %v1908 = vadd.f32 0.0, %v1907
      %v1909 = vpop.f32.mrb[0].mxu0
      %1910 = vmatprep.mubr.f32.mxu0 0.0
      %1911 = vmatmul.mubr.f32.gmra.mrb[0].mxu0 %v1688
      %v1912 = vpop.f32.mrb[0].mxu0
      %v1913 = vadd.f32 0.0, %v1912
      %v1914 = vpop.f32.mrb[0].mxu0
      %1915 = vmatprep.mubr.f32.mxu0 0.0
      %1916 = vmatmul.mubr.f32.gmra.mrb[0].mxu0 %v1691
      %v1917 = vpop.f32.mrb[0].mxu0
      %v1918 = vadd.f32 0.0, %v1917
      %v1919 = vpop.f32.mrb[0].mxu0
      %1920 = vdwg.mxu0
      %v1921 = vadd.f32 %v1531, %v1763
      %v1922 = vadd.f32 %v1532, %v1768
      %v1923 = vadd.f32 %v1533, %v1773
      %v1924 = vadd.f32 %v1534, %v1778
      %v1925 = vadd.f32 %v1535, %v1783
      %v1926 = vadd.f32 %v1536, %v1788
      %v1927 = vadd.f32 %v1537, %v1793
      %v1928 = vadd.f32 %v1538, %v1798
      %v1929 = vadd.f32 %v1539, %v1803
      %v1930 = vadd.f32 %v1540, %v1808
      %v1931 = vadd.f32 %v1541, %v1813
      %v1932 = vadd.f32 %v1542, %v1818
      %v1933 = vadd.f32 %v1543, %v1823
      %v1934 = vadd.f32 %v1544, %v1828
      %v1935 = vadd.f32 %v1545, %v1833
      %v1936 = vadd.f32 %v1546, %v1838
      %v1937 = vadd.f32 %v1547, %v1843
      %v1938 = vadd.f32 %v1548, %v1848
      %v1939 = vadd.f32 %v1549, %v1853
      %v1940 = vadd.f32 %v1550, %v1858
      %v1941 = vadd.f32 %v1551, %v1863
      %v1942 = vadd.f32 %v1552, %v1868
      %v1943 = vadd.f32 %v1553, %v1873
      %v1944 = vadd.f32 %v1554, %v1878
      %v1945 = vadd.f32 %v1555, %v1883
      %v1946 = vadd.f32 %v1556, %v1888
      %v1947 = vadd.f32 %v1557, %v1893
      %v1948 = vadd.f32 %v1558, %v1898
      %v1949 = vadd.f32 %v1559, %v1903
      %v1950 = vadd.f32 %v1560, %v1908
      %v1951 = vadd.f32 %v1561, %v1913
      %v1952 = vadd.f32 %v1562, %v1918
      %v1953 = vld [vmem:[%s424 + $0x1] sm:$0xff]
      %v1954 = vld [vmem:[%s424 + $0x9] sm:$0xff]
      %v1955 = vld [vmem:[%s424 + $0x19] sm:$0xff]
      %v1956 = vld [vmem:[%s424 + $0x21] sm:$0xff]
      %v1957 = vld [vmem:[%s424 + $0x31] sm:$0xff]
      %v1958 = vld [vmem:[%s424 + $0x39] sm:$0xff]
      %v1959 = vld [vmem:[%s424 + $0x49] sm:$0xff]
      %v1960 = vld [vmem:[%s424 + $0x51] sm:$0xff]
      %v1961 = vld [vmem:[%s424 + $0x61] sm:$0xff]
      %v1962 = vld [vmem:[%s424 + $0x69] sm:$0xff]
      %v1963 = vld [vmem:[%s424 + $0x79] sm:$0xff]
      %v1964 = vld [vmem:[%s424 + $0x81] sm:$0xff]
      %v1965 = vld [vmem:[%s424 + $0x91] sm:$0xff]
      %v1966 = vld [vmem:[%s424 + $0x99] sm:$0xff]
      %v1967 = vld [vmem:[%s424 + $0xa9] sm:$0xff]
      %v1968 = vld [vmem:[%s424 + $0xb1] sm:$0xff]
      %v1969 = vld [vmem:[%s424 + $0xc1] sm:$0xff]
      %v1970 = vld [vmem:[%s424 + $0xc9] sm:$0xff]
      %v1971 = vld [vmem:[%s424 + $0xd9] sm:$0xff]
      %v1972 = vld [vmem:[%s424 + $0xe1] sm:$0xff]
      %v1973 = vld [vmem:[%s424 + $0xf1] sm:$0xff]
      %v1974 = vld [vmem:[%s424 + $0xf9] sm:$0xff]
      %v1975 = vld [vmem:[%s424 + $0x109] sm:$0xff]
      %v1976 = vld [vmem:[%s424 + $0x111] sm:$0xff]
      %v1977 = vld [vmem:[%s424 + $0x121] sm:$0xff]
      %v1978 = vld [vmem:[%s424 + $0x129] sm:$0xff]
      %v1979 = vld [vmem:[%s424 + $0x139] sm:$0xff]
      %v1980 = vld [vmem:[%s424 + $0x141] sm:$0xff]
      %v1981 = vld [vmem:[%s424 + $0x151] sm:$0xff]
      %v1982 = vld [vmem:[%s424 + $0x159] sm:$0xff]
      %v1983 = vld [vmem:[%s424 + $0x169] sm:$0xff]
      %v1984 = vld [vmem:[%s424 + $0x171] sm:$0xff]
      %s1985 = scalar_lea.vmem %s3, 16
      %v1986 = vld [vmem:[%s1985] sm:$0xf]
      %v1988 = vsel %vm378, %v1953, 0
      %v1991 = vsel %vm378, %v1954, 0
      %v1994 = vsel %vm378, %v1955, 0
      %v1997 = vsel %vm378, %v1956, 0
      %v2000 = vsel %vm378, %v1957, 0
      %v2003 = vsel %vm378, %v1958, 0
      %v2006 = vsel %vm378, %v1959, 0
      %v2009 = vsel %vm378, %v1960, 0
      %v2012 = vsel %vm378, %v1961, 0
      %v2015 = vsel %vm378, %v1962, 0
      %v2018 = vsel %vm378, %v1963, 0
      %v2021 = vsel %vm378, %v1964, 0
      %v2024 = vsel %vm378, %v1965, 0
      %v2027 = vsel %vm378, %v1966, 0
      %v2030 = vsel %vm378, %v1967, 0
      %v2033 = vsel %vm378, %v1968, 0
      %v2036 = vsel %vm378, %v1969, 0
      %v2039 = vsel %vm378, %v1970, 0
      %v2042 = vsel %vm378, %v1971, 0
      %v2045 = vsel %vm378, %v1972, 0
      %v2048 = vsel %vm378, %v1973, 0
      %v2051 = vsel %vm378, %v1974, 0
      %v2054 = vsel %vm378, %v1975, 0
      %v2057 = vsel %vm378, %v1976, 0
      %v2060 = vsel %vm378, %v1977, 0
      %v2063 = vsel %vm378, %v1978, 0
      %v2066 = vsel %vm378, %v1979, 0
      %v2069 = vsel %vm378, %v1980, 0
      %v2072 = vsel %vm378, %v1981, 0
      %v2075 = vsel %vm378, %v1982, 0
      %v2078 = vsel %vm378, %v1983, 0
      %v2081 = vsel %vm378, %v1984, 0
      %v2084 = vsel %vm620, %v1986, 0
      %2086 = vmatprep.subr.mxu0 0.0
      %2087 = vmatpush1.msra.mxu0 %v2084
      %2088 = vmatprep.subr.mxu0 0.0
      %2089 = vmatpush1.msra.mxu0 0.0
      %2090 = vmatprep.subr.mxu0 0.0
      %2091 = vmatpush1.msra.mxu0 0.0
      %2092 = vmatprep.subr.mxu0 0.0
      %2093 = vmatpush1.msra.mxu0 0.0
      %2094 = vmatprep.subr.mxu0 0.0
      %2095 = vmatpush1.msra.mxu0 0.0
      %2096 = vmatprep.subr.mxu0 0.0
      %2097 = vmatpush1.msra.mxu0 0.0
      %2098 = vmatprep.subr.mxu0 0.0
      %2099 = vmatpush1.msra.mxu0 0.0
      %2100 = vmatprep.subr.mxu0 0.0
      %2101 = vmatpush1.msra.mxu0 0.0
      %2102 = vmatprep.subr.mxu0 0.0
      %2103 = vmatpush1.msra.mxu0 0.0
      %2104 = vmatprep.subr.mxu0 0.0
      %2105 = vmatpush1.msra.mxu0 0.0
      %2106 = vmatprep.subr.mxu0 0.0
      %2107 = vmatpush1.msra.mxu0 0.0
      %2108 = vmatprep.subr.mxu0 0.0
      %2109 = vmatpush1.msra.mxu0 0.0
      %2110 = vmatprep.subr.mxu0 0.0
      %2111 = vmatpush1.msra.mxu0 0.0
      %2112 = vmatprep.subr.mxu0 0.0
      %2113 = vmatpush1.msra.mxu0 0.0
      %2114 = vmatprep.subr.mxu0 0.0
      %2115 = vmatpush1.msra.mxu0 0.0
      %2116 = vmatprep.subr.mxu0 0.0
      %2117 = vmatpush1.msra.mxu0 0.0
      %2118 = vmatprep.subr.mxu0 0.0
      %2119 = vmatpush1.msra.mxu0 0.0
      %2120 = vmatprep.subr.mxu0 0.0
      %2121 = vmatpush1.msra.mxu0 0.0
      %2122 = vmatprep.subr.mxu0 0.0
      %2123 = vmatpush1.msra.mxu0 0.0
      %2124 = vmatprep.subr.mxu0 0.0
      %2125 = vmatpush1.msra.mxu0 0.0
      %2126 = vmatprep.subr.mxu0 0.0
      %2127 = vmatpush1.msra.mxu0 0.0
      %2128 = vmatprep.subr.mxu0 0.0
      %2129 = vmatpush1.msra.mxu0 0.0
      %2130 = vmatprep.subr.mxu0 0.0
      %2131 = vmatpush1.msra.mxu0 0.0
      %2132 = vmatprep.subr.mxu0 0.0
      %2133 = vmatpush1.msra.mxu0 0.0
      %2134 = vmatprep.subr.mxu0 0.0
      %2135 = vmatpush1.msra.mxu0 0.0
      %2136 = vmatprep.subr.mxu0 0.0
      %2137 = vmatpush1.msra.mxu0 0.0
      %2138 = vmatprep.subr.mxu0 0.0
      %2139 = vmatpush1.msra.mxu0 0.0
      %2140 = vmatprep.subr.mxu0 0.0
      %2141 = vmatpush1.msra.mxu0 0.0
      %2142 = vmatprep.subr.mxu0 0.0
      %2143 = vmatpush1.msra.mxu0 0.0
      %2144 = vmatprep.subr.mxu0 0.0
      %2145 = vmatpush1.msra.mxu0 0.0
      %2146 = vmatprep.subr.mxu0 0.0
      %2147 = vmatpush1.msra.mxu0 0.0
      %2148 = vmatprep.subr.mxu0 0.0
      %2149 = vmatpush1.msra.mxu0 0.0
      %2150 = vmatprep.mubr.f32.mxu0 0.0
      %2151 = vmatmul.mubr.f32.gmra.mrb[0].mxu0 %v1988
      %v2152 = vpop.f32.mrb[0].mxu0
      %v2153 = vadd.f32 0.0, %v2152
      %v2154 = vpop.f32.mrb[0].mxu0
      %2155 = vmatprep.mubr.f32.mxu0 0.0
      %2156 = vmatmul.mubr.f32.gmra.mrb[0].mxu0 %v1991
      %v2157 = vpop.f32.mrb[0].mxu0
      %v2158 = vadd.f32 0.0, %v2157
      %v2159 = vpop.f32.mrb[0].mxu0
      %2160 = vmatprep.mubr.f32.mxu0 0.0
      %2161 = vmatmul.mubr.f32.gmra.mrb[0].mxu0 %v1994
      %v2162 = vpop.f32.mrb[0].mxu0
      %v2163 = vadd.f32 0.0, %v2162
      %v2164 = vpop.f32.mrb[0].mxu0
      %2165 = vmatprep.mubr.f32.mxu0 0.0
      %2166 = vmatmul.mubr.f32.gmra.mrb[0].mxu0 %v1997
      %v2167 = vpop.f32.mrb[0].mxu0
      %v2168 = vadd.f32 0.0, %v2167
      %v2169 = vpop.f32.mrb[0].mxu0
      %2170 = vmatprep.mubr.f32.mxu0 0.0
      %2171 = vmatmul.mubr.f32.gmra.mrb[0].mxu0 %v2000
      %v2172 = vpop.f32.mrb[0].mxu0
      %v2173 = vadd.f32 0.0, %v2172
      %v2174 = vpop.f32.mrb[0].mxu0
      %2175 = vmatprep.mubr.f32.mxu0 0.0
      %2176 = vmatmul.mubr.f32.gmra.mrb[0].mxu0 %v2003
      %v2177 = vpop.f32.mrb[0].mxu0
      %v2178 = vadd.f32 0.0, %v2177
      %v2179 = vpop.f32.mrb[0].mxu0
      %2180 = vmatprep.mubr.f32.mxu0 0.0
      %2181 = vmatmul.mubr.f32.gmra.mrb[0].mxu0 %v2006
      %v2182 = vpop.f32.mrb[0].mxu0
      %v2183 = vadd.f32 0.0, %v2182
      %v2184 = vpop.f32.mrb[0].mxu0
      %2185 = vmatprep.mubr.f32.mxu0 0.0
      %2186 = vmatmul.mubr.f32.gmra.mrb[0].mxu0 %v2009
      %v2187 = vpop.f32.mrb[0].mxu0
      %v2188 = vadd.f32 0.0, %v2187
      %v2189 = vpop.f32.mrb[0].mxu0
      %2190 = vmatprep.mubr.f32.mxu0 0.0
      %2191 = vmatmul.mubr.f32.gmra.mrb[0].mxu0 %v2012
      %v2192 = vpop.f32.mrb[0].mxu0
      %v2193 = vadd.f32 0.0, %v2192
      %v2194 = vpop.f32.mrb[0].mxu0
      %2195 = vmatprep.mubr.f32.mxu0 0.0
      %2196 = vmatmul.mubr.f32.gmra.mrb[0].mxu0 %v2015
      %v2197 = vpop.f32.mrb[0].mxu0
      %v2198 = vadd.f32 0.0, %v2197
      %v2199 = vpop.f32.mrb[0].mxu0
      %2200 = vmatprep.mubr.f32.mxu0 0.0
      %2201 = vmatmul.mubr.f32.gmra.mrb[0].mxu0 %v2018
      %v2202 = vpop.f32.mrb[0].mxu0
      %v2203 = vadd.f32 0.0, %v2202
      %v2204 = vpop.f32.mrb[0].mxu0
      %2205 = vmatprep.mubr.f32.mxu0 0.0
      %2206 = vmatmul.mubr.f32.gmra.mrb[0].mxu0 %v2021
      %v2207 = vpop.f32.mrb[0].mxu0
      %v2208 = vadd.f32 0.0, %v2207
      %v2209 = vpop.f32.mrb[0].mxu0
      %2210 = vmatprep.mubr.f32.mxu0 0.0
      %2211 = vmatmul.mubr.f32.gmra.mrb[0].mxu0 %v2024
      %v2212 = vpop.f32.mrb[0].mxu0
      %v2213 = vadd.f32 0.0, %v2212
      %v2214 = vpop.f32.mrb[0].mxu0
      %2215 = vmatprep.mubr.f32.mxu0 0.0
      %2216 = vmatmul.mubr.f32.gmra.mrb[0].mxu0 %v2027
      %v2217 = vpop.f32.mrb[0].mxu0
      %v2218 = vadd.f32 0.0, %v2217
      %v2219 = vpop.f32.mrb[0].mxu0
      %2220 = vmatprep.mubr.f32.mxu0 0.0
      %2221 = vmatmul.mubr.f32.gmra.mrb[0].mxu0 %v2030
      %v2222 = vpop.f32.mrb[0].mxu0
      %v2223 = vadd.f32 0.0, %v2222
      %v2224 = vpop.f32.mrb[0].mxu0
      %2225 = vmatprep.mubr.f32.mxu0 0.0
      %2226 = vmatmul.mubr.f32.gmra.mrb[0].mxu0 %v2033
      %v2227 = vpop.f32.mrb[0].mxu0
      %v2228 = vadd.f32 0.0, %v2227
      %v2229 = vpop.f32.mrb[0].mxu0
      %2230 = vmatprep.mubr.f32.mxu0 0.0
      %2231 = vmatmul.mubr.f32.gmra.mrb[0].mxu0 %v2036
      %v2232 = vpop.f32.mrb[0].mxu0
      %v2233 = vadd.f32 0.0, %v2232
      %v2234 = vpop.f32.mrb[0].mxu0
      %2235 = vmatprep.mubr.f32.mxu0 0.0
      %2236 = vmatmul.mubr.f32.gmra.mrb[0].mxu0 %v2039
      %v2237 = vpop.f32.mrb[0].mxu0
      %v2238 = vadd.f32 0.0, %v2237
      %v2239 = vpop.f32.mrb[0].mxu0
      %2240 = vmatprep.mubr.f32.mxu0 0.0
      %2241 = vmatmul.mubr.f32.gmra.mrb[0].mxu0 %v2042
      %v2242 = vpop.f32.mrb[0].mxu0
      %v2243 = vadd.f32 0.0, %v2242
      %v2244 = vpop.f32.mrb[0].mxu0
      %2245 = vmatprep.mubr.f32.mxu0 0.0
      %2246 = vmatmul.mubr.f32.gmra.mrb[0].mxu0 %v2045
      %v2247 = vpop.f32.mrb[0].mxu0
      %v2248 = vadd.f32 0.0, %v2247
      %v2249 = vpop.f32.mrb[0].mxu0
      %2250 = vmatprep.mubr.f32.mxu0 0.0
      %2251 = vmatmul.mubr.f32.gmra.mrb[0].mxu0 %v2048
      %v2252 = vpop.f32.mrb[0].mxu0
      %v2253 = vadd.f32 0.0, %v2252
      %v2254 = vpop.f32.mrb[0].mxu0
      %2255 = vmatprep.mubr.f32.mxu0 0.0
      %2256 = vmatmul.mubr.f32.gmra.mrb[0].mxu0 %v2051
      %v2257 = vpop.f32.mrb[0].mxu0
      %v2258 = vadd.f32 0.0, %v2257
      %v2259 = vpop.f32.mrb[0].mxu0
      %2260 = vmatprep.mubr.f32.mxu0 0.0
      %2261 = vmatmul.mubr.f32.gmra.mrb[0].mxu0 %v2054
      %v2262 = vpop.f32.mrb[0].mxu0
      %v2263 = vadd.f32 0.0, %v2262
      %v2264 = vpop.f32.mrb[0].mxu0
      %2265 = vmatprep.mubr.f32.mxu0 0.0
      %2266 = vmatmul.mubr.f32.gmra.mrb[0].mxu0 %v2057
      %v2267 = vpop.f32.mrb[0].mxu0
      %v2268 = vadd.f32 0.0, %v2267
      %v2269 = vpop.f32.mrb[0].mxu0
      %2270 = vmatprep.mubr.f32.mxu0 0.0
      %2271 = vmatmul.mubr.f32.gmra.mrb[0].mxu0 %v2060
      %v2272 = vpop.f32.mrb[0].mxu0
      %v2273 = vadd.f32 0.0, %v2272
      %v2274 = vpop.f32.mrb[0].mxu0
      %2275 = vmatprep.mubr.f32.mxu0 0.0
      %2276 = vmatmul.mubr.f32.gmra.mrb[0].mxu0 %v2063
      %v2277 = vpop.f32.mrb[0].mxu0
      %v2278 = vadd.f32 0.0, %v2277
      %v2279 = vpop.f32.mrb[0].mxu0
      %2280 = vmatprep.mubr.f32.mxu0 0.0
      %2281 = vmatmul.mubr.f32.gmra.mrb[0].mxu0 %v2066
      %v2282 = vpop.f32.mrb[0].mxu0
      %v2283 = vadd.f32 0.0, %v2282
      %v2284 = vpop.f32.mrb[0].mxu0
      %2285 = vmatprep.mubr.f32.mxu0 0.0
      %2286 = vmatmul.mubr.f32.gmra.mrb[0].mxu0 %v2069
      %v2287 = vpop.f32.mrb[0].mxu0
      %v2288 = vadd.f32 0.0, %v2287
      %v2289 = vpop.f32.mrb[0].mxu0
      %2290 = vmatprep.mubr.f32.mxu0 0.0
      %2291 = vmatmul.mubr.f32.gmra.mrb[0].mxu0 %v2072
      %v2292 = vpop.f32.mrb[0].mxu0
      %v2293 = vadd.f32 0.0, %v2292
      %v2294 = vpop.f32.mrb[0].mxu0
      %2295 = vmatprep.mubr.f32.mxu0 0.0
      %2296 = vmatmul.mubr.f32.gmra.mrb[0].mxu0 %v2075
      %v2297 = vpop.f32.mrb[0].mxu0
      %v2298 = vadd.f32 0.0, %v2297
      %v2299 = vpop.f32.mrb[0].mxu0
      %2300 = vmatprep.mubr.f32.mxu0 0.0
      %2301 = vmatmul.mubr.f32.gmra.mrb[0].mxu0 %v2078
      %v2302 = vpop.f32.mrb[0].mxu0
      %v2303 = vadd.f32 0.0, %v2302
      %v2304 = vpop.f32.mrb[0].mxu0
      %2305 = vmatprep.mubr.f32.mxu0 0.0
      %2306 = vmatmul.mubr.f32.gmra.mrb[0].mxu0 %v2081
      %v2307 = vpop.f32.mrb[0].mxu0
      %v2308 = vadd.f32 0.0, %v2307
      %v2309 = vpop.f32.mrb[0].mxu0
      %2310 = vdwg.mxu0
      %v2311 = vadd.f32 %v1921, %v2153
      %v2312 = vadd.f32 %v1922, %v2158
      %v2313 = vadd.f32 %v1923, %v2163
      %v2314 = vadd.f32 %v1924, %v2168
      %v2315 = vadd.f32 %v1925, %v2173
      %v2316 = vadd.f32 %v1926, %v2178
      %v2317 = vadd.f32 %v1927, %v2183
      %v2318 = vadd.f32 %v1928, %v2188
      %v2319 = vadd.f32 %v1929, %v2193
      %v2320 = vadd.f32 %v1930, %v2198
      %v2321 = vadd.f32 %v1931, %v2203
      %v2322 = vadd.f32 %v1932, %v2208
      %v2323 = vadd.f32 %v1933, %v2213
      %v2324 = vadd.f32 %v1934, %v2218
      %v2325 = vadd.f32 %v1935, %v2223
      %v2326 = vadd.f32 %v1936, %v2228
      %v2327 = vadd.f32 %v1937, %v2233
      %v2328 = vadd.f32 %v1938, %v2238
      %v2329 = vadd.f32 %v1939, %v2243
      %v2330 = vadd.f32 %v1940, %v2248
      %v2331 = vadd.f32 %v1941, %v2253
      %v2332 = vadd.f32 %v1942, %v2258
      %v2333 = vadd.f32 %v1943, %v2263
      %v2334 = vadd.f32 %v1944, %v2268
      %v2335 = vadd.f32 %v1945, %v2273
      %v2336 = vadd.f32 %v1946, %v2278
      %v2337 = vadd.f32 %v1947, %v2283
      %v2338 = vadd.f32 %v1948, %v2288
      %v2339 = vadd.f32 %v1949, %v2293
      %v2340 = vadd.f32 %v1950, %v2298
      %v2341 = vadd.f32 %v1951, %v2303
      %v2342 = vadd.f32 %v1952, %v2308
      %v2343 = vld [vmem:[%s424 + $0x2] sm:$0xff]
      %v2344 = vld [vmem:[%s424 + $0xa] sm:$0xff]
      %v2345 = vld [vmem:[%s424 + $0x1a] sm:$0xff]
      %v2346 = vld [vmem:[%s424 + $0x22] sm:$0xff]
      %v2347 = vld [vmem:[%s424 + $0x32] sm:$0xff]
      %v2348 = vld [vmem:[%s424 + $0x3a] sm:$0xff]
      %v2349 = vld [vmem:[%s424 + $0x4a] sm:$0xff]
      %v2350 = vld [vmem:[%s424 + $0x52] sm:$0xff]
      %v2351 = vld [vmem:[%s424 + $0x62] sm:$0xff]
      %v2352 = vld [vmem:[%s424 + $0x6a] sm:$0xff]
      %v2353 = vld [vmem:[%s424 + $0x7a] sm:$0xff]
      %v2354 = vld [vmem:[%s424 + $0x82] sm:$0xff]
      %v2355 = vld [vmem:[%s424 + $0x92] sm:$0xff]
      %v2356 = vld [vmem:[%s424 + $0x9a] sm:$0xff]
      %v2357 = vld [vmem:[%s424 + $0xaa] sm:$0xff]
      %v2358 = vld [vmem:[%s424 + $0xb2] sm:$0xff]
      %v2359 = vld [vmem:[%s424 + $0xc2] sm:$0xff]
      %v2360 = vld [vmem:[%s424 + $0xca] sm:$0xff]
      %v2361 = vld [vmem:[%s424 + $0xda] sm:$0xff]
      %v2362 = vld [vmem:[%s424 + $0xe2] sm:$0xff]
      %v2363 = vld [vmem:[%s424 + $0xf2] sm:$0xff]
      %v2364 = vld [vmem:[%s424 + $0xfa] sm:$0xff]
      %v2365 = vld [vmem:[%s424 + $0x10a] sm:$0xff]
      %v2366 = vld [vmem:[%s424 + $0x112] sm:$0xff]
      %v2367 = vld [vmem:[%s424 + $0x122] sm:$0xff]
      %v2368 = vld [vmem:[%s424 + $0x12a] sm:$0xff]
      %v2369 = vld [vmem:[%s424 + $0x13a] sm:$0xff]
      %v2370 = vld [vmem:[%s424 + $0x142] sm:$0xff]
      %v2371 = vld [vmem:[%s424 + $0x152] sm:$0xff]
      %v2372 = vld [vmem:[%s424 + $0x15a] sm:$0xff]
      %v2373 = vld [vmem:[%s424 + $0x16a] sm:$0xff]
      %v2374 = vld [vmem:[%s424 + $0x172] sm:$0xff]
      %s2375 = scalar_lea.vmem %s3, 20
      %v2376 = vld [vmem:[%s2375] sm:$0xf]
      %v2378 = vsel %vm378, %v2343, 0
      %v2381 = vsel %vm378, %v2344, 0
      %v2384 = vsel %vm378, %v2345, 0
      %v2387 = vsel %vm378, %v2346, 0
      %v2390 = vsel %vm378, %v2347, 0
      %v2393 = vsel %vm378, %v2348, 0
      %v2396 = vsel %vm378, %v2349, 0
      %v2399 = vsel %vm378, %v2350, 0
      %v2402 = vsel %vm378, %v2351, 0
      %v2405 = vsel %vm378, %v2352, 0
      %v2408 = vsel %vm378, %v2353, 0
      %v2411 = vsel %vm378, %v2354, 0
      %v2414 = vsel %vm378, %v2355, 0
      %v2417 = vsel %vm378, %v2356, 0
      %v2420 = vsel %vm378, %v2357, 0
      %v2423 = vsel %vm378, %v2358, 0
      %v2426 = vsel %vm378, %v2359, 0
      %v2429 = vsel %vm378, %v2360, 0
      %v2432 = vsel %vm378, %v2361, 0
      %v2435 = vsel %vm378, %v2362, 0
      %v2438 = vsel %vm378, %v2363, 0
      %v2441 = vsel %vm378, %v2364, 0
      %v2444 = vsel %vm378, %v2365, 0
      %v2447 = vsel %vm378, %v2366, 0
      %v2450 = vsel %vm378, %v2367, 0
      %v2453 = vsel %vm378, %v2368, 0
      %v2456 = vsel %vm378, %v2369, 0
      %v2459 = vsel %vm378, %v2370, 0
      %v2462 = vsel %vm378, %v2371, 0
      %v2465 = vsel %vm378, %v2372, 0
      %v2468 = vsel %vm378, %v2373, 0
      %v2471 = vsel %vm378, %v2374, 0
      %v2474 = vsel %vm620, %v2376, 0
      %2476 = vmatprep.subr.mxu0 0.0
      %2477 = vmatpush1.msra.mxu0 %v2474
      %2478 = vmatprep.subr.mxu0 0.0
      %2479 = vmatpush1.msra.mxu0 0.0
      %2480 = vmatprep.subr.mxu0 0.0
      %2481 = vmatpush1.msra.mxu0 0.0
      %2482 = vmatprep.subr.mxu0 0.0
      %2483 = vmatpush1.msra.mxu0 0.0
      %2484 = vmatprep.subr.mxu0 0.0
      %2485 = vmatpush1.msra.mxu0 0.0
      %2486 = vmatprep.subr.mxu0 0.0
      %2487 = vmatpush1.msra.mxu0 0.0
      %2488 = vmatprep.subr.mxu0 0.0
      %2489 = vmatpush1.msra.mxu0 0.0
      %2490 = vmatprep.subr.mxu0 0.0
      %2491 = vmatpush1.msra.mxu0 0.0
      %2492 = vmatprep.subr.mxu0 0.0
      %2493 = vmatpush1.msra.mxu0 0.0
      %2494 = vmatprep.subr.mxu0 0.0
      %2495 = vmatpush1.msra.mxu0 0.0
      %2496 = vmatprep.subr.mxu0 0.0
      %2497 = vmatpush1.msra.mxu0 0.0
      %2498 = vmatprep.subr.mxu0 0.0
      %2499 = vmatpush1.msra.mxu0 0.0
      %2500 = vmatprep.subr.mxu0 0.0
      %2501 = vmatpush1.msra.mxu0 0.0
      %2502 = vmatprep.subr.mxu0 0.0
      %2503 = vmatpush1.msra.mxu0 0.0
      %2504 = vmatprep.subr.mxu0 0.0
      %2505 = vmatpush1.msra.mxu0 0.0
      %2506 = vmatprep.subr.mxu0 0.0
      %2507 = vmatpush1.msra.mxu0 0.0
      %2508 = vmatprep.subr.mxu0 0.0
      %2509 = vmatpush1.msra.mxu0 0.0
      %2510 = vmatprep.subr.mxu0 0.0
      %2511 = vmatpush1.msra.mxu0 0.0
      %2512 = vmatprep.subr.mxu0 0.0
      %2513 = vmatpush1.msra.mxu0 0.0
      %2514 = vmatprep.subr.mxu0 0.0
      %2515 = vmatpush1.msra.mxu0 0.0
      %2516 = vmatprep.subr.mxu0 0.0
      %2517 = vmatpush1.msra.mxu0 0.0
      %2518 = vmatprep.subr.mxu0 0.0
      %2519 = vmatpush1.msra.mxu0 0.0
      %2520 = vmatprep.subr.mxu0 0.0
      %2521 = vmatpush1.msra.mxu0 0.0
      %2522 = vmatprep.subr.mxu0 0.0
      %2523 = vmatpush1.msra.mxu0 0.0
      %2524 = vmatprep.subr.mxu0 0.0
      %2525 = vmatpush1.msra.mxu0 0.0
      %2526 = vmatprep.subr.mxu0 0.0
      %2527 = vmatpush1.msra.mxu0 0.0
      %2528 = vmatprep.subr.mxu0 0.0
      %2529 = vmatpush1.msra.mxu0 0.0
      %2530 = vmatprep.subr.mxu0 0.0
      %2531 = vmatpush1.msra.mxu0 0.0
      %2532 = vmatprep.subr.mxu0 0.0
      %2533 = vmatpush1.msra.mxu0 0.0
      %2534 = vmatprep.subr.mxu0 0.0
      %2535 = vmatpush1.msra.mxu0 0.0
      %2536 = vmatprep.subr.mxu0 0.0
      %2537 = vmatpush1.msra.mxu0 0.0
      %2538 = vmatprep.subr.mxu0 0.0
      %2539 = vmatpush1.msra.mxu0 0.0
      %2540 = vmatprep.mubr.f32.mxu0 0.0
      %2541 = vmatmul.mubr.f32.gmra.mrb[0].mxu0 %v2378
      %v2542 = vpop.f32.mrb[0].mxu0
      %v2543 = vadd.f32 0.0, %v2542
      %v2544 = vpop.f32.mrb[0].mxu0
      %2545 = vmatprep.mubr.f32.mxu0 0.0
      %2546 = vmatmul.mubr.f32.gmra.mrb[0].mxu0 %v2381
      %v2547 = vpop.f32.mrb[0].mxu0
      %v2548 = vadd.f32 0.0, %v2547
      %v2549 = vpop.f32.mrb[0].mxu0
      %2550 = vmatprep.mubr.f32.mxu0 0.0
      %2551 = vmatmul.mubr.f32.gmra.mrb[0].mxu0 %v2384
      %v2552 = vpop.f32.mrb[0].mxu0
      %v2553 = vadd.f32 0.0, %v2552
      %v2554 = vpop.f32.mrb[0].mxu0
      %2555 = vmatprep.mubr.f32.mxu0 0.0
      %2556 = vmatmul.mubr.f32.gmra.mrb[0].mxu0 %v2387
      %v2557 = vpop.f32.mrb[0].mxu0
      %v2558 = vadd.f32 0.0, %v2557
      %v2559 = vpop.f32.mrb[0].mxu0
      %2560 = vmatprep.mubr.f32.mxu0 0.0
      %2561 = vmatmul.mubr.f32.gmra.mrb[0].mxu0 %v2390
      %v2562 = vpop.f32.mrb[0].mxu0
      %v2563 = vadd.f32 0.0, %v2562
      %v2564 = vpop.f32.mrb[0].mxu0
      %2565 = vmatprep.mubr.f32.mxu0 0.0
      %2566 = vmatmul.mubr.f32.gmra.mrb[0].mxu0 %v2393
      %v2567 = vpop.f32.mrb[0].mxu0
      %v2568 = vadd.f32 0.0, %v2567
      %v2569 = vpop.f32.mrb[0].mxu0
      %2570 = vmatprep.mubr.f32.mxu0 0.0
      %2571 = vmatmul.mubr.f32.gmra.mrb[0].mxu0 %v2396
      %v2572 = vpop.f32.mrb[0].mxu0
      %v2573 = vadd.f32 0.0, %v2572
      %v2574 = vpop.f32.mrb[0].mxu0
      %2575 = vmatprep.mubr.f32.mxu0 0.0
      %2576 = vmatmul.mubr.f32.gmra.mrb[0].mxu0 %v2399
      %v2577 = vpop.f32.mrb[0].mxu0
      %v2578 = vadd.f32 0.0, %v2577
      %v2579 = vpop.f32.mrb[0].mxu0
      %2580 = vmatprep.mubr.f32.mxu0 0.0
      %2581 = vmatmul.mubr.f32.gmra.mrb[0].mxu0 %v2402
      %v2582 = vpop.f32.mrb[0].mxu0
      %v2583 = vadd.f32 0.0, %v2582
      %v2584 = vpop.f32.mrb[0].mxu0
      %2585 = vmatprep.mubr.f32.mxu0 0.0
      %2586 = vmatmul.mubr.f32.gmra.mrb[0].mxu0 %v2405
      %v2587 = vpop.f32.mrb[0].mxu0
      %v2588 = vadd.f32 0.0, %v2587
      %v2589 = vpop.f32.mrb[0].mxu0
      %2590 = vmatprep.mubr.f32.mxu0 0.0
      %2591 = vmatmul.mubr.f32.gmra.mrb[0].mxu0 %v2408
      %v2592 = vpop.f32.mrb[0].mxu0
      %v2593 = vadd.f32 0.0, %v2592
      %v2594 = vpop.f32.mrb[0].mxu0
      %2595 = vmatprep.mubr.f32.mxu0 0.0
      %2596 = vmatmul.mubr.f32.gmra.mrb[0].mxu0 %v2411
      %v2597 = vpop.f32.mrb[0].mxu0
      %v2598 = vadd.f32 0.0, %v2597
      %v2599 = vpop.f32.mrb[0].mxu0
      %2600 = vmatprep.mubr.f32.mxu0 0.0
      %2601 = vmatmul.mubr.f32.gmra.mrb[0].mxu0 %v2414
      %v2602 = vpop.f32.mrb[0].mxu0
      %v2603 = vadd.f32 0.0, %v2602
      %v2604 = vpop.f32.mrb[0].mxu0
      %2605 = vmatprep.mubr.f32.mxu0 0.0
      %2606 = vmatmul.mubr.f32.gmra.mrb[0].mxu0 %v2417
      %v2607 = vpop.f32.mrb[0].mxu0
      %v2608 = vadd.f32 0.0, %v2607
      %v2609 = vpop.f32.mrb[0].mxu0
      %2610 = vmatprep.mubr.f32.mxu0 0.0
      %2611 = vmatmul.mubr.f32.gmra.mrb[0].mxu0 %v2420
      %v2612 = vpop.f32.mrb[0].mxu0
      %v2613 = vadd.f32 0.0, %v2612
      %v2614 = vpop.f32.mrb[0].mxu0
      %2615 = vmatprep.mubr.f32.mxu0 0.0
      %2616 = vmatmul.mubr.f32.gmra.mrb[0].mxu0 %v2423
      %v2617 = vpop.f32.mrb[0].mxu0
      %v2618 = vadd.f32 0.0, %v2617
      %v2619 = vpop.f32.mrb[0].mxu0
      %2620 = vmatprep.mubr.f32.mxu0 0.0
      %2621 = vmatmul.mubr.f32.gmra.mrb[0].mxu0 %v2426
      %v2622 = vpop.f32.mrb[0].mxu0
      %v2623 = vadd.f32 0.0, %v2622
      %v2624 = vpop.f32.mrb[0].mxu0
      %2625 = vmatprep.mubr.f32.mxu0 0.0
      %2626 = vmatmul.mubr.f32.gmra.mrb[0].mxu0 %v2429
      %v2627 = vpop.f32.mrb[0].mxu0
      %v2628 = vadd.f32 0.0, %v2627
      %v2629 = vpop.f32.mrb[0].mxu0
      %2630 = vmatprep.mubr.f32.mxu0 0.0
      %2631 = vmatmul.mubr.f32.gmra.mrb[0].mxu0 %v2432
      %v2632 = vpop.f32.mrb[0].mxu0
      %v2633 = vadd.f32 0.0, %v2632
      %v2634 = vpop.f32.mrb[0].mxu0
      %2635 = vmatprep.mubr.f32.mxu0 0.0
      %2636 = vmatmul.mubr.f32.gmra.mrb[0].mxu0 %v2435
      %v2637 = vpop.f32.mrb[0].mxu0
      %v2638 = vadd.f32 0.0, %v2637
      %v2639 = vpop.f32.mrb[0].mxu0
      %2640 = vmatprep.mubr.f32.mxu0 0.0
      %2641 = vmatmul.mubr.f32.gmra.mrb[0].mxu0 %v2438
      %v2642 = vpop.f32.mrb[0].mxu0
      %v2643 = vadd.f32 0.0, %v2642
      %v2644 = vpop.f32.mrb[0].mxu0
      %2645 = vmatprep.mubr.f32.mxu0 0.0
      %2646 = vmatmul.mubr.f32.gmra.mrb[0].mxu0 %v2441
      %v2647 = vpop.f32.mrb[0].mxu0
      %v2648 = vadd.f32 0.0, %v2647
      %v2649 = vpop.f32.mrb[0].mxu0
      %2650 = vmatprep.mubr.f32.mxu0 0.0
      %2651 = vmatmul.mubr.f32.gmra.mrb[0].mxu0 %v2444
      %v2652 = vpop.f32.mrb[0].mxu0
      %v2653 = vadd.f32 0.0, %v2652
      %v2654 = vpop.f32.mrb[0].mxu0
      %2655 = vmatprep.mubr.f32.mxu0 0.0
      %2656 = vmatmul.mubr.f32.gmra.mrb[0].mxu0 %v2447
      %v2657 = vpop.f32.mrb[0].mxu0
      %v2658 = vadd.f32 0.0, %v2657
      %v2659 = vpop.f32.mrb[0].mxu0
      %2660 = vmatprep.mubr.f32.mxu0 0.0
      %2661 = vmatmul.mubr.f32.gmra.mrb[0].mxu0 %v2450
      %v2662 = vpop.f32.mrb[0].mxu0
      %v2663 = vadd.f32 0.0, %v2662
      %v2664 = vpop.f32.mrb[0].mxu0
      %2665 = vmatprep.mubr.f32.mxu0 0.0
      %2666 = vmatmul.mubr.f32.gmra.mrb[0].mxu0 %v2453
      %v2667 = vpop.f32.mrb[0].mxu0
      %v2668 = vadd.f32 0.0, %v2667
      %v2669 = vpop.f32.mrb[0].mxu0
      %2670 = vmatprep.mubr.f32.mxu0 0.0
      %2671 = vmatmul.mubr.f32.gmra.mrb[0].mxu0 %v2456
      %v2672 = vpop.f32.mrb[0].mxu0
      %v2673 = vadd.f32 0.0, %v2672
      %v2674 = vpop.f32.mrb[0].mxu0
      %2675 = vmatprep.mubr.f32.mxu0 0.0
      %2676 = vmatmul.mubr.f32.gmra.mrb[0].mxu0 %v2459
      %v2677 = vpop.f32.mrb[0].mxu0
      %v2678 = vadd.f32 0.0, %v2677
      %v2679 = vpop.f32.mrb[0].mxu0
      %2680 = vmatprep.mubr.f32.mxu0 0.0
      %2681 = vmatmul.mubr.f32.gmra.mrb[0].mxu0 %v2462
      %v2682 = vpop.f32.mrb[0].mxu0
      %v2683 = vadd.f32 0.0, %v2682
      %v2684 = vpop.f32.mrb[0].mxu0
      %2685 = vmatprep.mubr.f32.mxu0 0.0
      %2686 = vmatmul.mubr.f32.gmra.mrb[0].mxu0 %v2465
      %v2687 = vpop.f32.mrb[0].mxu0
      %v2688 = vadd.f32 0.0, %v2687
      %v2689 = vpop.f32.mrb[0].mxu0
      %2690 = vmatprep.mubr.f32.mxu0 0.0
      %2691 = vmatmul.mubr.f32.gmra.mrb[0].mxu0 %v2468
      %v2692 = vpop.f32.mrb[0].mxu0
      %v2693 = vadd.f32 0.0, %v2692
      %v2694 = vpop.f32.mrb[0].mxu0
      %2695 = vmatprep.mubr.f32.mxu0 0.0
      %2696 = vmatmul.mubr.f32.gmra.mrb[0].mxu0 %v2471
      %v2697 = vpop.f32.mrb[0].mxu0
      %v2698 = vadd.f32 0.0, %v2697
      %v2699 = vpop.f32.mrb[0].mxu0
      %2700 = vdwg.mxu0
      %v2701 = vadd.f32 %v2311, %v2543
      %v2702 = vadd.f32 %v2312, %v2548
      %v2703 = vadd.f32 %v2313, %v2553
      %v2704 = vadd.f32 %v2314, %v2558
      %v2705 = vadd.f32 %v2315, %v2563
      %v2706 = vadd.f32 %v2316, %v2568
      %v2707 = vadd.f32 %v2317, %v2573
      %v2708 = vadd.f32 %v2318, %v2578
      %v2709 = vadd.f32 %v2319, %v2583
      %v2710 = vadd.f32 %v2320, %v2588
      %v2711 = vadd.f32 %v2321, %v2593
      %v2712 = vadd.f32 %v2322, %v2598
      %v2713 = vadd.f32 %v2323, %v2603
      %v2714 = vadd.f32 %v2324, %v2608
      %v2715 = vadd.f32 %v2325, %v2613
      %v2716 = vadd.f32 %v2326, %v2618
      %v2717 = vadd.f32 %v2327, %v2623
      %v2718 = vadd.f32 %v2328, %v2628
      %v2719 = vadd.f32 %v2329, %v2633
      %v2720 = vadd.f32 %v2330, %v2638
      %v2721 = vadd.f32 %v2331, %v2643
      %v2722 = vadd.f32 %v2332, %v2648
      %v2723 = vadd.f32 %v2333, %v2653
      %v2724 = vadd.f32 %v2334, %v2658
      %v2725 = vadd.f32 %v2335, %v2663
      %v2726 = vadd.f32 %v2336, %v2668
      %v2727 = vadd.f32 %v2337, %v2673
      %v2728 = vadd.f32 %v2338, %v2678
      %v2729 = vadd.f32 %v2339, %v2683
      %v2730 = vadd.f32 %v2340, %v2688
      %v2731 = vadd.f32 %v2341, %v2693
      %v2732 = vadd.f32 %v2342, %v2698
      %s2733 = scalar_lea.vmem [#allocation2], 48
      %v2734 = vld [vmem:[%s2733] sm:$0xff]
      %v2735 = vld [vmem:[%s2733 + $0x8] sm:$0xff]
      %v2736 = vld [vmem:[%s2733 + $0x18] sm:$0xff]
      %v2737 = vld [vmem:[%s2733 + $0x20] sm:$0xff]
      %v2738 = vld [vmem:[%s2733 + $0x30] sm:$0xff]
      %v2739 = vld [vmem:[%s2733 + $0x38] sm:$0xff]
      %v2740 = vld [vmem:[%s2733 + $0x48] sm:$0xff]
      %v2741 = vld [vmem:[%s2733 + $0x50] sm:$0xff]
      %v2742 = vld [vmem:[%s2733 + $0x60] sm:$0xff]
      %v2743 = vld [vmem:[%s2733 + $0x68] sm:$0xff]
      %v2744 = vld [vmem:[%s2733 + $0x78] sm:$0xff]
      %v2745 = vld [vmem:[%s2733 + $0x80] sm:$0xff]
      %v2746 = vld [vmem:[%s2733 + $0x90] sm:$0xff]
      %v2747 = vld [vmem:[%s2733 + $0x98] sm:$0xff]
      %v2748 = vld [vmem:[%s2733 + $0xa8] sm:$0xff]
      %v2749 = vld [vmem:[%s2733 + $0xb0] sm:$0xff]
      %v2750 = vld [vmem:[%s2733 + $0xc0] sm:$0xff]
      %v2751 = vld [vmem:[%s2733 + $0xc8] sm:$0xff]
      %v2752 = vld [vmem:[%s2733 + $0xd8] sm:$0xff]
      %v2753 = vld [vmem:[%s2733 + $0xe0] sm:$0xff]
      %v2754 = vld [vmem:[%s2733 + $0xf0] sm:$0xff]
      %v2755 = vld [vmem:[%s2733 + $0xf8] sm:$0xff]
      %v2756 = vld [vmem:[%s2733 + $0x108] sm:$0xff]
      %v2757 = vld [vmem:[%s2733 + $0x110] sm:$0xff]
      %v2758 = vld [vmem:[%s2733 + $0x120] sm:$0xff]
      %v2759 = vld [vmem:[%s2733 + $0x128] sm:$0xff]
      %v2760 = vld [vmem:[%s2733 + $0x138] sm:$0xff]
      %v2761 = vld [vmem:[%s2733 + $0x140] sm:$0xff]
      %v2762 = vld [vmem:[%s2733 + $0x150] sm:$0xff]
      %v2763 = vld [vmem:[%s2733 + $0x158] sm:$0xff]
      %v2764 = vld [vmem:[%s2733 + $0x168] sm:$0xff]
      %v2765 = vld [vmem:[%s2733 + $0x170] sm:$0xff]
      %s2766 = scalar_lea.vmem %s3, 24
      %v2767 = vld [vmem:[%s2766] sm:$0xf]
      %v2769 = vsel %vm378, %v2734, 0
      %v2772 = vsel %vm378, %v2735, 0
      %v2775 = vsel %vm378, %v2736, 0
      %v2778 = vsel %vm378, %v2737, 0
      %v2781 = vsel %vm378, %v2738, 0
      %v2784 = vsel %vm378, %v2739, 0
      %v2787 = vsel %vm378, %v2740, 0
      %v2790 = vsel %vm378, %v2741, 0
      %v2793 = vsel %vm378, %v2742, 0
      %v2796 = vsel %vm378, %v2743, 0
      %v2799 = vsel %vm378, %v2744, 0
      %v2802 = vsel %vm378, %v2745, 0
      %v2805 = vsel %vm378, %v2746, 0
      %v2808 = vsel %vm378, %v2747, 0
      %v2811 = vsel %vm378, %v2748, 0
      %v2814 = vsel %vm378, %v2749, 0
      %v2817 = vsel %vm378, %v2750, 0
      %v2820 = vsel %vm378, %v2751, 0
      %v2823 = vsel %vm378, %v2752, 0
      %v2826 = vsel %vm378, %v2753, 0
      %v2829 = vsel %vm378, %v2754, 0
      %v2832 = vsel %vm378, %v2755, 0
      %v2835 = vsel %vm378, %v2756, 0
      %v2838 = vsel %vm378, %v2757, 0
      %v2841 = vsel %vm378, %v2758, 0
      %v2844 = vsel %vm378, %v2759, 0
      %v2847 = vsel %vm378, %v2760, 0
      %v2850 = vsel %vm378, %v2761, 0
      %v2853 = vsel %vm378, %v2762, 0
      %v2856 = vsel %vm378, %v2763, 0
      %v2859 = vsel %vm378, %v2764, 0
      %v2862 = vsel %vm378, %v2765, 0
      %v2865 = vsel %vm620, %v2767, 0
      %2867 = vmatprep.subr.mxu0 0.0
      %2868 = vmatpush1.msra.mxu0 %v2865
      %2869 = vmatprep.subr.mxu0 0.0
      %2870 = vmatpush1.msra.mxu0 0.0
      %2871 = vmatprep.subr.mxu0 0.0
      %2872 = vmatpush1.msra.mxu0 0.0
      %2873 = vmatprep.subr.mxu0 0.0
      %2874 = vmatpush1.msra.mxu0 0.0
      %2875 = vmatprep.subr.mxu0 0.0
      %2876 = vmatpush1.msra.mxu0 0.0
      %2877 = vmatprep.subr.mxu0 0.0
      %2878 = vmatpush1.msra.mxu0 0.0
      %2879 = vmatprep.subr.mxu0 0.0
      %2880 = vmatpush1.msra.mxu0 0.0
      %2881 = vmatprep.subr.mxu0 0.0
      %2882 = vmatpush1.msra.mxu0 0.0
      %2883 = vmatprep.subr.mxu0 0.0
      %2884 = vmatpush1.msra.mxu0 0.0
      %2885 = vmatprep.subr.mxu0 0.0
      %2886 = vmatpush1.msra.mxu0 0.0
      %2887 = vmatprep.subr.mxu0 0.0
      %2888 = vmatpush1.msra.mxu0 0.0
      %2889 = vmatprep.subr.mxu0 0.0
      %2890 = vmatpush1.msra.mxu0 0.0
      %2891 = vmatprep.subr.mxu0 0.0
      %2892 = vmatpush1.msra.mxu0 0.0
      %2893 = vmatprep.subr.mxu0 0.0
      %2894 = vmatpush1.msra.mxu0 0.0
      %2895 = vmatprep.subr.mxu0 0.0
      %2896 = vmatpush1.msra.mxu0 0.0
      %2897 = vmatprep.subr.mxu0 0.0
      %2898 = vmatpush1.msra.mxu0 0.0
      %2899 = vmatprep.subr.mxu0 0.0
      %2900 = vmatpush1.msra.mxu0 0.0
      %2901 = vmatprep.subr.mxu0 0.0
      %2902 = vmatpush1.msra.mxu0 0.0
      %2903 = vmatprep.subr.mxu0 0.0
      %2904 = vmatpush1.msra.mxu0 0.0
      %2905 = vmatprep.subr.mxu0 0.0
      %2906 = vmatpush1.msra.mxu0 0.0
      %2907 = vmatprep.subr.mxu0 0.0
      %2908 = vmatpush1.msra.mxu0 0.0
      %2909 = vmatprep.subr.mxu0 0.0
      %2910 = vmatpush1.msra.mxu0 0.0
      %2911 = vmatprep.subr.mxu0 0.0
      %2912 = vmatpush1.msra.mxu0 0.0
      %2913 = vmatprep.subr.mxu0 0.0
      %2914 = vmatpush1.msra.mxu0 0.0
      %2915 = vmatprep.subr.mxu0 0.0
      %2916 = vmatpush1.msra.mxu0 0.0
      %2917 = vmatprep.subr.mxu0 0.0
      %2918 = vmatpush1.msra.mxu0 0.0
      %2919 = vmatprep.subr.mxu0 0.0
      %2920 = vmatpush1.msra.mxu0 0.0
      %2921 = vmatprep.subr.mxu0 0.0
      %2922 = vmatpush1.msra.mxu0 0.0
      %2923 = vmatprep.subr.mxu0 0.0
      %2924 = vmatpush1.msra.mxu0 0.0
      %2925 = vmatprep.subr.mxu0 0.0
      %2926 = vmatpush1.msra.mxu0 0.0
      %2927 = vmatprep.subr.mxu0 0.0
      %2928 = vmatpush1.msra.mxu0 0.0
      %2929 = vmatprep.subr.mxu0 0.0
      %2930 = vmatpush1.msra.mxu0 0.0
      %2931 = vmatprep.mubr.f32.mxu0 0.0
      %2932 = vmatmul.mubr.f32.gmra.mrb[0].mxu0 %v2769
      %v2933 = vpop.f32.mrb[0].mxu0
      %v2934 = vadd.f32 0.0, %v2933
      %v2935 = vpop.f32.mrb[0].mxu0
      %2936 = vmatprep.mubr.f32.mxu0 0.0
      %2937 = vmatmul.mubr.f32.gmra.mrb[0].mxu0 %v2772
      %v2938 = vpop.f32.mrb[0].mxu0
      %v2939 = vadd.f32 0.0, %v2938
      %v2940 = vpop.f32.mrb[0].mxu0
      %2941 = vmatprep.mubr.f32.mxu0 0.0
      %2942 = vmatmul.mubr.f32.gmra.mrb[0].mxu0 %v2775
      %v2943 = vpop.f32.mrb[0].mxu0
      %v2944 = vadd.f32 0.0, %v2943
      %v2945 = vpop.f32.mrb[0].mxu0
      %2946 = vmatprep.mubr.f32.mxu0 0.0
      %2947 = vmatmul.mubr.f32.gmra.mrb[0].mxu0 %v2778
      %v2948 = vpop.f32.mrb[0].mxu0
      %v2949 = vadd.f32 0.0, %v2948
      %v2950 = vpop.f32.mrb[0].mxu0
      %2951 = vmatprep.mubr.f32.mxu0 0.0
      %2952 = vmatmul.mubr.f32.gmra.mrb[0].mxu0 %v2781
      %v2953 = vpop.f32.mrb[0].mxu0
      %v2954 = vadd.f32 0.0, %v2953
      %v2955 = vpop.f32.mrb[0].mxu0
      %2956 = vmatprep.mubr.f32.mxu0 0.0
      %2957 = vmatmul.mubr.f32.gmra.mrb[0].mxu0 %v2784
      %v2958 = vpop.f32.mrb[0].mxu0
      %v2959 = vadd.f32 0.0, %v2958
      %v2960 = vpop.f32.mrb[0].mxu0
      %2961 = vmatprep.mubr.f32.mxu0 0.0
      %2962 = vmatmul.mubr.f32.gmra.mrb[0].mxu0 %v2787
      %v2963 = vpop.f32.mrb[0].mxu0
      %v2964 = vadd.f32 0.0, %v2963
      %v2965 = vpop.f32.mrb[0].mxu0
      %2966 = vmatprep.mubr.f32.mxu0 0.0
      %2967 = vmatmul.mubr.f32.gmra.mrb[0].mxu0 %v2790
      %v2968 = vpop.f32.mrb[0].mxu0
      %v2969 = vadd.f32 0.0, %v2968
      %v2970 = vpop.f32.mrb[0].mxu0
      %2971 = vmatprep.mubr.f32.mxu0 0.0
      %2972 = vmatmul.mubr.f32.gmra.mrb[0].mxu0 %v2793
      %v2973 = vpop.f32.mrb[0].mxu0
      %v2974 = vadd.f32 0.0, %v2973
      %v2975 = vpop.f32.mrb[0].mxu0
      %2976 = vmatprep.mubr.f32.mxu0 0.0
      %2977 = vmatmul.mubr.f32.gmra.mrb[0].mxu0 %v2796
      %v2978 = vpop.f32.mrb[0].mxu0
      %v2979 = vadd.f32 0.0, %v2978
      %v2980 = vpop.f32.mrb[0].mxu0
      %2981 = vmatprep.mubr.f32.mxu0 0.0
      %2982 = vmatmul.mubr.f32.gmra.mrb[0].mxu0 %v2799
      %v2983 = vpop.f32.mrb[0].mxu0
      %v2984 = vadd.f32 0.0, %v2983
      %v2985 = vpop.f32.mrb[0].mxu0
      %2986 = vmatprep.mubr.f32.mxu0 0.0
      %2987 = vmatmul.mubr.f32.gmra.mrb[0].mxu0 %v2802
      %v2988 = vpop.f32.mrb[0].mxu0
      %v2989 = vadd.f32 0.0, %v2988
      %v2990 = vpop.f32.mrb[0].mxu0
      %2991 = vmatprep.mubr.f32.mxu0 0.0
      %2992 = vmatmul.mubr.f32.gmra.mrb[0].mxu0 %v2805
      %v2993 = vpop.f32.mrb[0].mxu0
      %v2994 = vadd.f32 0.0, %v2993
      %v2995 = vpop.f32.mrb[0].mxu0
      %2996 = vmatprep.mubr.f32.mxu0 0.0
      %2997 = vmatmul.mubr.f32.gmra.mrb[0].mxu0 %v2808
      %v2998 = vpop.f32.mrb[0].mxu0
      %v2999 = vadd.f32 0.0, %v2998
      %v3000 = vpop.f32.mrb[0].mxu0
      %3001 = vmatprep.mubr.f32.mxu0 0.0
      %3002 = vmatmul.mubr.f32.gmra.mrb[0].mxu0 %v2811
      %v3003 = vpop.f32.mrb[0].mxu0
      %v3004 = vadd.f32 0.0, %v3003
      %v3005 = vpop.f32.mrb[0].mxu0
      %3006 = vmatprep.mubr.f32.mxu0 0.0
      %3007 = vmatmul.mubr.f32.gmra.mrb[0].mxu0 %v2814
      %v3008 = vpop.f32.mrb[0].mxu0
      %v3009 = vadd.f32 0.0, %v3008
      %v3010 = vpop.f32.mrb[0].mxu0
      %3011 = vmatprep.mubr.f32.mxu0 0.0
      %3012 = vmatmul.mubr.f32.gmra.mrb[0].mxu0 %v2817
      %v3013 = vpop.f32.mrb[0].mxu0
      %v3014 = vadd.f32 0.0, %v3013
      %v3015 = vpop.f32.mrb[0].mxu0
      %3016 = vmatprep.mubr.f32.mxu0 0.0
      %3017 = vmatmul.mubr.f32.gmra.mrb[0].mxu0 %v2820
      %v3018 = vpop.f32.mrb[0].mxu0
      %v3019 = vadd.f32 0.0, %v3018
      %v3020 = vpop.f32.mrb[0].mxu0
      %3021 = vmatprep.mubr.f32.mxu0 0.0
      %3022 = vmatmul.mubr.f32.gmra.mrb[0].mxu0 %v2823
      %v3023 = vpop.f32.mrb[0].mxu0
      %v3024 = vadd.f32 0.0, %v3023
      %v3025 = vpop.f32.mrb[0].mxu0
      %3026 = vmatprep.mubr.f32.mxu0 0.0
      %3027 = vmatmul.mubr.f32.gmra.mrb[0].mxu0 %v2826
      %v3028 = vpop.f32.mrb[0].mxu0
      %v3029 = vadd.f32 0.0, %v3028
      %v3030 = vpop.f32.mrb[0].mxu0
      %3031 = vmatprep.mubr.f32.mxu0 0.0
      %3032 = vmatmul.mubr.f32.gmra.mrb[0].mxu0 %v2829
      %v3033 = vpop.f32.mrb[0].mxu0
      %v3034 = vadd.f32 0.0, %v3033
      %v3035 = vpop.f32.mrb[0].mxu0
      %3036 = vmatprep.mubr.f32.mxu0 0.0
      %3037 = vmatmul.mubr.f32.gmra.mrb[0].mxu0 %v2832
      %v3038 = vpop.f32.mrb[0].mxu0
      %v3039 = vadd.f32 0.0, %v3038
      %v3040 = vpop.f32.mrb[0].mxu0
      %3041 = vmatprep.mubr.f32.mxu0 0.0
      %3042 = vmatmul.mubr.f32.gmra.mrb[0].mxu0 %v2835
      %v3043 = vpop.f32.mrb[0].mxu0
      %v3044 = vadd.f32 0.0, %v3043
      %v3045 = vpop.f32.mrb[0].mxu0
      %3046 = vmatprep.mubr.f32.mxu0 0.0
      %3047 = vmatmul.mubr.f32.gmra.mrb[0].mxu0 %v2838
      %v3048 = vpop.f32.mrb[0].mxu0
      %v3049 = vadd.f32 0.0, %v3048
      %v3050 = vpop.f32.mrb[0].mxu0
      %3051 = vmatprep.mubr.f32.mxu0 0.0
      %3052 = vmatmul.mubr.f32.gmra.mrb[0].mxu0 %v2841
      %v3053 = vpop.f32.mrb[0].mxu0
      %v3054 = vadd.f32 0.0, %v3053
      %v3055 = vpop.f32.mrb[0].mxu0
      %3056 = vmatprep.mubr.f32.mxu0 0.0
      %3057 = vmatmul.mubr.f32.gmra.mrb[0].mxu0 %v2844
      %v3058 = vpop.f32.mrb[0].mxu0
      %v3059 = vadd.f32 0.0, %v3058
      %v3060 = vpop.f32.mrb[0].mxu0
      %3061 = vmatprep.mubr.f32.mxu0 0.0
      %3062 = vmatmul.mubr.f32.gmra.mrb[0].mxu0 %v2847
      %v3063 = vpop.f32.mrb[0].mxu0
      %v3064 = vadd.f32 0.0, %v3063
      %v3065 = vpop.f32.mrb[0].mxu0
      %3066 = vmatprep.mubr.f32.mxu0 0.0
      %3067 = vmatmul.mubr.f32.gmra.mrb[0].mxu0 %v2850
      %v3068 = vpop.f32.mrb[0].mxu0
      %v3069 = vadd.f32 0.0, %v3068
      %v3070 = vpop.f32.mrb[0].mxu0
      %3071 = vmatprep.mubr.f32.mxu0 0.0
      %3072 = vmatmul.mubr.f32.gmra.mrb[0].mxu0 %v2853
      %v3073 = vpop.f32.mrb[0].mxu0
      %v3074 = vadd.f32 0.0, %v3073
      %v3075 = vpop.f32.mrb[0].mxu0
      %3076 = vmatprep.mubr.f32.mxu0 0.0
      %3077 = vmatmul.mubr.f32.gmra.mrb[0].mxu0 %v2856
      %v3078 = vpop.f32.mrb[0].mxu0
      %v3079 = vadd.f32 0.0, %v3078
      %v3080 = vpop.f32.mrb[0].mxu0
      %3081 = vmatprep.mubr.f32.mxu0 0.0
      %3082 = vmatmul.mubr.f32.gmra.mrb[0].mxu0 %v2859
      %v3083 = vpop.f32.mrb[0].mxu0
      %v3084 = vadd.f32 0.0, %v3083
      %v3085 = vpop.f32.mrb[0].mxu0
      %3086 = vmatprep.mubr.f32.mxu0 0.0
      %3087 = vmatmul.mubr.f32.gmra.mrb[0].mxu0 %v2862
      %v3088 = vpop.f32.mrb[0].mxu0
      %v3089 = vadd.f32 0.0, %v3088
      %v3090 = vpop.f32.mrb[0].mxu0
      %3091 = vdwg.mxu0
      %v3092 = vadd.f32 %v2701, %v2934
      %v3093 = vadd.f32 %v2702, %v2939
      %v3094 = vadd.f32 %v2703, %v2944
      %v3095 = vadd.f32 %v2704, %v2949
      %v3096 = vadd.f32 %v2705, %v2954
      %v3097 = vadd.f32 %v2706, %v2959
      %v3098 = vadd.f32 %v2707, %v2964
      %v3099 = vadd.f32 %v2708, %v2969
      %v3100 = vadd.f32 %v2709, %v2974
      %v3101 = vadd.f32 %v2710, %v2979
      %v3102 = vadd.f32 %v2711, %v2984
      %v3103 = vadd.f32 %v2712, %v2989
      %v3104 = vadd.f32 %v2713, %v2994
      %v3105 = vadd.f32 %v2714, %v2999
      %v3106 = vadd.f32 %v2715, %v3004
      %v3107 = vadd.f32 %v2716, %v3009
      %v3108 = vadd.f32 %v2717, %v3014
      %v3109 = vadd.f32 %v2718, %v3019
      %v3110 = vadd.f32 %v2719, %v3024
      %v3111 = vadd.f32 %v2720, %v3029
      %v3112 = vadd.f32 %v2721, %v3034
      %v3113 = vadd.f32 %v2722, %v3039
      %v3114 = vadd.f32 %v2723, %v3044
      %v3115 = vadd.f32 %v2724, %v3049
      %v3116 = vadd.f32 %v2725, %v3054
      %v3117 = vadd.f32 %v2726, %v3059
      %v3118 = vadd.f32 %v2727, %v3064
      %v3119 = vadd.f32 %v2728, %v3069
      %v3120 = vadd.f32 %v2729, %v3074
      %v3121 = vadd.f32 %v2730, %v3079
      %v3122 = vadd.f32 %v2731, %v3084
      %v3123 = vadd.f32 %v2732, %v3089
      %v3124 = vld [vmem:[%s2733 + $0x1] sm:$0xff]
      %v3125 = vld [vmem:[%s2733 + $0x9] sm:$0xff]
      %v3126 = vld [vmem:[%s2733 + $0x19] sm:$0xff]
      %v3127 = vld [vmem:[%s2733 + $0x21] sm:$0xff]
      %v3128 = vld [vmem:[%s2733 + $0x31] sm:$0xff]
      %v3129 = vld [vmem:[%s2733 + $0x39] sm:$0xff]
      %v3130 = vld [vmem:[%s2733 + $0x49] sm:$0xff]
      %v3131 = vld [vmem:[%s2733 + $0x51] sm:$0xff]
      %v3132 = vld [vmem:[%s2733 + $0x61] sm:$0xff]
      %v3133 = vld [vmem:[%s2733 + $0x69] sm:$0xff]
      %v3134 = vld [vmem:[%s2733 + $0x79] sm:$0xff]
      %v3135 = vld [vmem:[%s2733 + $0x81] sm:$0xff]
      %v3136 = vld [vmem:[%s2733 + $0x91] sm:$0xff]
      %v3137 = vld [vmem:[%s2733 + $0x99] sm:$0xff]
      %v3138 = vld [vmem:[%s2733 + $0xa9] sm:$0xff]
      %v3139 = vld [vmem:[%s2733 + $0xb1] sm:$0xff]
      %v3140 = vld [vmem:[%s2733 + $0xc1] sm:$0xff]
      %v3141 = vld [vmem:[%s2733 + $0xc9] sm:$0xff]
      %v3142 = vld [vmem:[%s2733 + $0xd9] sm:$0xff]
      %v3143 = vld [vmem:[%s2733 + $0xe1] sm:$0xff]
      %v3144 = vld [vmem:[%s2733 + $0xf1] sm:$0xff]
      %v3145 = vld [vmem:[%s2733 + $0xf9] sm:$0xff]
      %v3146 = vld [vmem:[%s2733 + $0x109] sm:$0xff]
      %v3147 = vld [vmem:[%s2733 + $0x111] sm:$0xff]
      %v3148 = vld [vmem:[%s2733 + $0x121] sm:$0xff]
      %v3149 = vld [vmem:[%s2733 + $0x129] sm:$0xff]
      %v3150 = vld [vmem:[%s2733 + $0x139] sm:$0xff]
      %v3151 = vld [vmem:[%s2733 + $0x141] sm:$0xff]
      %v3152 = vld [vmem:[%s2733 + $0x151] sm:$0xff]
      %v3153 = vld [vmem:[%s2733 + $0x159] sm:$0xff]
      %v3154 = vld [vmem:[%s2733 + $0x169] sm:$0xff]
      %v3155 = vld [vmem:[%s2733 + $0x171] sm:$0xff]
      %s3156 = scalar_lea.vmem %s3, 28
      %v3157 = vld [vmem:[%s3156] sm:$0xf]
      %v3159 = vsel %vm378, %v3124, 0
      %v3162 = vsel %vm378, %v3125, 0
      %v3165 = vsel %vm378, %v3126, 0
      %v3168 = vsel %vm378, %v3127, 0
      %v3171 = vsel %vm378, %v3128, 0
      %v3174 = vsel %vm378, %v3129, 0
      %v3177 = vsel %vm378, %v3130, 0
      %v3180 = vsel %vm378, %v3131, 0
      %v3183 = vsel %vm378, %v3132, 0
      %v3186 = vsel %vm378, %v3133, 0
      %v3189 = vsel %vm378, %v3134, 0
      %v3192 = vsel %vm378, %v3135, 0
      %v3195 = vsel %vm378, %v3136, 0
      %v3198 = vsel %vm378, %v3137, 0
      %v3201 = vsel %vm378, %v3138, 0
      %v3204 = vsel %vm378, %v3139, 0
      %v3207 = vsel %vm378, %v3140, 0
      %v3210 = vsel %vm378, %v3141, 0
      %v3213 = vsel %vm378, %v3142, 0
      %v3216 = vsel %vm378, %v3143, 0
      %v3219 = vsel %vm378, %v3144, 0
      %v3222 = vsel %vm378, %v3145, 0
      %v3225 = vsel %vm378, %v3146, 0
      %v3228 = vsel %vm378, %v3147, 0
      %v3231 = vsel %vm378, %v3148, 0
      %v3234 = vsel %vm378, %v3149, 0
      %v3237 = vsel %vm378, %v3150, 0
      %v3240 = vsel %vm378, %v3151, 0
      %v3243 = vsel %vm378, %v3152, 0
      %v3246 = vsel %vm378, %v3153, 0
      %v3249 = vsel %vm378, %v3154, 0
      %v3252 = vsel %vm378, %v3155, 0
      %v3255 = vsel %vm620, %v3157, 0
      %3257 = vmatprep.subr.mxu0 0.0
      %3258 = vmatpush1.msra.mxu0 %v3255
      %3259 = vmatprep.subr.mxu0 0.0
      %3260 = vmatpush1.msra.mxu0 0.0
      %3261 = vmatprep.subr.mxu0 0.0
      %3262 = vmatpush1.msra.mxu0 0.0
      %3263 = vmatprep.subr.mxu0 0.0
      %3264 = vmatpush1.msra.mxu0 0.0
      %3265 = vmatprep.subr.mxu0 0.0
      %3266 = vmatpush1.msra.mxu0 0.0
      %3267 = vmatprep.subr.mxu0 0.0
      %3268 = vmatpush1.msra.mxu0 0.0
      %3269 = vmatprep.subr.mxu0 0.0
      %3270 = vmatpush1.msra.mxu0 0.0
      %3271 = vmatprep.subr.mxu0 0.0
      %3272 = vmatpush1.msra.mxu0 0.0
      %3273 = vmatprep.subr.mxu0 0.0
      %3274 = vmatpush1.msra.mxu0 0.0
      %3275 = vmatprep.subr.mxu0 0.0
      %3276 = vmatpush1.msra.mxu0 0.0
      %3277 = vmatprep.subr.mxu0 0.0
      %3278 = vmatpush1.msra.mxu0 0.0
      %3279 = vmatprep.subr.mxu0 0.0
      %3280 = vmatpush1.msra.mxu0 0.0
      %3281 = vmatprep.subr.mxu0 0.0
      %3282 = vmatpush1.msra.mxu0 0.0
      %3283 = vmatprep.subr.mxu0 0.0
      %3284 = vmatpush1.msra.mxu0 0.0
      %3285 = vmatprep.subr.mxu0 0.0
      %3286 = vmatpush1.msra.mxu0 0.0
      %3287 = vmatprep.subr.mxu0 0.0
      %3288 = vmatpush1.msra.mxu0 0.0
      %3289 = vmatprep.subr.mxu0 0.0
      %3290 = vmatpush1.msra.mxu0 0.0
      %3291 = vmatprep.subr.mxu0 0.0
      %3292 = vmatpush1.msra.mxu0 0.0
      %3293 = vmatprep.subr.mxu0 0.0
      %3294 = vmatpush1.msra.mxu0 0.0
      %3295 = vmatprep.subr.mxu0 0.0
      %3296 = vmatpush1.msra.mxu0 0.0
      %3297 = vmatprep.subr.mxu0 0.0
      %3298 = vmatpush1.msra.mxu0 0.0
      %3299 = vmatprep.subr.mxu0 0.0
      %3300 = vmatpush1.msra.mxu0 0.0
      %3301 = vmatprep.subr.mxu0 0.0
      %3302 = vmatpush1.msra.mxu0 0.0
      %3303 = vmatprep.subr.mxu0 0.0
      %3304 = vmatpush1.msra.mxu0 0.0
      %3305 = vmatprep.subr.mxu0 0.0
      %3306 = vmatpush1.msra.mxu0 0.0
      %3307 = vmatprep.subr.mxu0 0.0
      %3308 = vmatpush1.msra.mxu0 0.0
      %3309 = vmatprep.subr.mxu0 0.0
      %3310 = vmatpush1.msra.mxu0 0.0
      %3311 = vmatprep.subr.mxu0 0.0
      %3312 = vmatpush1.msra.mxu0 0.0
      %3313 = vmatprep.subr.mxu0 0.0
      %3314 = vmatpush1.msra.mxu0 0.0
      %3315 = vmatprep.subr.mxu0 0.0
      %3316 = vmatpush1.msra.mxu0 0.0
      %3317 = vmatprep.subr.mxu0 0.0
      %3318 = vmatpush1.msra.mxu0 0.0
      %3319 = vmatprep.subr.mxu0 0.0
      %3320 = vmatpush1.msra.mxu0 0.0
      %3321 = vmatprep.mubr.f32.mxu0 0.0
      %3322 = vmatmul.mubr.f32.gmra.mrb[0].mxu0 %v3159
      %v3323 = vpop.f32.mrb[0].mxu0
      %v3324 = vadd.f32 0.0, %v3323
      %v3325 = vpop.f32.mrb[0].mxu0
      %3326 = vmatprep.mubr.f32.mxu0 0.0
      %3327 = vmatmul.mubr.f32.gmra.mrb[0].mxu0 %v3162
      %v3328 = vpop.f32.mrb[0].mxu0
      %v3329 = vadd.f32 0.0, %v3328
      %v3330 = vpop.f32.mrb[0].mxu0
      %3331 = vmatprep.mubr.f32.mxu0 0.0
      %3332 = vmatmul.mubr.f32.gmra.mrb[0].mxu0 %v3165
      %v3333 = vpop.f32.mrb[0].mxu0
      %v3334 = vadd.f32 0.0, %v3333
      %v3335 = vpop.f32.mrb[0].mxu0
      %3336 = vmatprep.mubr.f32.mxu0 0.0
      %3337 = vmatmul.mubr.f32.gmra.mrb[0].mxu0 %v3168
      %v3338 = vpop.f32.mrb[0].mxu0
      %v3339 = vadd.f32 0.0, %v3338
      %v3340 = vpop.f32.mrb[0].mxu0
      %3341 = vmatprep.mubr.f32.mxu0 0.0
      %3342 = vmatmul.mubr.f32.gmra.mrb[0].mxu0 %v3171
      %v3343 = vpop.f32.mrb[0].mxu0
      %v3344 = vadd.f32 0.0, %v3343
      %v3345 = vpop.f32.mrb[0].mxu0
      %3346 = vmatprep.mubr.f32.mxu0 0.0
      %3347 = vmatmul.mubr.f32.gmra.mrb[0].mxu0 %v3174
      %v3348 = vpop.f32.mrb[0].mxu0
      %v3349 = vadd.f32 0.0, %v3348
      %v3350 = vpop.f32.mrb[0].mxu0
      %3351 = vmatprep.mubr.f32.mxu0 0.0
      %3352 = vmatmul.mubr.f32.gmra.mrb[0].mxu0 %v3177
      %v3353 = vpop.f32.mrb[0].mxu0
      %v3354 = vadd.f32 0.0, %v3353
      %v3355 = vpop.f32.mrb[0].mxu0
      %3356 = vmatprep.mubr.f32.mxu0 0.0
      %3357 = vmatmul.mubr.f32.gmra.mrb[0].mxu0 %v3180
      %v3358 = vpop.f32.mrb[0].mxu0
      %v3359 = vadd.f32 0.0, %v3358
      %v3360 = vpop.f32.mrb[0].mxu0
      %3361 = vmatprep.mubr.f32.mxu0 0.0
      %3362 = vmatmul.mubr.f32.gmra.mrb[0].mxu0 %v3183
      %v3363 = vpop.f32.mrb[0].mxu0
      %v3364 = vadd.f32 0.0, %v3363
      %v3365 = vpop.f32.mrb[0].mxu0
      %3366 = vmatprep.mubr.f32.mxu0 0.0
      %3367 = vmatmul.mubr.f32.gmra.mrb[0].mxu0 %v3186
      %v3368 = vpop.f32.mrb[0].mxu0
      %v3369 = vadd.f32 0.0, %v3368
      %v3370 = vpop.f32.mrb[0].mxu0
      %3371 = vmatprep.mubr.f32.mxu0 0.0
      %3372 = vmatmul.mubr.f32.gmra.mrb[0].mxu0 %v3189
      %v3373 = vpop.f32.mrb[0].mxu0
      %v3374 = vadd.f32 0.0, %v3373
      %v3375 = vpop.f32.mrb[0].mxu0
      %3376 = vmatprep.mubr.f32.mxu0 0.0
      %3377 = vmatmul.mubr.f32.gmra.mrb[0].mxu0 %v3192
      %v3378 = vpop.f32.mrb[0].mxu0
      %v3379 = vadd.f32 0.0, %v3378
      %v3380 = vpop.f32.mrb[0].mxu0
      %3381 = vmatprep.mubr.f32.mxu0 0.0
      %3382 = vmatmul.mubr.f32.gmra.mrb[0].mxu0 %v3195
      %v3383 = vpop.f32.mrb[0].mxu0
      %v3384 = vadd.f32 0.0, %v3383
      %v3385 = vpop.f32.mrb[0].mxu0
      %3386 = vmatprep.mubr.f32.mxu0 0.0
      %3387 = vmatmul.mubr.f32.gmra.mrb[0].mxu0 %v3198
      %v3388 = vpop.f32.mrb[0].mxu0
      %v3389 = vadd.f32 0.0, %v3388
      %v3390 = vpop.f32.mrb[0].mxu0
      %3391 = vmatprep.mubr.f32.mxu0 0.0
      %3392 = vmatmul.mubr.f32.gmra.mrb[0].mxu0 %v3201
      %v3393 = vpop.f32.mrb[0].mxu0
      %v3394 = vadd.f32 0.0, %v3393
      %v3395 = vpop.f32.mrb[0].mxu0
      %3396 = vmatprep.mubr.f32.mxu0 0.0
      %3397 = vmatmul.mubr.f32.gmra.mrb[0].mxu0 %v3204
      %v3398 = vpop.f32.mrb[0].mxu0
      %v3399 = vadd.f32 0.0, %v3398
      %v3400 = vpop.f32.mrb[0].mxu0
      %3401 = vmatprep.mubr.f32.mxu0 0.0
      %3402 = vmatmul.mubr.f32.gmra.mrb[0].mxu0 %v3207
      %v3403 = vpop.f32.mrb[0].mxu0
      %v3404 = vadd.f32 0.0, %v3403
      %v3405 = vpop.f32.mrb[0].mxu0
      %3406 = vmatprep.mubr.f32.mxu0 0.0
      %3407 = vmatmul.mubr.f32.gmra.mrb[0].mxu0 %v3210
      %v3408 = vpop.f32.mrb[0].mxu0
      %v3409 = vadd.f32 0.0, %v3408
      %v3410 = vpop.f32.mrb[0].mxu0
      %3411 = vmatprep.mubr.f32.mxu0 0.0
      %3412 = vmatmul.mubr.f32.gmra.mrb[0].mxu0 %v3213
      %v3413 = vpop.f32.mrb[0].mxu0
      %v3414 = vadd.f32 0.0, %v3413
      %v3415 = vpop.f32.mrb[0].mxu0
      %3416 = vmatprep.mubr.f32.mxu0 0.0
      %3417 = vmatmul.mubr.f32.gmra.mrb[0].mxu0 %v3216
      %v3418 = vpop.f32.mrb[0].mxu0
      %v3419 = vadd.f32 0.0, %v3418
      %v3420 = vpop.f32.mrb[0].mxu0
      %3421 = vmatprep.mubr.f32.mxu0 0.0
      %3422 = vmatmul.mubr.f32.gmra.mrb[0].mxu0 %v3219
      %v3423 = vpop.f32.mrb[0].mxu0
      %v3424 = vadd.f32 0.0, %v3423
      %v3425 = vpop.f32.mrb[0].mxu0
      %3426 = vmatprep.mubr.f32.mxu0 0.0
      %3427 = vmatmul.mubr.f32.gmra.mrb[0].mxu0 %v3222
      %v3428 = vpop.f32.mrb[0].mxu0
      %v3429 = vadd.f32 0.0, %v3428
      %v3430 = vpop.f32.mrb[0].mxu0
      %3431 = vmatprep.mubr.f32.mxu0 0.0
      %3432 = vmatmul.mubr.f32.gmra.mrb[0].mxu0 %v3225
      %v3433 = vpop.f32.mrb[0].mxu0
      %v3434 = vadd.f32 0.0, %v3433
      %v3435 = vpop.f32.mrb[0].mxu0
      %3436 = vmatprep.mubr.f32.mxu0 0.0
      %3437 = vmatmul.mubr.f32.gmra.mrb[0].mxu0 %v3228
      %v3438 = vpop.f32.mrb[0].mxu0
      %v3439 = vadd.f32 0.0, %v3438
      %v3440 = vpop.f32.mrb[0].mxu0
      %3441 = vmatprep.mubr.f32.mxu0 0.0
      %3442 = vmatmul.mubr.f32.gmra.mrb[0].mxu0 %v3231
      %v3443 = vpop.f32.mrb[0].mxu0
      %v3444 = vadd.f32 0.0, %v3443
      %v3445 = vpop.f32.mrb[0].mxu0
      %3446 = vmatprep.mubr.f32.mxu0 0.0
      %3447 = vmatmul.mubr.f32.gmra.mrb[0].mxu0 %v3234
      %v3448 = vpop.f32.mrb[0].mxu0
      %v3449 = vadd.f32 0.0, %v3448
      %v3450 = vpop.f32.mrb[0].mxu0
      %3451 = vmatprep.mubr.f32.mxu0 0.0
      %3452 = vmatmul.mubr.f32.gmra.mrb[0].mxu0 %v3237
      %v3453 = vpop.f32.mrb[0].mxu0
      %v3454 = vadd.f32 0.0, %v3453
      %v3455 = vpop.f32.mrb[0].mxu0
      %3456 = vmatprep.mubr.f32.mxu0 0.0
      %3457 = vmatmul.mubr.f32.gmra.mrb[0].mxu0 %v3240
      %v3458 = vpop.f32.mrb[0].mxu0
      %v3459 = vadd.f32 0.0, %v3458
      %v3460 = vpop.f32.mrb[0].mxu0
      %3461 = vmatprep.mubr.f32.mxu0 0.0
      %3462 = vmatmul.mubr.f32.gmra.mrb[0].mxu0 %v3243
      %v3463 = vpop.f32.mrb[0].mxu0
      %v3464 = vadd.f32 0.0, %v3463
      %v3465 = vpop.f32.mrb[0].mxu0
      %3466 = vmatprep.mubr.f32.mxu0 0.0
      %3467 = vmatmul.mubr.f32.gmra.mrb[0].mxu0 %v3246
      %v3468 = vpop.f32.mrb[0].mxu0
      %v3469 = vadd.f32 0.0, %v3468
      %v3470 = vpop.f32.mrb[0].mxu0
      %3471 = vmatprep.mubr.f32.mxu0 0.0
      %3472 = vmatmul.mubr.f32.gmra.mrb[0].mxu0 %v3249
      %v3473 = vpop.f32.mrb[0].mxu0
      %v3474 = vadd.f32 0.0, %v3473
      %v3475 = vpop.f32.mrb[0].mxu0
      %3476 = vmatprep.mubr.f32.mxu0 0.0
      %3477 = vmatmul.mubr.f32.gmra.mrb[0].mxu0 %v3252
      %v3478 = vpop.f32.mrb[0].mxu0
      %v3479 = vadd.f32 0.0, %v3478
      %v3480 = vpop.f32.mrb[0].mxu0
      %3481 = vdwg.mxu0
      %v3482 = vadd.f32 %v3092, %v3324
      %v3483 = vadd.f32 %v3093, %v3329
      %v3484 = vadd.f32 %v3094, %v3334
      %v3485 = vadd.f32 %v3095, %v3339
      %v3486 = vadd.f32 %v3096, %v3344
      %v3487 = vadd.f32 %v3097, %v3349
      %v3488 = vadd.f32 %v3098, %v3354
      %v3489 = vadd.f32 %v3099, %v3359
      %v3490 = vadd.f32 %v3100, %v3364
      %v3491 = vadd.f32 %v3101, %v3369
      %v3492 = vadd.f32 %v3102, %v3374
      %v3493 = vadd.f32 %v3103, %v3379
      %v3494 = vadd.f32 %v3104, %v3384
      %v3495 = vadd.f32 %v3105, %v3389
      %v3496 = vadd.f32 %v3106, %v3394
      %v3497 = vadd.f32 %v3107, %v3399
      %v3498 = vadd.f32 %v3108, %v3404
      %v3499 = vadd.f32 %v3109, %v3409
      %v3500 = vadd.f32 %v3110, %v3414
      %v3501 = vadd.f32 %v3111, %v3419
      %v3502 = vadd.f32 %v3112, %v3424
      %v3503 = vadd.f32 %v3113, %v3429
      %v3504 = vadd.f32 %v3114, %v3434
      %v3505 = vadd.f32 %v3115, %v3439
      %v3506 = vadd.f32 %v3116, %v3444
      %v3507 = vadd.f32 %v3117, %v3449
      %v3508 = vadd.f32 %v3118, %v3454
      %v3509 = vadd.f32 %v3119, %v3459
      %v3510 = vadd.f32 %v3120, %v3464
      %v3511 = vadd.f32 %v3121, %v3469
      %v3512 = vadd.f32 %v3122, %v3474
      %v3513 = vadd.f32 %v3123, %v3479
      %v3514 = vld [vmem:[%s2733 + $0x2] sm:$0xff]
      %v3515 = vld [vmem:[%s2733 + $0xa] sm:$0xff]
      %v3516 = vld [vmem:[%s2733 + $0x1a] sm:$0xff]
      %v3517 = vld [vmem:[%s2733 + $0x22] sm:$0xff]
      %v3518 = vld [vmem:[%s2733 + $0x32] sm:$0xff]
      %v3519 = vld [vmem:[%s2733 + $0x3a] sm:$0xff]
      %v3520 = vld [vmem:[%s2733 + $0x4a] sm:$0xff]
      %v3521 = vld [vmem:[%s2733 + $0x52] sm:$0xff]
      %v3522 = vld [vmem:[%s2733 + $0x62] sm:$0xff]
      %v3523 = vld [vmem:[%s2733 + $0x6a] sm:$0xff]
      %v3524 = vld [vmem:[%s2733 + $0x7a] sm:$0xff]
      %v3525 = vld [vmem:[%s2733 + $0x82] sm:$0xff]
      %v3526 = vld [vmem:[%s2733 + $0x92] sm:$0xff]
      %v3527 = vld [vmem:[%s2733 + $0x9a] sm:$0xff]
      %v3528 = vld [vmem:[%s2733 + $0xaa] sm:$0xff]
      %v3529 = vld [vmem:[%s2733 + $0xb2] sm:$0xff]
      %v3530 = vld [vmem:[%s2733 + $0xc2] sm:$0xff]
      %v3531 = vld [vmem:[%s2733 + $0xca] sm:$0xff]
      %v3532 = vld [vmem:[%s2733 + $0xda] sm:$0xff]
      %v3533 = vld [vmem:[%s2733 + $0xe2] sm:$0xff]
      %v3534 = vld [vmem:[%s2733 + $0xf2] sm:$0xff]
      %v3535 = vld [vmem:[%s2733 + $0xfa] sm:$0xff]
      %v3536 = vld [vmem:[%s2733 + $0x10a] sm:$0xff]
      %v3537 = vld [vmem:[%s2733 + $0x112] sm:$0xff]
      %v3538 = vld [vmem:[%s2733 + $0x122] sm:$0xff]
      %v3539 = vld [vmem:[%s2733 + $0x12a] sm:$0xff]
      %v3540 = vld [vmem:[%s2733 + $0x13a] sm:$0xff]
      %v3541 = vld [vmem:[%s2733 + $0x142] sm:$0xff]
      %v3542 = vld [vmem:[%s2733 + $0x152] sm:$0xff]
      %v3543 = vld [vmem:[%s2733 + $0x15a] sm:$0xff]
      %v3544 = vld [vmem:[%s2733 + $0x16a] sm:$0xff]
      %v3545 = vld [vmem:[%s2733 + $0x172] sm:$0xff]
      %s3546 = scalar_lea.vmem %s3, 32
      %v3547 = vld [vmem:[%s3546] sm:$0xf]
      %v3549 = vsel %vm378, %v3514, 0
      %v3552 = vsel %vm378, %v3515, 0
      %v3555 = vsel %vm378, %v3516, 0
      %v3558 = vsel %vm378, %v3517, 0
      %v3561 = vsel %vm378, %v3518, 0
      %v3564 = vsel %vm378, %v3519, 0
      %v3567 = vsel %vm378, %v3520, 0
      %v3570 = vsel %vm378, %v3521, 0
      %v3573 = vsel %vm378, %v3522, 0
      %v3576 = vsel %vm378, %v3523, 0
      %v3579 = vsel %vm378, %v3524, 0
      %v3582 = vsel %vm378, %v3525, 0
      %v3585 = vsel %vm378, %v3526, 0
      %v3588 = vsel %vm378, %v3527, 0
      %v3591 = vsel %vm378, %v3528, 0
      %v3594 = vsel %vm378, %v3529, 0
      %v3597 = vsel %vm378, %v3530, 0
      %v3600 = vsel %vm378, %v3531, 0
      %v3603 = vsel %vm378, %v3532, 0
      %v3606 = vsel %vm378, %v3533, 0
      %v3609 = vsel %vm378, %v3534, 0
      %v3612 = vsel %vm378, %v3535, 0
      %v3615 = vsel %vm378, %v3536, 0
      %v3618 = vsel %vm378, %v3537, 0
      %v3621 = vsel %vm378, %v3538, 0
      %v3624 = vsel %vm378, %v3539, 0
      %v3627 = vsel %vm378, %v3540, 0
      %v3630 = vsel %vm378, %v3541, 0
      %v3633 = vsel %vm378, %v3542, 0
      %v3636 = vsel %vm378, %v3543, 0
      %v3639 = vsel %vm378, %v3544, 0
      %v3642 = vsel %vm378, %v3545, 0
      %v3645 = vsel %vm620, %v3547, 0
      %3647 = vmatprep.subr.mxu0 0.0
      %3648 = vmatpush1.msra.mxu0 %v3645
      %3649 = vmatprep.subr.mxu0 0.0
      %3650 = vmatpush1.msra.mxu0 0.0
      %3651 = vmatprep.subr.mxu0 0.0
      %3652 = vmatpush1.msra.mxu0 0.0
      %3653 = vmatprep.subr.mxu0 0.0
      %3654 = vmatpush1.msra.mxu0 0.0
      %3655 = vmatprep.subr.mxu0 0.0
      %3656 = vmatpush1.msra.mxu0 0.0
      %3657 = vmatprep.subr.mxu0 0.0
      %3658 = vmatpush1.msra.mxu0 0.0
      %3659 = vmatprep.subr.mxu0 0.0
      %3660 = vmatpush1.msra.mxu0 0.0
      %3661 = vmatprep.subr.mxu0 0.0
      %3662 = vmatpush1.msra.mxu0 0.0
      %3663 = vmatprep.subr.mxu0 0.0
      %3664 = vmatpush1.msra.mxu0 0.0
      %3665 = vmatprep.subr.mxu0 0.0
      %3666 = vmatpush1.msra.mxu0 0.0
      %3667 = vmatprep.subr.mxu0 0.0
      %3668 = vmatpush1.msra.mxu0 0.0
      %3669 = vmatprep.subr.mxu0 0.0
      %3670 = vmatpush1.msra.mxu0 0.0
      %3671 = vmatprep.subr.mxu0 0.0
      %3672 = vmatpush1.msra.mxu0 0.0
      %3673 = vmatprep.subr.mxu0 0.0
      %3674 = vmatpush1.msra.mxu0 0.0
      %3675 = vmatprep.subr.mxu0 0.0
      %3676 = vmatpush1.msra.mxu0 0.0
      %3677 = vmatprep.subr.mxu0 0.0
      %3678 = vmatpush1.msra.mxu0 0.0
      %3679 = vmatprep.subr.mxu0 0.0
      %3680 = vmatpush1.msra.mxu0 0.0
      %3681 = vmatprep.subr.mxu0 0.0
      %3682 = vmatpush1.msra.mxu0 0.0
      %3683 = vmatprep.subr.mxu0 0.0
      %3684 = vmatpush1.msra.mxu0 0.0
      %3685 = vmatprep.subr.mxu0 0.0
      %3686 = vmatpush1.msra.mxu0 0.0
      %3687 = vmatprep.subr.mxu0 0.0
      %3688 = vmatpush1.msra.mxu0 0.0
      %3689 = vmatprep.subr.mxu0 0.0
      %3690 = vmatpush1.msra.mxu0 0.0
      %3691 = vmatprep.subr.mxu0 0.0
      %3692 = vmatpush1.msra.mxu0 0.0
      %3693 = vmatprep.subr.mxu0 0.0
      %3694 = vmatpush1.msra.mxu0 0.0
      %3695 = vmatprep.subr.mxu0 0.0
      %3696 = vmatpush1.msra.mxu0 0.0
      %3697 = vmatprep.subr.mxu0 0.0
      %3698 = vmatpush1.msra.mxu0 0.0
      %3699 = vmatprep.subr.mxu0 0.0
      %3700 = vmatpush1.msra.mxu0 0.0
      %3701 = vmatprep.subr.mxu0 0.0
      %3702 = vmatpush1.msra.mxu0 0.0
      %3703 = vmatprep.subr.mxu0 0.0
      %3704 = vmatpush1.msra.mxu0 0.0
      %3705 = vmatprep.subr.mxu0 0.0
      %3706 = vmatpush1.msra.mxu0 0.0
      %3707 = vmatprep.subr.mxu0 0.0
      %3708 = vmatpush1.msra.mxu0 0.0
      %3709 = vmatprep.subr.mxu0 0.0
      %3710 = vmatpush1.msra.mxu0 0.0
      %3711 = vmatprep.mubr.f32.mxu0 0.0
      %3712 = vmatmul.mubr.f32.gmra.mrb[0].mxu0 %v3549
      %v3713 = vpop.f32.mrb[0].mxu0
      %v3714 = vadd.f32 0.0, %v3713
      %v3715 = vpop.f32.mrb[0].mxu0
      %3716 = vmatprep.mubr.f32.mxu0 0.0
      %3717 = vmatmul.mubr.f32.gmra.mrb[0].mxu0 %v3552
      %v3718 = vpop.f32.mrb[0].mxu0
      %v3719 = vadd.f32 0.0, %v3718
      %v3720 = vpop.f32.mrb[0].mxu0
      %3721 = vmatprep.mubr.f32.mxu0 0.0
      %3722 = vmatmul.mubr.f32.gmra.mrb[0].mxu0 %v3555
      %v3723 = vpop.f32.mrb[0].mxu0
      %v3724 = vadd.f32 0.0, %v3723
      %v3725 = vpop.f32.mrb[0].mxu0
      %3726 = vmatprep.mubr.f32.mxu0 0.0
      %3727 = vmatmul.mubr.f32.gmra.mrb[0].mxu0 %v3558
      %v3728 = vpop.f32.mrb[0].mxu0
      %v3729 = vadd.f32 0.0, %v3728
      %v3730 = vpop.f32.mrb[0].mxu0
      %3731 = vmatprep.mubr.f32.mxu0 0.0
      %3732 = vmatmul.mubr.f32.gmra.mrb[0].mxu0 %v3561
      %v3733 = vpop.f32.mrb[0].mxu0
      %v3734 = vadd.f32 0.0, %v3733
      %v3735 = vpop.f32.mrb[0].mxu0
      %3736 = vmatprep.mubr.f32.mxu0 0.0
      %3737 = vmatmul.mubr.f32.gmra.mrb[0].mxu0 %v3564
      %v3738 = vpop.f32.mrb[0].mxu0
      %v3739 = vadd.f32 0.0, %v3738
      %v3740 = vpop.f32.mrb[0].mxu0
      %3741 = vmatprep.mubr.f32.mxu0 0.0
      %3742 = vmatmul.mubr.f32.gmra.mrb[0].mxu0 %v3567
      %v3743 = vpop.f32.mrb[0].mxu0
      %v3744 = vadd.f32 0.0, %v3743
      %v3745 = vpop.f32.mrb[0].mxu0
      %3746 = vmatprep.mubr.f32.mxu0 0.0
      %3747 = vmatmul.mubr.f32.gmra.mrb[0].mxu0 %v3570
      %v3748 = vpop.f32.mrb[0].mxu0
      %v3749 = vadd.f32 0.0, %v3748
      %v3750 = vpop.f32.mrb[0].mxu0
      %3751 = vmatprep.mubr.f32.mxu0 0.0
      %3752 = vmatmul.mubr.f32.gmra.mrb[0].mxu0 %v3573
      %v3753 = vpop.f32.mrb[0].mxu0
      %v3754 = vadd.f32 0.0, %v3753
      %v3755 = vpop.f32.mrb[0].mxu0
      %3756 = vmatprep.mubr.f32.mxu0 0.0
      %3757 = vmatmul.mubr.f32.gmra.mrb[0].mxu0 %v3576
      %v3758 = vpop.f32.mrb[0].mxu0
      %v3759 = vadd.f32 0.0, %v3758
      %v3760 = vpop.f32.mrb[0].mxu0
      %3761 = vmatprep.mubr.f32.mxu0 0.0
      %3762 = vmatmul.mubr.f32.gmra.mrb[0].mxu0 %v3579
      %v3763 = vpop.f32.mrb[0].mxu0
      %v3764 = vadd.f32 0.0, %v3763
      %v3765 = vpop.f32.mrb[0].mxu0
      %3766 = vmatprep.mubr.f32.mxu0 0.0
      %3767 = vmatmul.mubr.f32.gmra.mrb[0].mxu0 %v3582
      %v3768 = vpop.f32.mrb[0].mxu0
      %v3769 = vadd.f32 0.0, %v3768
      %v3770 = vpop.f32.mrb[0].mxu0
      %3771 = vmatprep.mubr.f32.mxu0 0.0
      %3772 = vmatmul.mubr.f32.gmra.mrb[0].mxu0 %v3585
      %v3773 = vpop.f32.mrb[0].mxu0
      %v3774 = vadd.f32 0.0, %v3773
      %v3775 = vpop.f32.mrb[0].mxu0
      %3776 = vmatprep.mubr.f32.mxu0 0.0
      %3777 = vmatmul.mubr.f32.gmra.mrb[0].mxu0 %v3588
      %v3778 = vpop.f32.mrb[0].mxu0
      %v3779 = vadd.f32 0.0, %v3778
      %v3780 = vpop.f32.mrb[0].mxu0
      %3781 = vmatprep.mubr.f32.mxu0 0.0
      %3782 = vmatmul.mubr.f32.gmra.mrb[0].mxu0 %v3591
      %v3783 = vpop.f32.mrb[0].mxu0
      %v3784 = vadd.f32 0.0, %v3783
      %v3785 = vpop.f32.mrb[0].mxu0
      %3786 = vmatprep.mubr.f32.mxu0 0.0
      %3787 = vmatmul.mubr.f32.gmra.mrb[0].mxu0 %v3594
      %v3788 = vpop.f32.mrb[0].mxu0
      %v3789 = vadd.f32 0.0, %v3788
      %v3790 = vpop.f32.mrb[0].mxu0
      %3791 = vmatprep.mubr.f32.mxu0 0.0
      %3792 = vmatmul.mubr.f32.gmra.mrb[0].mxu0 %v3597
      %v3793 = vpop.f32.mrb[0].mxu0
      %v3794 = vadd.f32 0.0, %v3793
      %v3795 = vpop.f32.mrb[0].mxu0
      %3796 = vmatprep.mubr.f32.mxu0 0.0
      %3797 = vmatmul.mubr.f32.gmra.mrb[0].mxu0 %v3600
      %v3798 = vpop.f32.mrb[0].mxu0
      %v3799 = vadd.f32 0.0, %v3798
      %v3800 = vpop.f32.mrb[0].mxu0
      %3801 = vmatprep.mubr.f32.mxu0 0.0
      %3802 = vmatmul.mubr.f32.gmra.mrb[0].mxu0 %v3603
      %v3803 = vpop.f32.mrb[0].mxu0
      %v3804 = vadd.f32 0.0, %v3803
      %v3805 = vpop.f32.mrb[0].mxu0
      %3806 = vmatprep.mubr.f32.mxu0 0.0
      %3807 = vmatmul.mubr.f32.gmra.mrb[0].mxu0 %v3606
      %v3808 = vpop.f32.mrb[0].mxu0
      %v3809 = vadd.f32 0.0, %v3808
      %v3810 = vpop.f32.mrb[0].mxu0
      %3811 = vmatprep.mubr.f32.mxu0 0.0
      %3812 = vmatmul.mubr.f32.gmra.mrb[0].mxu0 %v3609
      %v3813 = vpop.f32.mrb[0].mxu0
      %v3814 = vadd.f32 0.0, %v3813
      %v3815 = vpop.f32.mrb[0].mxu0
      %3816 = vmatprep.mubr.f32.mxu0 0.0
      %3817 = vmatmul.mubr.f32.gmra.mrb[0].mxu0 %v3612
      %v3818 = vpop.f32.mrb[0].mxu0
      %v3819 = vadd.f32 0.0, %v3818
      %v3820 = vpop.f32.mrb[0].mxu0
      %3821 = vmatprep.mubr.f32.mxu0 0.0
      %3822 = vmatmul.mubr.f32.gmra.mrb[0].mxu0 %v3615
      %v3823 = vpop.f32.mrb[0].mxu0
      %v3824 = vadd.f32 0.0, %v3823
      %v3825 = vpop.f32.mrb[0].mxu0
      %3826 = vmatprep.mubr.f32.mxu0 0.0
      %3827 = vmatmul.mubr.f32.gmra.mrb[0].mxu0 %v3618
      %v3828 = vpop.f32.mrb[0].mxu0
      %v3829 = vadd.f32 0.0, %v3828
      %v3830 = vpop.f32.mrb[0].mxu0
      %3831 = vmatprep.mubr.f32.mxu0 0.0
      %3832 = vmatmul.mubr.f32.gmra.mrb[0].mxu0 %v3621
      %v3833 = vpop.f32.mrb[0].mxu0
      %v3834 = vadd.f32 0.0, %v3833
      %v3835 = vpop.f32.mrb[0].mxu0
      %3836 = vmatprep.mubr.f32.mxu0 0.0
      %3837 = vmatmul.mubr.f32.gmra.mrb[0].mxu0 %v3624
      %v3838 = vpop.f32.mrb[0].mxu0
      %v3839 = vadd.f32 0.0, %v3838
      %v3840 = vpop.f32.mrb[0].mxu0
      %3841 = vmatprep.mubr.f32.mxu0 0.0
      %3842 = vmatmul.mubr.f32.gmra.mrb[0].mxu0 %v3627
      %v3843 = vpop.f32.mrb[0].mxu0
      %v3844 = vadd.f32 0.0, %v3843
      %v3845 = vpop.f32.mrb[0].mxu0
      %3846 = vmatprep.mubr.f32.mxu0 0.0
      %3847 = vmatmul.mubr.f32.gmra.mrb[0].mxu0 %v3630
      %v3848 = vpop.f32.mrb[0].mxu0
      %v3849 = vadd.f32 0.0, %v3848
      %v3850 = vpop.f32.mrb[0].mxu0
      %3851 = vmatprep.mubr.f32.mxu0 0.0
      %3852 = vmatmul.mubr.f32.gmra.mrb[0].mxu0 %v3633
      %v3853 = vpop.f32.mrb[0].mxu0
      %v3854 = vadd.f32 0.0, %v3853
      %v3855 = vpop.f32.mrb[0].mxu0
      %3856 = vmatprep.mubr.f32.mxu0 0.0
      %3857 = vmatmul.mubr.f32.gmra.mrb[0].mxu0 %v3636
      %v3858 = vpop.f32.mrb[0].mxu0
      %v3859 = vadd.f32 0.0, %v3858
      %v3860 = vpop.f32.mrb[0].mxu0
      %3861 = vmatprep.mubr.f32.mxu0 0.0
      %3862 = vmatmul.mubr.f32.gmra.mrb[0].mxu0 %v3639
      %v3863 = vpop.f32.mrb[0].mxu0
      %v3864 = vadd.f32 0.0, %v3863
      %v3865 = vpop.f32.mrb[0].mxu0
      %3866 = vmatprep.mubr.f32.mxu0 0.0
      %3867 = vmatmul.mubr.f32.gmra.mrb[0].mxu0 %v3642
      %v3868 = vpop.f32.mrb[0].mxu0
      %v3869 = vadd.f32 0.0, %v3868
      %v3870 = vpop.f32.mrb[0].mxu0
      %3871 = vdwg.mxu0
      %v3872 = vadd.f32 %v3482, %v3714
      %v3873 = vadd.f32 %v3483, %v3719
      %v3874 = vadd.f32 %v3484, %v3724
      %v3875 = vadd.f32 %v3485, %v3729
      %v3876 = vadd.f32 %v3486, %v3734
      %v3877 = vadd.f32 %v3487, %v3739
      %v3878 = vadd.f32 %v3488, %v3744
      %v3879 = vadd.f32 %v3489, %v3749
      %v3880 = vadd.f32 %v3490, %v3754
      %v3881 = vadd.f32 %v3491, %v3759
      %v3882 = vadd.f32 %v3492, %v3764
      %v3883 = vadd.f32 %v3493, %v3769
      %v3884 = vadd.f32 %v3494, %v3774
      %v3885 = vadd.f32 %v3495, %v3779
      %v3886 = vadd.f32 %v3496, %v3784
      %v3887 = vadd.f32 %v3497, %v3789
      %v3888 = vadd.f32 %v3498, %v3794
      %v3889 = vadd.f32 %v3499, %v3799
      %v3890 = vadd.f32 %v3500, %v3804
      %v3891 = vadd.f32 %v3501, %v3809
      %v3892 = vadd.f32 %v3502, %v3814
      %v3893 = vadd.f32 %v3503, %v3819
      %v3894 = vadd.f32 %v3504, %v3824
      %v3895 = vadd.f32 %v3505, %v3829
      %v3896 = vadd.f32 %v3506, %v3834
      %v3897 = vadd.f32 %v3507, %v3839
      %v3898 = vadd.f32 %v3508, %v3844
      %v3899 = vadd.f32 %v3509, %v3849
      %v3900 = vadd.f32 %v3510, %v3854
      %v3901 = vadd.f32 %v3511, %v3859
      %v3902 = vadd.f32 %v3512, %v3864
      %v3903 = vadd.f32 %v3513, %v3869
      %3904 = vst.msk [vmem:[%s231] sm:$0xff] %vm378, %v3872
      %3905 = vst.msk [vmem:[%s231 + $0x8] sm:$0xff] %vm378, %v3873
      %3906 = vst.msk [vmem:[%s231 + $0x10] sm:$0xff] %vm378, %v3874
      %3907 = vst.msk [vmem:[%s231 + $0x18] sm:$0xff] %vm378, %v3875
      %3908 = vst.msk [vmem:[%s231 + $0x20] sm:$0xff] %vm378, %v3876
      %3909 = vst.msk [vmem:[%s231 + $0x28] sm:$0xff] %vm378, %v3877
      %3910 = vst.msk [vmem:[%s231 + $0x30] sm:$0xff] %vm378, %v3878
      %3911 = vst.msk [vmem:[%s231 + $0x38] sm:$0xff] %vm378, %v3879
      %3912 = vst.msk [vmem:[%s231 + $0x40] sm:$0xff] %vm378, %v3880
      %3913 = vst.msk [vmem:[%s231 + $0x48] sm:$0xff] %vm378, %v3881
      %3914 = vst.msk [vmem:[%s231 + $0x50] sm:$0xff] %vm378, %v3882
      %3915 = vst.msk [vmem:[%s231 + $0x58] sm:$0xff] %vm378, %v3883
      %3916 = vst.msk [vmem:[%s231 + $0x60] sm:$0xff] %vm378, %v3884
      %3917 = vst.msk [vmem:[%s231 + $0x68] sm:$0xff] %vm378, %v3885
      %3918 = vst.msk [vmem:[%s231 + $0x70] sm:$0xff] %vm378, %v3886
      %3919 = vst.msk [vmem:[%s231 + $0x78] sm:$0xff] %vm378, %v3887
      %3920 = vst.msk [vmem:[%s231 + $0x80] sm:$0xff] %vm378, %v3888
      %3921 = vst.msk [vmem:[%s231 + $0x88] sm:$0xff] %vm378, %v3889
      %3922 = vst.msk [vmem:[%s231 + $0x90] sm:$0xff] %vm378, %v3890
      %3923 = vst.msk [vmem:[%s231 + $0x98] sm:$0xff] %vm378, %v3891
      %3924 = vst.msk [vmem:[%s231 + $0xa0] sm:$0xff] %vm378, %v3892
      %3925 = vst.msk [vmem:[%s231 + $0xa8] sm:$0xff] %vm378, %v3893
      %3926 = vst.msk [vmem:[%s231 + $0xb0] sm:$0xff] %vm378, %v3894
      %3927 = vst.msk [vmem:[%s231 + $0xb8] sm:$0xff] %vm378, %v3895
      %3928 = vst.msk [vmem:[%s231 + $0xc0] sm:$0xff] %vm378, %v3896
      %3929 = vst.msk [vmem:[%s231 + $0xc8] sm:$0xff] %vm378, %v3897
      %3930 = vst.msk [vmem:[%s231 + $0xd0] sm:$0xff] %vm378, %v3898
      %3931 = vst.msk [vmem:[%s231 + $0xd8] sm:$0xff] %vm378, %v3899
      %3932 = vst.msk [vmem:[%s231 + $0xe0] sm:$0xff] %vm378, %v3900
      %3933 = vst.msk [vmem:[%s231 + $0xe8] sm:$0xff] %vm378, %v3901
      %3934 = vst.msk [vmem:[%s231 + $0xf0] sm:$0xff] %vm378, %v3902
      %3935 = vst.msk [vmem:[%s231 + $0xf8] sm:$0xff] %vm378, %v3903
      %v3936 = vsel %vm378, %v3872, 0.0
      %v3937 = vsel %vm378, %v3873, 0.0
      %v3938 = vadd.f32 %v3936, %v3937
      %v3939 = vsel %vm378, %v3874, 0.0
      %v3940 = vadd.f32 %v3938, %v3939
      %v3941 = vsel %vm378, %v3875, 0.0
      %v3942 = vadd.f32 %v3940, %v3941
      %v3943 = vsel %vm378, %v3876, 0.0
      %v3944 = vadd.f32 %v3942, %v3943
      %v3945 = vsel %vm378, %v3877, 0.0
      %v3946 = vadd.f32 %v3944, %v3945
      %v3947 = vsel %vm378, %v3878, 0.0
      %v3948 = vadd.f32 %v3946, %v3947
      %v3949 = vsel %vm378, %v3879, 0.0
      %v3950 = vadd.f32 %v3948, %v3949
      %v3951 = vsel %vm378, %v3880, 0.0
      %v3952 = vadd.f32 %v3950, %v3951
      %v3953 = vsel %vm378, %v3881, 0.0
      %v3954 = vadd.f32 %v3952, %v3953
      %v3955 = vsel %vm378, %v3882, 0.0
      %v3956 = vadd.f32 %v3954, %v3955
      %v3957 = vsel %vm378, %v3883, 0.0
      %v3958 = vadd.f32 %v3956, %v3957
      %v3959 = vsel %vm378, %v3884, 0.0
      %v3960 = vadd.f32 %v3958, %v3959
      %v3961 = vsel %vm378, %v3885, 0.0
      %v3962 = vadd.f32 %v3960, %v3961
      %v3963 = vsel %vm378, %v3886, 0.0
      %v3964 = vadd.f32 %v3962, %v3963
      %v3965 = vsel %vm378, %v3887, 0.0
      %v3966 = vadd.f32 %v3964, %v3965
      %v3967 = vsel %vm378, %v3888, 0.0
      %v3968 = vadd.f32 %v3966, %v3967
      %v3969 = vsel %vm378, %v3889, 0.0
      %v3970 = vadd.f32 %v3968, %v3969
      %v3971 = vsel %vm378, %v3890, 0.0
      %v3972 = vadd.f32 %v3970, %v3971
      %v3973 = vsel %vm378, %v3891, 0.0
      %v3974 = vadd.f32 %v3972, %v3973
      %v3975 = vsel %vm378, %v3892, 0.0
      %v3976 = vadd.f32 %v3974, %v3975
      %v3977 = vsel %vm378, %v3893, 0.0
      %v3978 = vadd.f32 %v3976, %v3977
      %v3979 = vsel %vm378, %v3894, 0.0
      %v3980 = vadd.f32 %v3978, %v3979
      %v3981 = vsel %vm378, %v3895, 0.0
      %v3982 = vadd.f32 %v3980, %v3981
      %v3983 = vsel %vm378, %v3896, 0.0
      %v3984 = vadd.f32 %v3982, %v3983
      %v3985 = vsel %vm378, %v3897, 0.0
      %v3986 = vadd.f32 %v3984, %v3985
      %v3987 = vsel %vm378, %v3898, 0.0
      %v3988 = vadd.f32 %v3986, %v3987
      %v3989 = vsel %vm378, %v3899, 0.0
      %v3990 = vadd.f32 %v3988, %v3989
      %v3991 = vsel %vm378, %v3900, 0.0
      %v3992 = vadd.f32 %v3990, %v3991
      %v3993 = vsel %vm378, %v3901, 0.0
      %v3994 = vadd.f32 %v3992, %v3993
      %v3995 = vsel %vm378, %v3902, 0.0
      %v3996 = vadd.f32 %v3994, %v3995
      %v3997 = vsel %vm378, %v3903, 0.0
      %v3998 = vadd.f32 %v3996, %v3997
      %v3999 = vrot.slane %v3998, 4
      %v4000 = vadd.f32 %v3998, %v3999
      %v4001 = vrot.slane %v4000, 2
      %v4002 = vadd.f32 %v4000, %v4001
      %v4003 = vrot.slane %v4002, 1
      %v4004 = vadd.f32 %v4002, %v4003
      %4005 = vst.msk [vmem:[%s235] sm:$0x1] %vm387, %v4004
      %v4006 = vmul.f32 %v3872, %v3872
      %v4007 = vmul.f32 %v3873, %v3873
      %v4008 = vmul.f32 %v3874, %v3874
      %v4009 = vmul.f32 %v3875, %v3875
      %v4010 = vmul.f32 %v3876, %v3876
      %v4011 = vmul.f32 %v3877, %v3877
      %v4012 = vmul.f32 %v3878, %v3878
      %v4013 = vmul.f32 %v3879, %v3879
      %v4014 = vmul.f32 %v3880, %v3880
      %v4015 = vmul.f32 %v3881, %v3881
      %v4016 = vmul.f32 %v3882, %v3882
      %v4017 = vmul.f32 %v3883, %v3883
      %v4018 = vmul.f32 %v3884, %v3884
      %v4019 = vmul.f32 %v3885, %v3885
      %v4020 = vmul.f32 %v3886, %v3886
      %v4021 = vmul.f32 %v3887, %v3887
      %v4022 = vmul.f32 %v3888, %v3888
      %v4023 = vmul.f32 %v3889, %v3889
      %v4024 = vmul.f32 %v3890, %v3890
      %v4025 = vmul.f32 %v3891, %v3891
      %v4026 = vmul.f32 %v3892, %v3892
      %v4027 = vmul.f32 %v3893, %v3893
      %v4028 = vmul.f32 %v3894, %v3894
      %v4029 = vmul.f32 %v3895, %v3895
      %v4030 = vmul.f32 %v3896, %v3896
      %v4031 = vmul.f32 %v3897, %v3897
      %v4032 = vmul.f32 %v3898, %v3898
      %v4033 = vmul.f32 %v3899, %v3899
      %v4034 = vmul.f32 %v3900, %v3900
      %v4035 = vmul.f32 %v3901, %v3901
      %v4036 = vmul.f32 %v3902, %v3902
      %v4037 = vmul.f32 %v3903, %v3903
      %v4038 = vsel %vm378, %v4006, 0.0
      %v4039 = vsel %vm378, %v4007, 0.0
      %v4040 = vadd.f32 %v4038, %v4039
      %v4041 = vsel %vm378, %v4008, 0.0
      %v4042 = vadd.f32 %v4040, %v4041
      %v4043 = vsel %vm378, %v4009, 0.0
      %v4044 = vadd.f32 %v4042, %v4043
      %v4045 = vsel %vm378, %v4010, 0.0
      %v4046 = vadd.f32 %v4044, %v4045
      %v4047 = vsel %vm378, %v4011, 0.0
      %v4048 = vadd.f32 %v4046, %v4047
      %v4049 = vsel %vm378, %v4012, 0.0
      %v4050 = vadd.f32 %v4048, %v4049
      %v4051 = vsel %vm378, %v4013, 0.0
      %v4052 = vadd.f32 %v4050, %v4051
      %v4053 = vsel %vm378, %v4014, 0.0
      %v4054 = vadd.f32 %v4052, %v4053
      %v4055 = vsel %vm378, %v4015, 0.0
      %v4056 = vadd.f32 %v4054, %v4055
      %v4057 = vsel %vm378, %v4016, 0.0
      %v4058 = vadd.f32 %v4056, %v4057
      %v4059 = vsel %vm378, %v4017, 0.0
      %v4060 = vadd.f32 %v4058, %v4059
      %v4061 = vsel %vm378, %v4018, 0.0
      %v4062 = vadd.f32 %v4060, %v4061
      %v4063 = vsel %vm378, %v4019, 0.0
      %v4064 = vadd.f32 %v4062, %v4063
      %v4065 = vsel %vm378, %v4020, 0.0
      %v4066 = vadd.f32 %v4064, %v4065
      %v4067 = vsel %vm378, %v4021, 0.0
      %v4068 = vadd.f32 %v4066, %v4067
      %v4069 = vsel %vm378, %v4022, 0.0
      %v4070 = vadd.f32 %v4068, %v4069
      %v4071 = vsel %vm378, %v4023, 0.0
      %v4072 = vadd.f32 %v4070, %v4071
      %v4073 = vsel %vm378, %v4024, 0.0
      %v4074 = vadd.f32 %v4072, %v4073
      %v4075 = vsel %vm378, %v4025, 0.0
      %v4076 = vadd.f32 %v4074, %v4075
      %v4077 = vsel %vm378, %v4026, 0.0
      %v4078 = vadd.f32 %v4076, %v4077
      %v4079 = vsel %vm378, %v4027, 0.0
      %v4080 = vadd.f32 %v4078, %v4079
      %v4081 = vsel %vm378, %v4028, 0.0
      %v4082 = vadd.f32 %v4080, %v4081
      %v4083 = vsel %vm378, %v4029, 0.0
      %v4084 = vadd.f32 %v4082, %v4083
      %v4085 = vsel %vm378, %v4030, 0.0
      %v4086 = vadd.f32 %v4084, %v4085
      %v4087 = vsel %vm378, %v4031, 0.0
      %v4088 = vadd.f32 %v4086, %v4087
      %v4089 = vsel %vm378, %v4032, 0.0
      %v4090 = vadd.f32 %v4088, %v4089
      %v4091 = vsel %vm378, %v4033, 0.0
      %v4092 = vadd.f32 %v4090, %v4091
      %v4093 = vsel %vm378, %v4034, 0.0
      %v4094 = vadd.f32 %v4092, %v4093
      %v4095 = vsel %vm378, %v4035, 0.0
      %v4096 = vadd.f32 %v4094, %v4095
      %v4097 = vsel %vm378, %v4036, 0.0
      %v4098 = vadd.f32 %v4096, %v4097
      %v4099 = vsel %vm378, %v4037, 0.0
      %v4100 = vadd.f32 %v4098, %v4099
      %v4101 = vrot.slane %v4100, 4
      %v4102 = vadd.f32 %v4100, %v4101
      %v4103 = vrot.slane %v4102, 2
      %v4104 = vadd.f32 %v4102, %v4103
      %v4105 = vrot.slane %v4104, 1
      %v4106 = vadd.f32 %v4104, %v4105
      %4107 = vst.msk [vmem:[%s235 + $0x1] sm:$0x1] %vm387, %v4106
      %p4108 = scmp.lt.s32.totalorder %s17, 1
      %s4109 = scalar_select %p4108, %s17, 1
      %s4110 = smul.addr %s4109, 32
      %s4111 = smul.addr %s4110, 8
      %s4112 = scalar_lea.vmem %s4, %s4111
      %p4113 = scmp.lt.s32.totalorder %s17, 1
      %s4114 = scalar_select %p4113, %s17, 1
      %s4115 = smul.addr %s4114, 2
      %s4116 = scalar_lea.vmem %s5, %s4115
      // Predicated region
      $region37: #{resblock_forward.4} parent=35 // pred_check
        %p4117 = pneg %p124
      $region38: #{resblock_forward.4} parent=35 // pred_check_branch
        %4119 = sbr.rel (%p4117) target = $region40
      $region39: #{resblock_forward.4} parent=35 // pred_region
        _
      $region40: #{resblock_forward.4} parent=35 // pred_fallthru
        _
      // Predicated region
      $region41: #{resblock_forward.4} parent=35 // pred_check
        %p4120 = pneg %p150
      $region42: #{resblock_forward.4} parent=35 // pred_check_branch
        %4122 = sbr.rel (%p4120) target = $region44
      $region43: #{resblock_forward.4} parent=35 // pred_region
        _
      $region44: #{resblock_forward.4} parent=35 // pred_fallthru
        _
    $region36: #{resblock_forward.4} parent=5 // pred_fallthru
      _
    %p4123 = scmp.le.s32.totalorder 2, %s12
    // Predicated region
    $region45: #{resblock_forward.4} parent=5 // pred_check
      %p4124 = pneg %p4123
    $region46: #{resblock_forward.4} parent=5 // pred_check_branch
      %4126 = sbr.rel (%p4124) target = $region48
    $region47: #{resblock_forward.4} parent=5 // pred_region
      %s4127 = ssub.s32 %s12, 2
      // Predicated region
      $region49: #{resblock_forward.4} parent=47 // pred_check
        %p4128 = pneg %p130
      $region50: #{resblock_forward.4} parent=47 // pred_check_branch
        %4130 = sbr.rel (%p4128) target = $region52
      $region51: #{resblock_forward.4} parent=47 // pred_region
        %p4131 = scmp.lt.s32.totalorder %s18, 1
        %s4132 = scalar_select %p4131, %s18, 1
        %s4133 = smul.addr %s4132, 32
        %s4134 = smul.addr %s4133, 8
        %s4135 = scalar_lea.vmem %s4, %s4134
      $region52: #{resblock_forward.4} parent=47 // pred_fallthru
        _
      // Predicated region
      $region53: #{resblock_forward.4} parent=47 // pred_check
        %p4136 = pneg %p156
      $region54: #{resblock_forward.4} parent=47 // pred_check_branch
        %4138 = sbr.rel (%p4136) target = $region56
      $region55: #{resblock_forward.4} parent=47 // pred_region
        %p4139 = scmp.lt.s32.totalorder %s18, 1
        %s4140 = scalar_select %p4139, %s18, 1
        %s4141 = smul.addr %s4140, 2
        %s4142 = scalar_lea.vmem %s5, %s4141
      $region56: #{resblock_forward.4} parent=47 // pred_fallthru
        _
    $region48: #{resblock_forward.4} parent=5 // pred_fallthru
      _
  $region6: #{resblock_forward.4} parent=0 // loop_footer
    %s16 = sadd.s32 1, %s12
  $region7: #{resblock_forward.4} parent=0 // loop_footer_branch
    %11 = sbr.rel target = $region3
  $region8: #{resblock_forward.4} parent=0 // loop_exit
    _

// kernel: resblock_forward.3
$region0: #{resblock_forward.3}
  #allocation0 [shape = 'u32[]', space=smem, size = 0x4, offset = 0x4, fixed_abs, tag = 'smem constant byte address 0x4 - core index']
  #allocation1 [shape = 'u32[144,128]{1,0:T(1,128)}', space=vmem, size = 0x12000, scoped, tag = 'internal scratch']
  #allocation2 [shape = 'f32[18,18,4]{2,1,0:T(8,128)}', space=vmem, size = 0x36000, scoped, tag = 'scratch operand']
  %s0 = inlined_call_operand.vmem [shape: f32[2,16,16,4], index: 0, kind: input, shape index: {}]
  %s1 = inlined_call_operand.vmem [shape: f32[9,4,4], index: 1, kind: input, shape index: {}]
  %s2 = inlined_call_operand.vmem [shape: f32[2,16,16,4], index: 2, kind: output, shape index: {0}]
  %s3 = inlined_call_operand.vmem [shape: f32[2,2,4], index: 3, kind: output, shape index: {1}]
  %4 = xla_tuple %s2, %s3
  %s5 = sld [smem:[#allocation0]]
  $region49: #{resblock_forward.3} parent=0
    _
  %s7 = ssub.s32 1, %s5
  %s8 = scalar_select 0, %s7, %s5
  loop: start=0, step=1, limit=4
  $region2: #{resblock_forward.3} parent=0 // loop_pre_header
    _
  $region3: #{resblock_forward.3} parent=0 // loop_header
    %s10 = sphi 0, %s14
    %p11 = scmp.ge.s32.totalorder %s10, 4
    %s20 = sphi 0, %s22
    %s23 = sphi 0, %s20
    %s24 = sphi 0, %s23
    %s40 = sphi 0, %s24
    %s44 = sphi 0, %s44
    %s46 = sphi 0, %s44
    %s47 = sphi 0, %s46
    %s61 = sphi 0, %s47
    %s67 = sphi 0, %s69
    %s70 = sphi 0, %s67
    %s71 = sphi 0, %s70
    %s87 = sphi 0, %s71
    %s93 = sphi 0, %s95
    %s96 = sphi 0, %s93
    %s97 = sphi 0, %s96
    %s113 = sphi 0, %s97
  $region4: #{resblock_forward.3} parent=0 // loop_header_branch
    %13 = sbr.rel (%p11) target = $region8
  $region5: #{resblock_forward.3} parent=0 // loop_body
    %s15 = ssub.s32 %s10, 1
    %s16 = ssub.s32 %s10, 2
    %s17 = sadd.s32 %s10, 1
    %s18 = ssub.s32 %s10, %s17
    %p19 = scmp.eq.s32.totalorder %s18, 0
    %s21 = sadd.s32 %s20, 1
    %s22 = scalar_select %p19, %s20, %s21
    %p25 = pneg %p19
    %p26 = scmp.eq.s32.totalorder %s10, 1
    %p27 = por %p25, %p26
    %p28 = scmp.ne.s32.totalorder %s20, %s23
    %p29 = scmp.eq.s32.totalorder %s10, 0
    %p30 = por %p28, %p29
    %p31 = scmp.ne.s32.totalorder %s20, %s23
    %p32 = scmp.eq.s32.totalorder %s15, 1
    %p33 = por %p31, %p32
    %p34 = scmp.ne.s32.totalorder %s23, %s24
    %p35 = scmp.eq.s32.totalorder %s15, 0
    %p36 = por %p34, %p35
    %p37 = scmp.ne.s32.totalorder %s23, %s24
    %p38 = scmp.eq.s32.totalorder %s16, 1
    %p39 = por %p37, %p38
    %p41 = scmp.ne.s32.totalorder %s24, %s40
    %p42 = scmp.eq.s32.totalorder %s16, 0
    %p43 = por %p41, %p42
    %s45 = sadd.s32 %s44, 1
    %p48 = scmp.eq.s32.totalorder %s10, 1
    %p49 = scmp.ne.s32.totalorder %s44, %s46
    %p50 = scmp.eq.s32.totalorder %s10, 0
    %p51 = por %p49, %p50
    %p52 = scmp.ne.s32.totalorder %s44, %s46
    %p53 = scmp.eq.s32.totalorder %s15, 1
    %p54 = por %p52, %p53
    %p55 = scmp.ne.s32.totalorder %s46, %s47
    %p56 = scmp.eq.s32.totalorder %s15, 0
    %p57 = por %p55, %p56
    %p58 = scmp.ne.s32.totalorder %s46, %s47
    %p59 = scmp.eq.s32.totalorder %s16, 1
    %p60 = por %p58, %p59
    %p62 = scmp.ne.s32.totalorder %s47, %s61
    %p63 = scmp.eq.s32.totalorder %s16, 0
    %p64 = por %p62, %p63
    %s65 = ssub.s32 %s10, %s17
    %p66 = scmp.eq.s32.totalorder %s65, 0
    %s68 = sadd.s32 %s67, 1
    %s69 = scalar_select %p66, %s67, %s68
    %p72 = pneg %p66
    %p73 = scmp.eq.s32.totalorder %s10, 1
    %p74 = por %p72, %p73
    %p75 = scmp.ne.s32.totalorder %s67, %s70
    %p76 = scmp.eq.s32.totalorder %s10, 0
    %p77 = por %p75, %p76
    %p78 = scmp.ne.s32.totalorder %s67, %s70
    %p79 = scmp.eq.s32.totalorder %s15, 1
    %p80 = por %p78, %p79
    %p81 = scmp.ne.s32.totalorder %s70, %s71
    %p82 = scmp.eq.s32.totalorder %s15, 0
    %p83 = por %p81, %p82
    %p84 = scmp.ne.s32.totalorder %s70, %s71
    %p85 = scmp.eq.s32.totalorder %s16, 1
    %p86 = por %p84, %p85
    %p88 = scmp.ne.s32.totalorder %s71, %s87
    %p89 = scmp.eq.s32.totalorder %s16, 0
    %p90 = por %p88, %p89
    %s91 = ssub.s32 %s10, %s17
    %p92 = scmp.eq.s32.totalorder %s91, 0
    %s94 = sadd.s32 %s93, 1
    %s95 = scalar_select %p92, %s93, %s94
    %p98 = pneg %p92
    %p99 = scmp.eq.s32.totalorder %s10, 1
    %p100 = por %p98, %p99
    %p101 = scmp.ne.s32.totalorder %s93, %s96
    %p102 = scmp.eq.s32.totalorder %s10, 0
    %p103 = por %p101, %p102
    %p104 = scmp.ne.s32.totalorder %s93, %s96
    %p105 = scmp.eq.s32.totalorder %s15, 1
    %p106 = por %p104, %p105
    %p107 = scmp.ne.s32.totalorder %s96, %s97
    %p108 = scmp.eq.s32.totalorder %s15, 0
    %p109 = por %p107, %p108
    %p110 = scmp.ne.s32.totalorder %s96, %s97
    %p111 = scmp.eq.s32.totalorder %s16, 1
    %p112 = por %p110, %p111
    %p114 = scmp.ne.s32.totalorder %s97, %s113
    %p115 = scmp.eq.s32.totalorder %s16, 0
    %p116 = por %p114, %p115
    %p117 = scmp.le.s32.totalorder 1, %s10
    %p118 = scmp.lt.s32.totalorder %s10, 3
    %p119 = pnand %p117, %p118
    %p120 = pneg %p119
    // Predicated region
    $region9: #{resblock_forward.3} parent=5 // pred_check
      _
    $region10: #{resblock_forward.3} parent=5 // pred_check_branch
      %122 = sbr.rel (%p119) target = $region12
    $region11: #{resblock_forward.3} parent=5 // pred_region
      %s123 = ssub.s32 %s10, 1
      // Predicated region
      $region13: #{resblock_forward.3} parent=11 // pred_check
        %p124 = pneg %p57
      $region14: #{resblock_forward.3} parent=11 // pred_check_branch
        %126 = sbr.rel (%p124) target = $region16
      $region15: #{resblock_forward.3} parent=11 // pred_region
        _
      $region16: #{resblock_forward.3} parent=11 // pred_fallthru
        _
    $region12: #{resblock_forward.3} parent=5 // pred_fallthru
      _
    %p127 = scmp.lt.s32.totalorder %s10, 2
    // Predicated region
    $region17: #{resblock_forward.3} parent=5 // pred_check
      %p128 = pneg %p127
    $region18: #{resblock_forward.3} parent=5 // pred_check_branch
      %130 = sbr.rel (%p128) target = $region20
    $region19: #{resblock_forward.3} parent=5 // pred_region
      // Predicated region
      $region21: #{resblock_forward.3} parent=19 // pred_check
        %p131 = pneg %p30
      $region22: #{resblock_forward.3} parent=19 // pred_check_branch
        %133 = sbr.rel (%p131) target = $region24
      $region23: #{resblock_forward.3} parent=19 // pred_region
        %p134 = scmp.lt.s32.totalorder %s10, 1
        %s135 = scalar_select %p134, %s10, 1
        %s136 = smul.addr %s135, 32
        %s137 = smul.addr %s136, 8
        %s138 = scalar_lea.vmem %s0, %s137
      $region24: #{resblock_forward.3} parent=19 // pred_fallthru
        _
    $region20: #{resblock_forward.3} parent=5 // pred_fallthru
      _
    %p139 = scmp.le.s32.totalorder 1, %s10
    %p140 = scmp.lt.s32.totalorder %s10, 3
    %p141 = pnand %p139, %p140
    %p142 = pneg %p141
    // Predicated region
    $region25: #{resblock_forward.3} parent=5 // pred_check
      _
    $region26: #{resblock_forward.3} parent=5 // pred_check_branch
      %144 = sbr.rel (%p141) target = $region28
    $region27: #{resblock_forward.3} parent=5 // pred_region
      %s145 = ssub.s32 %s10, 1
      %p146 = scmp.lt.s32.totalorder %s15, 1
      %s147 = scalar_select %p146, %s15, 1
      %s148 = smul.addr %s147, 32
      %s149 = smul.addr %s148, 8
      %s150 = scalar_lea.vmem %s0, %s149
      %p151 = pneg %p36
      %p152 = pneg %p33
      %p153 = pneg %p57
      %p154 = pneg %p54
      %p155 = pneg %p83
      %p156 = pneg %p80
      %p157 = scmp.lt.s32.totalorder %s15, 1
      %s158 = scalar_select %p157, %s15, 1
      %s159 = smul.addr %s158, 32
      %s160 = smul.addr %s159, 8
      %s161 = scalar_lea.vmem %s2, %s160
      %p162 = pneg %p109
      %p163 = pneg %p106
      %p164 = scmp.lt.s32.totalorder %s15, 1
      %s165 = scalar_select %p164, %s15, 1
      %s166 = smul.addr %s165, 2
      %s167 = scalar_lea.vmem %s3, %s166
      %p168 = scmp.lt.s32.totalorder %s15, 1
      %s169 = scalar_select %p168, %s15, 1
      %s170 = smul.addr %s169, 32
      %s171 = smul.addr %s170, 8
      %s172 = scalar_lea.vmem %s0, %s171
      %p173 = scmp.lt.s32.totalorder %s15, 1
      %s174 = scalar_select %p173, %s15, 1
      %s175 = smul.addr %s174, 32
      %s176 = smul.addr %s175, 8
      %s177 = scalar_lea.vmem %s2, %s176
      %p178 = scmp.lt.s32.totalorder %s15, 1
      %s179 = scalar_select %p178, %s15, 1
      %s180 = smul.addr %s179, 2
      %s181 = scalar_lea.vmem %s3, %s180
      %vm182 = vcmask 31744
      %183 = vst.msk [vmem:[#allocation2] sm:$0xff] %vm182, 0.0
      %184 = vst.msk [vmem:[#allocation2 + $0x8] sm:$0xff] %vm182, 0.0
      %vm185 = vcmask 25600
      %186 = vst.msk [vmem:[#allocation2 + $0x10] sm:$0x3] %vm185, 0.0
      %s187 = scalar_lea.vmem [#allocation2], 408
      %188 = vst.msk [vmem:[%s187] sm:$0xff] %vm182, 0.0
      %189 = vst.msk [vmem:[%s187 + $0x8] sm:$0xff] %vm182, 0.0
      %190 = vst.msk [vmem:[%s187 + $0x10] sm:$0x3] %vm185, 0.0
      %vm191 = vcmask 24576
      %192 = vst.msk [vmem:[#allocation2] sm:$0x1] %vm191, 0.0
      %193 = vst.msk [vmem:[#allocation2 + $0x18] sm:$0x1] %vm191, 0.0
      %194 = vst.msk [vmem:[#allocation2 + $0x30] sm:$0x1] %vm191, 0.0
      %195 = vst.msk [vmem:[#allocation2 + $0x48] sm:$0x1] %vm191, 0.0
      %196 = vst.msk [vmem:[#allocation2 + $0x60] sm:$0x1] %vm191, 0.0
      %197 = vst.msk [vmem:[#allocation2 + $0x78] sm:$0x1] %vm191, 0.0
      %198 = vst.msk [vmem:[#allocation2 + $0x90] sm:$0x1] %vm191, 0.0
      %199 = vst.msk [vmem:[#allocation2 + $0xa8] sm:$0x1] %vm191, 0.0
      %200 = vst.msk [vmem:[#allocation2 + $0xc0] sm:$0x1] %vm191, 0.0
      %201 = vst.msk [vmem:[#allocation2 + $0xd8] sm:$0x1] %vm191, 0.0
      %202 = vst.msk [vmem:[#allocation2 + $0xf0] sm:$0x1] %vm191, 0.0
      %203 = vst.msk [vmem:[#allocation2 + $0x108] sm:$0x1] %vm191, 0.0
      %204 = vst.msk [vmem:[#allocation2 + $0x120] sm:$0x1] %vm191, 0.0
      %205 = vst.msk [vmem:[#allocation2 + $0x138] sm:$0x1] %vm191, 0.0
      %206 = vst.msk [vmem:[#allocation2 + $0x150] sm:$0x1] %vm191, 0.0
      %207 = vst.msk [vmem:[#allocation2 + $0x168] sm:$0x1] %vm191, 0.0
      %208 = vst.msk [vmem:[#allocation2 + $0x180] sm:$0x1] %vm191, 0.0
      %209 = vst.msk [vmem:[#allocation2 + $0x198] sm:$0x1] %vm191, 0.0
      %210 = vst.msk [vmem:[#allocation2 + $0x11] sm:$0x1] %vm191, 0.0
      %211 = vst.msk [vmem:[#allocation2 + $0x29] sm:$0x1] %vm191, 0.0
      %212 = vst.msk [vmem:[#allocation2 + $0x41] sm:$0x1] %vm191, 0.0
      %213 = vst.msk [vmem:[#allocation2 + $0x59] sm:$0x1] %vm191, 0.0
      %214 = vst.msk [vmem:[#allocation2 + $0x71] sm:$0x1] %vm191, 0.0
      %215 = vst.msk [vmem:[#allocation2 + $0x89] sm:$0x1] %vm191, 0.0
      %216 = vst.msk [vmem:[#allocation2 + $0xa1] sm:$0x1] %vm191, 0.0
      %217 = vst.msk [vmem:[#allocation2 + $0xb9] sm:$0x1] %vm191, 0.0
      %218 = vst.msk [vmem:[#allocation2 + $0xd1] sm:$0x1] %vm191, 0.0
      %219 = vst.msk [vmem:[#allocation2 + $0xe9] sm:$0x1] %vm191, 0.0
      %220 = vst.msk [vmem:[#allocation2 + $0x101] sm:$0x1] %vm191, 0.0
      %221 = vst.msk [vmem:[#allocation2 + $0x119] sm:$0x1] %vm191, 0.0
      %222 = vst.msk [vmem:[#allocation2 + $0x131] sm:$0x1] %vm191, 0.0
      %223 = vst.msk [vmem:[#allocation2 + $0x149] sm:$0x1] %vm191, 0.0
      %224 = vst.msk [vmem:[#allocation2 + $0x161] sm:$0x1] %vm191, 0.0
      %225 = vst.msk [vmem:[#allocation2 + $0x179] sm:$0x1] %vm191, 0.0
      %226 = vst.msk [vmem:[#allocation2 + $0x191] sm:$0x1] %vm191, 0.0
      %227 = vst.msk [vmem:[#allocation2 + $0x1a9] sm:$0x1] %vm191, 0.0
      %v228 = vld [vmem:[%s172] sm:$0xff]
      %v229 = vld [vmem:[%s172 + $0x8] sm:$0xff]
      %v230 = vld [vmem:[%s172 + $0x10] sm:$0xff]
      %v231 = vld [vmem:[%s172 + $0x18] sm:$0xff]
      %v232 = vld [vmem:[%s172 + $0x20] sm:$0xff]
      %v233 = vld [vmem:[%s172 + $0x28] sm:$0xff]
      %v234 = vld [vmem:[%s172 + $0x30] sm:$0xff]
      %v235 = vld [vmem:[%s172 + $0x38] sm:$0xff]
      %v236 = vld [vmem:[%s172 + $0x40] sm:$0xff]
      %v237 = vld [vmem:[%s172 + $0x48] sm:$0xff]
      %v238 = vld [vmem:[%s172 + $0x50] sm:$0xff]
      %v239 = vld [vmem:[%s172 + $0x58] sm:$0xff]
      %v240 = vld [vmem:[%s172 + $0x60] sm:$0xff]
      %v241 = vld [vmem:[%s172 + $0x68] sm:$0xff]
      %v242 = vld [vmem:[%s172 + $0x70] sm:$0xff]
      %v243 = vld [vmem:[%s172 + $0x78] sm:$0xff]
      %v244 = vld [vmem:[%s172 + $0x80] sm:$0xff]
      %v245 = vld [vmem:[%s172 + $0x88] sm:$0xff]
      %v246 = vld [vmem:[%s172 + $0x90] sm:$0xff]
      %v247 = vld [vmem:[%s172 + $0x98] sm:$0xff]
      %v248 = vld [vmem:[%s172 + $0xa0] sm:$0xff]
      %v249 = vld [vmem:[%s172 + $0xa8] sm:$0xff]
      %v250 = vld [vmem:[%s172 + $0xb0] sm:$0xff]
      %v251 = vld [vmem:[%s172 + $0xb8] sm:$0xff]
      %v252 = vld [vmem:[%s172 + $0xc0] sm:$0xff]
      %v253 = vld [vmem:[%s172 + $0xc8] sm:$0xff]
      %v254 = vld [vmem:[%s172 + $0xd0] sm:$0xff]
      %v255 = vld [vmem:[%s172 + $0xd8] sm:$0xff]
      %v256 = vld [vmem:[%s172 + $0xe0] sm:$0xff]
      %v257 = vld [vmem:[%s172 + $0xe8] sm:$0xff]
      %v258 = vld [vmem:[%s172 + $0xf0] sm:$0xff]
      %v259 = vld [vmem:[%s172 + $0xf8] sm:$0xff]
      %s260 = scalar_lea.vmem [#allocation2], 24
      %261 = vst.msk [vmem:[%s260 + $0x1] sm:$0xff] %vm182, %v228
      %262 = vst.msk [vmem:[%s260 + $0x9] sm:$0xff] %vm182, %v229
      %263 = vst.msk [vmem:[%s260 + $0x19] sm:$0xff] %vm182, %v230
      %264 = vst.msk [vmem:[%s260 + $0x21] sm:$0xff] %vm182, %v231
      %265 = vst.msk [vmem:[%s260 + $0x31] sm:$0xff] %vm182, %v232
      %266 = vst.msk [vmem:[%s260 + $0x39] sm:$0xff] %vm182, %v233
      %267 = vst.msk [vmem:[%s260 + $0x49] sm:$0xff] %vm182, %v234
      %268 = vst.msk [vmem:[%s260 + $0x51] sm:$0xff] %vm182, %v235
      %269 = vst.msk [vmem:[%s260 + $0x61] sm:$0xff] %vm182, %v236
      %270 = vst.msk [vmem:[%s260 + $0x69] sm:$0xff] %vm182, %v237
      %271 = vst.msk [vmem:[%s260 + $0x79] sm:$0xff] %vm182, %v238
      %272 = vst.msk [vmem:[%s260 + $0x81] sm:$0xff] %vm182, %v239
      %273 = vst.msk [vmem:[%s260 + $0x91] sm:$0xff] %vm182, %v240
      %274 = vst.msk [vmem:[%s260 + $0x99] sm:$0xff] %vm182, %v241
      %275 = vst.msk [vmem:[%s260 + $0xa9] sm:$0xff] %vm182, %v242
      %276 = vst.msk [vmem:[%s260 + $0xb1] sm:$0xff] %vm182, %v243
      %277 = vst.msk [vmem:[%s260 + $0xc1] sm:$0xff] %vm182, %v244
      %278 = vst.msk [vmem:[%s260 + $0xc9] sm:$0xff] %vm182, %v245
      %279 = vst.msk [vmem:[%s260 + $0xd9] sm:$0xff] %vm182, %v246
      %280 = vst.msk [vmem:[%s260 + $0xe1] sm:$0xff] %vm182, %v247
      %281 = vst.msk [vmem:[%s260 + $0xf1] sm:$0xff] %vm182, %v248
      %282 = vst.msk [vmem:[%s260 + $0xf9] sm:$0xff] %vm182, %v249
      %283 = vst.msk [vmem:[%s260 + $0x109] sm:$0xff] %vm182, %v250
      %284 = vst.msk [vmem:[%s260 + $0x111] sm:$0xff] %vm182, %v251
      %285 = vst.msk [vmem:[%s260 + $0x121] sm:$0xff] %vm182, %v252
      %286 = vst.msk [vmem:[%s260 + $0x129] sm:$0xff] %vm182, %v253
      %287 = vst.msk [vmem:[%s260 + $0x139] sm:$0xff] %vm182, %v254
      %288 = vst.msk [vmem:[%s260 + $0x141] sm:$0xff] %vm182, %v255
      %289 = vst.msk [vmem:[%s260 + $0x151] sm:$0xff] %vm182, %v256
      %290 = vst.msk [vmem:[%s260 + $0x159] sm:$0xff] %vm182, %v257
      %291 = vst.msk [vmem:[%s260 + $0x169] sm:$0xff] %vm182, %v258
      %292 = vst.msk [vmem:[%s260 + $0x171] sm:$0xff] %vm182, %v259
      %v293 = vld [vmem:[#allocation2] sm:$0xff]
      %v294 = vld [vmem:[#allocation2 + $0x8] sm:$0xff]
      %v295 = vld [vmem:[#allocation2 + $0x18] sm:$0xff]
      %v296 = vld [vmem:[#allocation2 + $0x20] sm:$0xff]
      %v297 = vld [vmem:[#allocation2 + $0x30] sm:$0xff]
      %v298 = vld [vmem:[#allocation2 + $0x38] sm:$0xff]
      %v299 = vld [vmem:[#allocation2 + $0x48] sm:$0xff]
      %v300 = vld [vmem:[#allocation2 + $0x50] sm:$0xff]
      %v301 = vld [vmem:[#allocation2 + $0x60] sm:$0xff]
      %v302 = vld [vmem:[#allocation2 + $0x68] sm:$0xff]
      %v303 = vld [vmem:[#allocation2 + $0x78] sm:$0xff]
      %v304 = vld [vmem:[#allocation2 + $0x80] sm:$0xff]
      %v305 = vld [vmem:[#allocation2 + $0x90] sm:$0xff]
      %v306 = vld [vmem:[#allocation2 + $0x98] sm:$0xff]
      %v307 = vld [vmem:[#allocation2 + $0xa8] sm:$0xff]
      %v308 = vld [vmem:[#allocation2 + $0xb0] sm:$0xff]
      %v309 = vld [vmem:[#allocation2 + $0xc0] sm:$0xff]
      %v310 = vld [vmem:[#allocation2 + $0xc8] sm:$0xff]
      %v311 = vld [vmem:[#allocation2 + $0xd8] sm:$0xff]
      %v312 = vld [vmem:[#allocation2 + $0xe0] sm:$0xff]
      %v313 = vld [vmem:[#allocation2 + $0xf0] sm:$0xff]
      %v314 = vld [vmem:[#allocation2 + $0xf8] sm:$0xff]
      %v315 = vld [vmem:[#allocation2 + $0x108] sm:$0xff]
      %v316 = vld [vmem:[#allocation2 + $0x110] sm:$0xff]
      %v317 = vld [vmem:[#allocation2 + $0x120] sm:$0xff]
      %v318 = vld [vmem:[#allocation2 + $0x128] sm:$0xff]
      %v319 = vld [vmem:[#allocation2 + $0x138] sm:$0xff]
      %v320 = vld [vmem:[#allocation2 + $0x140] sm:$0xff]
      %v321 = vld [vmem:[#allocation2 + $0x150] sm:$0xff]
      %v322 = vld [vmem:[#allocation2 + $0x158] sm:$0xff]
      %v323 = vld [vmem:[#allocation2 + $0x168] sm:$0xff]
      %v324 = vld [vmem:[#allocation2 + $0x170] sm:$0xff]
      %v325 = vld [vmem:[%s1] sm:$0xf]
      %v326 = vld [vmem:[#allocation2 + $0x1] sm:$0xff]
      %v327 = vld [vmem:[#allocation2 + $0x9] sm:$0xff]
      %v328 = vld [vmem:[#allocation2 + $0x19] sm:$0xff]
      %v329 = vld [vmem:[#allocation2 + $0x21] sm:$0xff]
      %v330 = vld [vmem:[#allocation2 + $0x31] sm:$0xff]
      %v331 = vld [vmem:[#allocation2 + $0x39] sm:$0xff]
      %v332 = vld [vmem:[#allocation2 + $0x49] sm:$0xff]
      %v333 = vld [vmem:[#allocation2 + $0x51] sm:$0xff]
      %v334 = vld [vmem:[#allocation2 + $0x61] sm:$0xff]
      %v335 = vld [vmem:[#allocation2 + $0x69] sm:$0xff]
      %v336 = vld [vmem:[#allocation2 + $0x79] sm:$0xff]
      %v337 = vld [vmem:[#allocation2 + $0x81] sm:$0xff]
      %v338 = vld [vmem:[#allocation2 + $0x91] sm:$0xff]
      %v339 = vld [vmem:[#allocation2 + $0x99] sm:$0xff]
      %v340 = vld [vmem:[#allocation2 + $0xa9] sm:$0xff]
      %v341 = vld [vmem:[#allocation2 + $0xb1] sm:$0xff]
      %v342 = vld [vmem:[#allocation2 + $0xc1] sm:$0xff]
      %v343 = vld [vmem:[#allocation2 + $0xc9] sm:$0xff]
      %v344 = vld [vmem:[#allocation2 + $0xd9] sm:$0xff]
      %v345 = vld [vmem:[#allocation2 + $0xe1] sm:$0xff]
      %v346 = vld [vmem:[#allocation2 + $0xf1] sm:$0xff]
      %v347 = vld [vmem:[#allocation2 + $0xf9] sm:$0xff]
      %v348 = vld [vmem:[#allocation2 + $0x109] sm:$0xff]
      %v349 = vld [vmem:[#allocation2 + $0x111] sm:$0xff]
      %v350 = vld [vmem:[#allocation2 + $0x121] sm:$0xff]
      %v351 = vld [vmem:[#allocation2 + $0x129] sm:$0xff]
      %v352 = vld [vmem:[#allocation2 + $0x139] sm:$0xff]
      %v353 = vld [vmem:[#allocation2 + $0x141] sm:$0xff]
      %v354 = vld [vmem:[#allocation2 + $0x151] sm:$0xff]
      %v355 = vld [vmem:[#allocation2 + $0x159] sm:$0xff]
      %v356 = vld [vmem:[#allocation2 + $0x169] sm:$0xff]
      %v357 = vld [vmem:[#allocation2 + $0x171] sm:$0xff]
      %s358 = scalar_lea.vmem %s1, 4
      %v359 = vld [vmem:[%s358] sm:$0xf]
      %v361 = vsel %vm182, %v326, 0
      %v364 = vsel %vm182, %v327, 0
      %v367 = vsel %vm182, %v328, 0
      %v370 = vsel %vm182, %v329, 0
      %v373 = vsel %vm182, %v330, 0
      %v376 = vsel %vm182, %v331, 0
      %v379 = vsel %vm182, %v332, 0
      %v382 = vsel %vm182, %v333, 0
      %v385 = vsel %vm182, %v334, 0
      %v388 = vsel %vm182, %v335, 0
      %v391 = vsel %vm182, %v336, 0
      %v394 = vsel %vm182, %v337, 0
      %v397 = vsel %vm182, %v338, 0
      %v400 = vsel %vm182, %v339, 0
      %v403 = vsel %vm182, %v340, 0
      %v406 = vsel %vm182, %v341, 0
      %v409 = vsel %vm182, %v342, 0
      %v412 = vsel %vm182, %v343, 0
      %v415 = vsel %vm182, %v344, 0
      %v418 = vsel %vm182, %v345, 0
      %v421 = vsel %vm182, %v346, 0
      %v424 = vsel %vm182, %v347, 0
      %v427 = vsel %vm182, %v348, 0
      %v430 = vsel %vm182, %v349, 0
      %v433 = vsel %vm182, %v350, 0
      %v436 = vsel %vm182, %v351, 0
      %v439 = vsel %vm182, %v352, 0
      %v442 = vsel %vm182, %v353, 0
      %v445 = vsel %vm182, %v354, 0
      %v448 = vsel %vm182, %v355, 0
      %v451 = vsel %vm182, %v356, 0
      %v454 = vsel %vm182, %v357, 0
      %vm456 = vcmask 1043456
      %v458 = vsel %vm456, %v359, 0
      %460 = vmatprep.subr.mxu0 0.0
      %461 = vmatpush1.msra.mxu0 %v458
      %462 = vmatprep.subr.mxu0 0.0
      %463 = vmatpush1.msra.mxu0 0.0
      %464 = vmatprep.subr.mxu0 0.0
      %465 = vmatpush1.msra.mxu0 0.0
      %466 = vmatprep.subr.mxu0 0.0
      %467 = vmatpush1.msra.mxu0 0.0
      %468 = vmatprep.subr.mxu0 0.0
      %469 = vmatpush1.msra.mxu0 0.0
      %470 = vmatprep.subr.mxu0 0.0
      %471 = vmatpush1.msra.mxu0 0.0
      %472 = vmatprep.subr.mxu0 0.0
      %473 = vmatpush1.msra.mxu0 0.0
      %474 = vmatprep.subr.mxu0 0.0
      %475 = vmatpush1.msra.mxu0 0.0
      %476 = vmatprep.subr.mxu0 0.0
      %477 = vmatpush1.msra.mxu0 0.0
      %478 = vmatprep.subr.mxu0 0.0
      %479 = vmatpush1.msra.mxu0 0.0
      %480 = vmatprep.subr.mxu0 0.0
      %481 = vmatpush1.msra.mxu0 0.0
      %482 = vmatprep.subr.mxu0 0.0
      %483 = vmatpush1.msra.mxu0 0.0
      %484 = vmatprep.subr.mxu0 0.0
      %485 = vmatpush1.msra.mxu0 0.0
      %486 = vmatprep.subr.mxu0 0.0
      %487 = vmatpush1.msra.mxu0 0.0
      %488 = vmatprep.subr.mxu0 0.0
      %489 = vmatpush1.msra.mxu0 0.0
      %490 = vmatprep.subr.mxu0 0.0
      %491 = vmatpush1.msra.mxu0 0.0
      %492 = vmatprep.subr.mxu0 0.0
      %493 = vmatpush1.msra.mxu0 0.0
      %494 = vmatprep.subr.mxu0 0.0
      %495 = vmatpush1.msra.mxu0 0.0
      %496 = vmatprep.subr.mxu0 0.0
      %497 = vmatpush1.msra.mxu0 0.0
      %498 = vmatprep.subr.mxu0 0.0
      %499 = vmatpush1.msra.mxu0 0.0
      %500 = vmatprep.subr.mxu0 0.0
      %501 = vmatpush1.msra.mxu0 0.0
      %502 = vmatprep.subr.mxu0 0.0
      %503 = vmatpush1.msra.mxu0 0.0
      %504 = vmatprep.subr.mxu0 0.0
      %505 = vmatpush1.msra.mxu0 0.0
      %506 = vmatprep.subr.mxu0 0.0
      %507 = vmatpush1.msra.mxu0 0.0
      %508 = vmatprep.subr.mxu0 0.0
      %509 = vmatpush1.msra.mxu0 0.0
      %510 = vmatprep.subr.mxu0 0.0
      %511 = vmatpush1.msra.mxu0 0.0
      %512 = vmatprep.subr.mxu0 0.0
      %513 = vmatpush1.msra.mxu0 0.0
      %514 = vmatprep.subr.mxu0 0.0
      %515 = vmatpush1.msra.mxu0 0.0
      %516 = vmatprep.subr.mxu0 0.0
      %517 = vmatpush1.msra.mxu0 0.0
      %518 = vmatprep.subr.mxu0 0.0
      %519 = vmatpush1.msra.mxu0 0.0
      %520 = vmatprep.subr.mxu0 0.0
      %521 = vmatpush1.msra.mxu0 0.0
      %522 = vmatprep.subr.mxu0 0.0
      %523 = vmatpush1.msra.mxu0 0.0
      %524 = vmatprep.mubr.f32.mxu0 0.0
      %525 = vmatmul.mubr.f32.gmra.mrb[0].mxu0 %v361
      %v526 = vpop.f32.mrb[0].mxu0
      %v527 = vadd.f32 0.0, %v526
      %v528 = vpop.f32.mrb[0].mxu0
      %529 = vmatprep.mubr.f32.mxu0 0.0
      %530 = vmatmul.mubr.f32.gmra.mrb[0].mxu0 %v364
      %v531 = vpop.f32.mrb[0].mxu0
      %v532 = vadd.f32 0.0, %v531
      %v533 = vpop.f32.mrb[0].mxu0
      %534 = vmatprep.mubr.f32.mxu0 0.0
      %535 = vmatmul.mubr.f32.gmra.mrb[0].mxu0 %v367
      %v536 = vpop.f32.mrb[0].mxu0
      %v537 = vadd.f32 0.0, %v536
      %v538 = vpop.f32.mrb[0].mxu0
      %539 = vmatprep.mubr.f32.mxu0 0.0
      %540 = vmatmul.mubr.f32.gmra.mrb[0].mxu0 %v370
      %v541 = vpop.f32.mrb[0].mxu0
      %v542 = vadd.f32 0.0, %v541
      %v543 = vpop.f32.mrb[0].mxu0
      %544 = vmatprep.mubr.f32.mxu0 0.0
      %545 = vmatmul.mubr.f32.gmra.mrb[0].mxu0 %v373
      %v546 = vpop.f32.mrb[0].mxu0
      %v547 = vadd.f32 0.0, %v546
      %v548 = vpop.f32.mrb[0].mxu0
      %549 = vmatprep.mubr.f32.mxu0 0.0
      %550 = vmatmul.mubr.f32.gmra.mrb[0].mxu0 %v376
      %v551 = vpop.f32.mrb[0].mxu0
      %v552 = vadd.f32 0.0, %v551
      %v553 = vpop.f32.mrb[0].mxu0
      %554 = vmatprep.mubr.f32.mxu0 0.0
      %555 = vmatmul.mubr.f32.gmra.mrb[0].mxu0 %v379
      %v556 = vpop.f32.mrb[0].mxu0
      %v557 = vadd.f32 0.0, %v556
      %v558 = vpop.f32.mrb[0].mxu0
      %559 = vmatprep.mubr.f32.mxu0 0.0
      %560 = vmatmul.mubr.f32.gmra.mrb[0].mxu0 %v382
      %v561 = vpop.f32.mrb[0].mxu0
      %v562 = vadd.f32 0.0, %v561
      %v563 = vpop.f32.mrb[0].mxu0
      %564 = vmatprep.mubr.f32.mxu0 0.0
      %565 = vmatmul.mubr.f32.gmra.mrb[0].mxu0 %v385
      %v566 = vpop.f32.mrb[0].mxu0
      %v567 = vadd.f32 0.0, %v566
      %v568 = vpop.f32.mrb[0].mxu0
      %569 = vmatprep.mubr.f32.mxu0 0.0
      %570 = vmatmul.mubr.f32.gmra.mrb[0].mxu0 %v388
      %v571 = vpop.f32.mrb[0].mxu0
      %v572 = vadd.f32 0.0, %v571
      %v573 = vpop.f32.mrb[0].mxu0
      %574 = vmatprep.mubr.f32.mxu0 0.0
      %575 = vmatmul.mubr.f32.gmra.mrb[0].mxu0 %v391
      %v576 = vpop.f32.mrb[0].mxu0
      %v577 = vadd.f32 0.0, %v576
      %v578 = vpop.f32.mrb[0].mxu0
      %579 = vmatprep.mubr.f32.mxu0 0.0
      %580 = vmatmul.mubr.f32.gmra.mrb[0].mxu0 %v394
      %v581 = vpop.f32.mrb[0].mxu0
      %v582 = vadd.f32 0.0, %v581
      %v583 = vpop.f32.mrb[0].mxu0
      %584 = vmatprep.mubr.f32.mxu0 0.0
      %585 = vmatmul.mubr.f32.gmra.mrb[0].mxu0 %v397
      %v586 = vpop.f32.mrb[0].mxu0
      %v587 = vadd.f32 0.0, %v586
      %v588 = vpop.f32.mrb[0].mxu0
      %589 = vmatprep.mubr.f32.mxu0 0.0
      %590 = vmatmul.mubr.f32.gmra.mrb[0].mxu0 %v400
      %v591 = vpop.f32.mrb[0].mxu0
      %v592 = vadd.f32 0.0, %v591
      %v593 = vpop.f32.mrb[0].mxu0
      %594 = vmatprep.mubr.f32.mxu0 0.0
      %595 = vmatmul.mubr.f32.gmra.mrb[0].mxu0 %v403
      %v596 = vpop.f32.mrb[0].mxu0
      %v597 = vadd.f32 0.0, %v596
      %v598 = vpop.f32.mrb[0].mxu0
      %599 = vmatprep.mubr.f32.mxu0 0.0
      %600 = vmatmul.mubr.f32.gmra.mrb[0].mxu0 %v406
      %v601 = vpop.f32.mrb[0].mxu0
      %v602 = vadd.f32 0.0, %v601
      %v603 = vpop.f32.mrb[0].mxu0
      %604 = vmatprep.mubr.f32.mxu0 0.0
      %605 = vmatmul.mubr.f32.gmra.mrb[0].mxu0 %v409
      %v606 = vpop.f32.mrb[0].mxu0
      %v607 = vadd.f32 0.0, %v606
      %v608 = vpop.f32.mrb[0].mxu0
      %609 = vmatprep.mubr.f32.mxu0 0.0
      %610 = vmatmul.mubr.f32.gmra.mrb[0].mxu0 %v412
      %v611 = vpop.f32.mrb[0].mxu0
      %v612 = vadd.f32 0.0, %v611
      %v613 = vpop.f32.mrb[0].mxu0
      %614 = vmatprep.mubr.f32.mxu0 0.0
      %615 = vmatmul.mubr.f32.gmra.mrb[0].mxu0 %v415
      %v616 = vpop.f32.mrb[0].mxu0
      %v617 = vadd.f32 0.0, %v616
      %v618 = vpop.f32.mrb[0].mxu0
      %619 = vmatprep.mubr.f32.mxu0 0.0
      %620 = vmatmul.mubr.f32.gmra.mrb[0].mxu0 %v418
      %v621 = vpop.f32.mrb[0].mxu0
      %v622 = vadd.f32 0.0, %v621
      %v623 = vpop.f32.mrb[0].mxu0
      %624 = vmatprep.mubr.f32.mxu0 0.0
      %625 = vmatmul.mubr.f32.gmra.mrb[0].mxu0 %v421
      %v626 = vpop.f32.mrb[0].mxu0
      %v627 = vadd.f32 0.0, %v626
      %v628 = vpop.f32.mrb[0].mxu0
      %629 = vmatprep.mubr.f32.mxu0 0.0
      %630 = vmatmul.mubr.f32.gmra.mrb[0].mxu0 %v424
      %v631 = vpop.f32.mrb[0].mxu0
      %v632 = vadd.f32 0.0, %v631
      %v633 = vpop.f32.mrb[0].mxu0
      %634 = vmatprep.mubr.f32.mxu0 0.0
      %635 = vmatmul.mubr.f32.gmra.mrb[0].mxu0 %v427
      %v636 = vpop.f32.mrb[0].mxu0
      %v637 = vadd.f32 0.0, %v636
      %v638 = vpop.f32.mrb[0].mxu0
      %639 = vmatprep.mubr.f32.mxu0 0.0
      %640 = vmatmul.mubr.f32.gmra.mrb[0].mxu0 %v430
      %v641 = vpop.f32.mrb[0].mxu0
      %v642 = vadd.f32 0.0, %v641
      %v643 = vpop.f32.mrb[0].mxu0
      %644 = vmatprep.mubr.f32.mxu0 0.0
      %645 = vmatmul.mubr.f32.gmra.mrb[0].mxu0 %v433
      %v646 = vpop.f32.mrb[0].mxu0
      %v647 = vadd.f32 0.0, %v646
      %v648 = vpop.f32.mrb[0].mxu0
      %649 = vmatprep.mubr.f32.mxu0 0.0
      %650 = vmatmul.mubr.f32.gmra.mrb[0].mxu0 %v436
      %v651 = vpop.f32.mrb[0].mxu0
      %v652 = vadd.f32 0.0, %v651
      %v653 = vpop.f32.mrb[0].mxu0
      %654 = vmatprep.mubr.f32.mxu0 0.0
      %655 = vmatmul.mubr.f32.gmra.mrb[0].mxu0 %v439
      %v656 = vpop.f32.mrb[0].mxu0
      %v657 = vadd.f32 0.0, %v656
      %v658 = vpop.f32.mrb[0].mxu0
      %659 = vmatprep.mubr.f32.mxu0 0.0
      %660 = vmatmul.mubr.f32.gmra.mrb[0].mxu0 %v442
      %v661 = vpop.f32.mrb[0].mxu0
      %v662 = vadd.f32 0.0, %v661
      %v663 = vpop.f32.mrb[0].mxu0
      %664 = vmatprep.mubr.f32.mxu0 0.0
      %665 = vmatmul.mubr.f32.gmra.mrb[0].mxu0 %v445
      %v666 = vpop.f32.mrb[0].mxu0
      %v667 = vadd.f32 0.0, %v666
      %v668 = vpop.f32.mrb[0].mxu0
      %669 = vmatprep.mubr.f32.mxu0 0.0
      %670 = vmatmul.mubr.f32.gmra.mrb[0].mxu0 %v448
      %v671 = vpop.f32.mrb[0].mxu0
      %v672 = vadd.f32 0.0, %v671
      %v673 = vpop.f32.mrb[0].mxu0
      %674 = vmatprep.mubr.f32.mxu0 0.0
      %675 = vmatmul.mubr.f32.gmra.mrb[0].mxu0 %v451
      %v676 = vpop.f32.mrb[0].mxu0
      %v677 = vadd.f32 0.0, %v676
      %v678 = vpop.f32.mrb[0].mxu0
      %679 = vmatprep.mubr.f32.mxu0 0.0
      %680 = vmatmul.mubr.f32.gmra.mrb[0].mxu0 %v454
      %v681 = vpop.f32.mrb[0].mxu0
      %v682 = vadd.f32 0.0, %v681
      %v683 = vpop.f32.mrb[0].mxu0
      %684 = vdwg.mxu0
      %v686 = vsel %vm182, %v293, 0
      %v689 = vsel %vm182, %v294, 0
      %v692 = vsel %vm182, %v295, 0
      %v695 = vsel %vm182, %v296, 0
      %v698 = vsel %vm182, %v297, 0
      %v701 = vsel %vm182, %v298, 0
      %v704 = vsel %vm182, %v299, 0
      %v707 = vsel %vm182, %v300, 0
      %v710 = vsel %vm182, %v301, 0
      %v713 = vsel %vm182, %v302, 0
      %v716 = vsel %vm182, %v303, 0
      %v719 = vsel %vm182, %v304, 0
      %v722 = vsel %vm182, %v305, 0
      %v725 = vsel %vm182, %v306, 0
      %v728 = vsel %vm182, %v307, 0
      %v731 = vsel %vm182, %v308, 0
      %v734 = vsel %vm182, %v309, 0
      %v737 = vsel %vm182, %v310, 0
      %v740 = vsel %vm182, %v311, 0
      %v743 = vsel %vm182, %v312, 0
      %v746 = vsel %vm182, %v313, 0
      %v749 = vsel %vm182, %v314, 0
      %v752 = vsel %vm182, %v315, 0
      %v755 = vsel %vm182, %v316, 0
      %v758 = vsel %vm182, %v317, 0
      %v761 = vsel %vm182, %v318, 0
      %v764 = vsel %vm182, %v319, 0
      %v767 = vsel %vm182, %v320, 0
      %v770 = vsel %vm182, %v321, 0
      %v773 = vsel %vm182, %v322, 0
      %v776 = vsel %vm182, %v323, 0
      %v779 = vsel %vm182, %v324, 0
      %v782 = vsel %vm456, %v325, 0
      %784 = vmatprep.subr.mxu0 0.0
      %785 = vmatpush1.msra.mxu0 %v782
      %786 = vmatprep.subr.mxu0 0.0
      %787 = vmatpush1.msra.mxu0 0.0
      %788 = vmatprep.subr.mxu0 0.0
      %789 = vmatpush1.msra.mxu0 0.0
      %790 = vmatprep.subr.mxu0 0.0
      %791 = vmatpush1.msra.mxu0 0.0
      %792 = vmatprep.subr.mxu0 0.0
      %793 = vmatpush1.msra.mxu0 0.0
      %794 = vmatprep.subr.mxu0 0.0
      %795 = vmatpush1.msra.mxu0 0.0
      %796 = vmatprep.subr.mxu0 0.0
      %797 = vmatpush1.msra.mxu0 0.0
      %798 = vmatprep.subr.mxu0 0.0
      %799 = vmatpush1.msra.mxu0 0.0
      %800 = vmatprep.subr.mxu0 0.0
      %801 = vmatpush1.msra.mxu0 0.0
      %802 = vmatprep.subr.mxu0 0.0
      %803 = vmatpush1.msra.mxu0 0.0
      %804 = vmatprep.subr.mxu0 0.0
      %805 = vmatpush1.msra.mxu0 0.0
      %806 = vmatprep.subr.mxu0 0.0
      %807 = vmatpush1.msra.mxu0 0.0
      %808 = vmatprep.subr.mxu0 0.0
      %809 = vmatpush1.msra.mxu0 0.0
      %810 = vmatprep.subr.mxu0 0.0
      %811 = vmatpush1.msra.mxu0 0.0
      %812 = vmatprep.subr.mxu0 0.0
      %813 = vmatpush1.msra.mxu0 0.0
      %814 = vmatprep.subr.mxu0 0.0
      %815 = vmatpush1.msra.mxu0 0.0
      %816 = vmatprep.subr.mxu0 0.0
      %817 = vmatpush1.msra.mxu0 0.0
      %818 = vmatprep.subr.mxu0 0.0
      %819 = vmatpush1.msra.mxu0 0.0
      %820 = vmatprep.subr.mxu0 0.0
      %821 = vmatpush1.msra.mxu0 0.0
      %822 = vmatprep.subr.mxu0 0.0
      %823 = vmatpush1.msra.mxu0 0.0
      %824 = vmatprep.subr.mxu0 0.0
      %825 = vmatpush1.msra.mxu0 0.0
      %826 = vmatprep.subr.mxu0 0.0
      %827 = vmatpush1.msra.mxu0 0.0
      %828 = vmatprep.subr.mxu0 0.0
      %829 = vmatpush1.msra.mxu0 0.0
      %830 = vmatprep.subr.mxu0 0.0
      %831 = vmatpush1.msra.mxu0 0.0
      %832 = vmatprep.subr.mxu0 0.0
      %833 = vmatpush1.msra.mxu0 0.0
      %834 = vmatprep.subr.mxu0 0.0
      %835 = vmatpush1.msra.mxu0 0.0
      %836 = vmatprep.subr.mxu0 0.0
      %837 = vmatpush1.msra.mxu0 0.0
      %838 = vmatprep.subr.mxu0 0.0
      %839 = vmatpush1.msra.mxu0 0.0
      %840 = vmatprep.subr.mxu0 0.0
      %841 = vmatpush1.msra.mxu0 0.0
      %842 = vmatprep.subr.mxu0 0.0
      %843 = vmatpush1.msra.mxu0 0.0
      %844 = vmatprep.subr.mxu0 0.0
      %845 = vmatpush1.msra.mxu0 0.0
      %846 = vmatprep.subr.mxu0 0.0
      %847 = vmatpush1.msra.mxu0 0.0
      %848 = vmatprep.mubr.f32.mxu0 0.0
      %849 = vmatmul.mubr.f32.gmra.mrb[0].mxu0 %v686
      %v850 = vpop.f32.mrb[0].mxu0
      %v851 = vadd.f32 %v527, %v850
      %v852 = vpop.f32.mrb[0].mxu0
      %853 = vmatprep.mubr.f32.mxu0 0.0
      %854 = vmatmul.mubr.f32.gmra.mrb[0].mxu0 %v689
      %v855 = vpop.f32.mrb[0].mxu0
      %v856 = vadd.f32 %v532, %v855
      %v857 = vpop.f32.mrb[0].mxu0
      %858 = vmatprep.mubr.f32.mxu0 0.0
      %859 = vmatmul.mubr.f32.gmra.mrb[0].mxu0 %v692
      %v860 = vpop.f32.mrb[0].mxu0
      %v861 = vadd.f32 %v537, %v860
      %v862 = vpop.f32.mrb[0].mxu0
      %863 = vmatprep.mubr.f32.mxu0 0.0
      %864 = vmatmul.mubr.f32.gmra.mrb[0].mxu0 %v695
      %v865 = vpop.f32.mrb[0].mxu0
      %v866 = vadd.f32 %v542, %v865
      %v867 = vpop.f32.mrb[0].mxu0
      %868 = vmatprep.mubr.f32.mxu0 0.0
      %869 = vmatmul.mubr.f32.gmra.mrb[0].mxu0 %v698
      %v870 = vpop.f32.mrb[0].mxu0
      %v871 = vadd.f32 %v547, %v870
      %v872 = vpop.f32.mrb[0].mxu0
      %873 = vmatprep.mubr.f32.mxu0 0.0
      %874 = vmatmul.mubr.f32.gmra.mrb[0].mxu0 %v701
      %v875 = vpop.f32.mrb[0].mxu0
      %v876 = vadd.f32 %v552, %v875
      %v877 = vpop.f32.mrb[0].mxu0
      %878 = vmatprep.mubr.f32.mxu0 0.0
      %879 = vmatmul.mubr.f32.gmra.mrb[0].mxu0 %v704
      %v880 = vpop.f32.mrb[0].mxu0
      %v881 = vadd.f32 %v557, %v880
      %v882 = vpop.f32.mrb[0].mxu0
      %883 = vmatprep.mubr.f32.mxu0 0.0
      %884 = vmatmul.mubr.f32.gmra.mrb[0].mxu0 %v707
      %v885 = vpop.f32.mrb[0].mxu0
      %v886 = vadd.f32 %v562, %v885
      %v887 = vpop.f32.mrb[0].mxu0
      %888 = vmatprep.mubr.f32.mxu0 0.0
      %889 = vmatmul.mubr.f32.gmra.mrb[0].mxu0 %v710
      %v890 = vpop.f32.mrb[0].mxu0
      %v891 = vadd.f32 %v567, %v890
      %v892 = vpop.f32.mrb[0].mxu0
      %893 = vmatprep.mubr.f32.mxu0 0.0
      %894 = vmatmul.mubr.f32.gmra.mrb[0].mxu0 %v713
      %v895 = vpop.f32.mrb[0].mxu0
      %v896 = vadd.f32 %v572, %v895
      %v897 = vpop.f32.mrb[0].mxu0
      %898 = vmatprep.mubr.f32.mxu0 0.0
      %899 = vmatmul.mubr.f32.gmra.mrb[0].mxu0 %v716
      %v900 = vpop.f32.mrb[0].mxu0
      %v901 = vadd.f32 %v577, %v900
      %v902 = vpop.f32.mrb[0].mxu0
      %903 = vmatprep.mubr.f32.mxu0 0.0
      %904 = vmatmul.mubr.f32.gmra.mrb[0].mxu0 %v719
      %v905 = vpop.f32.mrb[0].mxu0
      %v906 = vadd.f32 %v582, %v905
      %v907 = vpop.f32.mrb[0].mxu0
      %908 = vmatprep.mubr.f32.mxu0 0.0
      %909 = vmatmul.mubr.f32.gmra.mrb[0].mxu0 %v722
      %v910 = vpop.f32.mrb[0].mxu0
      %v911 = vadd.f32 %v587, %v910
      %v912 = vpop.f32.mrb[0].mxu0
      %913 = vmatprep.mubr.f32.mxu0 0.0
      %914 = vmatmul.mubr.f32.gmra.mrb[0].mxu0 %v725
      %v915 = vpop.f32.mrb[0].mxu0
      %v916 = vadd.f32 %v592, %v915
      %v917 = vpop.f32.mrb[0].mxu0
      %918 = vmatprep.mubr.f32.mxu0 0.0
      %919 = vmatmul.mubr.f32.gmra.mrb[0].mxu0 %v728
      %v920 = vpop.f32.mrb[0].mxu0
      %v921 = vadd.f32 %v597, %v920
      %v922 = vpop.f32.mrb[0].mxu0
      %923 = vmatprep.mubr.f32.mxu0 0.0
      %924 = vmatmul.mubr.f32.gmra.mrb[0].mxu0 %v731
      %v925 = vpop.f32.mrb[0].mxu0
      %v926 = vadd.f32 %v602, %v925
      %v927 = vpop.f32.mrb[0].mxu0
      %928 = vmatprep.mubr.f32.mxu0 0.0
      %929 = vmatmul.mubr.f32.gmra.mrb[0].mxu0 %v734
      %v930 = vpop.f32.mrb[0].mxu0
      %v931 = vadd.f32 %v607, %v930
      %v932 = vpop.f32.mrb[0].mxu0
      %933 = vmatprep.mubr.f32.mxu0 0.0
      %934 = vmatmul.mubr.f32.gmra.mrb[0].mxu0 %v737
      %v935 = vpop.f32.mrb[0].mxu0
      %v936 = vadd.f32 %v612, %v935
      %v937 = vpop.f32.mrb[0].mxu0
      %938 = vmatprep.mubr.f32.mxu0 0.0
      %939 = vmatmul.mubr.f32.gmra.mrb[0].mxu0 %v740
      %v940 = vpop.f32.mrb[0].mxu0
      %v941 = vadd.f32 %v617, %v940
      %v942 = vpop.f32.mrb[0].mxu0
      %943 = vmatprep.mubr.f32.mxu0 0.0
      %944 = vmatmul.mubr.f32.gmra.mrb[0].mxu0 %v743
      %v945 = vpop.f32.mrb[0].mxu0
      %v946 = vadd.f32 %v622, %v945
      %v947 = vpop.f32.mrb[0].mxu0
      %948 = vmatprep.mubr.f32.mxu0 0.0
      %949 = vmatmul.mubr.f32.gmra.mrb[0].mxu0 %v746
      %v950 = vpop.f32.mrb[0].mxu0
      %v951 = vadd.f32 %v627, %v950
      %v952 = vpop.f32.mrb[0].mxu0
      %953 = vmatprep.mubr.f32.mxu0 0.0
      %954 = vmatmul.mubr.f32.gmra.mrb[0].mxu0 %v749
      %v955 = vpop.f32.mrb[0].mxu0
      %v956 = vadd.f32 %v632, %v955
      %v957 = vpop.f32.mrb[0].mxu0
      %958 = vmatprep.mubr.f32.mxu0 0.0
      %959 = vmatmul.mubr.f32.gmra.mrb[0].mxu0 %v752
      %v960 = vpop.f32.mrb[0].mxu0
      %v961 = vadd.f32 %v637, %v960
      %v962 = vpop.f32.mrb[0].mxu0
      %963 = vmatprep.mubr.f32.mxu0 0.0
      %964 = vmatmul.mubr.f32.gmra.mrb[0].mxu0 %v755
      %v965 = vpop.f32.mrb[0].mxu0
      %v966 = vadd.f32 %v642, %v965
      %v967 = vpop.f32.mrb[0].mxu0
      %968 = vmatprep.mubr.f32.mxu0 0.0
      %969 = vmatmul.mubr.f32.gmra.mrb[0].mxu0 %v758
      %v970 = vpop.f32.mrb[0].mxu0
      %v971 = vadd.f32 %v647, %v970
      %v972 = vpop.f32.mrb[0].mxu0
      %973 = vmatprep.mubr.f32.mxu0 0.0
      %974 = vmatmul.mubr.f32.gmra.mrb[0].mxu0 %v761
      %v975 = vpop.f32.mrb[0].mxu0
      %v976 = vadd.f32 %v652, %v975
      %v977 = vpop.f32.mrb[0].mxu0
      %978 = vmatprep.mubr.f32.mxu0 0.0
      %979 = vmatmul.mubr.f32.gmra.mrb[0].mxu0 %v764
      %v980 = vpop.f32.mrb[0].mxu0
      %v981 = vadd.f32 %v657, %v980
      %v982 = vpop.f32.mrb[0].mxu0
      %983 = vmatprep.mubr.f32.mxu0 0.0
      %984 = vmatmul.mubr.f32.gmra.mrb[0].mxu0 %v767
      %v985 = vpop.f32.mrb[0].mxu0
      %v986 = vadd.f32 %v662, %v985
      %v987 = vpop.f32.mrb[0].mxu0
      %988 = vmatprep.mubr.f32.mxu0 0.0
      %989 = vmatmul.mubr.f32.gmra.mrb[0].mxu0 %v770
      %v990 = vpop.f32.mrb[0].mxu0
      %v991 = vadd.f32 %v667, %v990
      %v992 = vpop.f32.mrb[0].mxu0
      %993 = vmatprep.mubr.f32.mxu0 0.0
      %994 = vmatmul.mubr.f32.gmra.mrb[0].mxu0 %v773
      %v995 = vpop.f32.mrb[0].mxu0
      %v996 = vadd.f32 %v672, %v995
      %v997 = vpop.f32.mrb[0].mxu0
      %998 = vmatprep.mubr.f32.mxu0 0.0
      %999 = vmatmul.mubr.f32.gmra.mrb[0].mxu0 %v776
      %v1000 = vpop.f32.mrb[0].mxu0
      %v1001 = vadd.f32 %v677, %v1000
      %v1002 = vpop.f32.mrb[0].mxu0
      %1003 = vmatprep.mubr.f32.mxu0 0.0
      %1004 = vmatmul.mubr.f32.gmra.mrb[0].mxu0 %v779
      %v1005 = vpop.f32.mrb[0].mxu0
      %v1006 = vadd.f32 %v682, %v1005
      %v1007 = vpop.f32.mrb[0].mxu0
      %1008 = vdwg.mxu0
      %v1009 = vld [vmem:[#allocation2 + $0x2] sm:$0xff]
      %v1010 = vld [vmem:[#allocation2 + $0xa] sm:$0xff]
      %v1011 = vld [vmem:[#allocation2 + $0x1a] sm:$0xff]
      %v1012 = vld [vmem:[#allocation2 + $0x22] sm:$0xff]
      %v1013 = vld [vmem:[#allocation2 + $0x32] sm:$0xff]
      %v1014 = vld [vmem:[#allocation2 + $0x3a] sm:$0xff]
      %v1015 = vld [vmem:[#allocation2 + $0x4a] sm:$0xff]
      %v1016 = vld [vmem:[#allocation2 + $0x52] sm:$0xff]
      %v1017 = vld [vmem:[#allocation2 + $0x62] sm:$0xff]
      %v1018 = vld [vmem:[#allocation2 + $0x6a] sm:$0xff]
      %v1019 = vld [vmem:[#allocation2 + $0x7a] sm:$0xff]
      %v1020 = vld [vmem:[#allocation2 + $0x82] sm:$0xff]
      %v1021 = vld [vmem:[#allocation2 + $0x92] sm:$0xff]
      %v1022 = vld [vmem:[#allocation2 + $0x9a] sm:$0xff]
      %v1023 = vld [vmem:[#allocation2 + $0xaa] sm:$0xff]
      %v1024 = vld [vmem:[#allocation2 + $0xb2] sm:$0xff]
      %v1025 = vld [vmem:[#allocation2 + $0xc2] sm:$0xff]
      %v1026 = vld [vmem:[#allocation2 + $0xca] sm:$0xff]
      %v1027 = vld [vmem:[#allocation2 + $0xda] sm:$0xff]
      %v1028 = vld [vmem:[#allocation2 + $0xe2] sm:$0xff]
      %v1029 = vld [vmem:[#allocation2 + $0xf2] sm:$0xff]
      %v1030 = vld [vmem:[#allocation2 + $0xfa] sm:$0xff]
      %v1031 = vld [vmem:[#allocation2 + $0x10a] sm:$0xff]
      %v1032 = vld [vmem:[#allocation2 + $0x112] sm:$0xff]
      %v1033 = vld [vmem:[#allocation2 + $0x122] sm:$0xff]
      %v1034 = vld [vmem:[#allocation2 + $0x12a] sm:$0xff]
      %v1035 = vld [vmem:[#allocation2 + $0x13a] sm:$0xff]
      %v1036 = vld [vmem:[#allocation2 + $0x142] sm:$0xff]
      %v1037 = vld [vmem:[#allocation2 + $0x152] sm:$0xff]
      %v1038 = vld [vmem:[#allocation2 + $0x15a] sm:$0xff]
      %v1039 = vld [vmem:[#allocation2 + $0x16a] sm:$0xff]
      %v1040 = vld [vmem:[#allocation2 + $0x172] sm:$0xff]
      %s1041 = scalar_lea.vmem %s1, 8
      %v1042 = vld [vmem:[%s1041] sm:$0xf]
      %v1044 = vsel %vm182, %v1009, 0
      %v1047 = vsel %vm182, %v1010, 0
      %v1050 = vsel %vm182, %v1011, 0
      %v1053 = vsel %vm182, %v1012, 0
      %v1056 = vsel %vm182, %v1013, 0
      %v1059 = vsel %vm182, %v1014, 0
      %v1062 = vsel %vm182, %v1015, 0
      %v1065 = vsel %vm182, %v1016, 0
      %v1068 = vsel %vm182, %v1017, 0
      %v1071 = vsel %vm182, %v1018, 0
      %v1074 = vsel %vm182, %v1019, 0
      %v1077 = vsel %vm182, %v1020, 0
      %v1080 = vsel %vm182, %v1021, 0
      %v1083 = vsel %vm182, %v1022, 0
      %v1086 = vsel %vm182, %v1023, 0
      %v1089 = vsel %vm182, %v1024, 0
      %v1092 = vsel %vm182, %v1025, 0
      %v1095 = vsel %vm182, %v1026, 0
      %v1098 = vsel %vm182, %v1027, 0
      %v1101 = vsel %vm182, %v1028, 0
      %v1104 = vsel %vm182, %v1029, 0
      %v1107 = vsel %vm182, %v1030, 0
      %v1110 = vsel %vm182, %v1031, 0
      %v1113 = vsel %vm182, %v1032, 0
      %v1116 = vsel %vm182, %v1033, 0
      %v1119 = vsel %vm182, %v1034, 0
      %v1122 = vsel %vm182, %v1035, 0
      %v1125 = vsel %vm182, %v1036, 0
      %v1128 = vsel %vm182, %v1037, 0
      %v1131 = vsel %vm182, %v1038, 0
      %v1134 = vsel %vm182, %v1039, 0
      %v1137 = vsel %vm182, %v1040, 0
      %v1140 = vsel %vm456, %v1042, 0
      %1142 = vmatprep.subr.mxu0 0.0
      %1143 = vmatpush1.msra.mxu0 %v1140
      %1144 = vmatprep.subr.mxu0 0.0
      %1145 = vmatpush1.msra.mxu0 0.0
      %1146 = vmatprep.subr.mxu0 0.0
      %1147 = vmatpush1.msra.mxu0 0.0
      %1148 = vmatprep.subr.mxu0 0.0
      %1149 = vmatpush1.msra.mxu0 0.0
      %1150 = vmatprep.subr.mxu0 0.0
      %1151 = vmatpush1.msra.mxu0 0.0
      %1152 = vmatprep.subr.mxu0 0.0
      %1153 = vmatpush1.msra.mxu0 0.0
      %1154 = vmatprep.subr.mxu0 0.0
      %1155 = vmatpush1.msra.mxu0 0.0
      %1156 = vmatprep.subr.mxu0 0.0
      %1157 = vmatpush1.msra.mxu0 0.0
      %1158 = vmatprep.subr.mxu0 0.0
      %1159 = vmatpush1.msra.mxu0 0.0
      %1160 = vmatprep.subr.mxu0 0.0
      %1161 = vmatpush1.msra.mxu0 0.0
      %1162 = vmatprep.subr.mxu0 0.0
      %1163 = vmatpush1.msra.mxu0 0.0
      %1164 = vmatprep.subr.mxu0 0.0
      %1165 = vmatpush1.msra.mxu0 0.0
      %1166 = vmatprep.subr.mxu0 0.0
      %1167 = vmatpush1.msra.mxu0 0.0
      %1168 = vmatprep.subr.mxu0 0.0
      %1169 = vmatpush1.msra.mxu0 0.0
      %1170 = vmatprep.subr.mxu0 0.0
      %1171 = vmatpush1.msra.mxu0 0.0
      %1172 = vmatprep.subr.mxu0 0.0
      %1173 = vmatpush1.msra.mxu0 0.0
      %1174 = vmatprep.subr.mxu0 0.0
      %1175 = vmatpush1.msra.mxu0 0.0
      %1176 = vmatprep.subr.mxu0 0.0
      %1177 = vmatpush1.msra.mxu0 0.0
      %1178 = vmatprep.subr.mxu0 0.0
      %1179 = vmatpush1.msra.mxu0 0.0
      %1180 = vmatprep.subr.mxu0 0.0
      %1181 = vmatpush1.msra.mxu0 0.0
      %1182 = vmatprep.subr.mxu0 0.0
      %1183 = vmatpush1.msra.mxu0 0.0
      %1184 = vmatprep.subr.mxu0 0.0
      %1185 = vmatpush1.msra.mxu0 0.0
      %1186 = vmatprep.subr.mxu0 0.0
      %1187 = vmatpush1.msra.mxu0 0.0
      %1188 = vmatprep.subr.mxu0 0.0
      %1189 = vmatpush1.msra.mxu0 0.0
      %1190 = vmatprep.subr.mxu0 0.0
      %1191 = vmatpush1.msra.mxu0 0.0
      %1192 = vmatprep.subr.mxu0 0.0
      %1193 = vmatpush1.msra.mxu0 0.0
      %1194 = vmatprep.subr.mxu0 0.0
      %1195 = vmatpush1.msra.mxu0 0.0
      %1196 = vmatprep.subr.mxu0 0.0
      %1197 = vmatpush1.msra.mxu0 0.0
      %1198 = vmatprep.subr.mxu0 0.0
      %1199 = vmatpush1.msra.mxu0 0.0
      %1200 = vmatprep.subr.mxu0 0.0
      %1201 = vmatpush1.msra.mxu0 0.0
      %1202 = vmatprep.subr.mxu0 0.0
      %1203 = vmatpush1.msra.mxu0 0.0
      %1204 = vmatprep.subr.mxu0 0.0
      %1205 = vmatpush1.msra.mxu0 0.0
      %1206 = vmatprep.mubr.f32.mxu0 0.0
      %1207 = vmatmul.mubr.f32.gmra.mrb[0].mxu0 %v1044
      %v1208 = vpop.f32.mrb[0].mxu0
      %v1209 = vadd.f32 0.0, %v1208
      %v1210 = vpop.f32.mrb[0].mxu0
      %1211 = vmatprep.mubr.f32.mxu0 0.0
      %1212 = vmatmul.mubr.f32.gmra.mrb[0].mxu0 %v1047
      %v1213 = vpop.f32.mrb[0].mxu0
      %v1214 = vadd.f32 0.0, %v1213
      %v1215 = vpop.f32.mrb[0].mxu0
      %1216 = vmatprep.mubr.f32.mxu0 0.0
      %1217 = vmatmul.mubr.f32.gmra.mrb[0].mxu0 %v1050
      %v1218 = vpop.f32.mrb[0].mxu0
      %v1219 = vadd.f32 0.0, %v1218
      %v1220 = vpop.f32.mrb[0].mxu0
      %1221 = vmatprep.mubr.f32.mxu0 0.0
      %1222 = vmatmul.mubr.f32.gmra.mrb[0].mxu0 %v1053
      %v1223 = vpop.f32.mrb[0].mxu0
      %v1224 = vadd.f32 0.0, %v1223
      %v1225 = vpop.f32.mrb[0].mxu0
      %1226 = vmatprep.mubr.f32.mxu0 0.0
      %1227 = vmatmul.mubr.f32.gmra.mrb[0].mxu0 %v1056
      %v1228 = vpop.f32.mrb[0].mxu0
      %v1229 = vadd.f32 0.0, %v1228
      %v1230 = vpop.f32.mrb[0].mxu0
      %1231 = vmatprep.mubr.f32.mxu0 0.0
      %1232 = vmatmul.mubr.f32.gmra.mrb[0].mxu0 %v1059
      %v1233 = vpop.f32.mrb[0].mxu0
      %v1234 = vadd.f32 0.0, %v1233
      %v1235 = vpop.f32.mrb[0].mxu0
      %1236 = vmatprep.mubr.f32.mxu0 0.0
      %1237 = vmatmul.mubr.f32.gmra.mrb[0].mxu0 %v1062
      %v1238 = vpop.f32.mrb[0].mxu0
      %v1239 = vadd.f32 0.0, %v1238
      %v1240 = vpop.f32.mrb[0].mxu0
      %1241 = vmatprep.mubr.f32.mxu0 0.0
      %1242 = vmatmul.mubr.f32.gmra.mrb[0].mxu0 %v1065
      %v1243 = vpop.f32.mrb[0].mxu0
      %v1244 = vadd.f32 0.0, %v1243
      %v1245 = vpop.f32.mrb[0].mxu0
      %1246 = vmatprep.mubr.f32.mxu0 0.0
      %1247 = vmatmul.mubr.f32.gmra.mrb[0].mxu0 %v1068
      %v1248 = vpop.f32.mrb[0].mxu0
      %v1249 = vadd.f32 0.0, %v1248
      %v1250 = vpop.f32.mrb[0].mxu0
      %1251 = vmatprep.mubr.f32.mxu0 0.0
      %1252 = vmatmul.mubr.f32.gmra.mrb[0].mxu0 %v1071
      %v1253 = vpop.f32.mrb[0].mxu0
      %v1254 = vadd.f32 0.0, %v1253
      %v1255 = vpop.f32.mrb[0].mxu0
      %1256 = vmatprep.mubr.f32.mxu0 0.0
      %1257 = vmatmul.mubr.f32.gmra.mrb[0].mxu0 %v1074
      %v1258 = vpop.f32.mrb[0].mxu0
      %v1259 = vadd.f32 0.0, %v1258
      %v1260 = vpop.f32.mrb[0].mxu0
      %1261 = vmatprep.mubr.f32.mxu0 0.0
      %1262 = vmatmul.mubr.f32.gmra.mrb[0].mxu0 %v1077
      %v1263 = vpop.f32.mrb[0].mxu0
      %v1264 = vadd.f32 0.0, %v1263
      %v1265 = vpop.f32.mrb[0].mxu0
      %1266 = vmatprep.mubr.f32.mxu0 0.0
      %1267 = vmatmul.mubr.f32.gmra.mrb[0].mxu0 %v1080
      %v1268 = vpop.f32.mrb[0].mxu0
      %v1269 = vadd.f32 0.0, %v1268
      %v1270 = vpop.f32.mrb[0].mxu0
      %1271 = vmatprep.mubr.f32.mxu0 0.0
      %1272 = vmatmul.mubr.f32.gmra.mrb[0].mxu0 %v1083
      %v1273 = vpop.f32.mrb[0].mxu0
      %v1274 = vadd.f32 0.0, %v1273
      %v1275 = vpop.f32.mrb[0].mxu0
      %1276 = vmatprep.mubr.f32.mxu0 0.0
      %1277 = vmatmul.mubr.f32.gmra.mrb[0].mxu0 %v1086
      %v1278 = vpop.f32.mrb[0].mxu0
      %v1279 = vadd.f32 0.0, %v1278
      %v1280 = vpop.f32.mrb[0].mxu0
      %1281 = vmatprep.mubr.f32.mxu0 0.0
      %1282 = vmatmul.mubr.f32.gmra.mrb[0].mxu0 %v1089
      %v1283 = vpop.f32.mrb[0].mxu0
      %v1284 = vadd.f32 0.0, %v1283
      %v1285 = vpop.f32.mrb[0].mxu0
      %1286 = vmatprep.mubr.f32.mxu0 0.0
      %1287 = vmatmul.mubr.f32.gmra.mrb[0].mxu0 %v1092
      %v1288 = vpop.f32.mrb[0].mxu0
      %v1289 = vadd.f32 0.0, %v1288
      %v1290 = vpop.f32.mrb[0].mxu0
      %1291 = vmatprep.mubr.f32.mxu0 0.0
      %1292 = vmatmul.mubr.f32.gmra.mrb[0].mxu0 %v1095
      %v1293 = vpop.f32.mrb[0].mxu0
      %v1294 = vadd.f32 0.0, %v1293
      %v1295 = vpop.f32.mrb[0].mxu0
      %1296 = vmatprep.mubr.f32.mxu0 0.0
      %1297 = vmatmul.mubr.f32.gmra.mrb[0].mxu0 %v1098
      %v1298 = vpop.f32.mrb[0].mxu0
      %v1299 = vadd.f32 0.0, %v1298
      %v1300 = vpop.f32.mrb[0].mxu0
      %1301 = vmatprep.mubr.f32.mxu0 0.0
      %1302 = vmatmul.mubr.f32.gmra.mrb[0].mxu0 %v1101
      %v1303 = vpop.f32.mrb[0].mxu0
      %v1304 = vadd.f32 0.0, %v1303
      %v1305 = vpop.f32.mrb[0].mxu0
      %1306 = vmatprep.mubr.f32.mxu0 0.0
      %1307 = vmatmul.mubr.f32.gmra.mrb[0].mxu0 %v1104
      %v1308 = vpop.f32.mrb[0].mxu0
      %v1309 = vadd.f32 0.0, %v1308
      %v1310 = vpop.f32.mrb[0].mxu0
      %1311 = vmatprep.mubr.f32.mxu0 0.0
      %1312 = vmatmul.mubr.f32.gmra.mrb[0].mxu0 %v1107
      %v1313 = vpop.f32.mrb[0].mxu0
      %v1314 = vadd.f32 0.0, %v1313
      %v1315 = vpop.f32.mrb[0].mxu0
      %1316 = vmatprep.mubr.f32.mxu0 0.0
      %1317 = vmatmul.mubr.f32.gmra.mrb[0].mxu0 %v1110
      %v1318 = vpop.f32.mrb[0].mxu0
      %v1319 = vadd.f32 0.0, %v1318
      %v1320 = vpop.f32.mrb[0].mxu0
      %1321 = vmatprep.mubr.f32.mxu0 0.0
      %1322 = vmatmul.mubr.f32.gmra.mrb[0].mxu0 %v1113
      %v1323 = vpop.f32.mrb[0].mxu0
      %v1324 = vadd.f32 0.0, %v1323
      %v1325 = vpop.f32.mrb[0].mxu0
      %1326 = vmatprep.mubr.f32.mxu0 0.0
      %1327 = vmatmul.mubr.f32.gmra.mrb[0].mxu0 %v1116
      %v1328 = vpop.f32.mrb[0].mxu0
      %v1329 = vadd.f32 0.0, %v1328
      %v1330 = vpop.f32.mrb[0].mxu0
      %1331 = vmatprep.mubr.f32.mxu0 0.0
      %1332 = vmatmul.mubr.f32.gmra.mrb[0].mxu0 %v1119
      %v1333 = vpop.f32.mrb[0].mxu0
      %v1334 = vadd.f32 0.0, %v1333
      %v1335 = vpop.f32.mrb[0].mxu0
      %1336 = vmatprep.mubr.f32.mxu0 0.0
      %1337 = vmatmul.mubr.f32.gmra.mrb[0].mxu0 %v1122
      %v1338 = vpop.f32.mrb[0].mxu0
      %v1339 = vadd.f32 0.0, %v1338
      %v1340 = vpop.f32.mrb[0].mxu0
      %1341 = vmatprep.mubr.f32.mxu0 0.0
      %1342 = vmatmul.mubr.f32.gmra.mrb[0].mxu0 %v1125
      %v1343 = vpop.f32.mrb[0].mxu0
      %v1344 = vadd.f32 0.0, %v1343
      %v1345 = vpop.f32.mrb[0].mxu0
      %1346 = vmatprep.mubr.f32.mxu0 0.0
      %1347 = vmatmul.mubr.f32.gmra.mrb[0].mxu0 %v1128
      %v1348 = vpop.f32.mrb[0].mxu0
      %v1349 = vadd.f32 0.0, %v1348
      %v1350 = vpop.f32.mrb[0].mxu0
      %1351 = vmatprep.mubr.f32.mxu0 0.0
      %1352 = vmatmul.mubr.f32.gmra.mrb[0].mxu0 %v1131
      %v1353 = vpop.f32.mrb[0].mxu0
      %v1354 = vadd.f32 0.0, %v1353
      %v1355 = vpop.f32.mrb[0].mxu0
      %1356 = vmatprep.mubr.f32.mxu0 0.0
      %1357 = vmatmul.mubr.f32.gmra.mrb[0].mxu0 %v1134
      %v1358 = vpop.f32.mrb[0].mxu0
      %v1359 = vadd.f32 0.0, %v1358
      %v1360 = vpop.f32.mrb[0].mxu0
      %1361 = vmatprep.mubr.f32.mxu0 0.0
      %1362 = vmatmul.mubr.f32.gmra.mrb[0].mxu0 %v1137
      %v1363 = vpop.f32.mrb[0].mxu0
      %v1364 = vadd.f32 0.0, %v1363
      %v1365 = vpop.f32.mrb[0].mxu0
      %1366 = vdwg.mxu0
      %v1367 = vadd.f32 %v851, %v1209
      %v1368 = vadd.f32 %v856, %v1214
      %v1369 = vadd.f32 %v861, %v1219
      %v1370 = vadd.f32 %v866, %v1224
      %v1371 = vadd.f32 %v871, %v1229
      %v1372 = vadd.f32 %v876, %v1234
      %v1373 = vadd.f32 %v881, %v1239
      %v1374 = vadd.f32 %v886, %v1244
      %v1375 = vadd.f32 %v891, %v1249
      %v1376 = vadd.f32 %v896, %v1254
      %v1377 = vadd.f32 %v901, %v1259
      %v1378 = vadd.f32 %v906, %v1264
      %v1379 = vadd.f32 %v911, %v1269
      %v1380 = vadd.f32 %v916, %v1274
      %v1381 = vadd.f32 %v921, %v1279
      %v1382 = vadd.f32 %v926, %v1284
      %v1383 = vadd.f32 %v931, %v1289
      %v1384 = vadd.f32 %v936, %v1294
      %v1385 = vadd.f32 %v941, %v1299
      %v1386 = vadd.f32 %v946, %v1304
      %v1387 = vadd.f32 %v951, %v1309
      %v1388 = vadd.f32 %v956, %v1314
      %v1389 = vadd.f32 %v961, %v1319
      %v1390 = vadd.f32 %v966, %v1324
      %v1391 = vadd.f32 %v971, %v1329
      %v1392 = vadd.f32 %v976, %v1334
      %v1393 = vadd.f32 %v981, %v1339
      %v1394 = vadd.f32 %v986, %v1344
      %v1395 = vadd.f32 %v991, %v1349
      %v1396 = vadd.f32 %v996, %v1354
      %v1397 = vadd.f32 %v1001, %v1359
      %v1398 = vadd.f32 %v1006, %v1364
      %v1399 = vld [vmem:[%s260] sm:$0xff]
      %v1400 = vld [vmem:[%s260 + $0x8] sm:$0xff]
      %v1401 = vld [vmem:[%s260 + $0x18] sm:$0xff]
      %v1402 = vld [vmem:[%s260 + $0x20] sm:$0xff]
      %v1403 = vld [vmem:[%s260 + $0x30] sm:$0xff]
      %v1404 = vld [vmem:[%s260 + $0x38] sm:$0xff]
      %v1405 = vld [vmem:[%s260 + $0x48] sm:$0xff]
      %v1406 = vld [vmem:[%s260 + $0x50] sm:$0xff]
      %v1407 = vld [vmem:[%s260 + $0x60] sm:$0xff]
      %v1408 = vld [vmem:[%s260 + $0x68] sm:$0xff]
      %v1409 = vld [vmem:[%s260 + $0x78] sm:$0xff]
      %v1410 = vld [vmem:[%s260 + $0x80] sm:$0xff]
      %v1411 = vld [vmem:[%s260 + $0x90] sm:$0xff]
      %v1412 = vld [vmem:[%s260 + $0x98] sm:$0xff]
      %v1413 = vld [vmem:[%s260 + $0xa8] sm:$0xff]
      %v1414 = vld [vmem:[%s260 + $0xb0] sm:$0xff]
      %v1415 = vld [vmem:[%s260 + $0xc0] sm:$0xff]
      %v1416 = vld [vmem:[%s260 + $0xc8] sm:$0xff]
      %v1417 = vld [vmem:[%s260 + $0xd8] sm:$0xff]
      %v1418 = vld [vmem:[%s260 + $0xe0] sm:$0xff]
      %v1419 = vld [vmem:[%s260 + $0xf0] sm:$0xff]
      %v1420 = vld [vmem:[%s260 + $0xf8] sm:$0xff]
      %v1421 = vld [vmem:[%s260 + $0x108] sm:$0xff]
      %v1422 = vld [vmem:[%s260 + $0x110] sm:$0xff]
      %v1423 = vld [vmem:[%s260 + $0x120] sm:$0xff]
      %v1424 = vld [vmem:[%s260 + $0x128] sm:$0xff]
      %v1425 = vld [vmem:[%s260 + $0x138] sm:$0xff]
      %v1426 = vld [vmem:[%s260 + $0x140] sm:$0xff]
      %v1427 = vld [vmem:[%s260 + $0x150] sm:$0xff]
      %v1428 = vld [vmem:[%s260 + $0x158] sm:$0xff]
      %v1429 = vld [vmem:[%s260 + $0x168] sm:$0xff]
      %v1430 = vld [vmem:[%s260 + $0x170] sm:$0xff]
      %s1431 = scalar_lea.vmem %s1, 12
      %v1432 = vld [vmem:[%s1431] sm:$0xf]
      %v1434 = vsel %vm182, %v1399, 0
      %v1437 = vsel %vm182, %v1400, 0
      %v1440 = vsel %vm182, %v1401, 0
      %v1443 = vsel %vm182, %v1402, 0
      %v1446 = vsel %vm182, %v1403, 0
      %v1449 = vsel %vm182, %v1404, 0
      %v1452 = vsel %vm182, %v1405, 0
      %v1455 = vsel %vm182, %v1406, 0
      %v1458 = vsel %vm182, %v1407, 0
      %v1461 = vsel %vm182, %v1408, 0
      %v1464 = vsel %vm182, %v1409, 0
      %v1467 = vsel %vm182, %v1410, 0
      %v1470 = vsel %vm182, %v1411, 0
      %v1473 = vsel %vm182, %v1412, 0
      %v1476 = vsel %vm182, %v1413, 0
      %v1479 = vsel %vm182, %v1414, 0
      %v1482 = vsel %vm182, %v1415, 0
      %v1485 = vsel %vm182, %v1416, 0
      %v1488 = vsel %vm182, %v1417, 0
      %v1491 = vsel %vm182, %v1418, 0
      %v1494 = vsel %vm182, %v1419, 0
      %v1497 = vsel %vm182, %v1420, 0
      %v1500 = vsel %vm182, %v1421, 0
      %v1503 = vsel %vm182, %v1422, 0
      %v1506 = vsel %vm182, %v1423, 0
      %v1509 = vsel %vm182, %v1424, 0
      %v1512 = vsel %vm182, %v1425, 0
      %v1515 = vsel %vm182, %v1426, 0
      %v1518 = vsel %vm182, %v1427, 0
      %v1521 = vsel %vm182, %v1428, 0
      %v1524 = vsel %vm182, %v1429, 0
      %v1527 = vsel %vm182, %v1430, 0
      %v1530 = vsel %vm456, %v1432, 0
      %1532 = vmatprep.subr.mxu0 0.0
      %1533 = vmatpush1.msra.mxu0 %v1530
      %1534 = vmatprep.subr.mxu0 0.0
      %1535 = vmatpush1.msra.mxu0 0.0
      %1536 = vmatprep.subr.mxu0 0.0
      %1537 = vmatpush1.msra.mxu0 0.0
      %1538 = vmatprep.subr.mxu0 0.0
      %1539 = vmatpush1.msra.mxu0 0.0
      %1540 = vmatprep.subr.mxu0 0.0
      %1541 = vmatpush1.msra.mxu0 0.0
      %1542 = vmatprep.subr.mxu0 0.0
      %1543 = vmatpush1.msra.mxu0 0.0
      %1544 = vmatprep.subr.mxu0 0.0
      %1545 = vmatpush1.msra.mxu0 0.0
      %1546 = vmatprep.subr.mxu0 0.0
      %1547 = vmatpush1.msra.mxu0 0.0
      %1548 = vmatprep.subr.mxu0 0.0
      %1549 = vmatpush1.msra.mxu0 0.0
      %1550 = vmatprep.subr.mxu0 0.0
      %1551 = vmatpush1.msra.mxu0 0.0
      %1552 = vmatprep.subr.mxu0 0.0
      %1553 = vmatpush1.msra.mxu0 0.0
      %1554 = vmatprep.subr.mxu0 0.0
      %1555 = vmatpush1.msra.mxu0 0.0
      %1556 = vmatprep.subr.mxu0 0.0
      %1557 = vmatpush1.msra.mxu0 0.0
      %1558 = vmatprep.subr.mxu0 0.0
      %1559 = vmatpush1.msra.mxu0 0.0
      %1560 = vmatprep.subr.mxu0 0.0
      %1561 = vmatpush1.msra.mxu0 0.0
      %1562 = vmatprep.subr.mxu0 0.0
      %1563 = vmatpush1.msra.mxu0 0.0
      %1564 = vmatprep.subr.mxu0 0.0
      %1565 = vmatpush1.msra.mxu0 0.0
      %1566 = vmatprep.subr.mxu0 0.0
      %1567 = vmatpush1.msra.mxu0 0.0
      %1568 = vmatprep.subr.mxu0 0.0
      %1569 = vmatpush1.msra.mxu0 0.0
      %1570 = vmatprep.subr.mxu0 0.0
      %1571 = vmatpush1.msra.mxu0 0.0
      %1572 = vmatprep.subr.mxu0 0.0
      %1573 = vmatpush1.msra.mxu0 0.0
      %1574 = vmatprep.subr.mxu0 0.0
      %1575 = vmatpush1.msra.mxu0 0.0
      %1576 = vmatprep.subr.mxu0 0.0
      %1577 = vmatpush1.msra.mxu0 0.0
      %1578 = vmatprep.subr.mxu0 0.0
      %1579 = vmatpush1.msra.mxu0 0.0
      %1580 = vmatprep.subr.mxu0 0.0
      %1581 = vmatpush1.msra.mxu0 0.0
      %1582 = vmatprep.subr.mxu0 0.0
      %1583 = vmatpush1.msra.mxu0 0.0
      %1584 = vmatprep.subr.mxu0 0.0
      %1585 = vmatpush1.msra.mxu0 0.0
      %1586 = vmatprep.subr.mxu0 0.0
      %1587 = vmatpush1.msra.mxu0 0.0
      %1588 = vmatprep.subr.mxu0 0.0
      %1589 = vmatpush1.msra.mxu0 0.0
      %1590 = vmatprep.subr.mxu0 0.0
      %1591 = vmatpush1.msra.mxu0 0.0
      %1592 = vmatprep.subr.mxu0 0.0
      %1593 = vmatpush1.msra.mxu0 0.0
      %1594 = vmatprep.subr.mxu0 0.0
      %1595 = vmatpush1.msra.mxu0 0.0
      %1596 = vmatprep.mubr.f32.mxu0 0.0
      %1597 = vmatmul.mubr.f32.gmra.mrb[0].mxu0 %v1434
      %v1598 = vpop.f32.mrb[0].mxu0
      %v1599 = vadd.f32 0.0, %v1598
      %v1600 = vpop.f32.mrb[0].mxu0
      %1601 = vmatprep.mubr.f32.mxu0 0.0
      %1602 = vmatmul.mubr.f32.gmra.mrb[0].mxu0 %v1437
      %v1603 = vpop.f32.mrb[0].mxu0
      %v1604 = vadd.f32 0.0, %v1603
      %v1605 = vpop.f32.mrb[0].mxu0
      %1606 = vmatprep.mubr.f32.mxu0 0.0
      %1607 = vmatmul.mubr.f32.gmra.mrb[0].mxu0 %v1440
      %v1608 = vpop.f32.mrb[0].mxu0
      %v1609 = vadd.f32 0.0, %v1608
      %v1610 = vpop.f32.mrb[0].mxu0
      %1611 = vmatprep.mubr.f32.mxu0 0.0
      %1612 = vmatmul.mubr.f32.gmra.mrb[0].mxu0 %v1443
      %v1613 = vpop.f32.mrb[0].mxu0
      %v1614 = vadd.f32 0.0, %v1613
      %v1615 = vpop.f32.mrb[0].mxu0
      %1616 = vmatprep.mubr.f32.mxu0 0.0
      %1617 = vmatmul.mubr.f32.gmra.mrb[0].mxu0 %v1446
      %v1618 = vpop.f32.mrb[0].mxu0
      %v1619 = vadd.f32 0.0, %v1618
      %v1620 = vpop.f32.mrb[0].mxu0
      %1621 = vmatprep.mubr.f32.mxu0 0.0
      %1622 = vmatmul.mubr.f32.gmra.mrb[0].mxu0 %v1449
      %v1623 = vpop.f32.mrb[0].mxu0
      %v1624 = vadd.f32 0.0, %v1623
      %v1625 = vpop.f32.mrb[0].mxu0
      %1626 = vmatprep.mubr.f32.mxu0 0.0
      %1627 = vmatmul.mubr.f32.gmra.mrb[0].mxu0 %v1452
      %v1628 = vpop.f32.mrb[0].mxu0
      %v1629 = vadd.f32 0.0, %v1628
      %v1630 = vpop.f32.mrb[0].mxu0
      %1631 = vmatprep.mubr.f32.mxu0 0.0
      %1632 = vmatmul.mubr.f32.gmra.mrb[0].mxu0 %v1455
      %v1633 = vpop.f32.mrb[0].mxu0
      %v1634 = vadd.f32 0.0, %v1633
      %v1635 = vpop.f32.mrb[0].mxu0
      %1636 = vmatprep.mubr.f32.mxu0 0.0
      %1637 = vmatmul.mubr.f32.gmra.mrb[0].mxu0 %v1458
      %v1638 = vpop.f32.mrb[0].mxu0
      %v1639 = vadd.f32 0.0, %v1638
      %v1640 = vpop.f32.mrb[0].mxu0
      %1641 = vmatprep.mubr.f32.mxu0 0.0
      %1642 = vmatmul.mubr.f32.gmra.mrb[0].mxu0 %v1461
      %v1643 = vpop.f32.mrb[0].mxu0
      %v1644 = vadd.f32 0.0, %v1643
      %v1645 = vpop.f32.mrb[0].mxu0
      %1646 = vmatprep.mubr.f32.mxu0 0.0
      %1647 = vmatmul.mubr.f32.gmra.mrb[0].mxu0 %v1464
      %v1648 = vpop.f32.mrb[0].mxu0
      %v1649 = vadd.f32 0.0, %v1648
      %v1650 = vpop.f32.mrb[0].mxu0
      %1651 = vmatprep.mubr.f32.mxu0 0.0
      %1652 = vmatmul.mubr.f32.gmra.mrb[0].mxu0 %v1467
      %v1653 = vpop.f32.mrb[0].mxu0
      %v1654 = vadd.f32 0.0, %v1653
      %v1655 = vpop.f32.mrb[0].mxu0
      %1656 = vmatprep.mubr.f32.mxu0 0.0
      %1657 = vmatmul.mubr.f32.gmra.mrb[0].mxu0 %v1470
      %v1658 = vpop.f32.mrb[0].mxu0
      %v1659 = vadd.f32 0.0, %v1658
      %v1660 = vpop.f32.mrb[0].mxu0
      %1661 = vmatprep.mubr.f32.mxu0 0.0
      %1662 = vmatmul.mubr.f32.gmra.mrb[0].mxu0 %v1473
      %v1663 = vpop.f32.mrb[0].mxu0
      %v1664 = vadd.f32 0.0, %v1663
      %v1665 = vpop.f32.mrb[0].mxu0
      %1666 = vmatprep.mubr.f32.mxu0 0.0
      %1667 = vmatmul.mubr.f32.gmra.mrb[0].mxu0 %v1476
      %v1668 = vpop.f32.mrb[0].mxu0
      %v1669 = vadd.f32 0.0, %v1668
      %v1670 = vpop.f32.mrb[0].mxu0
      %1671 = vmatprep.mubr.f32.mxu0 0.0
      %1672 = vmatmul.mubr.f32.gmra.mrb[0].mxu0 %v1479
      %v1673 = vpop.f32.mrb[0].mxu0
      %v1674 = vadd.f32 0.0, %v1673
      %v1675 = vpop.f32.mrb[0].mxu0
      %1676 = vmatprep.mubr.f32.mxu0 0.0
      %1677 = vmatmul.mubr.f32.gmra.mrb[0].mxu0 %v1482
      %v1678 = vpop.f32.mrb[0].mxu0
      %v1679 = vadd.f32 0.0, %v1678
      %v1680 = vpop.f32.mrb[0].mxu0
      %1681 = vmatprep.mubr.f32.mxu0 0.0
      %1682 = vmatmul.mubr.f32.gmra.mrb[0].mxu0 %v1485
      %v1683 = vpop.f32.mrb[0].mxu0
      %v1684 = vadd.f32 0.0, %v1683
      %v1685 = vpop.f32.mrb[0].mxu0
      %1686 = vmatprep.mubr.f32.mxu0 0.0
      %1687 = vmatmul.mubr.f32.gmra.mrb[0].mxu0 %v1488
      %v1688 = vpop.f32.mrb[0].mxu0
      %v1689 = vadd.f32 0.0, %v1688
      %v1690 = vpop.f32.mrb[0].mxu0
      %1691 = vmatprep.mubr.f32.mxu0 0.0
      %1692 = vmatmul.mubr.f32.gmra.mrb[0].mxu0 %v1491
      %v1693 = vpop.f32.mrb[0].mxu0
      %v1694 = vadd.f32 0.0, %v1693
      %v1695 = vpop.f32.mrb[0].mxu0
      %1696 = vmatprep.mubr.f32.mxu0 0.0
      %1697 = vmatmul.mubr.f32.gmra.mrb[0].mxu0 %v1494
      %v1698 = vpop.f32.mrb[0].mxu0
      %v1699 = vadd.f32 0.0, %v1698
      %v1700 = vpop.f32.mrb[0].mxu0
      %1701 = vmatprep.mubr.f32.mxu0 0.0
      %1702 = vmatmul.mubr.f32.gmra.mrb[0].mxu0 %v1497
      %v1703 = vpop.f32.mrb[0].mxu0
      %v1704 = vadd.f32 0.0, %v1703
      %v1705 = vpop.f32.mrb[0].mxu0
      %1706 = vmatprep.mubr.f32.mxu0 0.0
      %1707 = vmatmul.mubr.f32.gmra.mrb[0].mxu0 %v1500
      %v1708 = vpop.f32.mrb[0].mxu0
      %v1709 = vadd.f32 0.0, %v1708
      %v1710 = vpop.f32.mrb[0].mxu0
      %1711 = vmatprep.mubr.f32.mxu0 0.0
      %1712 = vmatmul.mubr.f32.gmra.mrb[0].mxu0 %v1503
      %v1713 = vpop.f32.mrb[0].mxu0
      %v1714 = vadd.f32 0.0, %v1713
      %v1715 = vpop.f32.mrb[0].mxu0
      %1716 = vmatprep.mubr.f32.mxu0 0.0
      %1717 = vmatmul.mubr.f32.gmra.mrb[0].mxu0 %v1506
      %v1718 = vpop.f32.mrb[0].mxu0
      %v1719 = vadd.f32 0.0, %v1718
      %v1720 = vpop.f32.mrb[0].mxu0
      %1721 = vmatprep.mubr.f32.mxu0 0.0
      %1722 = vmatmul.mubr.f32.gmra.mrb[0].mxu0 %v1509
      %v1723 = vpop.f32.mrb[0].mxu0
      %v1724 = vadd.f32 0.0, %v1723
      %v1725 = vpop.f32.mrb[0].mxu0
      %1726 = vmatprep.mubr.f32.mxu0 0.0
      %1727 = vmatmul.mubr.f32.gmra.mrb[0].mxu0 %v1512
      %v1728 = vpop.f32.mrb[0].mxu0
      %v1729 = vadd.f32 0.0, %v1728
      %v1730 = vpop.f32.mrb[0].mxu0
      %1731 = vmatprep.mubr.f32.mxu0 0.0
      %1732 = vmatmul.mubr.f32.gmra.mrb[0].mxu0 %v1515
      %v1733 = vpop.f32.mrb[0].mxu0
      %v1734 = vadd.f32 0.0, %v1733
      %v1735 = vpop.f32.mrb[0].mxu0
      %1736 = vmatprep.mubr.f32.mxu0 0.0
      %1737 = vmatmul.mubr.f32.gmra.mrb[0].mxu0 %v1518
      %v1738 = vpop.f32.mrb[0].mxu0
      %v1739 = vadd.f32 0.0, %v1738
      %v1740 = vpop.f32.mrb[0].mxu0
      %1741 = vmatprep.mubr.f32.mxu0 0.0
      %1742 = vmatmul.mubr.f32.gmra.mrb[0].mxu0 %v1521
      %v1743 = vpop.f32.mrb[0].mxu0
      %v1744 = vadd.f32 0.0, %v1743
      %v1745 = vpop.f32.mrb[0].mxu0
      %1746 = vmatprep.mubr.f32.mxu0 0.0
      %1747 = vmatmul.mubr.f32.gmra.mrb[0].mxu0 %v1524
      %v1748 = vpop.f32.mrb[0].mxu0
      %v1749 = vadd.f32 0.0, %v1748
      %v1750 = vpop.f32.mrb[0].mxu0
      %1751 = vmatprep.mubr.f32.mxu0 0.0
      %1752 = vmatmul.mubr.f32.gmra.mrb[0].mxu0 %v1527
      %v1753 = vpop.f32.mrb[0].mxu0
      %v1754 = vadd.f32 0.0, %v1753
      %v1755 = vpop.f32.mrb[0].mxu0
      %1756 = vdwg.mxu0
      %v1757 = vadd.f32 %v1367, %v1599
      %v1758 = vadd.f32 %v1368, %v1604
      %v1759 = vadd.f32 %v1369, %v1609
      %v1760 = vadd.f32 %v1370, %v1614
      %v1761 = vadd.f32 %v1371, %v1619
      %v1762 = vadd.f32 %v1372, %v1624
      %v1763 = vadd.f32 %v1373, %v1629
      %v1764 = vadd.f32 %v1374, %v1634
      %v1765 = vadd.f32 %v1375, %v1639
      %v1766 = vadd.f32 %v1376, %v1644
      %v1767 = vadd.f32 %v1377, %v1649
      %v1768 = vadd.f32 %v1378, %v1654
      %v1769 = vadd.f32 %v1379, %v1659
      %v1770 = vadd.f32 %v1380, %v1664
      %v1771 = vadd.f32 %v1381, %v1669
      %v1772 = vadd.f32 %v1382, %v1674
      %v1773 = vadd.f32 %v1383, %v1679
      %v1774 = vadd.f32 %v1384, %v1684
      %v1775 = vadd.f32 %v1385, %v1689
      %v1776 = vadd.f32 %v1386, %v1694
      %v1777 = vadd.f32 %v1387, %v1699
      %v1778 = vadd.f32 %v1388, %v1704
      %v1779 = vadd.f32 %v1389, %v1709
      %v1780 = vadd.f32 %v1390, %v1714
      %v1781 = vadd.f32 %v1391, %v1719
      %v1782 = vadd.f32 %v1392, %v1724
      %v1783 = vadd.f32 %v1393, %v1729
      %v1784 = vadd.f32 %v1394, %v1734
      %v1785 = vadd.f32 %v1395, %v1739
      %v1786 = vadd.f32 %v1396, %v1744
      %v1787 = vadd.f32 %v1397, %v1749
      %v1788 = vadd.f32 %v1398, %v1754
      %v1789 = vld [vmem:[%s260 + $0x1] sm:$0xff]
      %v1790 = vld [vmem:[%s260 + $0x9] sm:$0xff]
      %v1791 = vld [vmem:[%s260 + $0x19] sm:$0xff]
      %v1792 = vld [vmem:[%s260 + $0x21] sm:$0xff]
      %v1793 = vld [vmem:[%s260 + $0x31] sm:$0xff]
      %v1794 = vld [vmem:[%s260 + $0x39] sm:$0xff]
      %v1795 = vld [vmem:[%s260 + $0x49] sm:$0xff]
      %v1796 = vld [vmem:[%s260 + $0x51] sm:$0xff]
      %v1797 = vld [vmem:[%s260 + $0x61] sm:$0xff]
      %v1798 = vld [vmem:[%s260 + $0x69] sm:$0xff]
      %v1799 = vld [vmem:[%s260 + $0x79] sm:$0xff]
      %v1800 = vld [vmem:[%s260 + $0x81] sm:$0xff]
      %v1801 = vld [vmem:[%s260 + $0x91] sm:$0xff]
      %v1802 = vld [vmem:[%s260 + $0x99] sm:$0xff]
      %v1803 = vld [vmem:[%s260 + $0xa9] sm:$0xff]
      %v1804 = vld [vmem:[%s260 + $0xb1] sm:$0xff]
      %v1805 = vld [vmem:[%s260 + $0xc1] sm:$0xff]
      %v1806 = vld [vmem:[%s260 + $0xc9] sm:$0xff]
      %v1807 = vld [vmem:[%s260 + $0xd9] sm:$0xff]
      %v1808 = vld [vmem:[%s260 + $0xe1] sm:$0xff]
      %v1809 = vld [vmem:[%s260 + $0xf1] sm:$0xff]
      %v1810 = vld [vmem:[%s260 + $0xf9] sm:$0xff]
      %v1811 = vld [vmem:[%s260 + $0x109] sm:$0xff]
      %v1812 = vld [vmem:[%s260 + $0x111] sm:$0xff]
      %v1813 = vld [vmem:[%s260 + $0x121] sm:$0xff]
      %v1814 = vld [vmem:[%s260 + $0x129] sm:$0xff]
      %v1815 = vld [vmem:[%s260 + $0x139] sm:$0xff]
      %v1816 = vld [vmem:[%s260 + $0x141] sm:$0xff]
      %v1817 = vld [vmem:[%s260 + $0x151] sm:$0xff]
      %v1818 = vld [vmem:[%s260 + $0x159] sm:$0xff]
      %v1819 = vld [vmem:[%s260 + $0x169] sm:$0xff]
      %v1820 = vld [vmem:[%s260 + $0x171] sm:$0xff]
      %s1821 = scalar_lea.vmem %s1, 16
      %v1822 = vld [vmem:[%s1821] sm:$0xf]
      %v1824 = vsel %vm182, %v1789, 0
      %v1827 = vsel %vm182, %v1790, 0
      %v1830 = vsel %vm182, %v1791, 0
      %v1833 = vsel %vm182, %v1792, 0
      %v1836 = vsel %vm182, %v1793, 0
      %v1839 = vsel %vm182, %v1794, 0
      %v1842 = vsel %vm182, %v1795, 0
      %v1845 = vsel %vm182, %v1796, 0
      %v1848 = vsel %vm182, %v1797, 0
      %v1851 = vsel %vm182, %v1798, 0
      %v1854 = vsel %vm182, %v1799, 0
      %v1857 = vsel %vm182, %v1800, 0
      %v1860 = vsel %vm182, %v1801, 0
      %v1863 = vsel %vm182, %v1802, 0
      %v1866 = vsel %vm182, %v1803, 0
      %v1869 = vsel %vm182, %v1804, 0
      %v1872 = vsel %vm182, %v1805, 0
      %v1875 = vsel %vm182, %v1806, 0
      %v1878 = vsel %vm182, %v1807, 0
      %v1881 = vsel %vm182, %v1808, 0
      %v1884 = vsel %vm182, %v1809, 0
      %v1887 = vsel %vm182, %v1810, 0
      %v1890 = vsel %vm182, %v1811, 0
      %v1893 = vsel %vm182, %v1812, 0
      %v1896 = vsel %vm182, %v1813, 0
      %v1899 = vsel %vm182, %v1814, 0
      %v1902 = vsel %vm182, %v1815, 0
      %v1905 = vsel %vm182, %v1816, 0
      %v1908 = vsel %vm182, %v1817, 0
      %v1911 = vsel %vm182, %v1818, 0
      %v1914 = vsel %vm182, %v1819, 0
      %v1917 = vsel %vm182, %v1820, 0
      %v1920 = vsel %vm456, %v1822, 0
      %1922 = vmatprep.subr.mxu0 0.0
      %1923 = vmatpush1.msra.mxu0 %v1920
      %1924 = vmatprep.subr.mxu0 0.0
      %1925 = vmatpush1.msra.mxu0 0.0
      %1926 = vmatprep.subr.mxu0 0.0
      %1927 = vmatpush1.msra.mxu0 0.0
      %1928 = vmatprep.subr.mxu0 0.0
      %1929 = vmatpush1.msra.mxu0 0.0
      %1930 = vmatprep.subr.mxu0 0.0
      %1931 = vmatpush1.msra.mxu0 0.0
      %1932 = vmatprep.subr.mxu0 0.0
      %1933 = vmatpush1.msra.mxu0 0.0
      %1934 = vmatprep.subr.mxu0 0.0
      %1935 = vmatpush1.msra.mxu0 0.0
      %1936 = vmatprep.subr.mxu0 0.0
      %1937 = vmatpush1.msra.mxu0 0.0
      %1938 = vmatprep.subr.mxu0 0.0
      %1939 = vmatpush1.msra.mxu0 0.0
      %1940 = vmatprep.subr.mxu0 0.0
      %1941 = vmatpush1.msra.mxu0 0.0
      %1942 = vmatprep.subr.mxu0 0.0
      %1943 = vmatpush1.msra.mxu0 0.0
      %1944 = vmatprep.subr.mxu0 0.0
      %1945 = vmatpush1.msra.mxu0 0.0
      %1946 = vmatprep.subr.mxu0 0.0
      %1947 = vmatpush1.msra.mxu0 0.0
      %1948 = vmatprep.subr.mxu0 0.0
      %1949 = vmatpush1.msra.mxu0 0.0
      %1950 = vmatprep.subr.mxu0 0.0
      %1951 = vmatpush1.msra.mxu0 0.0
      %1952 = vmatprep.subr.mxu0 0.0
      %1953 = vmatpush1.msra.mxu0 0.0
      %1954 = vmatprep.subr.mxu0 0.0
      %1955 = vmatpush1.msra.mxu0 0.0
      %1956 = vmatprep.subr.mxu0 0.0
      %1957 = vmatpush1.msra.mxu0 0.0
      %1958 = vmatprep.subr.mxu0 0.0
      %1959 = vmatpush1.msra.mxu0 0.0
      %1960 = vmatprep.subr.mxu0 0.0
      %1961 = vmatpush1.msra.mxu0 0.0
      %1962 = vmatprep.subr.mxu0 0.0
      %1963 = vmatpush1.msra.mxu0 0.0
      %1964 = vmatprep.subr.mxu0 0.0
      %1965 = vmatpush1.msra.mxu0 0.0
      %1966 = vmatprep.subr.mxu0 0.0
      %1967 = vmatpush1.msra.mxu0 0.0
      %1968 = vmatprep.subr.mxu0 0.0
      %1969 = vmatpush1.msra.mxu0 0.0
      %1970 = vmatprep.subr.mxu0 0.0
      %1971 = vmatpush1.msra.mxu0 0.0
      %1972 = vmatprep.subr.mxu0 0.0
      %1973 = vmatpush1.msra.mxu0 0.0
      %1974 = vmatprep.subr.mxu0 0.0
      %1975 = vmatpush1.msra.mxu0 0.0
      %1976 = vmatprep.subr.mxu0 0.0
      %1977 = vmatpush1.msra.mxu0 0.0
      %1978 = vmatprep.subr.mxu0 0.0
      %1979 = vmatpush1.msra.mxu0 0.0
      %1980 = vmatprep.subr.mxu0 0.0
      %1981 = vmatpush1.msra.mxu0 0.0
      %1982 = vmatprep.subr.mxu0 0.0
      %1983 = vmatpush1.msra.mxu0 0.0
      %1984 = vmatprep.subr.mxu0 0.0
      %1985 = vmatpush1.msra.mxu0 0.0
      %1986 = vmatprep.mubr.f32.mxu0 0.0
      %1987 = vmatmul.mubr.f32.gmra.mrb[0].mxu0 %v1824
      %v1988 = vpop.f32.mrb[0].mxu0
      %v1989 = vadd.f32 0.0, %v1988
      %v1990 = vpop.f32.mrb[0].mxu0
      %1991 = vmatprep.mubr.f32.mxu0 0.0
      %1992 = vmatmul.mubr.f32.gmra.mrb[0].mxu0 %v1827
      %v1993 = vpop.f32.mrb[0].mxu0
      %v1994 = vadd.f32 0.0, %v1993
      %v1995 = vpop.f32.mrb[0].mxu0
      %1996 = vmatprep.mubr.f32.mxu0 0.0
      %1997 = vmatmul.mubr.f32.gmra.mrb[0].mxu0 %v1830
      %v1998 = vpop.f32.mrb[0].mxu0
      %v1999 = vadd.f32 0.0, %v1998
      %v2000 = vpop.f32.mrb[0].mxu0
      %2001 = vmatprep.mubr.f32.mxu0 0.0
      %2002 = vmatmul.mubr.f32.gmra.mrb[0].mxu0 %v1833
      %v2003 = vpop.f32.mrb[0].mxu0
      %v2004 = vadd.f32 0.0, %v2003
      %v2005 = vpop.f32.mrb[0].mxu0
      %2006 = vmatprep.mubr.f32.mxu0 0.0
      %2007 = vmatmul.mubr.f32.gmra.mrb[0].mxu0 %v1836
      %v2008 = vpop.f32.mrb[0].mxu0
      %v2009 = vadd.f32 0.0, %v2008
      %v2010 = vpop.f32.mrb[0].mxu0
      %2011 = vmatprep.mubr.f32.mxu0 0.0
      %2012 = vmatmul.mubr.f32.gmra.mrb[0].mxu0 %v1839
      %v2013 = vpop.f32.mrb[0].mxu0
      %v2014 = vadd.f32 0.0, %v2013
      %v2015 = vpop.f32.mrb[0].mxu0
      %2016 = vmatprep.mubr.f32.mxu0 0.0
      %2017 = vmatmul.mubr.f32.gmra.mrb[0].mxu0 %v1842
      %v2018 = vpop.f32.mrb[0].mxu0
      %v2019 = vadd.f32 0.0, %v2018
      %v2020 = vpop.f32.mrb[0].mxu0
      %2021 = vmatprep.mubr.f32.mxu0 0.0
      %2022 = vmatmul.mubr.f32.gmra.mrb[0].mxu0 %v1845
      %v2023 = vpop.f32.mrb[0].mxu0
      %v2024 = vadd.f32 0.0, %v2023
      %v2025 = vpop.f32.mrb[0].mxu0
      %2026 = vmatprep.mubr.f32.mxu0 0.0
      %2027 = vmatmul.mubr.f32.gmra.mrb[0].mxu0 %v1848
      %v2028 = vpop.f32.mrb[0].mxu0
      %v2029 = vadd.f32 0.0, %v2028
      %v2030 = vpop.f32.mrb[0].mxu0
      %2031 = vmatprep.mubr.f32.mxu0 0.0
      %2032 = vmatmul.mubr.f32.gmra.mrb[0].mxu0 %v1851
      %v2033 = vpop.f32.mrb[0].mxu0
      %v2034 = vadd.f32 0.0, %v2033
      %v2035 = vpop.f32.mrb[0].mxu0
      %2036 = vmatprep.mubr.f32.mxu0 0.0
      %2037 = vmatmul.mubr.f32.gmra.mrb[0].mxu0 %v1854
      %v2038 = vpop.f32.mrb[0].mxu0
      %v2039 = vadd.f32 0.0, %v2038
      %v2040 = vpop.f32.mrb[0].mxu0
      %2041 = vmatprep.mubr.f32.mxu0 0.0
      %2042 = vmatmul.mubr.f32.gmra.mrb[0].mxu0 %v1857
      %v2043 = vpop.f32.mrb[0].mxu0
      %v2044 = vadd.f32 0.0, %v2043
      %v2045 = vpop.f32.mrb[0].mxu0
      %2046 = vmatprep.mubr.f32.mxu0 0.0
      %2047 = vmatmul.mubr.f32.gmra.mrb[0].mxu0 %v1860
      %v2048 = vpop.f32.mrb[0].mxu0
      %v2049 = vadd.f32 0.0, %v2048
      %v2050 = vpop.f32.mrb[0].mxu0
      %2051 = vmatprep.mubr.f32.mxu0 0.0
      %2052 = vmatmul.mubr.f32.gmra.mrb[0].mxu0 %v1863
      %v2053 = vpop.f32.mrb[0].mxu0
      %v2054 = vadd.f32 0.0, %v2053
      %v2055 = vpop.f32.mrb[0].mxu0
      %2056 = vmatprep.mubr.f32.mxu0 0.0
      %2057 = vmatmul.mubr.f32.gmra.mrb[0].mxu0 %v1866
      %v2058 = vpop.f32.mrb[0].mxu0
      %v2059 = vadd.f32 0.0, %v2058
      %v2060 = vpop.f32.mrb[0].mxu0
      %2061 = vmatprep.mubr.f32.mxu0 0.0
      %2062 = vmatmul.mubr.f32.gmra.mrb[0].mxu0 %v1869
      %v2063 = vpop.f32.mrb[0].mxu0
      %v2064 = vadd.f32 0.0, %v2063
      %v2065 = vpop.f32.mrb[0].mxu0
      %2066 = vmatprep.mubr.f32.mxu0 0.0
      %2067 = vmatmul.mubr.f32.gmra.mrb[0].mxu0 %v1872
      %v2068 = vpop.f32.mrb[0].mxu0
      %v2069 = vadd.f32 0.0, %v2068
      %v2070 = vpop.f32.mrb[0].mxu0
      %2071 = vmatprep.mubr.f32.mxu0 0.0
      %2072 = vmatmul.mubr.f32.gmra.mrb[0].mxu0 %v1875
      %v2073 = vpop.f32.mrb[0].mxu0
      %v2074 = vadd.f32 0.0, %v2073
      %v2075 = vpop.f32.mrb[0].mxu0
      %2076 = vmatprep.mubr.f32.mxu0 0.0
      %2077 = vmatmul.mubr.f32.gmra.mrb[0].mxu0 %v1878
      %v2078 = vpop.f32.mrb[0].mxu0
      %v2079 = vadd.f32 0.0, %v2078
      %v2080 = vpop.f32.mrb[0].mxu0
      %2081 = vmatprep.mubr.f32.mxu0 0.0
      %2082 = vmatmul.mubr.f32.gmra.mrb[0].mxu0 %v1881
      %v2083 = vpop.f32.mrb[0].mxu0
      %v2084 = vadd.f32 0.0, %v2083
      %v2085 = vpop.f32.mrb[0].mxu0
      %2086 = vmatprep.mubr.f32.mxu0 0.0
      %2087 = vmatmul.mubr.f32.gmra.mrb[0].mxu0 %v1884
      %v2088 = vpop.f32.mrb[0].mxu0
      %v2089 = vadd.f32 0.0, %v2088
      %v2090 = vpop.f32.mrb[0].mxu0
      %2091 = vmatprep.mubr.f32.mxu0 0.0
      %2092 = vmatmul.mubr.f32.gmra.mrb[0].mxu0 %v1887
      %v2093 = vpop.f32.mrb[0].mxu0
      %v2094 = vadd.f32 0.0, %v2093
      %v2095 = vpop.f32.mrb[0].mxu0
      %2096 = vmatprep.mubr.f32.mxu0 0.0
      %2097 = vmatmul.mubr.f32.gmra.mrb[0].mxu0 %v1890
      %v2098 = vpop.f32.mrb[0].mxu0
      %v2099 = vadd.f32 0.0, %v2098
      %v2100 = vpop.f32.mrb[0].mxu0
      %2101 = vmatprep.mubr.f32.mxu0 0.0
      %2102 = vmatmul.mubr.f32.gmra.mrb[0].mxu0 %v1893
      %v2103 = vpop.f32.mrb[0].mxu0
      %v2104 = vadd.f32 0.0, %v2103
      %v2105 = vpop.f32.mrb[0].mxu0
      %2106 = vmatprep.mubr.f32.mxu0 0.0
      %2107 = vmatmul.mubr.f32.gmra.mrb[0].mxu0 %v1896
      %v2108 = vpop.f32.mrb[0].mxu0
      %v2109 = vadd.f32 0.0, %v2108
      %v2110 = vpop.f32.mrb[0].mxu0
      %2111 = vmatprep.mubr.f32.mxu0 0.0
      %2112 = vmatmul.mubr.f32.gmra.mrb[0].mxu0 %v1899
      %v2113 = vpop.f32.mrb[0].mxu0
      %v2114 = vadd.f32 0.0, %v2113
      %v2115 = vpop.f32.mrb[0].mxu0
      %2116 = vmatprep.mubr.f32.mxu0 0.0
      %2117 = vmatmul.mubr.f32.gmra.mrb[0].mxu0 %v1902
      %v2118 = vpop.f32.mrb[0].mxu0
      %v2119 = vadd.f32 0.0, %v2118
      %v2120 = vpop.f32.mrb[0].mxu0
      %2121 = vmatprep.mubr.f32.mxu0 0.0
      %2122 = vmatmul.mubr.f32.gmra.mrb[0].mxu0 %v1905
      %v2123 = vpop.f32.mrb[0].mxu0
      %v2124 = vadd.f32 0.0, %v2123
      %v2125 = vpop.f32.mrb[0].mxu0
      %2126 = vmatprep.mubr.f32.mxu0 0.0
      %2127 = vmatmul.mubr.f32.gmra.mrb[0].mxu0 %v1908
      %v2128 = vpop.f32.mrb[0].mxu0
      %v2129 = vadd.f32 0.0, %v2128
      %v2130 = vpop.f32.mrb[0].mxu0
      %2131 = vmatprep.mubr.f32.mxu0 0.0
      %2132 = vmatmul.mubr.f32.gmra.mrb[0].mxu0 %v1911
      %v2133 = vpop.f32.mrb[0].mxu0
      %v2134 = vadd.f32 0.0, %v2133
      %v2135 = vpop.f32.mrb[0].mxu0
      %2136 = vmatprep.mubr.f32.mxu0 0.0
      %2137 = vmatmul.mubr.f32.gmra.mrb[0].mxu0 %v1914
      %v2138 = vpop.f32.mrb[0].mxu0
      %v2139 = vadd.f32 0.0, %v2138
      %v2140 = vpop.f32.mrb[0].mxu0
      %2141 = vmatprep.mubr.f32.mxu0 0.0
      %2142 = vmatmul.mubr.f32.gmra.mrb[0].mxu0 %v1917
      %v2143 = vpop.f32.mrb[0].mxu0
      %v2144 = vadd.f32 0.0, %v2143
      %v2145 = vpop.f32.mrb[0].mxu0
      %2146 = vdwg.mxu0
      %v2147 = vadd.f32 %v1757, %v1989
      %v2148 = vadd.f32 %v1758, %v1994
      %v2149 = vadd.f32 %v1759, %v1999
      %v2150 = vadd.f32 %v1760, %v2004
      %v2151 = vadd.f32 %v1761, %v2009
      %v2152 = vadd.f32 %v1762, %v2014
      %v2153 = vadd.f32 %v1763, %v2019
      %v2154 = vadd.f32 %v1764, %v2024
      %v2155 = vadd.f32 %v1765, %v2029
      %v2156 = vadd.f32 %v1766, %v2034
      %v2157 = vadd.f32 %v1767, %v2039
      %v2158 = vadd.f32 %v1768, %v2044
      %v2159 = vadd.f32 %v1769, %v2049
      %v2160 = vadd.f32 %v1770, %v2054
      %v2161 = vadd.f32 %v1771, %v2059
      %v2162 = vadd.f32 %v1772, %v2064
      %v2163 = vadd.f32 %v1773, %v2069
      %v2164 = vadd.f32 %v1774, %v2074
      %v2165 = vadd.f32 %v1775, %v2079
      %v2166 = vadd.f32 %v1776, %v2084
      %v2167 = vadd.f32 %v1777, %v2089
      %v2168 = vadd.f32 %v1778, %v2094
      %v2169 = vadd.f32 %v1779, %v2099
      %v2170 = vadd.f32 %v1780, %v2104
      %v2171 = vadd.f32 %v1781, %v2109
      %v2172 = vadd.f32 %v1782, %v2114
      %v2173 = vadd.f32 %v1783, %v2119
      %v2174 = vadd.f32 %v1784, %v2124
      %v2175 = vadd.f32 %v1785, %v2129
      %v2176 = vadd.f32 %v1786, %v2134
      %v2177 = vadd.f32 %v1787, %v2139
      %v2178 = vadd.f32 %v1788, %v2144
      %v2179 = vld [vmem:[%s260 + $0x2] sm:$0xff]
      %v2180 = vld [vmem:[%s260 + $0xa] sm:$0xff]
      %v2181 = vld [vmem:[%s260 + $0x1a] sm:$0xff]
      %v2182 = vld [vmem:[%s260 + $0x22] sm:$0xff]
      %v2183 = vld [vmem:[%s260 + $0x32] sm:$0xff]
      %v2184 = vld [vmem:[%s260 + $0x3a] sm:$0xff]
      %v2185 = vld [vmem:[%s260 + $0x4a] sm:$0xff]
      %v2186 = vld [vmem:[%s260 + $0x52] sm:$0xff]
      %v2187 = vld [vmem:[%s260 + $0x62] sm:$0xff]
      %v2188 = vld [vmem:[%s260 + $0x6a] sm:$0xff]
      %v2189 = vld [vmem:[%s260 + $0x7a] sm:$0xff]
      %v2190 = vld [vmem:[%s260 + $0x82] sm:$0xff]
      %v2191 = vld [vmem:[%s260 + $0x92] sm:$0xff]
      %v2192 = vld [vmem:[%s260 + $0x9a] sm:$0xff]
      %v2193 = vld [vmem:[%s260 + $0xaa] sm:$0xff]
      %v2194 = vld [vmem:[%s260 + $0xb2] sm:$0xff]
      %v2195 = vld [vmem:[%s260 + $0xc2] sm:$0xff]
      %v2196 = vld [vmem:[%s260 + $0xca] sm:$0xff]
      %v2197 = vld [vmem:[%s260 + $0xda] sm:$0xff]
      %v2198 = vld [vmem:[%s260 + $0xe2] sm:$0xff]
      %v2199 = vld [vmem:[%s260 + $0xf2] sm:$0xff]
      %v2200 = vld [vmem:[%s260 + $0xfa] sm:$0xff]
      %v2201 = vld [vmem:[%s260 + $0x10a] sm:$0xff]
      %v2202 = vld [vmem:[%s260 + $0x112] sm:$0xff]
      %v2203 = vld [vmem:[%s260 + $0x122] sm:$0xff]
      %v2204 = vld [vmem:[%s260 + $0x12a] sm:$0xff]
      %v2205 = vld [vmem:[%s260 + $0x13a] sm:$0xff]
      %v2206 = vld [vmem:[%s260 + $0x142] sm:$0xff]
      %v2207 = vld [vmem:[%s260 + $0x152] sm:$0xff]
      %v2208 = vld [vmem:[%s260 + $0x15a] sm:$0xff]
      %v2209 = vld [vmem:[%s260 + $0x16a] sm:$0xff]
      %v2210 = vld [vmem:[%s260 + $0x172] sm:$0xff]
      %s2211 = scalar_lea.vmem %s1, 20
      %v2212 = vld [vmem:[%s2211] sm:$0xf]
      %v2214 = vsel %vm182, %v2179, 0
      %v2217 = vsel %vm182, %v2180, 0
      %v2220 = vsel %vm182, %v2181, 0
      %v2223 = vsel %vm182, %v2182, 0
      %v2226 = vsel %vm182, %v2183, 0
      %v2229 = vsel %vm182, %v2184, 0
      %v2232 = vsel %vm182, %v2185, 0
      %v2235 = vsel %vm182, %v2186, 0
      %v2238 = vsel %vm182, %v2187, 0
      %v2241 = vsel %vm182, %v2188, 0
      %v2244 = vsel %vm182, %v2189, 0
      %v2247 = vsel %vm182, %v2190, 0
      %v2250 = vsel %vm182, %v2191, 0
      %v2253 = vsel %vm182, %v2192, 0
      %v2256 = vsel %vm182, %v2193, 0
      %v2259 = vsel %vm182, %v2194, 0
      %v2262 = vsel %vm182, %v2195, 0
      %v2265 = vsel %vm182, %v2196, 0
      %v2268 = vsel %vm182, %v2197, 0
      %v2271 = vsel %vm182, %v2198, 0
      %v2274 = vsel %vm182, %v2199, 0
      %v2277 = vsel %vm182, %v2200, 0
      %v2280 = vsel %vm182, %v2201, 0
      %v2283 = vsel %vm182, %v2202, 0
      %v2286 = vsel %vm182, %v2203, 0
      %v2289 = vsel %vm182, %v2204, 0
      %v2292 = vsel %vm182, %v2205, 0
      %v2295 = vsel %vm182, %v2206, 0
      %v2298 = vsel %vm182, %v2207, 0
      %v2301 = vsel %vm182, %v2208, 0
      %v2304 = vsel %vm182, %v2209, 0
      %v2307 = vsel %vm182, %v2210, 0
      %v2310 = vsel %vm456, %v2212, 0
      %2312 = vmatprep.subr.mxu0 0.0
      %2313 = vmatpush1.msra.mxu0 %v2310
      %2314 = vmatprep.subr.mxu0 0.0
      %2315 = vmatpush1.msra.mxu0 0.0
      %2316 = vmatprep.subr.mxu0 0.0
      %2317 = vmatpush1.msra.mxu0 0.0
      %2318 = vmatprep.subr.mxu0 0.0
      %2319 = vmatpush1.msra.mxu0 0.0
      %2320 = vmatprep.subr.mxu0 0.0
      %2321 = vmatpush1.msra.mxu0 0.0
      %2322 = vmatprep.subr.mxu0 0.0
      %2323 = vmatpush1.msra.mxu0 0.0
      %2324 = vmatprep.subr.mxu0 0.0
      %2325 = vmatpush1.msra.mxu0 0.0
      %2326 = vmatprep.subr.mxu0 0.0
      %2327 = vmatpush1.msra.mxu0 0.0
      %2328 = vmatprep.subr.mxu0 0.0
      %2329 = vmatpush1.msra.mxu0 0.0
      %2330 = vmatprep.subr.mxu0 0.0
      %2331 = vmatpush1.msra.mxu0 0.0
      %2332 = vmatprep.subr.mxu0 0.0
      %2333 = vmatpush1.msra.mxu0 0.0
      %2334 = vmatprep.subr.mxu0 0.0
      %2335 = vmatpush1.msra.mxu0 0.0
      %2336 = vmatprep.subr.mxu0 0.0
      %2337 = vmatpush1.msra.mxu0 0.0
      %2338 = vmatprep.subr.mxu0 0.0
      %2339 = vmatpush1.msra.mxu0 0.0
      %2340 = vmatprep.subr.mxu0 0.0
      %2341 = vmatpush1.msra.mxu0 0.0
      %2342 = vmatprep.subr.mxu0 0.0
      %2343 = vmatpush1.msra.mxu0 0.0
      %2344 = vmatprep.subr.mxu0 0.0
      %2345 = vmatpush1.msra.mxu0 0.0
      %2346 = vmatprep.subr.mxu0 0.0
      %2347 = vmatpush1.msra.mxu0 0.0
      %2348 = vmatprep.subr.mxu0 0.0
      %2349 = vmatpush1.msra.mxu0 0.0
      %2350 = vmatprep.subr.mxu0 0.0
      %2351 = vmatpush1.msra.mxu0 0.0
      %2352 = vmatprep.subr.mxu0 0.0
      %2353 = vmatpush1.msra.mxu0 0.0
      %2354 = vmatprep.subr.mxu0 0.0
      %2355 = vmatpush1.msra.mxu0 0.0
      %2356 = vmatprep.subr.mxu0 0.0
      %2357 = vmatpush1.msra.mxu0 0.0
      %2358 = vmatprep.subr.mxu0 0.0
      %2359 = vmatpush1.msra.mxu0 0.0
      %2360 = vmatprep.subr.mxu0 0.0
      %2361 = vmatpush1.msra.mxu0 0.0
      %2362 = vmatprep.subr.mxu0 0.0
      %2363 = vmatpush1.msra.mxu0 0.0
      %2364 = vmatprep.subr.mxu0 0.0
      %2365 = vmatpush1.msra.mxu0 0.0
      %2366 = vmatprep.subr.mxu0 0.0
      %2367 = vmatpush1.msra.mxu0 0.0
      %2368 = vmatprep.subr.mxu0 0.0
      %2369 = vmatpush1.msra.mxu0 0.0
      %2370 = vmatprep.subr.mxu0 0.0
      %2371 = vmatpush1.msra.mxu0 0.0
      %2372 = vmatprep.subr.mxu0 0.0
      %2373 = vmatpush1.msra.mxu0 0.0
      %2374 = vmatprep.subr.mxu0 0.0
      %2375 = vmatpush1.msra.mxu0 0.0
      %2376 = vmatprep.mubr.f32.mxu0 0.0
      %2377 = vmatmul.mubr.f32.gmra.mrb[0].mxu0 %v2214
      %v2378 = vpop.f32.mrb[0].mxu0
      %v2379 = vadd.f32 0.0, %v2378
      %v2380 = vpop.f32.mrb[0].mxu0
      %2381 = vmatprep.mubr.f32.mxu0 0.0
      %2382 = vmatmul.mubr.f32.gmra.mrb[0].mxu0 %v2217
      %v2383 = vpop.f32.mrb[0].mxu0
      %v2384 = vadd.f32 0.0, %v2383
      %v2385 = vpop.f32.mrb[0].mxu0
      %2386 = vmatprep.mubr.f32.mxu0 0.0
      %2387 = vmatmul.mubr.f32.gmra.mrb[0].mxu0 %v2220
      %v2388 = vpop.f32.mrb[0].mxu0
      %v2389 = vadd.f32 0.0, %v2388
      %v2390 = vpop.f32.mrb[0].mxu0
      %2391 = vmatprep.mubr.f32.mxu0 0.0
      %2392 = vmatmul.mubr.f32.gmra.mrb[0].mxu0 %v2223
      %v2393 = vpop.f32.mrb[0].mxu0
      %v2394 = vadd.f32 0.0, %v2393
      %v2395 = vpop.f32.mrb[0].mxu0
      %2396 = vmatprep.mubr.f32.mxu0 0.0
      %2397 = vmatmul.mubr.f32.gmra.mrb[0].mxu0 %v2226
      %v2398 = vpop.f32.mrb[0].mxu0
      %v2399 = vadd.f32 0.0, %v2398
      %v2400 = vpop.f32.mrb[0].mxu0
      %2401 = vmatprep.mubr.f32.mxu0 0.0
      %2402 = vmatmul.mubr.f32.gmra.mrb[0].mxu0 %v2229
      %v2403 = vpop.f32.mrb[0].mxu0
      %v2404 = vadd.f32 0.0, %v2403
      %v2405 = vpop.f32.mrb[0].mxu0
      %2406 = vmatprep.mubr.f32.mxu0 0.0
      %2407 = vmatmul.mubr.f32.gmra.mrb[0].mxu0 %v2232
      %v2408 = vpop.f32.mrb[0].mxu0
      %v2409 = vadd.f32 0.0, %v2408
      %v2410 = vpop.f32.mrb[0].mxu0
      %2411 = vmatprep.mubr.f32.mxu0 0.0
      %2412 = vmatmul.mubr.f32.gmra.mrb[0].mxu0 %v2235
      %v2413 = vpop.f32.mrb[0].mxu0
      %v2414 = vadd.f32 0.0, %v2413
      %v2415 = vpop.f32.mrb[0].mxu0
      %2416 = vmatprep.mubr.f32.mxu0 0.0
      %2417 = vmatmul.mubr.f32.gmra.mrb[0].mxu0 %v2238
      %v2418 = vpop.f32.mrb[0].mxu0
      %v2419 = vadd.f32 0.0, %v2418
      %v2420 = vpop.f32.mrb[0].mxu0
      %2421 = vmatprep.mubr.f32.mxu0 0.0
      %2422 = vmatmul.mubr.f32.gmra.mrb[0].mxu0 %v2241
      %v2423 = vpop.f32.mrb[0].mxu0
      %v2424 = vadd.f32 0.0, %v2423
      %v2425 = vpop.f32.mrb[0].mxu0
      %2426 = vmatprep.mubr.f32.mxu0 0.0
      %2427 = vmatmul.mubr.f32.gmra.mrb[0].mxu0 %v2244
      %v2428 = vpop.f32.mrb[0].mxu0
      %v2429 = vadd.f32 0.0, %v2428
      %v2430 = vpop.f32.mrb[0].mxu0
      %2431 = vmatprep.mubr.f32.mxu0 0.0
      %2432 = vmatmul.mubr.f32.gmra.mrb[0].mxu0 %v2247
      %v2433 = vpop.f32.mrb[0].mxu0
      %v2434 = vadd.f32 0.0, %v2433
      %v2435 = vpop.f32.mrb[0].mxu0
      %2436 = vmatprep.mubr.f32.mxu0 0.0
      %2437 = vmatmul.mubr.f32.gmra.mrb[0].mxu0 %v2250
      %v2438 = vpop.f32.mrb[0].mxu0
      %v2439 = vadd.f32 0.0, %v2438
      %v2440 = vpop.f32.mrb[0].mxu0
      %2441 = vmatprep.mubr.f32.mxu0 0.0
      %2442 = vmatmul.mubr.f32.gmra.mrb[0].mxu0 %v2253
      %v2443 = vpop.f32.mrb[0].mxu0
      %v2444 = vadd.f32 0.0, %v2443
      %v2445 = vpop.f32.mrb[0].mxu0
      %2446 = vmatprep.mubr.f32.mxu0 0.0
      %2447 = vmatmul.mubr.f32.gmra.mrb[0].mxu0 %v2256
      %v2448 = vpop.f32.mrb[0].mxu0
      %v2449 = vadd.f32 0.0, %v2448
      %v2450 = vpop.f32.mrb[0].mxu0
      %2451 = vmatprep.mubr.f32.mxu0 0.0
      %2452 = vmatmul.mubr.f32.gmra.mrb[0].mxu0 %v2259
      %v2453 = vpop.f32.mrb[0].mxu0
      %v2454 = vadd.f32 0.0, %v2453
      %v2455 = vpop.f32.mrb[0].mxu0
      %2456 = vmatprep.mubr.f32.mxu0 0.0
      %2457 = vmatmul.mubr.f32.gmra.mrb[0].mxu0 %v2262
      %v2458 = vpop.f32.mrb[0].mxu0
      %v2459 = vadd.f32 0.0, %v2458
      %v2460 = vpop.f32.mrb[0].mxu0
      %2461 = vmatprep.mubr.f32.mxu0 0.0
      %2462 = vmatmul.mubr.f32.gmra.mrb[0].mxu0 %v2265
      %v2463 = vpop.f32.mrb[0].mxu0
      %v2464 = vadd.f32 0.0, %v2463
      %v2465 = vpop.f32.mrb[0].mxu0
      %2466 = vmatprep.mubr.f32.mxu0 0.0
      %2467 = vmatmul.mubr.f32.gmra.mrb[0].mxu0 %v2268
      %v2468 = vpop.f32.mrb[0].mxu0
      %v2469 = vadd.f32 0.0, %v2468
      %v2470 = vpop.f32.mrb[0].mxu0
      %2471 = vmatprep.mubr.f32.mxu0 0.0
      %2472 = vmatmul.mubr.f32.gmra.mrb[0].mxu0 %v2271
      %v2473 = vpop.f32.mrb[0].mxu0
      %v2474 = vadd.f32 0.0, %v2473
      %v2475 = vpop.f32.mrb[0].mxu0
      %2476 = vmatprep.mubr.f32.mxu0 0.0
      %2477 = vmatmul.mubr.f32.gmra.mrb[0].mxu0 %v2274
      %v2478 = vpop.f32.mrb[0].mxu0
      %v2479 = vadd.f32 0.0, %v2478
      %v2480 = vpop.f32.mrb[0].mxu0
      %2481 = vmatprep.mubr.f32.mxu0 0.0
      %2482 = vmatmul.mubr.f32.gmra.mrb[0].mxu0 %v2277
      %v2483 = vpop.f32.mrb[0].mxu0
      %v2484 = vadd.f32 0.0, %v2483
      %v2485 = vpop.f32.mrb[0].mxu0
      %2486 = vmatprep.mubr.f32.mxu0 0.0
      %2487 = vmatmul.mubr.f32.gmra.mrb[0].mxu0 %v2280
      %v2488 = vpop.f32.mrb[0].mxu0
      %v2489 = vadd.f32 0.0, %v2488
      %v2490 = vpop.f32.mrb[0].mxu0
      %2491 = vmatprep.mubr.f32.mxu0 0.0
      %2492 = vmatmul.mubr.f32.gmra.mrb[0].mxu0 %v2283
      %v2493 = vpop.f32.mrb[0].mxu0
      %v2494 = vadd.f32 0.0, %v2493
      %v2495 = vpop.f32.mrb[0].mxu0
      %2496 = vmatprep.mubr.f32.mxu0 0.0
      %2497 = vmatmul.mubr.f32.gmra.mrb[0].mxu0 %v2286
      %v2498 = vpop.f32.mrb[0].mxu0
      %v2499 = vadd.f32 0.0, %v2498
      %v2500 = vpop.f32.mrb[0].mxu0
      %2501 = vmatprep.mubr.f32.mxu0 0.0
      %2502 = vmatmul.mubr.f32.gmra.mrb[0].mxu0 %v2289
      %v2503 = vpop.f32.mrb[0].mxu0
      %v2504 = vadd.f32 0.0, %v2503
      %v2505 = vpop.f32.mrb[0].mxu0
      %2506 = vmatprep.mubr.f32.mxu0 0.0
      %2507 = vmatmul.mubr.f32.gmra.mrb[0].mxu0 %v2292
      %v2508 = vpop.f32.mrb[0].mxu0
      %v2509 = vadd.f32 0.0, %v2508
      %v2510 = vpop.f32.mrb[0].mxu0
      %2511 = vmatprep.mubr.f32.mxu0 0.0
      %2512 = vmatmul.mubr.f32.gmra.mrb[0].mxu0 %v2295
      %v2513 = vpop.f32.mrb[0].mxu0
      %v2514 = vadd.f32 0.0, %v2513
      %v2515 = vpop.f32.mrb[0].mxu0
      %2516 = vmatprep.mubr.f32.mxu0 0.0
      %2517 = vmatmul.mubr.f32.gmra.mrb[0].mxu0 %v2298
      %v2518 = vpop.f32.mrb[0].mxu0
      %v2519 = vadd.f32 0.0, %v2518
      %v2520 = vpop.f32.mrb[0].mxu0
      %2521 = vmatprep.mubr.f32.mxu0 0.0
      %2522 = vmatmul.mubr.f32.gmra.mrb[0].mxu0 %v2301
      %v2523 = vpop.f32.mrb[0].mxu0
      %v2524 = vadd.f32 0.0, %v2523
      %v2525 = vpop.f32.mrb[0].mxu0
      %2526 = vmatprep.mubr.f32.mxu0 0.0
      %2527 = vmatmul.mubr.f32.gmra.mrb[0].mxu0 %v2304
      %v2528 = vpop.f32.mrb[0].mxu0
      %v2529 = vadd.f32 0.0, %v2528
      %v2530 = vpop.f32.mrb[0].mxu0
      %2531 = vmatprep.mubr.f32.mxu0 0.0
      %2532 = vmatmul.mubr.f32.gmra.mrb[0].mxu0 %v2307
      %v2533 = vpop.f32.mrb[0].mxu0
      %v2534 = vadd.f32 0.0, %v2533
      %v2535 = vpop.f32.mrb[0].mxu0
      %2536 = vdwg.mxu0
      %v2537 = vadd.f32 %v2147, %v2379
      %v2538 = vadd.f32 %v2148, %v2384
      %v2539 = vadd.f32 %v2149, %v2389
      %v2540 = vadd.f32 %v2150, %v2394
      %v2541 = vadd.f32 %v2151, %v2399
      %v2542 = vadd.f32 %v2152, %v2404
      %v2543 = vadd.f32 %v2153, %v2409
      %v2544 = vadd.f32 %v2154, %v2414
      %v2545 = vadd.f32 %v2155, %v2419
      %v2546 = vadd.f32 %v2156, %v2424
      %v2547 = vadd.f32 %v2157, %v2429
      %v2548 = vadd.f32 %v2158, %v2434
      %v2549 = vadd.f32 %v2159, %v2439
      %v2550 = vadd.f32 %v2160, %v2444
      %v2551 = vadd.f32 %v2161, %v2449
      %v2552 = vadd.f32 %v2162, %v2454
      %v2553 = vadd.f32 %v2163, %v2459
      %v2554 = vadd.f32 %v2164, %v2464
      %v2555 = vadd.f32 %v2165, %v2469
      %v2556 = vadd.f32 %v2166, %v2474
      %v2557 = vadd.f32 %v2167, %v2479
      %v2558 = vadd.f32 %v2168, %v2484
      %v2559 = vadd.f32 %v2169, %v2489
      %v2560 = vadd.f32 %v2170, %v2494
      %v2561 = vadd.f32 %v2171, %v2499
      %v2562 = vadd.f32 %v2172, %v2504
      %v2563 = vadd.f32 %v2173, %v2509
      %v2564 = vadd.f32 %v2174, %v2514
      %v2565 = vadd.f32 %v2175, %v2519
      %v2566 = vadd.f32 %v2176, %v2524
      %v2567 = vadd.f32 %v2177, %v2529
      %v2568 = vadd.f32 %v2178, %v2534
      %s2569 = scalar_lea.vmem [#allocation2], 48
      %v2570 = vld [vmem:[%s2569] sm:$0xff]
      %v2571 = vld [vmem:[%s2569 + $0x8] sm:$0xff]
      %v2572 = vld [vmem:[%s2569 + $0x18] sm:$0xff]
      %v2573 = vld [vmem:[%s2569 + $0x20] sm:$0xff]
      %v2574 = vld [vmem:[%s2569 + $0x30] sm:$0xff]
      %v2575 = vld [vmem:[%s2569 + $0x38] sm:$0xff]
      %v2576 = vld [vmem:[%s2569 + $0x48] sm:$0xff]
      %v2577 = vld [vmem:[%s2569 + $0x50] sm:$0xff]
      %v2578 = vld [vmem:[%s2569 + $0x60] sm:$0xff]
      %v2579 = vld [vmem:[%s2569 + $0x68] sm:$0xff]
      %v2580 = vld [vmem:[%s2569 + $0x78] sm:$0xff]
      %v2581 = vld [vmem:[%s2569 + $0x80] sm:$0xff]
      %v2582 = vld [vmem:[%s2569 + $0x90] sm:$0xff]
      %v2583 = vld [vmem:[%s2569 + $0x98] sm:$0xff]
      %v2584 = vld [vmem:[%s2569 + $0xa8] sm:$0xff]
      %v2585 = vld [vmem:[%s2569 + $0xb0] sm:$0xff]
      %v2586 = vld [vmem:[%s2569 + $0xc0] sm:$0xff]
      %v2587 = vld [vmem:[%s2569 + $0xc8] sm:$0xff]
      %v2588 = vld [vmem:[%s2569 + $0xd8] sm:$0xff]
      %v2589 = vld [vmem:[%s2569 + $0xe0] sm:$0xff]
      %v2590 = vld [vmem:[%s2569 + $0xf0] sm:$0xff]
      %v2591 = vld [vmem:[%s2569 + $0xf8] sm:$0xff]
      %v2592 = vld [vmem:[%s2569 + $0x108] sm:$0xff]
      %v2593 = vld [vmem:[%s2569 + $0x110] sm:$0xff]
      %v2594 = vld [vmem:[%s2569 + $0x120] sm:$0xff]
      %v2595 = vld [vmem:[%s2569 + $0x128] sm:$0xff]
      %v2596 = vld [vmem:[%s2569 + $0x138] sm:$0xff]
      %v2597 = vld [vmem:[%s2569 + $0x140] sm:$0xff]
      %v2598 = vld [vmem:[%s2569 + $0x150] sm:$0xff]
      %v2599 = vld [vmem:[%s2569 + $0x158] sm:$0xff]
      %v2600 = vld [vmem:[%s2569 + $0x168] sm:$0xff]
      %v2601 = vld [vmem:[%s2569 + $0x170] sm:$0xff]
      %s2602 = scalar_lea.vmem %s1, 24
      %v2603 = vld [vmem:[%s2602] sm:$0xf]
      %v2605 = vsel %vm182, %v2570, 0
      %v2608 = vsel %vm182, %v2571, 0
      %v2611 = vsel %vm182, %v2572, 0
      %v2614 = vsel %vm182, %v2573, 0
      %v2617 = vsel %vm182, %v2574, 0
      %v2620 = vsel %vm182, %v2575, 0
      %v2623 = vsel %vm182, %v2576, 0
      %v2626 = vsel %vm182, %v2577, 0
      %v2629 = vsel %vm182, %v2578, 0
      %v2632 = vsel %vm182, %v2579, 0
      %v2635 = vsel %vm182, %v2580, 0
      %v2638 = vsel %vm182, %v2581, 0
      %v2641 = vsel %vm182, %v2582, 0
      %v2644 = vsel %vm182, %v2583, 0
      %v2647 = vsel %vm182, %v2584, 0
      %v2650 = vsel %vm182, %v2585, 0
      %v2653 = vsel %vm182, %v2586, 0
      %v2656 = vsel %vm182, %v2587, 0
      %v2659 = vsel %vm182, %v2588, 0
      %v2662 = vsel %vm182, %v2589, 0
      %v2665 = vsel %vm182, %v2590, 0
      %v2668 = vsel %vm182, %v2591, 0
      %v2671 = vsel %vm182, %v2592, 0
      %v2674 = vsel %vm182, %v2593, 0
      %v2677 = vsel %vm182, %v2594, 0
      %v2680 = vsel %vm182, %v2595, 0
      %v2683 = vsel %vm182, %v2596, 0
      %v2686 = vsel %vm182, %v2597, 0
      %v2689 = vsel %vm182, %v2598, 0
      %v2692 = vsel %vm182, %v2599, 0
      %v2695 = vsel %vm182, %v2600, 0
      %v2698 = vsel %vm182, %v2601, 0
      %v2701 = vsel %vm456, %v2603, 0
      %2703 = vmatprep.subr.mxu0 0.0
      %2704 = vmatpush1.msra.mxu0 %v2701
      %2705 = vmatprep.subr.mxu0 0.0
      %2706 = vmatpush1.msra.mxu0 0.0
      %2707 = vmatprep.subr.mxu0 0.0
      %2708 = vmatpush1.msra.mxu0 0.0
      %2709 = vmatprep.subr.mxu0 0.0
      %2710 = vmatpush1.msra.mxu0 0.0
      %2711 = vmatprep.subr.mxu0 0.0
      %2712 = vmatpush1.msra.mxu0 0.0
      %2713 = vmatprep.subr.mxu0 0.0
      %2714 = vmatpush1.msra.mxu0 0.0
      %2715 = vmatprep.subr.mxu0 0.0
      %2716 = vmatpush1.msra.mxu0 0.0
      %2717 = vmatprep.subr.mxu0 0.0
      %2718 = vmatpush1.msra.mxu0 0.0
      %2719 = vmatprep.subr.mxu0 0.0
      %2720 = vmatpush1.msra.mxu0 0.0
      %2721 = vmatprep.subr.mxu0 0.0
      %2722 = vmatpush1.msra.mxu0 0.0
      %2723 = vmatprep.subr.mxu0 0.0
      %2724 = vmatpush1.msra.mxu0 0.0
      %2725 = vmatprep.subr.mxu0 0.0
      %2726 = vmatpush1.msra.mxu0 0.0
      %2727 = vmatprep.subr.mxu0 0.0
      %2728 = vmatpush1.msra.mxu0 0.0
      %2729 = vmatprep.subr.mxu0 0.0
      %2730 = vmatpush1.msra.mxu0 0.0
      %2731 = vmatprep.subr.mxu0 0.0
      %2732 = vmatpush1.msra.mxu0 0.0
      %2733 = vmatprep.subr.mxu0 0.0
      %2734 = vmatpush1.msra.mxu0 0.0
      %2735 = vmatprep.subr.mxu0 0.0
      %2736 = vmatpush1.msra.mxu0 0.0
      %2737 = vmatprep.subr.mxu0 0.0
      %2738 = vmatpush1.msra.mxu0 0.0
      %2739 = vmatprep.subr.mxu0 0.0
      %2740 = vmatpush1.msra.mxu0 0.0
      %2741 = vmatprep.subr.mxu0 0.0
      %2742 = vmatpush1.msra.mxu0 0.0
      %2743 = vmatprep.subr.mxu0 0.0
      %2744 = vmatpush1.msra.mxu0 0.0
      %2745 = vmatprep.subr.mxu0 0.0
      %2746 = vmatpush1.msra.mxu0 0.0
      %2747 = vmatprep.subr.mxu0 0.0
      %2748 = vmatpush1.msra.mxu0 0.0
      %2749 = vmatprep.subr.mxu0 0.0
      %2750 = vmatpush1.msra.mxu0 0.0
      %2751 = vmatprep.subr.mxu0 0.0
      %2752 = vmatpush1.msra.mxu0 0.0
      %2753 = vmatprep.subr.mxu0 0.0
      %2754 = vmatpush1.msra.mxu0 0.0
      %2755 = vmatprep.subr.mxu0 0.0
      %2756 = vmatpush1.msra.mxu0 0.0
      %2757 = vmatprep.subr.mxu0 0.0
      %2758 = vmatpush1.msra.mxu0 0.0
      %2759 = vmatprep.subr.mxu0 0.0
      %2760 = vmatpush1.msra.mxu0 0.0
      %2761 = vmatprep.subr.mxu0 0.0
      %2762 = vmatpush1.msra.mxu0 0.0
      %2763 = vmatprep.subr.mxu0 0.0
      %2764 = vmatpush1.msra.mxu0 0.0
      %2765 = vmatprep.subr.mxu0 0.0
      %2766 = vmatpush1.msra.mxu0 0.0
      %2767 = vmatprep.mubr.f32.mxu0 0.0
      %2768 = vmatmul.mubr.f32.gmra.mrb[0].mxu0 %v2605
      %v2769 = vpop.f32.mrb[0].mxu0
      %v2770 = vadd.f32 0.0, %v2769
      %v2771 = vpop.f32.mrb[0].mxu0
      %2772 = vmatprep.mubr.f32.mxu0 0.0
      %2773 = vmatmul.mubr.f32.gmra.mrb[0].mxu0 %v2608
      %v2774 = vpop.f32.mrb[0].mxu0
      %v2775 = vadd.f32 0.0, %v2774
      %v2776 = vpop.f32.mrb[0].mxu0
      %2777 = vmatprep.mubr.f32.mxu0 0.0
      %2778 = vmatmul.mubr.f32.gmra.mrb[0].mxu0 %v2611
      %v2779 = vpop.f32.mrb[0].mxu0
      %v2780 = vadd.f32 0.0, %v2779
      %v2781 = vpop.f32.mrb[0].mxu0
      %2782 = vmatprep.mubr.f32.mxu0 0.0
      %2783 = vmatmul.mubr.f32.gmra.mrb[0].mxu0 %v2614
      %v2784 = vpop.f32.mrb[0].mxu0
      %v2785 = vadd.f32 0.0, %v2784
      %v2786 = vpop.f32.mrb[0].mxu0
      %2787 = vmatprep.mubr.f32.mxu0 0.0
      %2788 = vmatmul.mubr.f32.gmra.mrb[0].mxu0 %v2617
      %v2789 = vpop.f32.mrb[0].mxu0
      %v2790 = vadd.f32 0.0, %v2789
      %v2791 = vpop.f32.mrb[0].mxu0
      %2792 = vmatprep.mubr.f32.mxu0 0.0
      %2793 = vmatmul.mubr.f32.gmra.mrb[0].mxu0 %v2620
      %v2794 = vpop.f32.mrb[0].mxu0
      %v2795 = vadd.f32 0.0, %v2794
      %v2796 = vpop.f32.mrb[0].mxu0
      %2797 = vmatprep.mubr.f32.mxu0 0.0
      %2798 = vmatmul.mubr.f32.gmra.mrb[0].mxu0 %v2623
      %v2799 = vpop.f32.mrb[0].mxu0
      %v2800 = vadd.f32 0.0, %v2799
      %v2801 = vpop.f32.mrb[0].mxu0
      %2802 = vmatprep.mubr.f32.mxu0 0.0
      %2803 = vmatmul.mubr.f32.gmra.mrb[0].mxu0 %v2626
      %v2804 = vpop.f32.mrb[0].mxu0
      %v2805 = vadd.f32 0.0, %v2804
      %v2806 = vpop.f32.mrb[0].mxu0
      %2807 = vmatprep.mubr.f32.mxu0 0.0
      %2808 = vmatmul.mubr.f32.gmra.mrb[0].mxu0 %v2629
      %v2809 = vpop.f32.mrb[0].mxu0
      %v2810 = vadd.f32 0.0, %v2809
      %v2811 = vpop.f32.mrb[0].mxu0
      %2812 = vmatprep.mubr.f32.mxu0 0.0
      %2813 = vmatmul.mubr.f32.gmra.mrb[0].mxu0 %v2632
      %v2814 = vpop.f32.mrb[0].mxu0
      %v2815 = vadd.f32 0.0, %v2814
      %v2816 = vpop.f32.mrb[0].mxu0
      %2817 = vmatprep.mubr.f32.mxu0 0.0
      %2818 = vmatmul.mubr.f32.gmra.mrb[0].mxu0 %v2635
      %v2819 = vpop.f32.mrb[0].mxu0
      %v2820 = vadd.f32 0.0, %v2819
      %v2821 = vpop.f32.mrb[0].mxu0
      %2822 = vmatprep.mubr.f32.mxu0 0.0
      %2823 = vmatmul.mubr.f32.gmra.mrb[0].mxu0 %v2638
      %v2824 = vpop.f32.mrb[0].mxu0
      %v2825 = vadd.f32 0.0, %v2824
      %v2826 = vpop.f32.mrb[0].mxu0
      %2827 = vmatprep.mubr.f32.mxu0 0.0
      %2828 = vmatmul.mubr.f32.gmra.mrb[0].mxu0 %v2641
      %v2829 = vpop.f32.mrb[0].mxu0
      %v2830 = vadd.f32 0.0, %v2829
      %v2831 = vpop.f32.mrb[0].mxu0
      %2832 = vmatprep.mubr.f32.mxu0 0.0
      %2833 = vmatmul.mubr.f32.gmra.mrb[0].mxu0 %v2644
      %v2834 = vpop.f32.mrb[0].mxu0
      %v2835 = vadd.f32 0.0, %v2834
      %v2836 = vpop.f32.mrb[0].mxu0
      %2837 = vmatprep.mubr.f32.mxu0 0.0
      %2838 = vmatmul.mubr.f32.gmra.mrb[0].mxu0 %v2647
      %v2839 = vpop.f32.mrb[0].mxu0
      %v2840 = vadd.f32 0.0, %v2839
      %v2841 = vpop.f32.mrb[0].mxu0
      %2842 = vmatprep.mubr.f32.mxu0 0.0
      %2843 = vmatmul.mubr.f32.gmra.mrb[0].mxu0 %v2650
      %v2844 = vpop.f32.mrb[0].mxu0
      %v2845 = vadd.f32 0.0, %v2844
      %v2846 = vpop.f32.mrb[0].mxu0
      %2847 = vmatprep.mubr.f32.mxu0 0.0
      %2848 = vmatmul.mubr.f32.gmra.mrb[0].mxu0 %v2653
      %v2849 = vpop.f32.mrb[0].mxu0
      %v2850 = vadd.f32 0.0, %v2849
      %v2851 = vpop.f32.mrb[0].mxu0
      %2852 = vmatprep.mubr.f32.mxu0 0.0
      %2853 = vmatmul.mubr.f32.gmra.mrb[0].mxu0 %v2656
      %v2854 = vpop.f32.mrb[0].mxu0
      %v2855 = vadd.f32 0.0, %v2854
      %v2856 = vpop.f32.mrb[0].mxu0
      %2857 = vmatprep.mubr.f32.mxu0 0.0
      %2858 = vmatmul.mubr.f32.gmra.mrb[0].mxu0 %v2659
      %v2859 = vpop.f32.mrb[0].mxu0
      %v2860 = vadd.f32 0.0, %v2859
      %v2861 = vpop.f32.mrb[0].mxu0
      %2862 = vmatprep.mubr.f32.mxu0 0.0
      %2863 = vmatmul.mubr.f32.gmra.mrb[0].mxu0 %v2662
      %v2864 = vpop.f32.mrb[0].mxu0
      %v2865 = vadd.f32 0.0, %v2864
      %v2866 = vpop.f32.mrb[0].mxu0
      %2867 = vmatprep.mubr.f32.mxu0 0.0
      %2868 = vmatmul.mubr.f32.gmra.mrb[0].mxu0 %v2665
      %v2869 = vpop.f32.mrb[0].mxu0
      %v2870 = vadd.f32 0.0, %v2869
      %v2871 = vpop.f32.mrb[0].mxu0
      %2872 = vmatprep.mubr.f32.mxu0 0.0
      %2873 = vmatmul.mubr.f32.gmra.mrb[0].mxu0 %v2668
      %v2874 = vpop.f32.mrb[0].mxu0
      %v2875 = vadd.f32 0.0, %v2874
      %v2876 = vpop.f32.mrb[0].mxu0
      %2877 = vmatprep.mubr.f32.mxu0 0.0
      %2878 = vmatmul.mubr.f32.gmra.mrb[0].mxu0 %v2671
      %v2879 = vpop.f32.mrb[0].mxu0
      %v2880 = vadd.f32 0.0, %v2879
      %v2881 = vpop.f32.mrb[0].mxu0
      %2882 = vmatprep.mubr.f32.mxu0 0.0
      %2883 = vmatmul.mubr.f32.gmra.mrb[0].mxu0 %v2674
      %v2884 = vpop.f32.mrb[0].mxu0
      %v2885 = vadd.f32 0.0, %v2884
      %v2886 = vpop.f32.mrb[0].mxu0
      %2887 = vmatprep.mubr.f32.mxu0 0.0
      %2888 = vmatmul.mubr.f32.gmra.mrb[0].mxu0 %v2677
      %v2889 = vpop.f32.mrb[0].mxu0
      %v2890 = vadd.f32 0.0, %v2889
      %v2891 = vpop.f32.mrb[0].mxu0
      %2892 = vmatprep.mubr.f32.mxu0 0.0
      %2893 = vmatmul.mubr.f32.gmra.mrb[0].mxu0 %v2680
      %v2894 = vpop.f32.mrb[0].mxu0
      %v2895 = vadd.f32 0.0, %v2894
      %v2896 = vpop.f32.mrb[0].mxu0
      %2897 = vmatprep.mubr.f32.mxu0 0.0
      %2898 = vmatmul.mubr.f32.gmra.mrb[0].mxu0 %v2683
      %v2899 = vpop.f32.mrb[0].mxu0
      %v2900 = vadd.f32 0.0, %v2899
      %v2901 = vpop.f32.mrb[0].mxu0
      %2902 = vmatprep.mubr.f32.mxu0 0.0
      %2903 = vmatmul.mubr.f32.gmra.mrb[0].mxu0 %v2686
      %v2904 = vpop.f32.mrb[0].mxu0
      %v2905 = vadd.f32 0.0, %v2904
      %v2906 = vpop.f32.mrb[0].mxu0
      %2907 = vmatprep.mubr.f32.mxu0 0.0
      %2908 = vmatmul.mubr.f32.gmra.mrb[0].mxu0 %v2689
      %v2909 = vpop.f32.mrb[0].mxu0
      %v2910 = vadd.f32 0.0, %v2909
      %v2911 = vpop.f32.mrb[0].mxu0
      %2912 = vmatprep.mubr.f32.mxu0 0.0
      %2913 = vmatmul.mubr.f32.gmra.mrb[0].mxu0 %v2692
      %v2914 = vpop.f32.mrb[0].mxu0
      %v2915 = vadd.f32 0.0, %v2914
      %v2916 = vpop.f32.mrb[0].mxu0
      %2917 = vmatprep.mubr.f32.mxu0 0.0
      %2918 = vmatmul.mubr.f32.gmra.mrb[0].mxu0 %v2695
      %v2919 = vpop.f32.mrb[0].mxu0
      %v2920 = vadd.f32 0.0, %v2919
      %v2921 = vpop.f32.mrb[0].mxu0
      %2922 = vmatprep.mubr.f32.mxu0 0.0
      %2923 = vmatmul.mubr.f32.gmra.mrb[0].mxu0 %v2698
      %v2924 = vpop.f32.mrb[0].mxu0
      %v2925 = vadd.f32 0.0, %v2924
      %v2926 = vpop.f32.mrb[0].mxu0
      %2927 = vdwg.mxu0
      %v2928 = vadd.f32 %v2537, %v2770
      %v2929 = vadd.f32 %v2538, %v2775
      %v2930 = vadd.f32 %v2539, %v2780
      %v2931 = vadd.f32 %v2540, %v2785
      %v2932 = vadd.f32 %v2541, %v2790
      %v2933 = vadd.f32 %v2542, %v2795
      %v2934 = vadd.f32 %v2543, %v2800
      %v2935 = vadd.f32 %v2544, %v2805
      %v2936 = vadd.f32 %v2545, %v2810
      %v2937 = vadd.f32 %v2546, %v2815
      %v2938 = vadd.f32 %v2547, %v2820
      %v2939 = vadd.f32 %v2548, %v2825
      %v2940 = vadd.f32 %v2549, %v2830
      %v2941 = vadd.f32 %v2550, %v2835
      %v2942 = vadd.f32 %v2551, %v2840
      %v2943 = vadd.f32 %v2552, %v2845
      %v2944 = vadd.f32 %v2553, %v2850
      %v2945 = vadd.f32 %v2554, %v2855
      %v2946 = vadd.f32 %v2555, %v2860
      %v2947 = vadd.f32 %v2556, %v2865
      %v2948 = vadd.f32 %v2557, %v2870
      %v2949 = vadd.f32 %v2558, %v2875
      %v2950 = vadd.f32 %v2559, %v2880
      %v2951 = vadd.f32 %v2560, %v2885
      %v2952 = vadd.f32 %v2561, %v2890
      %v2953 = vadd.f32 %v2562, %v2895
      %v2954 = vadd.f32 %v2563, %v2900
      %v2955 = vadd.f32 %v2564, %v2905
      %v2956 = vadd.f32 %v2565, %v2910
      %v2957 = vadd.f32 %v2566, %v2915
      %v2958 = vadd.f32 %v2567, %v2920
      %v2959 = vadd.f32 %v2568, %v2925
      %v2960 = vld [vmem:[%s2569 + $0x1] sm:$0xff]
      %v2961 = vld [vmem:[%s2569 + $0x9] sm:$0xff]
      %v2962 = vld [vmem:[%s2569 + $0x19] sm:$0xff]
      %v2963 = vld [vmem:[%s2569 + $0x21] sm:$0xff]
      %v2964 = vld [vmem:[%s2569 + $0x31] sm:$0xff]
      %v2965 = vld [vmem:[%s2569 + $0x39] sm:$0xff]
      %v2966 = vld [vmem:[%s2569 + $0x49] sm:$0xff]
      %v2967 = vld [vmem:[%s2569 + $0x51] sm:$0xff]
      %v2968 = vld [vmem:[%s2569 + $0x61] sm:$0xff]
      %v2969 = vld [vmem:[%s2569 + $0x69] sm:$0xff]
      %v2970 = vld [vmem:[%s2569 + $0x79] sm:$0xff]
      %v2971 = vld [vmem:[%s2569 + $0x81] sm:$0xff]
      %v2972 = vld [vmem:[%s2569 + $0x91] sm:$0xff]
      %v2973 = vld [vmem:[%s2569 + $0x99] sm:$0xff]
      %v2974 = vld [vmem:[%s2569 + $0xa9] sm:$0xff]
      %v2975 = vld [vmem:[%s2569 + $0xb1] sm:$0xff]
      %v2976 = vld [vmem:[%s2569 + $0xc1] sm:$0xff]
      %v2977 = vld [vmem:[%s2569 + $0xc9] sm:$0xff]
      %v2978 = vld [vmem:[%s2569 + $0xd9] sm:$0xff]
      %v2979 = vld [vmem:[%s2569 + $0xe1] sm:$0xff]
      %v2980 = vld [vmem:[%s2569 + $0xf1] sm:$0xff]
      %v2981 = vld [vmem:[%s2569 + $0xf9] sm:$0xff]
      %v2982 = vld [vmem:[%s2569 + $0x109] sm:$0xff]
      %v2983 = vld [vmem:[%s2569 + $0x111] sm:$0xff]
      %v2984 = vld [vmem:[%s2569 + $0x121] sm:$0xff]
      %v2985 = vld [vmem:[%s2569 + $0x129] sm:$0xff]
      %v2986 = vld [vmem:[%s2569 + $0x139] sm:$0xff]
      %v2987 = vld [vmem:[%s2569 + $0x141] sm:$0xff]
      %v2988 = vld [vmem:[%s2569 + $0x151] sm:$0xff]
      %v2989 = vld [vmem:[%s2569 + $0x159] sm:$0xff]
      %v2990 = vld [vmem:[%s2569 + $0x169] sm:$0xff]
      %v2991 = vld [vmem:[%s2569 + $0x171] sm:$0xff]
      %s2992 = scalar_lea.vmem %s1, 28
      %v2993 = vld [vmem:[%s2992] sm:$0xf]
      %v2995 = vsel %vm182, %v2960, 0
      %v2998 = vsel %vm182, %v2961, 0
      %v3001 = vsel %vm182, %v2962, 0
      %v3004 = vsel %vm182, %v2963, 0
      %v3007 = vsel %vm182, %v2964, 0
      %v3010 = vsel %vm182, %v2965, 0
      %v3013 = vsel %vm182, %v2966, 0
      %v3016 = vsel %vm182, %v2967, 0
      %v3019 = vsel %vm182, %v2968, 0
      %v3022 = vsel %vm182, %v2969, 0
      %v3025 = vsel %vm182, %v2970, 0
      %v3028 = vsel %vm182, %v2971, 0
      %v3031 = vsel %vm182, %v2972, 0
      %v3034 = vsel %vm182, %v2973, 0
      %v3037 = vsel %vm182, %v2974, 0
      %v3040 = vsel %vm182, %v2975, 0
      %v3043 = vsel %vm182, %v2976, 0
      %v3046 = vsel %vm182, %v2977, 0
      %v3049 = vsel %vm182, %v2978, 0
      %v3052 = vsel %vm182, %v2979, 0
      %v3055 = vsel %vm182, %v2980, 0
      %v3058 = vsel %vm182, %v2981, 0
      %v3061 = vsel %vm182, %v2982, 0
      %v3064 = vsel %vm182, %v2983, 0
      %v3067 = vsel %vm182, %v2984, 0
      %v3070 = vsel %vm182, %v2985, 0
      %v3073 = vsel %vm182, %v2986, 0
      %v3076 = vsel %vm182, %v2987, 0
      %v3079 = vsel %vm182, %v2988, 0
      %v3082 = vsel %vm182, %v2989, 0
      %v3085 = vsel %vm182, %v2990, 0
      %v3088 = vsel %vm182, %v2991, 0
      %v3091 = vsel %vm456, %v2993, 0
      %3093 = vmatprep.subr.mxu0 0.0
      %3094 = vmatpush1.msra.mxu0 %v3091
      %3095 = vmatprep.subr.mxu0 0.0
      %3096 = vmatpush1.msra.mxu0 0.0
      %3097 = vmatprep.subr.mxu0 0.0
      %3098 = vmatpush1.msra.mxu0 0.0
      %3099 = vmatprep.subr.mxu0 0.0
      %3100 = vmatpush1.msra.mxu0 0.0
      %3101 = vmatprep.subr.mxu0 0.0
      %3102 = vmatpush1.msra.mxu0 0.0
      %3103 = vmatprep.subr.mxu0 0.0
      %3104 = vmatpush1.msra.mxu0 0.0
      %3105 = vmatprep.subr.mxu0 0.0
      %3106 = vmatpush1.msra.mxu0 0.0
      %3107 = vmatprep.subr.mxu0 0.0
      %3108 = vmatpush1.msra.mxu0 0.0
      %3109 = vmatprep.subr.mxu0 0.0
      %3110 = vmatpush1.msra.mxu0 0.0
      %3111 = vmatprep.subr.mxu0 0.0
      %3112 = vmatpush1.msra.mxu0 0.0
      %3113 = vmatprep.subr.mxu0 0.0
      %3114 = vmatpush1.msra.mxu0 0.0
      %3115 = vmatprep.subr.mxu0 0.0
      %3116 = vmatpush1.msra.mxu0 0.0
      %3117 = vmatprep.subr.mxu0 0.0
      %3118 = vmatpush1.msra.mxu0 0.0
      %3119 = vmatprep.subr.mxu0 0.0
      %3120 = vmatpush1.msra.mxu0 0.0
      %3121 = vmatprep.subr.mxu0 0.0
      %3122 = vmatpush1.msra.mxu0 0.0
      %3123 = vmatprep.subr.mxu0 0.0
      %3124 = vmatpush1.msra.mxu0 0.0
      %3125 = vmatprep.subr.mxu0 0.0
      %3126 = vmatpush1.msra.mxu0 0.0
      %3127 = vmatprep.subr.mxu0 0.0
      %3128 = vmatpush1.msra.mxu0 0.0
      %3129 = vmatprep.subr.mxu0 0.0
      %3130 = vmatpush1.msra.mxu0 0.0
      %3131 = vmatprep.subr.mxu0 0.0
      %3132 = vmatpush1.msra.mxu0 0.0
      %3133 = vmatprep.subr.mxu0 0.0
      %3134 = vmatpush1.msra.mxu0 0.0
      %3135 = vmatprep.subr.mxu0 0.0
      %3136 = vmatpush1.msra.mxu0 0.0
      %3137 = vmatprep.subr.mxu0 0.0
      %3138 = vmatpush1.msra.mxu0 0.0
      %3139 = vmatprep.subr.mxu0 0.0
      %3140 = vmatpush1.msra.mxu0 0.0
      %3141 = vmatprep.subr.mxu0 0.0
      %3142 = vmatpush1.msra.mxu0 0.0
      %3143 = vmatprep.subr.mxu0 0.0
      %3144 = vmatpush1.msra.mxu0 0.0
      %3145 = vmatprep.subr.mxu0 0.0
      %3146 = vmatpush1.msra.mxu0 0.0
      %3147 = vmatprep.subr.mxu0 0.0
      %3148 = vmatpush1.msra.mxu0 0.0
      %3149 = vmatprep.subr.mxu0 0.0
      %3150 = vmatpush1.msra.mxu0 0.0
      %3151 = vmatprep.subr.mxu0 0.0
      %3152 = vmatpush1.msra.mxu0 0.0
      %3153 = vmatprep.subr.mxu0 0.0
      %3154 = vmatpush1.msra.mxu0 0.0
      %3155 = vmatprep.subr.mxu0 0.0
      %3156 = vmatpush1.msra.mxu0 0.0
      %3157 = vmatprep.mubr.f32.mxu0 0.0
      %3158 = vmatmul.mubr.f32.gmra.mrb[0].mxu0 %v2995
      %v3159 = vpop.f32.mrb[0].mxu0
      %v3160 = vadd.f32 0.0, %v3159
      %v3161 = vpop.f32.mrb[0].mxu0
      %3162 = vmatprep.mubr.f32.mxu0 0.0
      %3163 = vmatmul.mubr.f32.gmra.mrb[0].mxu0 %v2998
      %v3164 = vpop.f32.mrb[0].mxu0
      %v3165 = vadd.f32 0.0, %v3164
      %v3166 = vpop.f32.mrb[0].mxu0
      %3167 = vmatprep.mubr.f32.mxu0 0.0
      %3168 = vmatmul.mubr.f32.gmra.mrb[0].mxu0 %v3001
      %v3169 = vpop.f32.mrb[0].mxu0
      %v3170 = vadd.f32 0.0, %v3169
      %v3171 = vpop.f32.mrb[0].mxu0
      %3172 = vmatprep.mubr.f32.mxu0 0.0
      %3173 = vmatmul.mubr.f32.gmra.mrb[0].mxu0 %v3004
      %v3174 = vpop.f32.mrb[0].mxu0
      %v3175 = vadd.f32 0.0, %v3174
      %v3176 = vpop.f32.mrb[0].mxu0
      %3177 = vmatprep.mubr.f32.mxu0 0.0
      %3178 = vmatmul.mubr.f32.gmra.mrb[0].mxu0 %v3007
      %v3179 = vpop.f32.mrb[0].mxu0
      %v3180 = vadd.f32 0.0, %v3179
      %v3181 = vpop.f32.mrb[0].mxu0
      %3182 = vmatprep.mubr.f32.mxu0 0.0
      %3183 = vmatmul.mubr.f32.gmra.mrb[0].mxu0 %v3010
      %v3184 = vpop.f32.mrb[0].mxu0
      %v3185 = vadd.f32 0.0, %v3184
      %v3186 = vpop.f32.mrb[0].mxu0
      %3187 = vmatprep.mubr.f32.mxu0 0.0
      %3188 = vmatmul.mubr.f32.gmra.mrb[0].mxu0 %v3013
      %v3189 = vpop.f32.mrb[0].mxu0
      %v3190 = vadd.f32 0.0, %v3189
      %v3191 = vpop.f32.mrb[0].mxu0
      %3192 = vmatprep.mubr.f32.mxu0 0.0
      %3193 = vmatmul.mubr.f32.gmra.mrb[0].mxu0 %v3016
      %v3194 = vpop.f32.mrb[0].mxu0
      %v3195 = vadd.f32 0.0, %v3194
      %v3196 = vpop.f32.mrb[0].mxu0
      %3197 = vmatprep.mubr.f32.mxu0 0.0
      %3198 = vmatmul.mubr.f32.gmra.mrb[0].mxu0 %v3019
      %v3199 = vpop.f32.mrb[0].mxu0
      %v3200 = vadd.f32 0.0, %v3199
      %v3201 = vpop.f32.mrb[0].mxu0
      %3202 = vmatprep.mubr.f32.mxu0 0.0
      %3203 = vmatmul.mubr.f32.gmra.mrb[0].mxu0 %v3022
      %v3204 = vpop.f32.mrb[0].mxu0
      %v3205 = vadd.f32 0.0, %v3204
      %v3206 = vpop.f32.mrb[0].mxu0
      %3207 = vmatprep.mubr.f32.mxu0 0.0
      %3208 = vmatmul.mubr.f32.gmra.mrb[0].mxu0 %v3025
      %v3209 = vpop.f32.mrb[0].mxu0
      %v3210 = vadd.f32 0.0, %v3209
      %v3211 = vpop.f32.mrb[0].mxu0
      %3212 = vmatprep.mubr.f32.mxu0 0.0
      %3213 = vmatmul.mubr.f32.gmra.mrb[0].mxu0 %v3028
      %v3214 = vpop.f32.mrb[0].mxu0
      %v3215 = vadd.f32 0.0, %v3214
      %v3216 = vpop.f32.mrb[0].mxu0
      %3217 = vmatprep.mubr.f32.mxu0 0.0
      %3218 = vmatmul.mubr.f32.gmra.mrb[0].mxu0 %v3031
      %v3219 = vpop.f32.mrb[0].mxu0
      %v3220 = vadd.f32 0.0, %v3219
      %v3221 = vpop.f32.mrb[0].mxu0
      %3222 = vmatprep.mubr.f32.mxu0 0.0
      %3223 = vmatmul.mubr.f32.gmra.mrb[0].mxu0 %v3034
      %v3224 = vpop.f32.mrb[0].mxu0
      %v3225 = vadd.f32 0.0, %v3224
      %v3226 = vpop.f32.mrb[0].mxu0
      %3227 = vmatprep.mubr.f32.mxu0 0.0
      %3228 = vmatmul.mubr.f32.gmra.mrb[0].mxu0 %v3037
      %v3229 = vpop.f32.mrb[0].mxu0
      %v3230 = vadd.f32 0.0, %v3229
      %v3231 = vpop.f32.mrb[0].mxu0
      %3232 = vmatprep.mubr.f32.mxu0 0.0
      %3233 = vmatmul.mubr.f32.gmra.mrb[0].mxu0 %v3040
      %v3234 = vpop.f32.mrb[0].mxu0
      %v3235 = vadd.f32 0.0, %v3234
      %v3236 = vpop.f32.mrb[0].mxu0
      %3237 = vmatprep.mubr.f32.mxu0 0.0
      %3238 = vmatmul.mubr.f32.gmra.mrb[0].mxu0 %v3043
      %v3239 = vpop.f32.mrb[0].mxu0
      %v3240 = vadd.f32 0.0, %v3239
      %v3241 = vpop.f32.mrb[0].mxu0
      %3242 = vmatprep.mubr.f32.mxu0 0.0
      %3243 = vmatmul.mubr.f32.gmra.mrb[0].mxu0 %v3046
      %v3244 = vpop.f32.mrb[0].mxu0
      %v3245 = vadd.f32 0.0, %v3244
      %v3246 = vpop.f32.mrb[0].mxu0
      %3247 = vmatprep.mubr.f32.mxu0 0.0
      %3248 = vmatmul.mubr.f32.gmra.mrb[0].mxu0 %v3049
      %v3249 = vpop.f32.mrb[0].mxu0
      %v3250 = vadd.f32 0.0, %v3249
      %v3251 = vpop.f32.mrb[0].mxu0
      %3252 = vmatprep.mubr.f32.mxu0 0.0
      %3253 = vmatmul.mubr.f32.gmra.mrb[0].mxu0 %v3052
      %v3254 = vpop.f32.mrb[0].mxu0
      %v3255 = vadd.f32 0.0, %v3254
      %v3256 = vpop.f32.mrb[0].mxu0
      %3257 = vmatprep.mubr.f32.mxu0 0.0
      %3258 = vmatmul.mubr.f32.gmra.mrb[0].mxu0 %v3055
      %v3259 = vpop.f32.mrb[0].mxu0
      %v3260 = vadd.f32 0.0, %v3259
      %v3261 = vpop.f32.mrb[0].mxu0
      %3262 = vmatprep.mubr.f32.mxu0 0.0
      %3263 = vmatmul.mubr.f32.gmra.mrb[0].mxu0 %v3058
      %v3264 = vpop.f32.mrb[0].mxu0
      %v3265 = vadd.f32 0.0, %v3264
      %v3266 = vpop.f32.mrb[0].mxu0
      %3267 = vmatprep.mubr.f32.mxu0 0.0
      %3268 = vmatmul.mubr.f32.gmra.mrb[0].mxu0 %v3061
      %v3269 = vpop.f32.mrb[0].mxu0
      %v3270 = vadd.f32 0.0, %v3269
      %v3271 = vpop.f32.mrb[0].mxu0
      %3272 = vmatprep.mubr.f32.mxu0 0.0
      %3273 = vmatmul.mubr.f32.gmra.mrb[0].mxu0 %v3064
      %v3274 = vpop.f32.mrb[0].mxu0
      %v3275 = vadd.f32 0.0, %v3274
      %v3276 = vpop.f32.mrb[0].mxu0
      %3277 = vmatprep.mubr.f32.mxu0 0.0
      %3278 = vmatmul.mubr.f32.gmra.mrb[0].mxu0 %v3067
      %v3279 = vpop.f32.mrb[0].mxu0
      %v3280 = vadd.f32 0.0, %v3279
      %v3281 = vpop.f32.mrb[0].mxu0
      %3282 = vmatprep.mubr.f32.mxu0 0.0
      %3283 = vmatmul.mubr.f32.gmra.mrb[0].mxu0 %v3070
      %v3284 = vpop.f32.mrb[0].mxu0
      %v3285 = vadd.f32 0.0, %v3284
      %v3286 = vpop.f32.mrb[0].mxu0
      %3287 = vmatprep.mubr.f32.mxu0 0.0
      %3288 = vmatmul.mubr.f32.gmra.mrb[0].mxu0 %v3073
      %v3289 = vpop.f32.mrb[0].mxu0
      %v3290 = vadd.f32 0.0, %v3289
      %v3291 = vpop.f32.mrb[0].mxu0
      %3292 = vmatprep.mubr.f32.mxu0 0.0
      %3293 = vmatmul.mubr.f32.gmra.mrb[0].mxu0 %v3076
      %v3294 = vpop.f32.mrb[0].mxu0
      %v3295 = vadd.f32 0.0, %v3294
      %v3296 = vpop.f32.mrb[0].mxu0
      %3297 = vmatprep.mubr.f32.mxu0 0.0
      %3298 = vmatmul.mubr.f32.gmra.mrb[0].mxu0 %v3079
      %v3299 = vpop.f32.mrb[0].mxu0
      %v3300 = vadd.f32 0.0, %v3299
      %v3301 = vpop.f32.mrb[0].mxu0
      %3302 = vmatprep.mubr.f32.mxu0 0.0
      %3303 = vmatmul.mubr.f32.gmra.mrb[0].mxu0 %v3082
      %v3304 = vpop.f32.mrb[0].mxu0
      %v3305 = vadd.f32 0.0, %v3304
      %v3306 = vpop.f32.mrb[0].mxu0
      %3307 = vmatprep.mubr.f32.mxu0 0.0
      %3308 = vmatmul.mubr.f32.gmra.mrb[0].mxu0 %v3085
      %v3309 = vpop.f32.mrb[0].mxu0
      %v3310 = vadd.f32 0.0, %v3309
      %v3311 = vpop.f32.mrb[0].mxu0
      %3312 = vmatprep.mubr.f32.mxu0 0.0
      %3313 = vmatmul.mubr.f32.gmra.mrb[0].mxu0 %v3088
      %v3314 = vpop.f32.mrb[0].mxu0
      %v3315 = vadd.f32 0.0, %v3314
      %v3316 = vpop.f32.mrb[0].mxu0
      %3317 = vdwg.mxu0
      %v3318 = vadd.f32 %v2928, %v3160
      %v3319 = vadd.f32 %v2929, %v3165
      %v3320 = vadd.f32 %v2930, %v3170
      %v3321 = vadd.f32 %v2931, %v3175
      %v3322 = vadd.f32 %v2932, %v3180
      %v3323 = vadd.f32 %v2933, %v3185
      %v3324 = vadd.f32 %v2934, %v3190
      %v3325 = vadd.f32 %v2935, %v3195
      %v3326 = vadd.f32 %v2936, %v3200
      %v3327 = vadd.f32 %v2937, %v3205
      %v3328 = vadd.f32 %v2938, %v3210
      %v3329 = vadd.f32 %v2939, %v3215
      %v3330 = vadd.f32 %v2940, %v3220
      %v3331 = vadd.f32 %v2941, %v3225
      %v3332 = vadd.f32 %v2942, %v3230
      %v3333 = vadd.f32 %v2943, %v3235
      %v3334 = vadd.f32 %v2944, %v3240
      %v3335 = vadd.f32 %v2945, %v3245
      %v3336 = vadd.f32 %v2946, %v3250
      %v3337 = vadd.f32 %v2947, %v3255
      %v3338 = vadd.f32 %v2948, %v3260
      %v3339 = vadd.f32 %v2949, %v3265
      %v3340 = vadd.f32 %v2950, %v3270
      %v3341 = vadd.f32 %v2951, %v3275
      %v3342 = vadd.f32 %v2952, %v3280
      %v3343 = vadd.f32 %v2953, %v3285
      %v3344 = vadd.f32 %v2954, %v3290
      %v3345 = vadd.f32 %v2955, %v3295
      %v3346 = vadd.f32 %v2956, %v3300
      %v3347 = vadd.f32 %v2957, %v3305
      %v3348 = vadd.f32 %v2958, %v3310
      %v3349 = vadd.f32 %v2959, %v3315
      %v3350 = vld [vmem:[%s2569 + $0x2] sm:$0xff]
      %v3351 = vld [vmem:[%s2569 + $0xa] sm:$0xff]
      %v3352 = vld [vmem:[%s2569 + $0x1a] sm:$0xff]
      %v3353 = vld [vmem:[%s2569 + $0x22] sm:$0xff]
      %v3354 = vld [vmem:[%s2569 + $0x32] sm:$0xff]
      %v3355 = vld [vmem:[%s2569 + $0x3a] sm:$0xff]
      %v3356 = vld [vmem:[%s2569 + $0x4a] sm:$0xff]
      %v3357 = vld [vmem:[%s2569 + $0x52] sm:$0xff]
      %v3358 = vld [vmem:[%s2569 + $0x62] sm:$0xff]
      %v3359 = vld [vmem:[%s2569 + $0x6a] sm:$0xff]
      %v3360 = vld [vmem:[%s2569 + $0x7a] sm:$0xff]
      %v3361 = vld [vmem:[%s2569 + $0x82] sm:$0xff]
      %v3362 = vld [vmem:[%s2569 + $0x92] sm:$0xff]
      %v3363 = vld [vmem:[%s2569 + $0x9a] sm:$0xff]
      %v3364 = vld [vmem:[%s2569 + $0xaa] sm:$0xff]
      %v3365 = vld [vmem:[%s2569 + $0xb2] sm:$0xff]
      %v3366 = vld [vmem:[%s2569 + $0xc2] sm:$0xff]
      %v3367 = vld [vmem:[%s2569 + $0xca] sm:$0xff]
      %v3368 = vld [vmem:[%s2569 + $0xda] sm:$0xff]
      %v3369 = vld [vmem:[%s2569 + $0xe2] sm:$0xff]
      %v3370 = vld [vmem:[%s2569 + $0xf2] sm:$0xff]
      %v3371 = vld [vmem:[%s2569 + $0xfa] sm:$0xff]
      %v3372 = vld [vmem:[%s2569 + $0x10a] sm:$0xff]
      %v3373 = vld [vmem:[%s2569 + $0x112] sm:$0xff]
      %v3374 = vld [vmem:[%s2569 + $0x122] sm:$0xff]
      %v3375 = vld [vmem:[%s2569 + $0x12a] sm:$0xff]
      %v3376 = vld [vmem:[%s2569 + $0x13a] sm:$0xff]
      %v3377 = vld [vmem:[%s2569 + $0x142] sm:$0xff]
      %v3378 = vld [vmem:[%s2569 + $0x152] sm:$0xff]
      %v3379 = vld [vmem:[%s2569 + $0x15a] sm:$0xff]
      %v3380 = vld [vmem:[%s2569 + $0x16a] sm:$0xff]
      %v3381 = vld [vmem:[%s2569 + $0x172] sm:$0xff]
      %s3382 = scalar_lea.vmem %s1, 32
      %v3383 = vld [vmem:[%s3382] sm:$0xf]
      %v3385 = vsel %vm182, %v3350, 0
      %v3388 = vsel %vm182, %v3351, 0
      %v3391 = vsel %vm182, %v3352, 0
      %v3394 = vsel %vm182, %v3353, 0
      %v3397 = vsel %vm182, %v3354, 0
      %v3400 = vsel %vm182, %v3355, 0
      %v3403 = vsel %vm182, %v3356, 0
      %v3406 = vsel %vm182, %v3357, 0
      %v3409 = vsel %vm182, %v3358, 0
      %v3412 = vsel %vm182, %v3359, 0
      %v3415 = vsel %vm182, %v3360, 0
      %v3418 = vsel %vm182, %v3361, 0
      %v3421 = vsel %vm182, %v3362, 0
      %v3424 = vsel %vm182, %v3363, 0
      %v3427 = vsel %vm182, %v3364, 0
      %v3430 = vsel %vm182, %v3365, 0
      %v3433 = vsel %vm182, %v3366, 0
      %v3436 = vsel %vm182, %v3367, 0
      %v3439 = vsel %vm182, %v3368, 0
      %v3442 = vsel %vm182, %v3369, 0
      %v3445 = vsel %vm182, %v3370, 0
      %v3448 = vsel %vm182, %v3371, 0
      %v3451 = vsel %vm182, %v3372, 0
      %v3454 = vsel %vm182, %v3373, 0
      %v3457 = vsel %vm182, %v3374, 0
      %v3460 = vsel %vm182, %v3375, 0
      %v3463 = vsel %vm182, %v3376, 0
      %v3466 = vsel %vm182, %v3377, 0
      %v3469 = vsel %vm182, %v3378, 0
      %v3472 = vsel %vm182, %v3379, 0
      %v3475 = vsel %vm182, %v3380, 0
      %v3478 = vsel %vm182, %v3381, 0
      %v3481 = vsel %vm456, %v3383, 0
      %3483 = vmatprep.subr.mxu0 0.0
      %3484 = vmatpush1.msra.mxu0 %v3481
      %3485 = vmatprep.subr.mxu0 0.0
      %3486 = vmatpush1.msra.mxu0 0.0
      %3487 = vmatprep.subr.mxu0 0.0
      %3488 = vmatpush1.msra.mxu0 0.0
      %3489 = vmatprep.subr.mxu0 0.0
      %3490 = vmatpush1.msra.mxu0 0.0
      %3491 = vmatprep.subr.mxu0 0.0
      %3492 = vmatpush1.msra.mxu0 0.0
      %3493 = vmatprep.subr.mxu0 0.0
      %3494 = vmatpush1.msra.mxu0 0.0
      %3495 = vmatprep.subr.mxu0 0.0
      %3496 = vmatpush1.msra.mxu0 0.0
      %3497 = vmatprep.subr.mxu0 0.0
      %3498 = vmatpush1.msra.mxu0 0.0
      %3499 = vmatprep.subr.mxu0 0.0
      %3500 = vmatpush1.msra.mxu0 0.0
      %3501 = vmatprep.subr.mxu0 0.0
      %3502 = vmatpush1.msra.mxu0 0.0
      %3503 = vmatprep.subr.mxu0 0.0
      %3504 = vmatpush1.msra.mxu0 0.0
      %3505 = vmatprep.subr.mxu0 0.0
      %3506 = vmatpush1.msra.mxu0 0.0
      %3507 = vmatprep.subr.mxu0 0.0
      %3508 = vmatpush1.msra.mxu0 0.0
      %3509 = vmatprep.subr.mxu0 0.0
      %3510 = vmatpush1.msra.mxu0 0.0
      %3511 = vmatprep.subr.mxu0 0.0
      %3512 = vmatpush1.msra.mxu0 0.0
      %3513 = vmatprep.subr.mxu0 0.0
      %3514 = vmatpush1.msra.mxu0 0.0
      %3515 = vmatprep.subr.mxu0 0.0
      %3516 = vmatpush1.msra.mxu0 0.0
      %3517 = vmatprep.subr.mxu0 0.0
      %3518 = vmatpush1.msra.mxu0 0.0
      %3519 = vmatprep.subr.mxu0 0.0
      %3520 = vmatpush1.msra.mxu0 0.0
      %3521 = vmatprep.subr.mxu0 0.0
      %3522 = vmatpush1.msra.mxu0 0.0
      %3523 = vmatprep.subr.mxu0 0.0
      %3524 = vmatpush1.msra.mxu0 0.0
      %3525 = vmatprep.subr.mxu0 0.0
      %3526 = vmatpush1.msra.mxu0 0.0
      %3527 = vmatprep.subr.mxu0 0.0
      %3528 = vmatpush1.msra.mxu0 0.0
      %3529 = vmatprep.subr.mxu0 0.0
      %3530 = vmatpush1.msra.mxu0 0.0
      %3531 = vmatprep.subr.mxu0 0.0
      %3532 = vmatpush1.msra.mxu0 0.0
      %3533 = vmatprep.subr.mxu0 0.0
      %3534 = vmatpush1.msra.mxu0 0.0
      %3535 = vmatprep.subr.mxu0 0.0
      %3536 = vmatpush1.msra.mxu0 0.0
      %3537 = vmatprep.subr.mxu0 0.0
      %3538 = vmatpush1.msra.mxu0 0.0
      %3539 = vmatprep.subr.mxu0 0.0
      %3540 = vmatpush1.msra.mxu0 0.0
      %3541 = vmatprep.subr.mxu0 0.0
      %3542 = vmatpush1.msra.mxu0 0.0
      %3543 = vmatprep.subr.mxu0 0.0
      %3544 = vmatpush1.msra.mxu0 0.0
      %3545 = vmatprep.subr.mxu0 0.0
      %3546 = vmatpush1.msra.mxu0 0.0
      %3547 = vmatprep.mubr.f32.mxu0 0.0
      %3548 = vmatmul.mubr.f32.gmra.mrb[0].mxu0 %v3385
      %v3549 = vpop.f32.mrb[0].mxu0
      %v3550 = vadd.f32 0.0, %v3549
      %v3551 = vpop.f32.mrb[0].mxu0
      %3552 = vmatprep.mubr.f32.mxu0 0.0
      %3553 = vmatmul.mubr.f32.gmra.mrb[0].mxu0 %v3388
      %v3554 = vpop.f32.mrb[0].mxu0
      %v3555 = vadd.f32 0.0, %v3554
      %v3556 = vpop.f32.mrb[0].mxu0
      %3557 = vmatprep.mubr.f32.mxu0 0.0
      %3558 = vmatmul.mubr.f32.gmra.mrb[0].mxu0 %v3391
      %v3559 = vpop.f32.mrb[0].mxu0
      %v3560 = vadd.f32 0.0, %v3559
      %v3561 = vpop.f32.mrb[0].mxu0
      %3562 = vmatprep.mubr.f32.mxu0 0.0
      %3563 = vmatmul.mubr.f32.gmra.mrb[0].mxu0 %v3394
      %v3564 = vpop.f32.mrb[0].mxu0
      %v3565 = vadd.f32 0.0, %v3564
      %v3566 = vpop.f32.mrb[0].mxu0
      %3567 = vmatprep.mubr.f32.mxu0 0.0
      %3568 = vmatmul.mubr.f32.gmra.mrb[0].mxu0 %v3397
      %v3569 = vpop.f32.mrb[0].mxu0
      %v3570 = vadd.f32 0.0, %v3569
      %v3571 = vpop.f32.mrb[0].mxu0
      %3572 = vmatprep.mubr.f32.mxu0 0.0
      %3573 = vmatmul.mubr.f32.gmra.mrb[0].mxu0 %v3400
      %v3574 = vpop.f32.mrb[0].mxu0
      %v3575 = vadd.f32 0.0, %v3574
      %v3576 = vpop.f32.mrb[0].mxu0
      %3577 = vmatprep.mubr.f32.mxu0 0.0
      %3578 = vmatmul.mubr.f32.gmra.mrb[0].mxu0 %v3403
      %v3579 = vpop.f32.mrb[0].mxu0
      %v3580 = vadd.f32 0.0, %v3579
      %v3581 = vpop.f32.mrb[0].mxu0
      %3582 = vmatprep.mubr.f32.mxu0 0.0
      %3583 = vmatmul.mubr.f32.gmra.mrb[0].mxu0 %v3406
      %v3584 = vpop.f32.mrb[0].mxu0
      %v3585 = vadd.f32 0.0, %v3584
      %v3586 = vpop.f32.mrb[0].mxu0
      %3587 = vmatprep.mubr.f32.mxu0 0.0
      %3588 = vmatmul.mubr.f32.gmra.mrb[0].mxu0 %v3409
      %v3589 = vpop.f32.mrb[0].mxu0
      %v3590 = vadd.f32 0.0, %v3589
      %v3591 = vpop.f32.mrb[0].mxu0
      %3592 = vmatprep.mubr.f32.mxu0 0.0
      %3593 = vmatmul.mubr.f32.gmra.mrb[0].mxu0 %v3412
      %v3594 = vpop.f32.mrb[0].mxu0
      %v3595 = vadd.f32 0.0, %v3594
      %v3596 = vpop.f32.mrb[0].mxu0
      %3597 = vmatprep.mubr.f32.mxu0 0.0
      %3598 = vmatmul.mubr.f32.gmra.mrb[0].mxu0 %v3415
      %v3599 = vpop.f32.mrb[0].mxu0
      %v3600 = vadd.f32 0.0, %v3599
      %v3601 = vpop.f32.mrb[0].mxu0
      %3602 = vmatprep.mubr.f32.mxu0 0.0
      %3603 = vmatmul.mubr.f32.gmra.mrb[0].mxu0 %v3418
      %v3604 = vpop.f32.mrb[0].mxu0
      %v3605 = vadd.f32 0.0, %v3604
      %v3606 = vpop.f32.mrb[0].mxu0
      %3607 = vmatprep.mubr.f32.mxu0 0.0
      %3608 = vmatmul.mubr.f32.gmra.mrb[0].mxu0 %v3421
      %v3609 = vpop.f32.mrb[0].mxu0
      %v3610 = vadd.f32 0.0, %v3609
      %v3611 = vpop.f32.mrb[0].mxu0
      %3612 = vmatprep.mubr.f32.mxu0 0.0
      %3613 = vmatmul.mubr.f32.gmra.mrb[0].mxu0 %v3424
      %v3614 = vpop.f32.mrb[0].mxu0
      %v3615 = vadd.f32 0.0, %v3614
      %v3616 = vpop.f32.mrb[0].mxu0
      %3617 = vmatprep.mubr.f32.mxu0 0.0
      %3618 = vmatmul.mubr.f32.gmra.mrb[0].mxu0 %v3427
      %v3619 = vpop.f32.mrb[0].mxu0
      %v3620 = vadd.f32 0.0, %v3619
      %v3621 = vpop.f32.mrb[0].mxu0
      %3622 = vmatprep.mubr.f32.mxu0 0.0
      %3623 = vmatmul.mubr.f32.gmra.mrb[0].mxu0 %v3430
      %v3624 = vpop.f32.mrb[0].mxu0
      %v3625 = vadd.f32 0.0, %v3624
      %v3626 = vpop.f32.mrb[0].mxu0
      %3627 = vmatprep.mubr.f32.mxu0 0.0
      %3628 = vmatmul.mubr.f32.gmra.mrb[0].mxu0 %v3433
      %v3629 = vpop.f32.mrb[0].mxu0
      %v3630 = vadd.f32 0.0, %v3629
      %v3631 = vpop.f32.mrb[0].mxu0
      %3632 = vmatprep.mubr.f32.mxu0 0.0
      %3633 = vmatmul.mubr.f32.gmra.mrb[0].mxu0 %v3436
      %v3634 = vpop.f32.mrb[0].mxu0
      %v3635 = vadd.f32 0.0, %v3634
      %v3636 = vpop.f32.mrb[0].mxu0
      %3637 = vmatprep.mubr.f32.mxu0 0.0
      %3638 = vmatmul.mubr.f32.gmra.mrb[0].mxu0 %v3439
      %v3639 = vpop.f32.mrb[0].mxu0
      %v3640 = vadd.f32 0.0, %v3639
      %v3641 = vpop.f32.mrb[0].mxu0
      %3642 = vmatprep.mubr.f32.mxu0 0.0
      %3643 = vmatmul.mubr.f32.gmra.mrb[0].mxu0 %v3442
      %v3644 = vpop.f32.mrb[0].mxu0
      %v3645 = vadd.f32 0.0, %v3644
      %v3646 = vpop.f32.mrb[0].mxu0
      %3647 = vmatprep.mubr.f32.mxu0 0.0
      %3648 = vmatmul.mubr.f32.gmra.mrb[0].mxu0 %v3445
      %v3649 = vpop.f32.mrb[0].mxu0
      %v3650 = vadd.f32 0.0, %v3649
      %v3651 = vpop.f32.mrb[0].mxu0
      %3652 = vmatprep.mubr.f32.mxu0 0.0
      %3653 = vmatmul.mubr.f32.gmra.mrb[0].mxu0 %v3448
      %v3654 = vpop.f32.mrb[0].mxu0
      %v3655 = vadd.f32 0.0, %v3654
      %v3656 = vpop.f32.mrb[0].mxu0
      %3657 = vmatprep.mubr.f32.mxu0 0.0
      %3658 = vmatmul.mubr.f32.gmra.mrb[0].mxu0 %v3451
      %v3659 = vpop.f32.mrb[0].mxu0
      %v3660 = vadd.f32 0.0, %v3659
      %v3661 = vpop.f32.mrb[0].mxu0
      %3662 = vmatprep.mubr.f32.mxu0 0.0
      %3663 = vmatmul.mubr.f32.gmra.mrb[0].mxu0 %v3454
      %v3664 = vpop.f32.mrb[0].mxu0
      %v3665 = vadd.f32 0.0, %v3664
      %v3666 = vpop.f32.mrb[0].mxu0
      %3667 = vmatprep.mubr.f32.mxu0 0.0
      %3668 = vmatmul.mubr.f32.gmra.mrb[0].mxu0 %v3457
      %v3669 = vpop.f32.mrb[0].mxu0
      %v3670 = vadd.f32 0.0, %v3669
      %v3671 = vpop.f32.mrb[0].mxu0
      %3672 = vmatprep.mubr.f32.mxu0 0.0
      %3673 = vmatmul.mubr.f32.gmra.mrb[0].mxu0 %v3460
      %v3674 = vpop.f32.mrb[0].mxu0
      %v3675 = vadd.f32 0.0, %v3674
      %v3676 = vpop.f32.mrb[0].mxu0
      %3677 = vmatprep.mubr.f32.mxu0 0.0
      %3678 = vmatmul.mubr.f32.gmra.mrb[0].mxu0 %v3463
      %v3679 = vpop.f32.mrb[0].mxu0
      %v3680 = vadd.f32 0.0, %v3679
      %v3681 = vpop.f32.mrb[0].mxu0
      %3682 = vmatprep.mubr.f32.mxu0 0.0
      %3683 = vmatmul.mubr.f32.gmra.mrb[0].mxu0 %v3466
      %v3684 = vpop.f32.mrb[0].mxu0
      %v3685 = vadd.f32 0.0, %v3684
      %v3686 = vpop.f32.mrb[0].mxu0
      %3687 = vmatprep.mubr.f32.mxu0 0.0
      %3688 = vmatmul.mubr.f32.gmra.mrb[0].mxu0 %v3469
      %v3689 = vpop.f32.mrb[0].mxu0
      %v3690 = vadd.f32 0.0, %v3689
      %v3691 = vpop.f32.mrb[0].mxu0
      %3692 = vmatprep.mubr.f32.mxu0 0.0
      %3693 = vmatmul.mubr.f32.gmra.mrb[0].mxu0 %v3472
      %v3694 = vpop.f32.mrb[0].mxu0
      %v3695 = vadd.f32 0.0, %v3694
      %v3696 = vpop.f32.mrb[0].mxu0
      %3697 = vmatprep.mubr.f32.mxu0 0.0
      %3698 = vmatmul.mubr.f32.gmra.mrb[0].mxu0 %v3475
      %v3699 = vpop.f32.mrb[0].mxu0
      %v3700 = vadd.f32 0.0, %v3699
      %v3701 = vpop.f32.mrb[0].mxu0
      %3702 = vmatprep.mubr.f32.mxu0 0.0
      %3703 = vmatmul.mubr.f32.gmra.mrb[0].mxu0 %v3478
      %v3704 = vpop.f32.mrb[0].mxu0
      %v3705 = vadd.f32 0.0, %v3704
      %v3706 = vpop.f32.mrb[0].mxu0
      %3707 = vdwg.mxu0
      %v3708 = vadd.f32 %v3318, %v3550
      %v3709 = vadd.f32 %v3319, %v3555
      %v3710 = vadd.f32 %v3320, %v3560
      %v3711 = vadd.f32 %v3321, %v3565
      %v3712 = vadd.f32 %v3322, %v3570
      %v3713 = vadd.f32 %v3323, %v3575
      %v3714 = vadd.f32 %v3324, %v3580
      %v3715 = vadd.f32 %v3325, %v3585
      %v3716 = vadd.f32 %v3326, %v3590
      %v3717 = vadd.f32 %v3327, %v3595
      %v3718 = vadd.f32 %v3328, %v3600
      %v3719 = vadd.f32 %v3329, %v3605
      %v3720 = vadd.f32 %v3330, %v3610
      %v3721 = vadd.f32 %v3331, %v3615
      %v3722 = vadd.f32 %v3332, %v3620
      %v3723 = vadd.f32 %v3333, %v3625
      %v3724 = vadd.f32 %v3334, %v3630
      %v3725 = vadd.f32 %v3335, %v3635
      %v3726 = vadd.f32 %v3336, %v3640
      %v3727 = vadd.f32 %v3337, %v3645
      %v3728 = vadd.f32 %v3338, %v3650
      %v3729 = vadd.f32 %v3339, %v3655
      %v3730 = vadd.f32 %v3340, %v3660
      %v3731 = vadd.f32 %v3341, %v3665
      %v3732 = vadd.f32 %v3342, %v3670
      %v3733 = vadd.f32 %v3343, %v3675
      %v3734 = vadd.f32 %v3344, %v3680
      %v3735 = vadd.f32 %v3345, %v3685
      %v3736 = vadd.f32 %v3346, %v3690
      %v3737 = vadd.f32 %v3347, %v3695
      %v3738 = vadd.f32 %v3348, %v3700
      %v3739 = vadd.f32 %v3349, %v3705
      %3740 = vst.msk [vmem:[%s177] sm:$0xff] %vm182, %v3708
      %3741 = vst.msk [vmem:[%s177 + $0x8] sm:$0xff] %vm182, %v3709
      %3742 = vst.msk [vmem:[%s177 + $0x10] sm:$0xff] %vm182, %v3710
      %3743 = vst.msk [vmem:[%s177 + $0x18] sm:$0xff] %vm182, %v3711
      %3744 = vst.msk [vmem:[%s177 + $0x20] sm:$0xff] %vm182, %v3712
      %3745 = vst.msk [vmem:[%s177 + $0x28] sm:$0xff] %vm182, %v3713
      %3746 = vst.msk [vmem:[%s177 + $0x30] sm:$0xff] %vm182, %v3714
      %3747 = vst.msk [vmem:[%s177 + $0x38] sm:$0xff] %vm182, %v3715
      %3748 = vst.msk [vmem:[%s177 + $0x40] sm:$0xff] %vm182, %v3716
      %3749 = vst.msk [vmem:[%s177 + $0x48] sm:$0xff] %vm182, %v3717
      %3750 = vst.msk [vmem:[%s177 + $0x50] sm:$0xff] %vm182, %v3718
      %3751 = vst.msk [vmem:[%s177 + $0x58] sm:$0xff] %vm182, %v3719
      %3752 = vst.msk [vmem:[%s177 + $0x60] sm:$0xff] %vm182, %v3720
      %3753 = vst.msk [vmem:[%s177 + $0x68] sm:$0xff] %vm182, %v3721
      %3754 = vst.msk [vmem:[%s177 + $0x70] sm:$0xff] %vm182, %v3722
      %3755 = vst.msk [vmem:[%s177 + $0x78] sm:$0xff] %vm182, %v3723
      %3756 = vst.msk [vmem:[%s177 + $0x80] sm:$0xff] %vm182, %v3724
      %3757 = vst.msk [vmem:[%s177 + $0x88] sm:$0xff] %vm182, %v3725
      %3758 = vst.msk [vmem:[%s177 + $0x90] sm:$0xff] %vm182, %v3726
      %3759 = vst.msk [vmem:[%s177 + $0x98] sm:$0xff] %vm182, %v3727
      %3760 = vst.msk [vmem:[%s177 + $0xa0] sm:$0xff] %vm182, %v3728
      %3761 = vst.msk [vmem:[%s177 + $0xa8] sm:$0xff] %vm182, %v3729
      %3762 = vst.msk [vmem:[%s177 + $0xb0] sm:$0xff] %vm182, %v3730
      %3763 = vst.msk [vmem:[%s177 + $0xb8] sm:$0xff] %vm182, %v3731
      %3764 = vst.msk [vmem:[%s177 + $0xc0] sm:$0xff] %vm182, %v3732
      %3765 = vst.msk [vmem:[%s177 + $0xc8] sm:$0xff] %vm182, %v3733
      %3766 = vst.msk [vmem:[%s177 + $0xd0] sm:$0xff] %vm182, %v3734
      %3767 = vst.msk [vmem:[%s177 + $0xd8] sm:$0xff] %vm182, %v3735
      %3768 = vst.msk [vmem:[%s177 + $0xe0] sm:$0xff] %vm182, %v3736
      %3769 = vst.msk [vmem:[%s177 + $0xe8] sm:$0xff] %vm182, %v3737
      %3770 = vst.msk [vmem:[%s177 + $0xf0] sm:$0xff] %vm182, %v3738
      %3771 = vst.msk [vmem:[%s177 + $0xf8] sm:$0xff] %vm182, %v3739
      %v3772 = vsel %vm182, %v3708, 0.0
      %v3773 = vsel %vm182, %v3709, 0.0
      %v3774 = vadd.f32 %v3772, %v3773
      %v3775 = vsel %vm182, %v3710, 0.0
      %v3776 = vadd.f32 %v3774, %v3775
      %v3777 = vsel %vm182, %v3711, 0.0
      %v3778 = vadd.f32 %v3776, %v3777
      %v3779 = vsel %vm182, %v3712, 0.0
      %v3780 = vadd.f32 %v3778, %v3779
      %v3781 = vsel %vm182, %v3713, 0.0
      %v3782 = vadd.f32 %v3780, %v3781
      %v3783 = vsel %vm182, %v3714, 0.0
      %v3784 = vadd.f32 %v3782, %v3783
      %v3785 = vsel %vm182, %v3715, 0.0
      %v3786 = vadd.f32 %v3784, %v3785
      %v3787 = vsel %vm182, %v3716, 0.0
      %v3788 = vadd.f32 %v3786, %v3787
      %v3789 = vsel %vm182, %v3717, 0.0
      %v3790 = vadd.f32 %v3788, %v3789
      %v3791 = vsel %vm182, %v3718, 0.0
      %v3792 = vadd.f32 %v3790, %v3791
      %v3793 = vsel %vm182, %v3719, 0.0
      %v3794 = vadd.f32 %v3792, %v3793
      %v3795 = vsel %vm182, %v3720, 0.0
      %v3796 = vadd.f32 %v3794, %v3795
      %v3797 = vsel %vm182, %v3721, 0.0
      %v3798 = vadd.f32 %v3796, %v3797
      %v3799 = vsel %vm182, %v3722, 0.0
      %v3800 = vadd.f32 %v3798, %v3799
      %v3801 = vsel %vm182, %v3723, 0.0
      %v3802 = vadd.f32 %v3800, %v3801
      %v3803 = vsel %vm182, %v3724, 0.0
      %v3804 = vadd.f32 %v3802, %v3803
      %v3805 = vsel %vm182, %v3725, 0.0
      %v3806 = vadd.f32 %v3804, %v3805
      %v3807 = vsel %vm182, %v3726, 0.0
      %v3808 = vadd.f32 %v3806, %v3807
      %v3809 = vsel %vm182, %v3727, 0.0
      %v3810 = vadd.f32 %v3808, %v3809
      %v3811 = vsel %vm182, %v3728, 0.0
      %v3812 = vadd.f32 %v3810, %v3811
      %v3813 = vsel %vm182, %v3729, 0.0
      %v3814 = vadd.f32 %v3812, %v3813
      %v3815 = vsel %vm182, %v3730, 0.0
      %v3816 = vadd.f32 %v3814, %v3815
      %v3817 = vsel %vm182, %v3731, 0.0
      %v3818 = vadd.f32 %v3816, %v3817
      %v3819 = vsel %vm182, %v3732, 0.0
      %v3820 = vadd.f32 %v3818, %v3819
      %v3821 = vsel %vm182, %v3733, 0.0
      %v3822 = vadd.f32 %v3820, %v3821
      %v3823 = vsel %vm182, %v3734, 0.0
      %v3824 = vadd.f32 %v3822, %v3823
      %v3825 = vsel %vm182, %v3735, 0.0
      %v3826 = vadd.f32 %v3824, %v3825
      %v3827 = vsel %vm182, %v3736, 0.0
      %v3828 = vadd.f32 %v3826, %v3827
      %v3829 = vsel %vm182, %v3737, 0.0
      %v3830 = vadd.f32 %v3828, %v3829
      %v3831 = vsel %vm182, %v3738, 0.0
      %v3832 = vadd.f32 %v3830, %v3831
      %v3833 = vsel %vm182, %v3739, 0.0
      %v3834 = vadd.f32 %v3832, %v3833
      %v3835 = vrot.slane %v3834, 4
      %v3836 = vadd.f32 %v3834, %v3835
      %v3837 = vrot.slane %v3836, 2
      %v3838 = vadd.f32 %v3836, %v3837
      %v3839 = vrot.slane %v3838, 1
      %v3840 = vadd.f32 %v3838, %v3839
      %3841 = vst.msk [vmem:[%s181] sm:$0x1] %vm191, %v3840
      %v3842 = vmul.f32 %v3708, %v3708
      %v3843 = vmul.f32 %v3709, %v3709
      %v3844 = vmul.f32 %v3710, %v3710
      %v3845 = vmul.f32 %v3711, %v3711
      %v3846 = vmul.f32 %v3712, %v3712
      %v3847 = vmul.f32 %v3713, %v3713
      %v3848 = vmul.f32 %v3714, %v3714
      %v3849 = vmul.f32 %v3715, %v3715
      %v3850 = vmul.f32 %v3716, %v3716
      %v3851 = vmul.f32 %v3717, %v3717
      %v3852 = vmul.f32 %v3718, %v3718
      %v3853 = vmul.f32 %v3719, %v3719
      %v3854 = vmul.f32 %v3720, %v3720
      %v3855 = vmul.f32 %v3721, %v3721
      %v3856 = vmul.f32 %v3722, %v3722
      %v3857 = vmul.f32 %v3723, %v3723
      %v3858 = vmul.f32 %v3724, %v3724
      %v3859 = vmul.f32 %v3725, %v3725
      %v3860 = vmul.f32 %v3726, %v3726
      %v3861 = vmul.f32 %v3727, %v3727
      %v3862 = vmul.f32 %v3728, %v3728
      %v3863 = vmul.f32 %v3729, %v3729
      %v3864 = vmul.f32 %v3730, %v3730
      %v3865 = vmul.f32 %v3731, %v3731
      %v3866 = vmul.f32 %v3732, %v3732
      %v3867 = vmul.f32 %v3733, %v3733
      %v3868 = vmul.f32 %v3734, %v3734
      %v3869 = vmul.f32 %v3735, %v3735
      %v3870 = vmul.f32 %v3736, %v3736
      %v3871 = vmul.f32 %v3737, %v3737
      %v3872 = vmul.f32 %v3738, %v3738
      %v3873 = vmul.f32 %v3739, %v3739
      %v3874 = vsel %vm182, %v3842, 0.0
      %v3875 = vsel %vm182, %v3843, 0.0
      %v3876 = vadd.f32 %v3874, %v3875
      %v3877 = vsel %vm182, %v3844, 0.0
      %v3878 = vadd.f32 %v3876, %v3877
      %v3879 = vsel %vm182, %v3845, 0.0
      %v3880 = vadd.f32 %v3878, %v3879
      %v3881 = vsel %vm182, %v3846, 0.0
      %v3882 = vadd.f32 %v3880, %v3881
      %v3883 = vsel %vm182, %v3847, 0.0
      %v3884 = vadd.f32 %v3882, %v3883
      %v3885 = vsel %vm182, %v3848, 0.0
      %v3886 = vadd.f32 %v3884, %v3885
      %v3887 = vsel %vm182, %v3849, 0.0
      %v3888 = vadd.f32 %v3886, %v3887
      %v3889 = vsel %vm182, %v3850, 0.0
      %v3890 = vadd.f32 %v3888, %v3889
      %v3891 = vsel %vm182, %v3851, 0.0
      %v3892 = vadd.f32 %v3890, %v3891
      %v3893 = vsel %vm182, %v3852, 0.0
      %v3894 = vadd.f32 %v3892, %v3893
      %v3895 = vsel %vm182, %v3853, 0.0
      %v3896 = vadd.f32 %v3894, %v3895
      %v3897 = vsel %vm182, %v3854, 0.0
      %v3898 = vadd.f32 %v3896, %v3897
      %v3899 = vsel %vm182, %v3855, 0.0
      %v3900 = vadd.f32 %v3898, %v3899
      %v3901 = vsel %vm182, %v3856, 0.0
      %v3902 = vadd.f32 %v3900, %v3901
      %v3903 = vsel %vm182, %v3857, 0.0
      %v3904 = vadd.f32 %v3902, %v3903
      %v3905 = vsel %vm182, %v3858, 0.0
      %v3906 = vadd.f32 %v3904, %v3905
      %v3907 = vsel %vm182, %v3859, 0.0
      %v3908 = vadd.f32 %v3906, %v3907
      %v3909 = vsel %vm182, %v3860, 0.0
      %v3910 = vadd.f32 %v3908, %v3909
      %v3911 = vsel %vm182, %v3861, 0.0
      %v3912 = vadd.f32 %v3910, %v3911
      %v3913 = vsel %vm182, %v3862, 0.0
      %v3914 = vadd.f32 %v3912, %v3913
      %v3915 = vsel %vm182, %v3863, 0.0
      %v3916 = vadd.f32 %v3914, %v3915
      %v3917 = vsel %vm182, %v3864, 0.0
      %v3918 = vadd.f32 %v3916, %v3917
      %v3919 = vsel %vm182, %v3865, 0.0
      %v3920 = vadd.f32 %v3918, %v3919
      %v3921 = vsel %vm182, %v3866, 0.0
      %v3922 = vadd.f32 %v3920, %v3921
      %v3923 = vsel %vm182, %v3867, 0.0
      %v3924 = vadd.f32 %v3922, %v3923
      %v3925 = vsel %vm182, %v3868, 0.0
      %v3926 = vadd.f32 %v3924, %v3925
      %v3927 = vsel %vm182, %v3869, 0.0
      %v3928 = vadd.f32 %v3926, %v3927
      %v3929 = vsel %vm182, %v3870, 0.0
      %v3930 = vadd.f32 %v3928, %v3929
      %v3931 = vsel %vm182, %v3871, 0.0
      %v3932 = vadd.f32 %v3930, %v3931
      %v3933 = vsel %vm182, %v3872, 0.0
      %v3934 = vadd.f32 %v3932, %v3933
      %v3935 = vsel %vm182, %v3873, 0.0
      %v3936 = vadd.f32 %v3934, %v3935
      %v3937 = vrot.slane %v3936, 4
      %v3938 = vadd.f32 %v3936, %v3937
      %v3939 = vrot.slane %v3938, 2
      %v3940 = vadd.f32 %v3938, %v3939
      %v3941 = vrot.slane %v3940, 1
      %v3942 = vadd.f32 %v3940, %v3941
      %3943 = vst.msk [vmem:[%s181 + $0x1] sm:$0x1] %vm191, %v3942
      %p3944 = scmp.lt.s32.totalorder %s15, 1
      %s3945 = scalar_select %p3944, %s15, 1
      %s3946 = smul.addr %s3945, 32
      %s3947 = smul.addr %s3946, 8
      %s3948 = scalar_lea.vmem %s2, %s3947
      %p3949 = scmp.lt.s32.totalorder %s15, 1
      %s3950 = scalar_select %p3949, %s15, 1
      %s3951 = smul.addr %s3950, 2
      %s3952 = scalar_lea.vmem %s3, %s3951
      // Predicated region
      $region29: #{resblock_forward.3} parent=27 // pred_check
        %p3953 = pneg %p80
      $region30: #{resblock_forward.3} parent=27 // pred_check_branch
        %3955 = sbr.rel (%p3953) target = $region32
      $region31: #{resblock_forward.3} parent=27 // pred_region
        _
      $region32: #{resblock_forward.3} parent=27 // pred_fallthru
        _
      // Predicated region
      $region33: #{resblock_forward.3} parent=27 // pred_check
        %p3956 = pneg %p106
      $region34: #{resblock_forward.3} parent=27 // pred_check_branch
        %3958 = sbr.rel (%p3956) target = $region36
      $region35: #{resblock_forward.3} parent=27 // pred_region
        _
      $region36: #{resblock_forward.3} parent=27 // pred_fallthru
        _
    $region28: #{resblock_forward.3} parent=5 // pred_fallthru
      _
    %p3959 = scmp.le.s32.totalorder 2, %s10
    // Predicated region
    $region37: #{resblock_forward.3} parent=5 // pred_check
      %p3960 = pneg %p3959
    $region38: #{resblock_forward.3} parent=5 // pred_check_branch
      %3962 = sbr.rel (%p3960) target = $region40
    $region39: #{resblock_forward.3} parent=5 // pred_region
      %s3963 = ssub.s32 %s10, 2
      // Predicated region
      $region41: #{resblock_forward.3} parent=39 // pred_check
        %p3964 = pneg %p86
      $region42: #{resblock_forward.3} parent=39 // pred_check_branch
        %3966 = sbr.rel (%p3964) target = $region44
      $region43: #{resblock_forward.3} parent=39 // pred_region
        %p3967 = scmp.lt.s32.totalorder %s16, 1
        %s3968 = scalar_select %p3967, %s16, 1
        %s3969 = smul.addr %s3968, 32
        %s3970 = smul.addr %s3969, 8
        %s3971 = scalar_lea.vmem %s2, %s3970
      $region44: #{resblock_forward.3} parent=39 // pred_fallthru
        _
      // Predicated region
      $region45: #{resblock_forward.3} parent=39 // pred_check
        %p3972 = pneg %p112
      $region46: #{resblock_forward.3} parent=39 // pred_check_branch
        %3974 = sbr.rel (%p3972) target = $region48
      $region47: #{resblock_forward.3} parent=39 // pred_region
        %p3975 = scmp.lt.s32.totalorder %s16, 1
        %s3976 = scalar_select %p3975, %s16, 1
        %s3977 = smul.addr %s3976, 2
        %s3978 = scalar_lea.vmem %s3, %s3977
      $region48: #{resblock_forward.3} parent=39 // pred_fallthru
        _
    $region40: #{resblock_forward.3} parent=5 // pred_fallthru
      _
  $region6: #{resblock_forward.3} parent=0 // loop_footer
    %s14 = sadd.s32 1, %s10
  $region7: #{resblock_forward.3} parent=0 // loop_footer_branch
    %9 = sbr.rel target = $region3
  $region8: #{resblock_forward.3} parent=0 // loop_exit
    _

</llo_original>
